<compile_context>
chip_gen: v7x
topology: tpu7x:2x2x1
jax: 0.10.0
libtpu: 0.0.40
codegen_flags: <defaults>
</compile_context>

<pallas_src>
import functools

import numpy as np
import jax
import jax.numpy as jnp
from jax.experimental import pallas as pl
from jax.experimental.pallas import tpu as pltpu

# SAMPLE_RATE is undefined in the source module; fix it deterministically here.
SAMPLE_RATE = 16000
N_FFT = 1024
WIN = N_FFT                     # torchaudio default: win_length = n_fft
HOP = WIN // 2                  # hop_length=None -> win_length // 2 = 512
N_MELS = 64
N_MELS_PAD = 128                # pad mel axis to full 128 lanes (zero fb columns)
N_FREQS = N_FFT // 2 + 1        # onesided rFFT bins = 513
N_FREQS_USED = 512              # Nyquist bin dropped: its mel-fb row is 0 for f_max=sr/2


def _hz_to_mel(f):
    return 2595.0 * np.log10(1.0 + f / 700.0)


def _mel_to_hz(m):
    return 700.0 * (10.0 ** (m / 2595.0) - 1.0)


def _melscale_fbanks(n_freqs, f_min, f_max, n_mels, sample_rate):
    # Matches torchaudio.functional.melscale_fbanks with mel_scale='htk', norm=None.
    all_freqs = np.linspace(0.0, sample_rate // 2, n_freqs)
    m_pts = np.linspace(_hz_to_mel(f_min), _hz_to_mel(f_max), n_mels + 2)
    f_pts = _mel_to_hz(m_pts)
    f_diff = f_pts[1:] - f_pts[:-1]                       # (n_mels + 1,)
    slopes = f_pts[None, :] - all_freqs[:, None]          # (n_freqs, n_mels + 2)
    down = -slopes[:, :-2] / f_diff[:-1]
    up = slopes[:, 2:] / f_diff[1:]
    fb = np.maximum(0.0, np.minimum(down, up))
    return fb.astype(np.float32)                          # (n_freqs, n_mels)


@functools.lru_cache(maxsize=1)
def _build_constants():
    n = np.arange(N_FFT, dtype=np.float64)
    # torch.hann_window(n_fft, periodic=True), folded into the DFT matrices.
    window = 0.5 - 0.5 * np.cos(2.0 * np.pi * n / N_FFT)
    k = np.arange(N_FREQS_USED, dtype=np.float64)         # bins 0..511
    ang = 2.0 * np.pi * np.outer(n, k) / N_FFT            # (N_FFT, 512)
    cos_m = np.cos(ang) * window[:, None]                 # windowed real part
    sin_m = -np.sin(ang) * window[:, None]                # windowed imag part (exp(-i*ang))
    dft_np = np.concatenate([cos_m, sin_m], axis=1).astype(np.float32)   # (1024, 1024)

    # bf16 hi/lo split: dft ~= hi + lo with residual ~2^-18 -> the MXU sees only
    # bf16 operands (2 passes) while the DFT itself carries ~f32 precision.
    dft_f32 = jnp.asarray(dft_np)
    dft_hi = dft_f32.astype(jnp.bfloat16)
    dft_lo = (dft_f32 - dft_hi.astype(jnp.float32)).astype(jnp.bfloat16)

    fb_full = _melscale_fbanks(N_FREQS, 0.0, SAMPLE_RATE / 2.0, N_MELS, SAMPLE_RATE)
    fb = np.zeros((N_FREQS_USED, N_MELS_PAD), np.float32)
    fb[:, :N_MELS] = fb_full[:N_FREQS_USED, :]            # Nyquist row (==0) dropped
    return dft_hi, dft_lo, jnp.asarray(fb)


def mel_kernel(frames_ref, dft_hi_ref, dft_lo_ref, fb_ref, out_ref):
    # frames: (TM, N_FFT) bf16, dft_hi/lo: (N_FFT, 1024) bf16 = [win*cos || -win*sin],
    # fb: (512, N_MELS_PAD) f32, out: (TM, N_MELS_PAD) f32
    x = frames_ref[...]
    y = jnp.dot(x, dft_hi_ref[...], preferred_element_type=jnp.float32)
    y = y + jnp.dot(x, dft_lo_ref[...], preferred_element_type=jnp.float32)
    re = y[:, :N_FREQS_USED]                               # lane-aligned slice (512)
    im = y[:, N_FREQS_USED:]
    pwr = re * re + im * im                                # power spectrogram (power=2.0), VPU
    out_ref[...] = jnp.dot(pwr, fb_ref[...],
                           preferred_element_type=jnp.float32)   # mel projection (f32)


def _round_up(x, m):
    return (x + m - 1) // m * m


def mel_spectrogram(audio):
    """audio: (B, L) float32 -> (B, n_mels, T) float32, T = 1 + L // HOP."""
    B, L = audio.shape
    assert L % HOP == 0, "keep L a multiple of hop for clean framing"
    pad = N_FFT // 2
    # center=True with reflect padding (torch.stft default pad_mode='reflect')
    padded = jnp.pad(audio.astype(jnp.float32), ((0, 0), (pad, pad)), mode="reflect")
    n_frames = 1 + L // HOP

    # Framing without a gather: since HOP == N_FFT // 2, frame t is the
    # concatenation of HOP-sized chunks t and t+1 of the padded signal.
    # Cast to bf16 BEFORE the concat so the materialized (B*T, 1024) frame
    # array (and its per-tile DMA) is half-size.
    chunks = padded.astype(jnp.bfloat16).reshape(B, n_frames + 1, HOP)
    frames = jnp.concatenate([chunks[:, :-1, :], chunks[:, 1:, :]], axis=-1)  # (B, T, N_FFT)
    frames = frames.reshape(B * n_frames, N_FFT)

    dft_hi, dft_lo, fb = _build_constants()

    M = B * n_frames
    # Large M: TM=512 (MXU-row aligned, halves grid-step overhead vs 256).
    # Small M: split into (at least) 2 sublane-aligned tiles so the "parallel"
    # grid axis can occupy both v7x TensorCores.
    TM = min(512, _round_up(pl.cdiv(M, 2), 8))
    M_pad = _round_up(M, TM)
    if M_pad != M:
        frames = jnp.pad(frames, ((0, M_pad - M), (0, 0)))

    flops = (2 * 2 * M_pad * N_FFT * (2 * N_FREQS_USED)        # two bf16 DFT passes
             + 2 * M_pad * N_FREQS_USED * N_MELS_PAD            # mel projection
             + 3 * M_pad * N_FREQS_USED)                        # pwr elementwise
    bytes_accessed = (M_pad * N_FFT * 2                         # frames (bf16)
                      + M_pad * N_MELS_PAD * 4                  # out (f32)
                      + 2 * N_FFT * (2 * N_FREQS_USED) * 2      # dft_hi + dft_lo (bf16)
                      + N_FREQS_USED * N_MELS_PAD * 4)          # fb (f32)

    out = pl.pallas_call(
        mel_kernel,
        out_shape=jax.ShapeDtypeStruct((M_pad, N_MELS_PAD), jnp.float32),
        grid_spec=pltpu.PrefetchScalarGridSpec(
            num_scalar_prefetch=0,
            grid=(M_pad // TM,),
            in_specs=[
                pl.BlockSpec((TM, N_FFT), lambda i: (i, 0)),
                pl.BlockSpec((N_FFT, 2 * N_FREQS_USED), lambda i: (0, 0)),   # resident
                pl.BlockSpec((N_FFT, 2 * N_FREQS_USED), lambda i: (0, 0)),   # resident
                pl.BlockSpec((N_FREQS_USED, N_MELS_PAD), lambda i: (0, 0)),  # resident
            ],
            out_specs=pl.BlockSpec((TM, N_MELS_PAD), lambda i: (i, 0)),
        ),
        compiler_params=pltpu.CompilerParams(
            dimension_semantics=("parallel",),
            vmem_limit_bytes=32 * 1024 * 1024,
        ),
        cost_estimate=pl.CostEstimate(
            flops=int(flops), transcendentals=0, bytes_accessed=int(bytes_accessed)),
    )(frames, dft_hi, dft_lo, fb)

    # drop row padding and the 64 zero mel lanes, then go to (batch, n_mels, time)
    out = out[:M, :N_MELS]
    return out.reshape(B, n_frames, N_MELS).transpose(0, 2, 1)


if __name__ == "__main__":
    key = jax.random.PRNGKey(0)
    B, L = 2, 7680                         # small synthetic audio: 2 clips, 7680 samples
    audio = jax.random.normal(key, (B, L), dtype=jnp.float32)

    spec = mel_spectrogram(audio)
    spec = jax.block_until_ready(spec)

    T = 1 + L // HOP                       # center=True frame count
    assert spec.shape == (B, N_MELS, T), spec.shape
    assert bool(jnp.all(jnp.isfinite(spec)))

    # float64 numpy reference (torchaudio-equivalent math) for a numerical sanity check
    audio_np = np.asarray(audio, dtype=np.float64)
    padded_np = np.pad(audio_np, ((0, 0), (N_FFT // 2, N_FFT // 2)), mode="reflect")
    win = 0.5 - 0.5 * np.cos(2.0 * np.pi * np.arange(N_FFT) / N_FFT)
    idx = np.arange(T)[:, None] * HOP + np.arange(N_FFT)[None, :]
    frames_np = padded_np[:, idx] * win
    pwr_np = np.abs(np.fft.rfft(frames_np, axis=-1)) ** 2          # (B, T, 513)
    fb_ref = _melscale_fbanks(N_FREQS, 0.0, SAMPLE_RATE / 2.0, N_MELS, SAMPLE_RATE)
    ref = np.einsum("btf,fm->bmt", pwr_np, fb_ref.astype(np.float64))
    err = np.max(np.abs(np.asarray(spec, dtype=np.float64) - ref)) / np.max(np.abs(ref))
    assert err < 2e-3, f"numerical mismatch vs reference: {err}"

    print("KERNEL_OK")
</pallas_src>

<mosaic_0001>
module attributes {stable_mosaic.version = 11 : i64} {
  func.func @mel_kernel(%arg0: i32, %arg1: memref<16x1024xbf16, #tpu.memory_space<vmem>>, %arg2: memref<1024x1024xbf16, #tpu.memory_space<vmem>>, %arg3: memref<1024x1024xbf16, #tpu.memory_space<vmem>>, %arg4: memref<512x128xf32, #tpu.memory_space<vmem>>, %arg5: memref<16x128xf32, #tpu.memory_space<vmem>>) attributes {dimension_semantics = [#tpu.dimension_semantics<parallel>], iteration_bounds = array<i64: 2>, scalar_prefetch = 0 : i64, scratch_operands = 0 : i64, tpu.core_type = #tpu.core_type<tc>, window_params = [{transform_indices = @transform_0, window_bounds = array<i64: 16, 1024>}, {pipeline_mode = #tpu.pipeline_mode<synchronous>, transform_indices = @transform_1, window_bounds = array<i64: 1024, 1024>}, {pipeline_mode = #tpu.pipeline_mode<synchronous>, transform_indices = @transform_2, window_bounds = array<i64: 1024, 1024>}, {pipeline_mode = #tpu.pipeline_mode<synchronous>, transform_indices = @transform_3, window_bounds = array<i64: 512, 128>}, {transform_indices = @transform_4, window_bounds = array<i64: 16, 128>}]} {
    %c0 = arith.constant 0 : index
    %c0_0 = arith.constant 0 : index
    %0 = vector.load %arg1[%c0, %c0_0] : memref<16x1024xbf16, #tpu.memory_space<vmem>>, vector<16x1024xbf16>
    %c0_1 = arith.constant 0 : index
    %c0_2 = arith.constant 0 : index
    %1 = vector.load %arg2[%c0_1, %c0_2] : memref<1024x1024xbf16, #tpu.memory_space<vmem>>, vector<1024x1024xbf16>
    %cst = arith.constant dense<0.000000e+00> : vector<16x1024xf32>
    %2 = tpu.matmul %0, %1, %cst {dimension_numbers = #tpu.dot_dimension_numbers<[1], [0], [0], [1], [0, 0, 1, 1], [], []>} : vector<16x1024xbf16>, vector<1024x1024xbf16>, vector<16x1024xf32> -> vector<16x1024xf32>
    %c0_3 = arith.constant 0 : index
    %c0_4 = arith.constant 0 : index
    %3 = vector.load %arg3[%c0_3, %c0_4] : memref<1024x1024xbf16, #tpu.memory_space<vmem>>, vector<1024x1024xbf16>
    %cst_5 = arith.constant dense<0.000000e+00> : vector<16x1024xf32>
    %4 = tpu.matmul %0, %3, %cst_5 {dimension_numbers = #tpu.dot_dimension_numbers<[1], [0], [0], [1], [0, 0, 1, 1], [], []>} : vector<16x1024xbf16>, vector<1024x1024xbf16>, vector<16x1024xf32> -> vector<16x1024xf32>
    %5 = arith.addf %2, %4 : vector<16x1024xf32>
    %6 = vector.extract_strided_slice %5 {offsets = [0, 0], sizes = [16, 512], strides = [1, 1]} : vector<16x1024xf32> to vector<16x512xf32>
    %7 = vector.extract_strided_slice %5 {offsets = [0, 512], sizes = [16, 512], strides = [1, 1]} : vector<16x1024xf32> to vector<16x512xf32>
    %8 = arith.mulf %6, %6 : vector<16x512xf32>
    %9 = arith.mulf %7, %7 : vector<16x512xf32>
    %10 = arith.addf %8, %9 : vector<16x512xf32>
    %c0_6 = arith.constant 0 : index
    %c0_7 = arith.constant 0 : index
    %11 = vector.load %arg4[%c0_6, %c0_7] : memref<512x128xf32, #tpu.memory_space<vmem>>, vector<512x128xf32>
    %cst_8 = arith.constant dense<0.000000e+00> : vector<16x128xf32>
    %12 = tpu.matmul %10, %11, %cst_8 {dimension_numbers = #tpu.dot_dimension_numbers<[1], [0], [0], [1], [0, 0, 1, 1], [], []>} : vector<16x512xf32>, vector<512x128xf32>, vector<16x128xf32> -> vector<16x128xf32>
    %c0_9 = arith.constant 0 : index
    %c0_10 = arith.constant 0 : index
    %13 = vector.load %arg5[%c0_9, %c0_10] : memref<16x128xf32, #tpu.memory_space<vmem>>, vector<16x128xf32>
    tpu.vector_store %arg5[%c0_9, %c0_10], %12 {strides = array<i32>} : memref<16x128xf32, #tpu.memory_space<vmem>>, vector<16x128xf32>,
    return
  }
  func.func @transform_0(%arg0: i32) -> (i32, i32) {
    %c0_i32 = arith.constant 0 : i32
    %c0_i32_0 = arith.constant 0 : i32
    return %arg0, %c0_i32 : i32, i32
  }
  func.func @transform_1(%arg0: i32) -> (i32, i32) {
    %c0_i32 = arith.constant 0 : i32
    %c0_i32_0 = arith.constant 0 : i32
    %c0_i32_1 = arith.constant 0 : i32
    return %c0_i32, %c0_i32_0 : i32, i32
  }
  func.func @transform_2(%arg0: i32) -> (i32, i32) {
    %c0_i32 = arith.constant 0 : i32
    %c0_i32_0 = arith.constant 0 : i32
    %c0_i32_1 = arith.constant 0 : i32
    return %c0_i32, %c0_i32_0 : i32, i32
  }
  func.func @transform_3(%arg0: i32) -> (i32, i32) {
    %c0_i32 = arith.constant 0 : i32
    %c0_i32_0 = arith.constant 0 : i32
    %c0_i32_1 = arith.constant 0 : i32
    return %c0_i32, %c0_i32_0 : i32, i32
  }
  func.func @transform_4(%arg0: i32) -> (i32, i32) {
    %c0_i32 = arith.constant 0 : i32
    %c0_i32_0 = arith.constant 0 : i32
    return %arg0, %c0_i32 : i32, i32
  }
}

</mosaic_0001>

<llo_original>
// kernel: tpu_custom_call.1
$region0: #{tpu_custom_call.1}
  #allocation0 [shape = 'u32[]', space=smem, size = 0x4, offset = 0x4, fixed_abs, tag = 'smem constant byte address 0x4 - core index']
  #allocation1 [shape = 'u32[144,128]{1,0:T(1,128)}', space=vmem, size = 0x12000, scoped, tag = 'internal scratch']
  %s0 = inlined_call_operand.hbm [shape: bf16[32,1024], index: 0, kind: input, shape index: {}]
  %s1 = inlined_call_operand.hbm [shape: bf16[1024,1024], index: 1, kind: input, shape index: {}]
  %s2 = inlined_call_operand.hbm [shape: bf16[1024,1024], index: 2, kind: input, shape index: {}]
  %s3 = inlined_call_operand.hbm [shape: f32[512,128], index: 3, kind: input, shape index: {}]
  %s4 = inlined_call_operand.hbm [shape: f32[32,128], index: 4, kind: output, shape index: {}]
  %s5 = sld [smem:[#allocation0]]
  $region65: #{tpu_custom_call.1} parent=0
    _
  %s7 = ssub.s32 1, %s5
  %s8 = scalar_select 0, %s7, %s5
  $region1: #{tpu_custom_call.1} parent=0
    #allocation2 [shape = 'u8[65536]{0}', space=vmem, size = 0x10000, scoped, tag = 'input window, operand 0']
    #allocation3 [shape = 's32[2]{0}', space=sflag, size = 0x8, scoped, tag = 'scoped memory for tpu_custom_call.1']
    #allocation4 [shape = 's32[2]{0}', space=sflag, size = 0x8, scoped, tag = 'scoped memory for tpu_custom_call.1']
    #allocation5 [shape = 'u8[2097152]{0}', space=vmem, size = 0x200000, scoped, tag = 'input window, operand 1, single buffered']
    #allocation6 [shape = 's32[1]{0}', space=sflag, size = 0x4, scoped, tag = 'scoped memory for tpu_custom_call.1']
    #allocation7 [shape = 'u8[2097152]{0}', space=vmem, size = 0x200000, scoped, tag = 'input window, operand 2, single buffered']
    #allocation8 [shape = 'u8[262144]{0}', space=vmem, size = 0x40000, scoped, tag = 'input window, operand 3, single buffered']
    #allocation9 [shape = 's32[1]{0}', space=sflag, size = 0x4, scoped, tag = 'scoped memory for tpu_custom_call.1']
    #allocation10 [shape = 'u8[16384]{0}', space=vmem, size = 0x4000, scoped, tag = 'output window, operand 0']
    %9 = vsyncpa [#allocation3], 0
    %s10 = scalar_lea.sflag [#allocation3], 1
    %11 = vsyncpa %s10, 0
    %12 = vsyncpa [#allocation6], 0
    %13 = vsyncpa [#allocation9], 0
    %14 = vsyncpa [#allocation4], 0
    %s15 = scalar_lea.sflag [#allocation4], 1
    %16 = vsyncpa %s15, 0
    loop: start=0, step=1, limit=4
    $region2: #{tpu_custom_call.1} parent=1 // loop_pre_header
      _
    $region3: #{tpu_custom_call.1} parent=1 // loop_header
      %s18 = sphi 0, %s22
      %p19 = scmp.ge.s32.totalorder %s18, 4
      %s28 = sphi 0, %s30
      %s31 = sphi 0, %s28
      %s32 = sphi 0, %s31
      %s48 = sphi 0, %s32
      %s52 = sphi 0, %s52
      %s54 = sphi 0, %s52
      %s55 = sphi 0, %s54
      %s69 = sphi 0, %s55
      %s73 = sphi 0, %s73
      %s75 = sphi 0, %s73
      %s76 = sphi 0, %s75
      %s90 = sphi 0, %s76
      %s94 = sphi 0, %s94
      %s96 = sphi 0, %s94
      %s97 = sphi 0, %s96
      %s111 = sphi 0, %s97
      %s117 = sphi 0, %s119
      %s120 = sphi 0, %s117
      %s121 = sphi 0, %s120
      %s137 = sphi 0, %s121
    $region4: #{tpu_custom_call.1} parent=1 // loop_header_branch
      %21 = sbr.rel (%p19) target = $region8
    $region5: #{tpu_custom_call.1} parent=1 // loop_body
      %s23 = ssub.s32 %s18, 1
      %s24 = ssub.s32 %s18, 2
      %s25 = sadd.s32 %s18, 1
      %s26 = ssub.s32 %s18, %s25
      %p27 = scmp.eq.s32.totalorder %s26, 0
      %s29 = sadd.s32 %s28, 1
      %s30 = scalar_select %p27, %s28, %s29
      %p33 = pneg %p27
      %p34 = scmp.eq.s32.totalorder %s18, 1
      %p35 = por %p33, %p34
      %p36 = scmp.ne.s32.totalorder %s28, %s31
      %p37 = scmp.eq.s32.totalorder %s18, 0
      %p38 = por %p36, %p37
      %p39 = scmp.ne.s32.totalorder %s28, %s31
      %p40 = scmp.eq.s32.totalorder %s23, 1
      %p41 = por %p39, %p40
      %p42 = scmp.ne.s32.totalorder %s31, %s32
      %p43 = scmp.eq.s32.totalorder %s23, 0
      %p44 = por %p42, %p43
      %p45 = scmp.ne.s32.totalorder %s31, %s32
      %p46 = scmp.eq.s32.totalorder %s24, 1
      %p47 = por %p45, %p46
      %p49 = scmp.ne.s32.totalorder %s32, %s48
      %p50 = scmp.eq.s32.totalorder %s24, 0
      %p51 = por %p49, %p50
      %s53 = sadd.s32 %s52, 1
      %p56 = scmp.eq.s32.totalorder %s18, 1
      %p57 = scmp.ne.s32.totalorder %s52, %s54
      %p58 = scmp.eq.s32.totalorder %s18, 0
      %p59 = por %p57, %p58
      %p60 = scmp.ne.s32.totalorder %s52, %s54
      %p61 = scmp.eq.s32.totalorder %s23, 1
      %p62 = por %p60, %p61
      %p63 = scmp.ne.s32.totalorder %s54, %s55
      %p64 = scmp.eq.s32.totalorder %s23, 0
      %p65 = por %p63, %p64
      %p66 = scmp.ne.s32.totalorder %s54, %s55
      %p67 = scmp.eq.s32.totalorder %s24, 1
      %p68 = por %p66, %p67
      %p70 = scmp.ne.s32.totalorder %s55, %s69
      %p71 = scmp.eq.s32.totalorder %s24, 0
      %p72 = por %p70, %p71
      %s74 = sadd.s32 %s73, 1
      %p77 = scmp.eq.s32.totalorder %s18, 1
      %p78 = scmp.ne.s32.totalorder %s73, %s75
      %p79 = scmp.eq.s32.totalorder %s18, 0
      %p80 = por %p78, %p79
      %p81 = scmp.ne.s32.totalorder %s73, %s75
      %p82 = scmp.eq.s32.totalorder %s23, 1
      %p83 = por %p81, %p82
      %p84 = scmp.ne.s32.totalorder %s75, %s76
      %p85 = scmp.eq.s32.totalorder %s23, 0
      %p86 = por %p84, %p85
      %p87 = scmp.ne.s32.totalorder %s75, %s76
      %p88 = scmp.eq.s32.totalorder %s24, 1
      %p89 = por %p87, %p88
      %p91 = scmp.ne.s32.totalorder %s76, %s90
      %p92 = scmp.eq.s32.totalorder %s24, 0
      %p93 = por %p91, %p92
      %s95 = sadd.s32 %s94, 1
      %p98 = scmp.eq.s32.totalorder %s18, 1
      %p99 = scmp.ne.s32.totalorder %s94, %s96
      %p100 = scmp.eq.s32.totalorder %s18, 0
      %p101 = por %p99, %p100
      %p102 = scmp.ne.s32.totalorder %s94, %s96
      %p103 = scmp.eq.s32.totalorder %s23, 1
      %p104 = por %p102, %p103
      %p105 = scmp.ne.s32.totalorder %s96, %s97
      %p106 = scmp.eq.s32.totalorder %s23, 0
      %p107 = por %p105, %p106
      %p108 = scmp.ne.s32.totalorder %s96, %s97
      %p109 = scmp.eq.s32.totalorder %s24, 1
      %p110 = por %p108, %p109
      %p112 = scmp.ne.s32.totalorder %s97, %s111
      %p113 = scmp.eq.s32.totalorder %s24, 0
      %p114 = por %p112, %p113
      %s115 = ssub.s32 %s18, %s25
      %p116 = scmp.eq.s32.totalorder %s115, 0
      %s118 = sadd.s32 %s117, 1
      %s119 = scalar_select %p116, %s117, %s118
      %p122 = pneg %p116
      %p123 = scmp.eq.s32.totalorder %s18, 1
      %p124 = por %p122, %p123
      %p125 = scmp.ne.s32.totalorder %s117, %s120
      %p126 = scmp.eq.s32.totalorder %s18, 0
      %p127 = por %p125, %p126
      %p128 = scmp.ne.s32.totalorder %s117, %s120
      %p129 = scmp.eq.s32.totalorder %s23, 1
      %p130 = por %p128, %p129
      %p131 = scmp.ne.s32.totalorder %s120, %s121
      %p132 = scmp.eq.s32.totalorder %s23, 0
      %p133 = por %p131, %p132
      %p134 = scmp.ne.s32.totalorder %s120, %s121
      %p135 = scmp.eq.s32.totalorder %s24, 1
      %p136 = por %p134, %p135
      %p138 = scmp.ne.s32.totalorder %s121, %s137
      %p139 = scmp.eq.s32.totalorder %s24, 0
      %p140 = por %p138, %p139
      %p141 = scmp.le.s32.totalorder 1, %s18
      %p142 = scmp.lt.s32.totalorder %s18, 3
      %p143 = pnand %p141, %p142
      %p144 = pneg %p143
      // Predicated region
      $region9: #{tpu_custom_call.1} parent=5 // pred_check
        _
      $region10: #{tpu_custom_call.1} parent=5 // pred_check_branch
        %146 = sbr.rel (%p143) target = $region12
      $region11: #{tpu_custom_call.1} parent=5 // pred_region
        %s147 = ssub.s32 %s18, 1
        // Predicated region
        $region13: #{tpu_custom_call.1} parent=11 // pred_check
          %p148 = pneg %p65
        $region14: #{tpu_custom_call.1} parent=11 // pred_check_branch
          %150 = sbr.rel (%p148) target = $region16
        $region15: #{tpu_custom_call.1} parent=11 // pred_region
          %s152 = ssub.s32 65536, 65536
          %153 = vsyncadd [#allocation6], %s152
          %s154 = sshll.u32 [#allocation5], 4
          %s155 = int_to_ptr.vmem [resolvable:$true] %s154
          %160 = dma.hbm_to_vmem [thread:$0]  %s1, 65536, %s155, [#allocation6], 512, 512, 32
        $region16: #{tpu_custom_call.1} parent=11 // pred_fallthru
          _
        // Predicated region
        $region17: #{tpu_custom_call.1} parent=11 // pred_check
          %p161 = pneg %p86
        $region18: #{tpu_custom_call.1} parent=11 // pred_check_branch
          %163 = sbr.rel (%p161) target = $region20
        $region19: #{tpu_custom_call.1} parent=11 // pred_region
          %s165 = ssub.s32 65536, 65536
          %166 = vsyncadd [#allocation6], %s165
          %s167 = sshll.u32 [#allocation7], 4
          %s168 = int_to_ptr.vmem [resolvable:$true] %s167
          %173 = dma.hbm_to_vmem [thread:$0]  %s2, 65536, %s168, [#allocation6], 512, 512, 32
        $region20: #{tpu_custom_call.1} parent=11 // pred_fallthru
          _
        // Predicated region
        $region21: #{tpu_custom_call.1} parent=11 // pred_check
          %p174 = pneg %p107
        $region22: #{tpu_custom_call.1} parent=11 // pred_check_branch
          %176 = sbr.rel (%p174) target = $region24
        $region23: #{tpu_custom_call.1} parent=11 // pred_region
          %s178 = ssub.s32 8192, 8192
          %179 = vsyncadd [#allocation9], %s178
          %s180 = sshll.u32 [#allocation8], 4
          %s181 = int_to_ptr.vmem [resolvable:$true] %s180
          %186 = dma.hbm_to_vmem [thread:$0]  %s3, 8192, %s181, [#allocation9], 128, 128, 8
        $region24: #{tpu_custom_call.1} parent=11 // pred_fallthru
          _
      $region12: #{tpu_custom_call.1} parent=5 // pred_fallthru
        _
      %p187 = scmp.lt.s32.totalorder %s18, 2
      // Predicated region
      $region25: #{tpu_custom_call.1} parent=5 // pred_check
        %p188 = pneg %p187
      $region26: #{tpu_custom_call.1} parent=5 // pred_check_branch
        %190 = sbr.rel (%p188) target = $region28
      $region27: #{tpu_custom_call.1} parent=5 // pred_region
        // Predicated region
        $region29: #{tpu_custom_call.1} parent=27 // pred_check
          %p191 = pneg %p38
        $region30: #{tpu_custom_call.1} parent=27 // pred_check_branch
          %193 = sbr.rel (%p191) target = $region32
        $region31: #{tpu_custom_call.1} parent=27 // pred_region
          %s194 = sand.u32 %s28, 1
          %s195 = scalar_lea.sflag [#allocation3], %s194
          %s196 = sand.u32 %s28, 1
          %s197 = smul.addr %s196, 64
          %s198 = scalar_lea.vmem [#allocation2], %s197
          %s199 = smul.u32 2, %s18
          %s201 = ssub.s32 1024, 1024
          %202 = vsyncadd %s195, %s201
          %s203 = smul.addr %s199, 8
          %s204 = smul.addr %s203, 64
          %s205 = scalar_lea.hbm %s0, %s204
          %s206 = sshll.u32 %s198, 4
          %s207 = int_to_ptr.vmem [resolvable:$true] %s206
          %212 = dma.hbm_to_vmem [thread:$0]  %s205, 1024, %s207, %s195, 512, 512, 32
        $region32: #{tpu_custom_call.1} parent=27 // pred_fallthru
          _
      $region28: #{tpu_custom_call.1} parent=5 // pred_fallthru
        _
      %p213 = scmp.le.s32.totalorder 1, %s18
      %p214 = scmp.lt.s32.totalorder %s18, 3
      %p215 = pnand %p213, %p214
      %p216 = pneg %p215
      // Predicated region
      $region33: #{tpu_custom_call.1} parent=5 // pred_check
        _
      $region34: #{tpu_custom_call.1} parent=5 // pred_check_branch
        %218 = sbr.rel (%p215) target = $region36
      $region35: #{tpu_custom_call.1} parent=5 // pred_region
        %s219 = ssub.s32 %s18, 1
        %s220 = sand.u32 %s31, 1
        %s221 = scalar_lea.sflag [#allocation3], %s220
        %s222 = sand.u32 %s31, 1
        %s223 = smul.addr %s222, 64
        %s224 = scalar_lea.vmem [#allocation2], %s223
        // Predicated region
        $region37: #{tpu_custom_call.1} parent=35 // pred_check
          %p225 = pneg %p44
        $region38: #{tpu_custom_call.1} parent=35 // pred_check_branch
          %227 = sbr.rel (%p225) target = $region40
        $region39: #{tpu_custom_call.1} parent=35 // pred_region
          %228 = dma.done %s221, 1024
        $region40: #{tpu_custom_call.1} parent=35 // pred_fallthru
          _
        // Predicated region
        $region41: #{tpu_custom_call.1} parent=35 // pred_check
          %p229 = pneg %p65
        $region42: #{tpu_custom_call.1} parent=35 // pred_check_branch
          %231 = sbr.rel (%p229) target = $region44
        $region43: #{tpu_custom_call.1} parent=35 // pred_region
          %232 = dma.done [#allocation6], 65536
        $region44: #{tpu_custom_call.1} parent=35 // pred_fallthru
          _
        // Predicated region
        $region45: #{tpu_custom_call.1} parent=35 // pred_check
          %p233 = pneg %p86
        $region46: #{tpu_custom_call.1} parent=35 // pred_check_branch
          %235 = sbr.rel (%p233) target = $region48
        $region47: #{tpu_custom_call.1} parent=35 // pred_region
          %236 = dma.done [#allocation6], 65536
        $region48: #{tpu_custom_call.1} parent=35 // pred_fallthru
          _
        // Predicated region
        $region49: #{tpu_custom_call.1} parent=35 // pred_check
          %p237 = pneg %p107
        $region50: #{tpu_custom_call.1} parent=35 // pred_check_branch
          %239 = sbr.rel (%p237) target = $region52
        $region51: #{tpu_custom_call.1} parent=35 // pred_region
          %240 = dma.done [#allocation9], 8192
        $region52: #{tpu_custom_call.1} parent=35 // pred_fallthru
          _
        %s241 = sand.u32 %s31, 1
        %s242 = scalar_lea.sflag [#allocation3], %s241
        %s243 = sand.u32 %s31, 1
        %s244 = smul.addr %s243, 64
        %s245 = scalar_lea.vmem [#allocation2], %s244
        %p246 = pneg %p44
        %p247 = pneg %p41
        %p248 = pneg %p65
        %p249 = pneg %p62
        %p250 = pneg %p86
        %p251 = pneg %p83
        %p252 = pneg %p107
        %p253 = pneg %p104
        %p254 = pneg %p133
        %p255 = pneg %p130
        %s256 = sand.u32 %s120, 1
        %s257 = scalar_lea.sflag [#allocation4], %s256
        %s258 = sand.u32 %s120, 1
        %s259 = smul.addr %s258, 16
        %s260 = scalar_lea.vmem [#allocation10], %s259
        %s261 = smul.u32 2, %s23
        %s262 = smul.u32 2, %s23
        %v263 = vld [vmem:[%s224] sm:$0xff]
        %v264 = vld [vmem:[%s224 + $0x8] sm:$0xff]
        %v265 = vld [vmem:[%s224 + $0x10] sm:$0xff]
        %v266 = vld [vmem:[%s224 + $0x18] sm:$0xff]
        %v267 = vld [vmem:[%s224 + $0x20] sm:$0xff]
        %v268 = vld [vmem:[%s224 + $0x28] sm:$0xff]
        %v269 = vld [vmem:[%s224 + $0x30] sm:$0xff]
        %v270 = vld [vmem:[%s224 + $0x38] sm:$0xff]
        %v271 = vld [vmem:[#allocation5] sm:$0xff]
        %v272 = vld [vmem:[#allocation5 + $0x8] sm:$0xff]
        %v273 = vld [vmem:[#allocation5 + $0x10] sm:$0xff]
        %v274 = vld [vmem:[#allocation5 + $0x18] sm:$0xff]
        %v275 = vld [vmem:[#allocation5 + $0x20] sm:$0xff]
        %v276 = vld [vmem:[#allocation5 + $0x28] sm:$0xff]
        %v277 = vld [vmem:[#allocation5 + $0x30] sm:$0xff]
        %v278 = vld [vmem:[#allocation5 + $0x38] sm:$0xff]
        %v279 = vld [vmem:[#allocation5 + $0x40] sm:$0xff]
        %v280 = vld [vmem:[#allocation5 + $0x48] sm:$0xff]
        %v281 = vld [vmem:[#allocation5 + $0x50] sm:$0xff]
        %v282 = vld [vmem:[#allocation5 + $0x58] sm:$0xff]
        %v283 = vld [vmem:[#allocation5 + $0x60] sm:$0xff]
        %v284 = vld [vmem:[#allocation5 + $0x68] sm:$0xff]
        %v285 = vld [vmem:[#allocation5 + $0x70] sm:$0xff]
        %v286 = vld [vmem:[#allocation5 + $0x78] sm:$0xff]
        %v287 = vld [vmem:[#allocation5 + $0x80] sm:$0xff]
        %v288 = vld [vmem:[#allocation5 + $0x88] sm:$0xff]
        %v289 = vld [vmem:[#allocation5 + $0x90] sm:$0xff]
        %v290 = vld [vmem:[#allocation5 + $0x98] sm:$0xff]
        %v291 = vld [vmem:[#allocation5 + $0xa0] sm:$0xff]
        %v292 = vld [vmem:[#allocation5 + $0xa8] sm:$0xff]
        %v293 = vld [vmem:[#allocation5 + $0xb0] sm:$0xff]
        %v294 = vld [vmem:[#allocation5 + $0xb8] sm:$0xff]
        %v295 = vld [vmem:[#allocation5 + $0xc0] sm:$0xff]
        %v296 = vld [vmem:[#allocation5 + $0xc8] sm:$0xff]
        %v297 = vld [vmem:[#allocation5 + $0xd0] sm:$0xff]
        %v298 = vld [vmem:[#allocation5 + $0xd8] sm:$0xff]
        %v299 = vld [vmem:[#allocation5 + $0xe0] sm:$0xff]
        %v300 = vld [vmem:[#allocation5 + $0xe8] sm:$0xff]
        %v301 = vld [vmem:[#allocation5 + $0xf0] sm:$0xff]
        %v302 = vld [vmem:[#allocation5 + $0xf8] sm:$0xff]
        %v303 = vld [vmem:[#allocation5 + $0x100] sm:$0xff]
        %v304 = vld [vmem:[#allocation5 + $0x108] sm:$0xff]
        %v305 = vld [vmem:[#allocation5 + $0x110] sm:$0xff]
        %v306 = vld [vmem:[#allocation5 + $0x118] sm:$0xff]
        %v307 = vld [vmem:[#allocation5 + $0x120] sm:$0xff]
        %v308 = vld [vmem:[#allocation5 + $0x128] sm:$0xff]
        %v309 = vld [vmem:[#allocation5 + $0x130] sm:$0xff]
        %v310 = vld [vmem:[#allocation5 + $0x138] sm:$0xff]
        %v311 = vld [vmem:[#allocation5 + $0x140] sm:$0xff]
        %v312 = vld [vmem:[#allocation5 + $0x148] sm:$0xff]
        %v313 = vld [vmem:[#allocation5 + $0x150] sm:$0xff]
        %v314 = vld [vmem:[#allocation5 + $0x158] sm:$0xff]
        %v315 = vld [vmem:[#allocation5 + $0x160] sm:$0xff]
        %v316 = vld [vmem:[#allocation5 + $0x168] sm:$0xff]
        %v317 = vld [vmem:[#allocation5 + $0x170] sm:$0xff]
        %v318 = vld [vmem:[#allocation5 + $0x178] sm:$0xff]
        %v319 = vld [vmem:[#allocation5 + $0x180] sm:$0xff]
        %v320 = vld [vmem:[#allocation5 + $0x188] sm:$0xff]
        %v321 = vld [vmem:[#allocation5 + $0x190] sm:$0xff]
        %v322 = vld [vmem:[#allocation5 + $0x198] sm:$0xff]
        %v323 = vld [vmem:[#allocation5 + $0x1a0] sm:$0xff]
        %v324 = vld [vmem:[#allocation5 + $0x1a8] sm:$0xff]
        %v325 = vld [vmem:[#allocation5 + $0x1b0] sm:$0xff]
        %v326 = vld [vmem:[#allocation5 + $0x1b8] sm:$0xff]
        %v327 = vld [vmem:[#allocation5 + $0x1c0] sm:$0xff]
        %v328 = vld [vmem:[#allocation5 + $0x1c8] sm:$0xff]
        %v329 = vld [vmem:[#allocation5 + $0x1d0] sm:$0xff]
        %v330 = vld [vmem:[#allocation5 + $0x1d8] sm:$0xff]
        %v331 = vld [vmem:[#allocation5 + $0x1e0] sm:$0xff]
        %v332 = vld [vmem:[#allocation5 + $0x1e8] sm:$0xff]
        %v333 = vld [vmem:[#allocation5 + $0x1f0] sm:$0xff]
        %v334 = vld [vmem:[#allocation5 + $0x1f8] sm:$0xff]
        %v335 = vld [vmem:[#allocation5 + $0x200] sm:$0xff]
        %v336 = vld [vmem:[#allocation5 + $0x208] sm:$0xff]
        %v337 = vld [vmem:[#allocation5 + $0x210] sm:$0xff]
        %v338 = vld [vmem:[#allocation5 + $0x218] sm:$0xff]
        %v339 = vld [vmem:[#allocation5 + $0x220] sm:$0xff]
        %v340 = vld [vmem:[#allocation5 + $0x228] sm:$0xff]
        %v341 = vld [vmem:[#allocation5 + $0x230] sm:$0xff]
        %v342 = vld [vmem:[#allocation5 + $0x238] sm:$0xff]
        %v343 = vld [vmem:[#allocation5 + $0x240] sm:$0xff]
        %v344 = vld [vmem:[#allocation5 + $0x248] sm:$0xff]
        %v345 = vld [vmem:[#allocation5 + $0x250] sm:$0xff]
        %v346 = vld [vmem:[#allocation5 + $0x258] sm:$0xff]
        %v347 = vld [vmem:[#allocation5 + $0x260] sm:$0xff]
        %v348 = vld [vmem:[#allocation5 + $0x268] sm:$0xff]
        %v349 = vld [vmem:[#allocation5 + $0x270] sm:$0xff]
        %v350 = vld [vmem:[#allocation5 + $0x278] sm:$0xff]
        %v351 = vld [vmem:[#allocation5 + $0x280] sm:$0xff]
        %v352 = vld [vmem:[#allocation5 + $0x288] sm:$0xff]
        %v353 = vld [vmem:[#allocation5 + $0x290] sm:$0xff]
        %v354 = vld [vmem:[#allocation5 + $0x298] sm:$0xff]
        %v355 = vld [vmem:[#allocation5 + $0x2a0] sm:$0xff]
        %v356 = vld [vmem:[#allocation5 + $0x2a8] sm:$0xff]
        %v357 = vld [vmem:[#allocation5 + $0x2b0] sm:$0xff]
        %v358 = vld [vmem:[#allocation5 + $0x2b8] sm:$0xff]
        %v359 = vld [vmem:[#allocation5 + $0x2c0] sm:$0xff]
        %v360 = vld [vmem:[#allocation5 + $0x2c8] sm:$0xff]
        %v361 = vld [vmem:[#allocation5 + $0x2d0] sm:$0xff]
        %v362 = vld [vmem:[#allocation5 + $0x2d8] sm:$0xff]
        %v363 = vld [vmem:[#allocation5 + $0x2e0] sm:$0xff]
        %v364 = vld [vmem:[#allocation5 + $0x2e8] sm:$0xff]
        %v365 = vld [vmem:[#allocation5 + $0x2f0] sm:$0xff]
        %v366 = vld [vmem:[#allocation5 + $0x2f8] sm:$0xff]
        %v367 = vld [vmem:[#allocation5 + $0x300] sm:$0xff]
        %v368 = vld [vmem:[#allocation5 + $0x308] sm:$0xff]
        %v369 = vld [vmem:[#allocation5 + $0x310] sm:$0xff]
        %v370 = vld [vmem:[#allocation5 + $0x318] sm:$0xff]
        %v371 = vld [vmem:[#allocation5 + $0x320] sm:$0xff]
        %v372 = vld [vmem:[#allocation5 + $0x328] sm:$0xff]
        %v373 = vld [vmem:[#allocation5 + $0x330] sm:$0xff]
        %v374 = vld [vmem:[#allocation5 + $0x338] sm:$0xff]
        %v375 = vld [vmem:[#allocation5 + $0x340] sm:$0xff]
        %v376 = vld [vmem:[#allocation5 + $0x348] sm:$0xff]
        %v377 = vld [vmem:[#allocation5 + $0x350] sm:$0xff]
        %v378 = vld [vmem:[#allocation5 + $0x358] sm:$0xff]
        %v379 = vld [vmem:[#allocation5 + $0x360] sm:$0xff]
        %v380 = vld [vmem:[#allocation5 + $0x368] sm:$0xff]
        %v381 = vld [vmem:[#allocation5 + $0x370] sm:$0xff]
        %v382 = vld [vmem:[#allocation5 + $0x378] sm:$0xff]
        %v383 = vld [vmem:[#allocation5 + $0x380] sm:$0xff]
        %v384 = vld [vmem:[#allocation5 + $0x388] sm:$0xff]
        %v385 = vld [vmem:[#allocation5 + $0x390] sm:$0xff]
        %v386 = vld [vmem:[#allocation5 + $0x398] sm:$0xff]
        %v387 = vld [vmem:[#allocation5 + $0x3a0] sm:$0xff]
        %v388 = vld [vmem:[#allocation5 + $0x3a8] sm:$0xff]
        %v389 = vld [vmem:[#allocation5 + $0x3b0] sm:$0xff]
        %v390 = vld [vmem:[#allocation5 + $0x3b8] sm:$0xff]
        %v391 = vld [vmem:[#allocation5 + $0x3c0] sm:$0xff]
        %v392 = vld [vmem:[#allocation5 + $0x3c8] sm:$0xff]
        %v393 = vld [vmem:[#allocation5 + $0x3d0] sm:$0xff]
        %v394 = vld [vmem:[#allocation5 + $0x3d8] sm:$0xff]
        %v395 = vld [vmem:[#allocation5 + $0x3e0] sm:$0xff]
        %v396 = vld [vmem:[#allocation5 + $0x3e8] sm:$0xff]
        %v397 = vld [vmem:[#allocation5 + $0x3f0] sm:$0xff]
        %v398 = vld [vmem:[#allocation5 + $0x3f8] sm:$0xff]
        %v399 = vld [vmem:[#allocation5 + $0x400] sm:$0xff]
        %v400 = vld [vmem:[#allocation5 + $0x408] sm:$0xff]
        %v401 = vld [vmem:[#allocation5 + $0x410] sm:$0xff]
        %v402 = vld [vmem:[#allocation5 + $0x418] sm:$0xff]
        %v403 = vld [vmem:[#allocation5 + $0x420] sm:$0xff]
        %v404 = vld [vmem:[#allocation5 + $0x428] sm:$0xff]
        %v405 = vld [vmem:[#allocation5 + $0x430] sm:$0xff]
        %v406 = vld [vmem:[#allocation5 + $0x438] sm:$0xff]
        %v407 = vld [vmem:[#allocation5 + $0x440] sm:$0xff]
        %v408 = vld [vmem:[#allocation5 + $0x448] sm:$0xff]
        %v409 = vld [vmem:[#allocation5 + $0x450] sm:$0xff]
        %v410 = vld [vmem:[#allocation5 + $0x458] sm:$0xff]
        %v411 = vld [vmem:[#allocation5 + $0x460] sm:$0xff]
        %v412 = vld [vmem:[#allocation5 + $0x468] sm:$0xff]
        %v413 = vld [vmem:[#allocation5 + $0x470] sm:$0xff]
        %v414 = vld [vmem:[#allocation5 + $0x478] sm:$0xff]
        %v415 = vld [vmem:[#allocation5 + $0x480] sm:$0xff]
        %v416 = vld [vmem:[#allocation5 + $0x488] sm:$0xff]
        %v417 = vld [vmem:[#allocation5 + $0x490] sm:$0xff]
        %v418 = vld [vmem:[#allocation5 + $0x498] sm:$0xff]
        %v419 = vld [vmem:[#allocation5 + $0x4a0] sm:$0xff]
        %v420 = vld [vmem:[#allocation5 + $0x4a8] sm:$0xff]
        %v421 = vld [vmem:[#allocation5 + $0x4b0] sm:$0xff]
        %v422 = vld [vmem:[#allocation5 + $0x4b8] sm:$0xff]
        %v423 = vld [vmem:[#allocation5 + $0x4c0] sm:$0xff]
        %v424 = vld [vmem:[#allocation5 + $0x4c8] sm:$0xff]
        %v425 = vld [vmem:[#allocation5 + $0x4d0] sm:$0xff]
        %v426 = vld [vmem:[#allocation5 + $0x4d8] sm:$0xff]
        %v427 = vld [vmem:[#allocation5 + $0x4e0] sm:$0xff]
        %v428 = vld [vmem:[#allocation5 + $0x4e8] sm:$0xff]
        %v429 = vld [vmem:[#allocation5 + $0x4f0] sm:$0xff]
        %v430 = vld [vmem:[#allocation5 + $0x4f8] sm:$0xff]
        %v431 = vld [vmem:[#allocation5 + $0x500] sm:$0xff]
        %v432 = vld [vmem:[#allocation5 + $0x508] sm:$0xff]
        %v433 = vld [vmem:[#allocation5 + $0x510] sm:$0xff]
        %v434 = vld [vmem:[#allocation5 + $0x518] sm:$0xff]
        %v435 = vld [vmem:[#allocation5 + $0x520] sm:$0xff]
        %v436 = vld [vmem:[#allocation5 + $0x528] sm:$0xff]
        %v437 = vld [vmem:[#allocation5 + $0x530] sm:$0xff]
        %v438 = vld [vmem:[#allocation5 + $0x538] sm:$0xff]
        %v439 = vld [vmem:[#allocation5 + $0x540] sm:$0xff]
        %v440 = vld [vmem:[#allocation5 + $0x548] sm:$0xff]
        %v441 = vld [vmem:[#allocation5 + $0x550] sm:$0xff]
        %v442 = vld [vmem:[#allocation5 + $0x558] sm:$0xff]
        %v443 = vld [vmem:[#allocation5 + $0x560] sm:$0xff]
        %v444 = vld [vmem:[#allocation5 + $0x568] sm:$0xff]
        %v445 = vld [vmem:[#allocation5 + $0x570] sm:$0xff]
        %v446 = vld [vmem:[#allocation5 + $0x578] sm:$0xff]
        %v447 = vld [vmem:[#allocation5 + $0x580] sm:$0xff]
        %v448 = vld [vmem:[#allocation5 + $0x588] sm:$0xff]
        %v449 = vld [vmem:[#allocation5 + $0x590] sm:$0xff]
        %v450 = vld [vmem:[#allocation5 + $0x598] sm:$0xff]
        %v451 = vld [vmem:[#allocation5 + $0x5a0] sm:$0xff]
        %v452 = vld [vmem:[#allocation5 + $0x5a8] sm:$0xff]
        %v453 = vld [vmem:[#allocation5 + $0x5b0] sm:$0xff]
        %v454 = vld [vmem:[#allocation5 + $0x5b8] sm:$0xff]
        %v455 = vld [vmem:[#allocation5 + $0x5c0] sm:$0xff]
        %v456 = vld [vmem:[#allocation5 + $0x5c8] sm:$0xff]
        %v457 = vld [vmem:[#allocation5 + $0x5d0] sm:$0xff]
        %v458 = vld [vmem:[#allocation5 + $0x5d8] sm:$0xff]
        %v459 = vld [vmem:[#allocation5 + $0x5e0] sm:$0xff]
        %v460 = vld [vmem:[#allocation5 + $0x5e8] sm:$0xff]
        %v461 = vld [vmem:[#allocation5 + $0x5f0] sm:$0xff]
        %v462 = vld [vmem:[#allocation5 + $0x5f8] sm:$0xff]
        %v463 = vld [vmem:[#allocation5 + $0x600] sm:$0xff]
        %v464 = vld [vmem:[#allocation5 + $0x608] sm:$0xff]
        %v465 = vld [vmem:[#allocation5 + $0x610] sm:$0xff]
        %v466 = vld [vmem:[#allocation5 + $0x618] sm:$0xff]
        %v467 = vld [vmem:[#allocation5 + $0x620] sm:$0xff]
        %v468 = vld [vmem:[#allocation5 + $0x628] sm:$0xff]
        %v469 = vld [vmem:[#allocation5 + $0x630] sm:$0xff]
        %v470 = vld [vmem:[#allocation5 + $0x638] sm:$0xff]
        %v471 = vld [vmem:[#allocation5 + $0x640] sm:$0xff]
        %v472 = vld [vmem:[#allocation5 + $0x648] sm:$0xff]
        %v473 = vld [vmem:[#allocation5 + $0x650] sm:$0xff]
        %v474 = vld [vmem:[#allocation5 + $0x658] sm:$0xff]
        %v475 = vld [vmem:[#allocation5 + $0x660] sm:$0xff]
        %v476 = vld [vmem:[#allocation5 + $0x668] sm:$0xff]
        %v477 = vld [vmem:[#allocation5 + $0x670] sm:$0xff]
        %v478 = vld [vmem:[#allocation5 + $0x678] sm:$0xff]
        %v479 = vld [vmem:[#allocation5 + $0x680] sm:$0xff]
        %v480 = vld [vmem:[#allocation5 + $0x688] sm:$0xff]
        %v481 = vld [vmem:[#allocation5 + $0x690] sm:$0xff]
        %v482 = vld [vmem:[#allocation5 + $0x698] sm:$0xff]
        %v483 = vld [vmem:[#allocation5 + $0x6a0] sm:$0xff]
        %v484 = vld [vmem:[#allocation5 + $0x6a8] sm:$0xff]
        %v485 = vld [vmem:[#allocation5 + $0x6b0] sm:$0xff]
        %v486 = vld [vmem:[#allocation5 + $0x6b8] sm:$0xff]
        %v487 = vld [vmem:[#allocation5 + $0x6c0] sm:$0xff]
        %v488 = vld [vmem:[#allocation5 + $0x6c8] sm:$0xff]
        %v489 = vld [vmem:[#allocation5 + $0x6d0] sm:$0xff]
        %v490 = vld [vmem:[#allocation5 + $0x6d8] sm:$0xff]
        %v491 = vld [vmem:[#allocation5 + $0x6e0] sm:$0xff]
        %v492 = vld [vmem:[#allocation5 + $0x6e8] sm:$0xff]
        %v493 = vld [vmem:[#allocation5 + $0x6f0] sm:$0xff]
        %v494 = vld [vmem:[#allocation5 + $0x6f8] sm:$0xff]
        %v495 = vld [vmem:[#allocation5 + $0x700] sm:$0xff]
        %v496 = vld [vmem:[#allocation5 + $0x708] sm:$0xff]
        %v497 = vld [vmem:[#allocation5 + $0x710] sm:$0xff]
        %v498 = vld [vmem:[#allocation5 + $0x718] sm:$0xff]
        %v499 = vld [vmem:[#allocation5 + $0x720] sm:$0xff]
        %v500 = vld [vmem:[#allocation5 + $0x728] sm:$0xff]
        %v501 = vld [vmem:[#allocation5 + $0x730] sm:$0xff]
        %v502 = vld [vmem:[#allocation5 + $0x738] sm:$0xff]
        %v503 = vld [vmem:[#allocation5 + $0x740] sm:$0xff]
        %v504 = vld [vmem:[#allocation5 + $0x748] sm:$0xff]
        %v505 = vld [vmem:[#allocation5 + $0x750] sm:$0xff]
        %v506 = vld [vmem:[#allocation5 + $0x758] sm:$0xff]
        %v507 = vld [vmem:[#allocation5 + $0x760] sm:$0xff]
        %v508 = vld [vmem:[#allocation5 + $0x768] sm:$0xff]
        %v509 = vld [vmem:[#allocation5 + $0x770] sm:$0xff]
        %v510 = vld [vmem:[#allocation5 + $0x778] sm:$0xff]
        %v511 = vld [vmem:[#allocation5 + $0x780] sm:$0xff]
        %v512 = vld [vmem:[#allocation5 + $0x788] sm:$0xff]
        %v513 = vld [vmem:[#allocation5 + $0x790] sm:$0xff]
        %v514 = vld [vmem:[#allocation5 + $0x798] sm:$0xff]
        %v515 = vld [vmem:[#allocation5 + $0x7a0] sm:$0xff]
        %v516 = vld [vmem:[#allocation5 + $0x7a8] sm:$0xff]
        %v517 = vld [vmem:[#allocation5 + $0x7b0] sm:$0xff]
        %v518 = vld [vmem:[#allocation5 + $0x7b8] sm:$0xff]
        %v519 = vld [vmem:[#allocation5 + $0x7c0] sm:$0xff]
        %v520 = vld [vmem:[#allocation5 + $0x7c8] sm:$0xff]
        %v521 = vld [vmem:[#allocation5 + $0x7d0] sm:$0xff]
        %v522 = vld [vmem:[#allocation5 + $0x7d8] sm:$0xff]
        %v523 = vld [vmem:[#allocation5 + $0x7e0] sm:$0xff]
        %v524 = vld [vmem:[#allocation5 + $0x7e8] sm:$0xff]
        %v525 = vld [vmem:[#allocation5 + $0x7f0] sm:$0xff]
        %v526 = vld [vmem:[#allocation5 + $0x7f8] sm:$0xff]
        %v527 = vld [vmem:[#allocation5 + $0x800] sm:$0xff]
        %v528 = vld [vmem:[#allocation5 + $0x808] sm:$0xff]
        %v529 = vld [vmem:[#allocation5 + $0x810] sm:$0xff]
        %v530 = vld [vmem:[#allocation5 + $0x818] sm:$0xff]
        %v531 = vld [vmem:[#allocation5 + $0x820] sm:$0xff]
        %v532 = vld [vmem:[#allocation5 + $0x828] sm:$0xff]
        %v533 = vld [vmem:[#allocation5 + $0x830] sm:$0xff]
        %v534 = vld [vmem:[#allocation5 + $0x838] sm:$0xff]
        %v535 = vld [vmem:[#allocation5 + $0x840] sm:$0xff]
        %v536 = vld [vmem:[#allocation5 + $0x848] sm:$0xff]
        %v537 = vld [vmem:[#allocation5 + $0x850] sm:$0xff]
        %v538 = vld [vmem:[#allocation5 + $0x858] sm:$0xff]
        %v539 = vld [vmem:[#allocation5 + $0x860] sm:$0xff]
        %v540 = vld [vmem:[#allocation5 + $0x868] sm:$0xff]
        %v541 = vld [vmem:[#allocation5 + $0x870] sm:$0xff]
        %v542 = vld [vmem:[#allocation5 + $0x878] sm:$0xff]
        %v543 = vld [vmem:[#allocation5 + $0x880] sm:$0xff]
        %v544 = vld [vmem:[#allocation5 + $0x888] sm:$0xff]
        %v545 = vld [vmem:[#allocation5 + $0x890] sm:$0xff]
        %v546 = vld [vmem:[#allocation5 + $0x898] sm:$0xff]
        %v547 = vld [vmem:[#allocation5 + $0x8a0] sm:$0xff]
        %v548 = vld [vmem:[#allocation5 + $0x8a8] sm:$0xff]
        %v549 = vld [vmem:[#allocation5 + $0x8b0] sm:$0xff]
        %v550 = vld [vmem:[#allocation5 + $0x8b8] sm:$0xff]
        %v551 = vld [vmem:[#allocation5 + $0x8c0] sm:$0xff]
        %v552 = vld [vmem:[#allocation5 + $0x8c8] sm:$0xff]
        %v553 = vld [vmem:[#allocation5 + $0x8d0] sm:$0xff]
        %v554 = vld [vmem:[#allocation5 + $0x8d8] sm:$0xff]
        %v555 = vld [vmem:[#allocation5 + $0x8e0] sm:$0xff]
        %v556 = vld [vmem:[#allocation5 + $0x8e8] sm:$0xff]
        %v557 = vld [vmem:[#allocation5 + $0x8f0] sm:$0xff]
        %v558 = vld [vmem:[#allocation5 + $0x8f8] sm:$0xff]
        %v559 = vld [vmem:[#allocation5 + $0x900] sm:$0xff]
        %v560 = vld [vmem:[#allocation5 + $0x908] sm:$0xff]
        %v561 = vld [vmem:[#allocation5 + $0x910] sm:$0xff]
        %v562 = vld [vmem:[#allocation5 + $0x918] sm:$0xff]
        %v563 = vld [vmem:[#allocation5 + $0x920] sm:$0xff]
        %v564 = vld [vmem:[#allocation5 + $0x928] sm:$0xff]
        %v565 = vld [vmem:[#allocation5 + $0x930] sm:$0xff]
        %v566 = vld [vmem:[#allocation5 + $0x938] sm:$0xff]
        %v567 = vld [vmem:[#allocation5 + $0x940] sm:$0xff]
        %v568 = vld [vmem:[#allocation5 + $0x948] sm:$0xff]
        %v569 = vld [vmem:[#allocation5 + $0x950] sm:$0xff]
        %v570 = vld [vmem:[#allocation5 + $0x958] sm:$0xff]
        %v571 = vld [vmem:[#allocation5 + $0x960] sm:$0xff]
        %v572 = vld [vmem:[#allocation5 + $0x968] sm:$0xff]
        %v573 = vld [vmem:[#allocation5 + $0x970] sm:$0xff]
        %v574 = vld [vmem:[#allocation5 + $0x978] sm:$0xff]
        %v575 = vld [vmem:[#allocation5 + $0x980] sm:$0xff]
        %v576 = vld [vmem:[#allocation5 + $0x988] sm:$0xff]
        %v577 = vld [vmem:[#allocation5 + $0x990] sm:$0xff]
        %v578 = vld [vmem:[#allocation5 + $0x998] sm:$0xff]
        %v579 = vld [vmem:[#allocation5 + $0x9a0] sm:$0xff]
        %v580 = vld [vmem:[#allocation5 + $0x9a8] sm:$0xff]
        %v581 = vld [vmem:[#allocation5 + $0x9b0] sm:$0xff]
        %v582 = vld [vmem:[#allocation5 + $0x9b8] sm:$0xff]
        %v583 = vld [vmem:[#allocation5 + $0x9c0] sm:$0xff]
        %v584 = vld [vmem:[#allocation5 + $0x9c8] sm:$0xff]
        %v585 = vld [vmem:[#allocation5 + $0x9d0] sm:$0xff]
        %v586 = vld [vmem:[#allocation5 + $0x9d8] sm:$0xff]
        %v587 = vld [vmem:[#allocation5 + $0x9e0] sm:$0xff]
        %v588 = vld [vmem:[#allocation5 + $0x9e8] sm:$0xff]
        %v589 = vld [vmem:[#allocation5 + $0x9f0] sm:$0xff]
        %v590 = vld [vmem:[#allocation5 + $0x9f8] sm:$0xff]
        %v591 = vld [vmem:[#allocation5 + $0xa00] sm:$0xff]
        %v592 = vld [vmem:[#allocation5 + $0xa08] sm:$0xff]
        %v593 = vld [vmem:[#allocation5 + $0xa10] sm:$0xff]
        %v594 = vld [vmem:[#allocation5 + $0xa18] sm:$0xff]
        %v595 = vld [vmem:[#allocation5 + $0xa20] sm:$0xff]
        %v596 = vld [vmem:[#allocation5 + $0xa28] sm:$0xff]
        %v597 = vld [vmem:[#allocation5 + $0xa30] sm:$0xff]
        %v598 = vld [vmem:[#allocation5 + $0xa38] sm:$0xff]
        %v599 = vld [vmem:[#allocation5 + $0xa40] sm:$0xff]
        %v600 = vld [vmem:[#allocation5 + $0xa48] sm:$0xff]
        %v601 = vld [vmem:[#allocation5 + $0xa50] sm:$0xff]
        %v602 = vld [vmem:[#allocation5 + $0xa58] sm:$0xff]
        %v603 = vld [vmem:[#allocation5 + $0xa60] sm:$0xff]
        %v604 = vld [vmem:[#allocation5 + $0xa68] sm:$0xff]
        %v605 = vld [vmem:[#allocation5 + $0xa70] sm:$0xff]
        %v606 = vld [vmem:[#allocation5 + $0xa78] sm:$0xff]
        %v607 = vld [vmem:[#allocation5 + $0xa80] sm:$0xff]
        %v608 = vld [vmem:[#allocation5 + $0xa88] sm:$0xff]
        %v609 = vld [vmem:[#allocation5 + $0xa90] sm:$0xff]
        %v610 = vld [vmem:[#allocation5 + $0xa98] sm:$0xff]
        %v611 = vld [vmem:[#allocation5 + $0xaa0] sm:$0xff]
        %v612 = vld [vmem:[#allocation5 + $0xaa8] sm:$0xff]
        %v613 = vld [vmem:[#allocation5 + $0xab0] sm:$0xff]
        %v614 = vld [vmem:[#allocation5 + $0xab8] sm:$0xff]
        %v615 = vld [vmem:[#allocation5 + $0xac0] sm:$0xff]
        %v616 = vld [vmem:[#allocation5 + $0xac8] sm:$0xff]
        %v617 = vld [vmem:[#allocation5 + $0xad0] sm:$0xff]
        %v618 = vld [vmem:[#allocation5 + $0xad8] sm:$0xff]
        %v619 = vld [vmem:[#allocation5 + $0xae0] sm:$0xff]
        %v620 = vld [vmem:[#allocation5 + $0xae8] sm:$0xff]
        %v621 = vld [vmem:[#allocation5 + $0xaf0] sm:$0xff]
        %v622 = vld [vmem:[#allocation5 + $0xaf8] sm:$0xff]
        %v623 = vld [vmem:[#allocation5 + $0xb00] sm:$0xff]
        %v624 = vld [vmem:[#allocation5 + $0xb08] sm:$0xff]
        %v625 = vld [vmem:[#allocation5 + $0xb10] sm:$0xff]
        %v626 = vld [vmem:[#allocation5 + $0xb18] sm:$0xff]
        %v627 = vld [vmem:[#allocation5 + $0xb20] sm:$0xff]
        %v628 = vld [vmem:[#allocation5 + $0xb28] sm:$0xff]
        %v629 = vld [vmem:[#allocation5 + $0xb30] sm:$0xff]
        %v630 = vld [vmem:[#allocation5 + $0xb38] sm:$0xff]
        %v631 = vld [vmem:[#allocation5 + $0xb40] sm:$0xff]
        %v632 = vld [vmem:[#allocation5 + $0xb48] sm:$0xff]
        %v633 = vld [vmem:[#allocation5 + $0xb50] sm:$0xff]
        %v634 = vld [vmem:[#allocation5 + $0xb58] sm:$0xff]
        %v635 = vld [vmem:[#allocation5 + $0xb60] sm:$0xff]
        %v636 = vld [vmem:[#allocation5 + $0xb68] sm:$0xff]
        %v637 = vld [vmem:[#allocation5 + $0xb70] sm:$0xff]
        %v638 = vld [vmem:[#allocation5 + $0xb78] sm:$0xff]
        %v639 = vld [vmem:[#allocation5 + $0xb80] sm:$0xff]
        %v640 = vld [vmem:[#allocation5 + $0xb88] sm:$0xff]
        %v641 = vld [vmem:[#allocation5 + $0xb90] sm:$0xff]
        %v642 = vld [vmem:[#allocation5 + $0xb98] sm:$0xff]
        %v643 = vld [vmem:[#allocation5 + $0xba0] sm:$0xff]
        %v644 = vld [vmem:[#allocation5 + $0xba8] sm:$0xff]
        %v645 = vld [vmem:[#allocation5 + $0xbb0] sm:$0xff]
        %v646 = vld [vmem:[#allocation5 + $0xbb8] sm:$0xff]
        %v647 = vld [vmem:[#allocation5 + $0xbc0] sm:$0xff]
        %v648 = vld [vmem:[#allocation5 + $0xbc8] sm:$0xff]
        %v649 = vld [vmem:[#allocation5 + $0xbd0] sm:$0xff]
        %v650 = vld [vmem:[#allocation5 + $0xbd8] sm:$0xff]
        %v651 = vld [vmem:[#allocation5 + $0xbe0] sm:$0xff]
        %v652 = vld [vmem:[#allocation5 + $0xbe8] sm:$0xff]
        %v653 = vld [vmem:[#allocation5 + $0xbf0] sm:$0xff]
        %v654 = vld [vmem:[#allocation5 + $0xbf8] sm:$0xff]
        %v655 = vld [vmem:[#allocation5 + $0xc00] sm:$0xff]
        %v656 = vld [vmem:[#allocation5 + $0xc08] sm:$0xff]
        %v657 = vld [vmem:[#allocation5 + $0xc10] sm:$0xff]
        %v658 = vld [vmem:[#allocation5 + $0xc18] sm:$0xff]
        %v659 = vld [vmem:[#allocation5 + $0xc20] sm:$0xff]
        %v660 = vld [vmem:[#allocation5 + $0xc28] sm:$0xff]
        %v661 = vld [vmem:[#allocation5 + $0xc30] sm:$0xff]
        %v662 = vld [vmem:[#allocation5 + $0xc38] sm:$0xff]
        %v663 = vld [vmem:[#allocation5 + $0xc40] sm:$0xff]
        %v664 = vld [vmem:[#allocation5 + $0xc48] sm:$0xff]
        %v665 = vld [vmem:[#allocation5 + $0xc50] sm:$0xff]
        %v666 = vld [vmem:[#allocation5 + $0xc58] sm:$0xff]
        %v667 = vld [vmem:[#allocation5 + $0xc60] sm:$0xff]
        %v668 = vld [vmem:[#allocation5 + $0xc68] sm:$0xff]
        %v669 = vld [vmem:[#allocation5 + $0xc70] sm:$0xff]
        %v670 = vld [vmem:[#allocation5 + $0xc78] sm:$0xff]
        %v671 = vld [vmem:[#allocation5 + $0xc80] sm:$0xff]
        %v672 = vld [vmem:[#allocation5 + $0xc88] sm:$0xff]
        %v673 = vld [vmem:[#allocation5 + $0xc90] sm:$0xff]
        %v674 = vld [vmem:[#allocation5 + $0xc98] sm:$0xff]
        %v675 = vld [vmem:[#allocation5 + $0xca0] sm:$0xff]
        %v676 = vld [vmem:[#allocation5 + $0xca8] sm:$0xff]
        %v677 = vld [vmem:[#allocation5 + $0xcb0] sm:$0xff]
        %v678 = vld [vmem:[#allocation5 + $0xcb8] sm:$0xff]
        %v679 = vld [vmem:[#allocation5 + $0xcc0] sm:$0xff]
        %v680 = vld [vmem:[#allocation5 + $0xcc8] sm:$0xff]
        %v681 = vld [vmem:[#allocation5 + $0xcd0] sm:$0xff]
        %v682 = vld [vmem:[#allocation5 + $0xcd8] sm:$0xff]
        %v683 = vld [vmem:[#allocation5 + $0xce0] sm:$0xff]
        %v684 = vld [vmem:[#allocation5 + $0xce8] sm:$0xff]
        %v685 = vld [vmem:[#allocation5 + $0xcf0] sm:$0xff]
        %v686 = vld [vmem:[#allocation5 + $0xcf8] sm:$0xff]
        %v687 = vld [vmem:[#allocation5 + $0xd00] sm:$0xff]
        %v688 = vld [vmem:[#allocation5 + $0xd08] sm:$0xff]
        %v689 = vld [vmem:[#allocation5 + $0xd10] sm:$0xff]
        %v690 = vld [vmem:[#allocation5 + $0xd18] sm:$0xff]
        %v691 = vld [vmem:[#allocation5 + $0xd20] sm:$0xff]
        %v692 = vld [vmem:[#allocation5 + $0xd28] sm:$0xff]
        %v693 = vld [vmem:[#allocation5 + $0xd30] sm:$0xff]
        %v694 = vld [vmem:[#allocation5 + $0xd38] sm:$0xff]
        %v695 = vld [vmem:[#allocation5 + $0xd40] sm:$0xff]
        %v696 = vld [vmem:[#allocation5 + $0xd48] sm:$0xff]
        %v697 = vld [vmem:[#allocation5 + $0xd50] sm:$0xff]
        %v698 = vld [vmem:[#allocation5 + $0xd58] sm:$0xff]
        %v699 = vld [vmem:[#allocation5 + $0xd60] sm:$0xff]
        %v700 = vld [vmem:[#allocation5 + $0xd68] sm:$0xff]
        %v701 = vld [vmem:[#allocation5 + $0xd70] sm:$0xff]
        %v702 = vld [vmem:[#allocation5 + $0xd78] sm:$0xff]
        %v703 = vld [vmem:[#allocation5 + $0xd80] sm:$0xff]
        %v704 = vld [vmem:[#allocation5 + $0xd88] sm:$0xff]
        %v705 = vld [vmem:[#allocation5 + $0xd90] sm:$0xff]
        %v706 = vld [vmem:[#allocation5 + $0xd98] sm:$0xff]
        %v707 = vld [vmem:[#allocation5 + $0xda0] sm:$0xff]
        %v708 = vld [vmem:[#allocation5 + $0xda8] sm:$0xff]
        %v709 = vld [vmem:[#allocation5 + $0xdb0] sm:$0xff]
        %v710 = vld [vmem:[#allocation5 + $0xdb8] sm:$0xff]
        %v711 = vld [vmem:[#allocation5 + $0xdc0] sm:$0xff]
        %v712 = vld [vmem:[#allocation5 + $0xdc8] sm:$0xff]
        %v713 = vld [vmem:[#allocation5 + $0xdd0] sm:$0xff]
        %v714 = vld [vmem:[#allocation5 + $0xdd8] sm:$0xff]
        %v715 = vld [vmem:[#allocation5 + $0xde0] sm:$0xff]
        %v716 = vld [vmem:[#allocation5 + $0xde8] sm:$0xff]
        %v717 = vld [vmem:[#allocation5 + $0xdf0] sm:$0xff]
        %v718 = vld [vmem:[#allocation5 + $0xdf8] sm:$0xff]
        %v719 = vld [vmem:[#allocation5 + $0xe00] sm:$0xff]
        %v720 = vld [vmem:[#allocation5 + $0xe08] sm:$0xff]
        %v721 = vld [vmem:[#allocation5 + $0xe10] sm:$0xff]
        %v722 = vld [vmem:[#allocation5 + $0xe18] sm:$0xff]
        %v723 = vld [vmem:[#allocation5 + $0xe20] sm:$0xff]
        %v724 = vld [vmem:[#allocation5 + $0xe28] sm:$0xff]
        %v725 = vld [vmem:[#allocation5 + $0xe30] sm:$0xff]
        %v726 = vld [vmem:[#allocation5 + $0xe38] sm:$0xff]
        %v727 = vld [vmem:[#allocation5 + $0xe40] sm:$0xff]
        %v728 = vld [vmem:[#allocation5 + $0xe48] sm:$0xff]
        %v729 = vld [vmem:[#allocation5 + $0xe50] sm:$0xff]
        %v730 = vld [vmem:[#allocation5 + $0xe58] sm:$0xff]
        %v731 = vld [vmem:[#allocation5 + $0xe60] sm:$0xff]
        %v732 = vld [vmem:[#allocation5 + $0xe68] sm:$0xff]
        %v733 = vld [vmem:[#allocation5 + $0xe70] sm:$0xff]
        %v734 = vld [vmem:[#allocation5 + $0xe78] sm:$0xff]
        %v735 = vld [vmem:[#allocation5 + $0xe80] sm:$0xff]
        %v736 = vld [vmem:[#allocation5 + $0xe88] sm:$0xff]
        %v737 = vld [vmem:[#allocation5 + $0xe90] sm:$0xff]
        %v738 = vld [vmem:[#allocation5 + $0xe98] sm:$0xff]
        %v739 = vld [vmem:[#allocation5 + $0xea0] sm:$0xff]
        %v740 = vld [vmem:[#allocation5 + $0xea8] sm:$0xff]
        %v741 = vld [vmem:[#allocation5 + $0xeb0] sm:$0xff]
        %v742 = vld [vmem:[#allocation5 + $0xeb8] sm:$0xff]
        %v743 = vld [vmem:[#allocation5 + $0xec0] sm:$0xff]
        %v744 = vld [vmem:[#allocation5 + $0xec8] sm:$0xff]
        %v745 = vld [vmem:[#allocation5 + $0xed0] sm:$0xff]
        %v746 = vld [vmem:[#allocation5 + $0xed8] sm:$0xff]
        %v747 = vld [vmem:[#allocation5 + $0xee0] sm:$0xff]
        %v748 = vld [vmem:[#allocation5 + $0xee8] sm:$0xff]
        %v749 = vld [vmem:[#allocation5 + $0xef0] sm:$0xff]
        %v750 = vld [vmem:[#allocation5 + $0xef8] sm:$0xff]
        %v751 = vld [vmem:[#allocation5 + $0xf00] sm:$0xff]
        %v752 = vld [vmem:[#allocation5 + $0xf08] sm:$0xff]
        %v753 = vld [vmem:[#allocation5 + $0xf10] sm:$0xff]
        %v754 = vld [vmem:[#allocation5 + $0xf18] sm:$0xff]
        %v755 = vld [vmem:[#allocation5 + $0xf20] sm:$0xff]
        %v756 = vld [vmem:[#allocation5 + $0xf28] sm:$0xff]
        %v757 = vld [vmem:[#allocation5 + $0xf30] sm:$0xff]
        %v758 = vld [vmem:[#allocation5 + $0xf38] sm:$0xff]
        %v759 = vld [vmem:[#allocation5 + $0xf40] sm:$0xff]
        %v760 = vld [vmem:[#allocation5 + $0xf48] sm:$0xff]
        %v761 = vld [vmem:[#allocation5 + $0xf50] sm:$0xff]
        %v762 = vld [vmem:[#allocation5 + $0xf58] sm:$0xff]
        %v763 = vld [vmem:[#allocation5 + $0xf60] sm:$0xff]
        %v764 = vld [vmem:[#allocation5 + $0xf68] sm:$0xff]
        %v765 = vld [vmem:[#allocation5 + $0xf70] sm:$0xff]
        %v766 = vld [vmem:[#allocation5 + $0xf78] sm:$0xff]
        %v767 = vld [vmem:[#allocation5 + $0xf80] sm:$0xff]
        %v768 = vld [vmem:[#allocation5 + $0xf88] sm:$0xff]
        %v769 = vld [vmem:[#allocation5 + $0xf90] sm:$0xff]
        %v770 = vld [vmem:[#allocation5 + $0xf98] sm:$0xff]
        %v771 = vld [vmem:[#allocation5 + $0xfa0] sm:$0xff]
        %v772 = vld [vmem:[#allocation5 + $0xfa8] sm:$0xff]
        %v773 = vld [vmem:[#allocation5 + $0xfb0] sm:$0xff]
        %v774 = vld [vmem:[#allocation5 + $0xfb8] sm:$0xff]
        %v775 = vld [vmem:[#allocation5 + $0xfc0] sm:$0xff]
        %v776 = vld [vmem:[#allocation5 + $0xfc8] sm:$0xff]
        %v777 = vld [vmem:[#allocation5 + $0xfd0] sm:$0xff]
        %v778 = vld [vmem:[#allocation5 + $0xfd8] sm:$0xff]
        %v779 = vld [vmem:[#allocation5 + $0xfe0] sm:$0xff]
        %v780 = vld [vmem:[#allocation5 + $0xfe8] sm:$0xff]
        %v781 = vld [vmem:[#allocation5 + $0xff0] sm:$0xff]
        %v782 = vld [vmem:[#allocation5 + $0xff8] sm:$0xff]
        %v783 = vld [vmem:[#allocation7] sm:$0xff]
        %v784 = vld [vmem:[#allocation7 + $0x8] sm:$0xff]
        %v785 = vld [vmem:[#allocation7 + $0x10] sm:$0xff]
        %v786 = vld [vmem:[#allocation7 + $0x18] sm:$0xff]
        %v787 = vld [vmem:[#allocation7 + $0x20] sm:$0xff]
        %v788 = vld [vmem:[#allocation7 + $0x28] sm:$0xff]
        %v789 = vld [vmem:[#allocation7 + $0x30] sm:$0xff]
        %v790 = vld [vmem:[#allocation7 + $0x38] sm:$0xff]
        %v791 = vld [vmem:[#allocation7 + $0x40] sm:$0xff]
        %v792 = vld [vmem:[#allocation7 + $0x48] sm:$0xff]
        %v793 = vld [vmem:[#allocation7 + $0x50] sm:$0xff]
        %v794 = vld [vmem:[#allocation7 + $0x58] sm:$0xff]
        %v795 = vld [vmem:[#allocation7 + $0x60] sm:$0xff]
        %v796 = vld [vmem:[#allocation7 + $0x68] sm:$0xff]
        %v797 = vld [vmem:[#allocation7 + $0x70] sm:$0xff]
        %v798 = vld [vmem:[#allocation7 + $0x78] sm:$0xff]
        %v799 = vld [vmem:[#allocation7 + $0x80] sm:$0xff]
        %v800 = vld [vmem:[#allocation7 + $0x88] sm:$0xff]
        %v801 = vld [vmem:[#allocation7 + $0x90] sm:$0xff]
        %v802 = vld [vmem:[#allocation7 + $0x98] sm:$0xff]
        %v803 = vld [vmem:[#allocation7 + $0xa0] sm:$0xff]
        %v804 = vld [vmem:[#allocation7 + $0xa8] sm:$0xff]
        %v805 = vld [vmem:[#allocation7 + $0xb0] sm:$0xff]
        %v806 = vld [vmem:[#allocation7 + $0xb8] sm:$0xff]
        %v807 = vld [vmem:[#allocation7 + $0xc0] sm:$0xff]
        %v808 = vld [vmem:[#allocation7 + $0xc8] sm:$0xff]
        %v809 = vld [vmem:[#allocation7 + $0xd0] sm:$0xff]
        %v810 = vld [vmem:[#allocation7 + $0xd8] sm:$0xff]
        %v811 = vld [vmem:[#allocation7 + $0xe0] sm:$0xff]
        %v812 = vld [vmem:[#allocation7 + $0xe8] sm:$0xff]
        %v813 = vld [vmem:[#allocation7 + $0xf0] sm:$0xff]
        %v814 = vld [vmem:[#allocation7 + $0xf8] sm:$0xff]
        %v815 = vld [vmem:[#allocation7 + $0x100] sm:$0xff]
        %v816 = vld [vmem:[#allocation7 + $0x108] sm:$0xff]
        %v817 = vld [vmem:[#allocation7 + $0x110] sm:$0xff]
        %v818 = vld [vmem:[#allocation7 + $0x118] sm:$0xff]
        %v819 = vld [vmem:[#allocation7 + $0x120] sm:$0xff]
        %v820 = vld [vmem:[#allocation7 + $0x128] sm:$0xff]
        %v821 = vld [vmem:[#allocation7 + $0x130] sm:$0xff]
        %v822 = vld [vmem:[#allocation7 + $0x138] sm:$0xff]
        %v823 = vld [vmem:[#allocation7 + $0x140] sm:$0xff]
        %v824 = vld [vmem:[#allocation7 + $0x148] sm:$0xff]
        %v825 = vld [vmem:[#allocation7 + $0x150] sm:$0xff]
        %v826 = vld [vmem:[#allocation7 + $0x158] sm:$0xff]
        %v827 = vld [vmem:[#allocation7 + $0x160] sm:$0xff]
        %v828 = vld [vmem:[#allocation7 + $0x168] sm:$0xff]
        %v829 = vld [vmem:[#allocation7 + $0x170] sm:$0xff]
        %v830 = vld [vmem:[#allocation7 + $0x178] sm:$0xff]
        %v831 = vld [vmem:[#allocation7 + $0x180] sm:$0xff]
        %v832 = vld [vmem:[#allocation7 + $0x188] sm:$0xff]
        %v833 = vld [vmem:[#allocation7 + $0x190] sm:$0xff]
        %v834 = vld [vmem:[#allocation7 + $0x198] sm:$0xff]
        %v835 = vld [vmem:[#allocation7 + $0x1a0] sm:$0xff]
        %v836 = vld [vmem:[#allocation7 + $0x1a8] sm:$0xff]
        %v837 = vld [vmem:[#allocation7 + $0x1b0] sm:$0xff]
        %v838 = vld [vmem:[#allocation7 + $0x1b8] sm:$0xff]
        %v839 = vld [vmem:[#allocation7 + $0x1c0] sm:$0xff]
        %v840 = vld [vmem:[#allocation7 + $0x1c8] sm:$0xff]
        %v841 = vld [vmem:[#allocation7 + $0x1d0] sm:$0xff]
        %v842 = vld [vmem:[#allocation7 + $0x1d8] sm:$0xff]
        %v843 = vld [vmem:[#allocation7 + $0x1e0] sm:$0xff]
        %v844 = vld [vmem:[#allocation7 + $0x1e8] sm:$0xff]
        %v845 = vld [vmem:[#allocation7 + $0x1f0] sm:$0xff]
        %v846 = vld [vmem:[#allocation7 + $0x1f8] sm:$0xff]
        %v847 = vld [vmem:[#allocation7 + $0x200] sm:$0xff]
        %v848 = vld [vmem:[#allocation7 + $0x208] sm:$0xff]
        %v849 = vld [vmem:[#allocation7 + $0x210] sm:$0xff]
        %v850 = vld [vmem:[#allocation7 + $0x218] sm:$0xff]
        %v851 = vld [vmem:[#allocation7 + $0x220] sm:$0xff]
        %v852 = vld [vmem:[#allocation7 + $0x228] sm:$0xff]
        %v853 = vld [vmem:[#allocation7 + $0x230] sm:$0xff]
        %v854 = vld [vmem:[#allocation7 + $0x238] sm:$0xff]
        %v855 = vld [vmem:[#allocation7 + $0x240] sm:$0xff]
        %v856 = vld [vmem:[#allocation7 + $0x248] sm:$0xff]
        %v857 = vld [vmem:[#allocation7 + $0x250] sm:$0xff]
        %v858 = vld [vmem:[#allocation7 + $0x258] sm:$0xff]
        %v859 = vld [vmem:[#allocation7 + $0x260] sm:$0xff]
        %v860 = vld [vmem:[#allocation7 + $0x268] sm:$0xff]
        %v861 = vld [vmem:[#allocation7 + $0x270] sm:$0xff]
        %v862 = vld [vmem:[#allocation7 + $0x278] sm:$0xff]
        %v863 = vld [vmem:[#allocation7 + $0x280] sm:$0xff]
        %v864 = vld [vmem:[#allocation7 + $0x288] sm:$0xff]
        %v865 = vld [vmem:[#allocation7 + $0x290] sm:$0xff]
        %v866 = vld [vmem:[#allocation7 + $0x298] sm:$0xff]
        %v867 = vld [vmem:[#allocation7 + $0x2a0] sm:$0xff]
        %v868 = vld [vmem:[#allocation7 + $0x2a8] sm:$0xff]
        %v869 = vld [vmem:[#allocation7 + $0x2b0] sm:$0xff]
        %v870 = vld [vmem:[#allocation7 + $0x2b8] sm:$0xff]
        %v871 = vld [vmem:[#allocation7 + $0x2c0] sm:$0xff]
        %v872 = vld [vmem:[#allocation7 + $0x2c8] sm:$0xff]
        %v873 = vld [vmem:[#allocation7 + $0x2d0] sm:$0xff]
        %v874 = vld [vmem:[#allocation7 + $0x2d8] sm:$0xff]
        %v875 = vld [vmem:[#allocation7 + $0x2e0] sm:$0xff]
        %v876 = vld [vmem:[#allocation7 + $0x2e8] sm:$0xff]
        %v877 = vld [vmem:[#allocation7 + $0x2f0] sm:$0xff]
        %v878 = vld [vmem:[#allocation7 + $0x2f8] sm:$0xff]
        %v879 = vld [vmem:[#allocation7 + $0x300] sm:$0xff]
        %v880 = vld [vmem:[#allocation7 + $0x308] sm:$0xff]
        %v881 = vld [vmem:[#allocation7 + $0x310] sm:$0xff]
        %v882 = vld [vmem:[#allocation7 + $0x318] sm:$0xff]
        %v883 = vld [vmem:[#allocation7 + $0x320] sm:$0xff]
        %v884 = vld [vmem:[#allocation7 + $0x328] sm:$0xff]
        %v885 = vld [vmem:[#allocation7 + $0x330] sm:$0xff]
        %v886 = vld [vmem:[#allocation7 + $0x338] sm:$0xff]
        %v887 = vld [vmem:[#allocation7 + $0x340] sm:$0xff]
        %v888 = vld [vmem:[#allocation7 + $0x348] sm:$0xff]
        %v889 = vld [vmem:[#allocation7 + $0x350] sm:$0xff]
        %v890 = vld [vmem:[#allocation7 + $0x358] sm:$0xff]
        %v891 = vld [vmem:[#allocation7 + $0x360] sm:$0xff]
        %v892 = vld [vmem:[#allocation7 + $0x368] sm:$0xff]
        %v893 = vld [vmem:[#allocation7 + $0x370] sm:$0xff]
        %v894 = vld [vmem:[#allocation7 + $0x378] sm:$0xff]
        %v895 = vld [vmem:[#allocation7 + $0x380] sm:$0xff]
        %v896 = vld [vmem:[#allocation7 + $0x388] sm:$0xff]
        %v897 = vld [vmem:[#allocation7 + $0x390] sm:$0xff]
        %v898 = vld [vmem:[#allocation7 + $0x398] sm:$0xff]
        %v899 = vld [vmem:[#allocation7 + $0x3a0] sm:$0xff]
        %v900 = vld [vmem:[#allocation7 + $0x3a8] sm:$0xff]
        %v901 = vld [vmem:[#allocation7 + $0x3b0] sm:$0xff]
        %v902 = vld [vmem:[#allocation7 + $0x3b8] sm:$0xff]
        %v903 = vld [vmem:[#allocation7 + $0x3c0] sm:$0xff]
        %v904 = vld [vmem:[#allocation7 + $0x3c8] sm:$0xff]
        %v905 = vld [vmem:[#allocation7 + $0x3d0] sm:$0xff]
        %v906 = vld [vmem:[#allocation7 + $0x3d8] sm:$0xff]
        %v907 = vld [vmem:[#allocation7 + $0x3e0] sm:$0xff]
        %v908 = vld [vmem:[#allocation7 + $0x3e8] sm:$0xff]
        %v909 = vld [vmem:[#allocation7 + $0x3f0] sm:$0xff]
        %v910 = vld [vmem:[#allocation7 + $0x3f8] sm:$0xff]
        %v911 = vld [vmem:[#allocation7 + $0x400] sm:$0xff]
        %v912 = vld [vmem:[#allocation7 + $0x408] sm:$0xff]
        %v913 = vld [vmem:[#allocation7 + $0x410] sm:$0xff]
        %v914 = vld [vmem:[#allocation7 + $0x418] sm:$0xff]
        %v915 = vld [vmem:[#allocation7 + $0x420] sm:$0xff]
        %v916 = vld [vmem:[#allocation7 + $0x428] sm:$0xff]
        %v917 = vld [vmem:[#allocation7 + $0x430] sm:$0xff]
        %v918 = vld [vmem:[#allocation7 + $0x438] sm:$0xff]
        %v919 = vld [vmem:[#allocation7 + $0x440] sm:$0xff]
        %v920 = vld [vmem:[#allocation7 + $0x448] sm:$0xff]
        %v921 = vld [vmem:[#allocation7 + $0x450] sm:$0xff]
        %v922 = vld [vmem:[#allocation7 + $0x458] sm:$0xff]
        %v923 = vld [vmem:[#allocation7 + $0x460] sm:$0xff]
        %v924 = vld [vmem:[#allocation7 + $0x468] sm:$0xff]
        %v925 = vld [vmem:[#allocation7 + $0x470] sm:$0xff]
        %v926 = vld [vmem:[#allocation7 + $0x478] sm:$0xff]
        %v927 = vld [vmem:[#allocation7 + $0x480] sm:$0xff]
        %v928 = vld [vmem:[#allocation7 + $0x488] sm:$0xff]
        %v929 = vld [vmem:[#allocation7 + $0x490] sm:$0xff]
        %v930 = vld [vmem:[#allocation7 + $0x498] sm:$0xff]
        %v931 = vld [vmem:[#allocation7 + $0x4a0] sm:$0xff]
        %v932 = vld [vmem:[#allocation7 + $0x4a8] sm:$0xff]
        %v933 = vld [vmem:[#allocation7 + $0x4b0] sm:$0xff]
        %v934 = vld [vmem:[#allocation7 + $0x4b8] sm:$0xff]
        %v935 = vld [vmem:[#allocation7 + $0x4c0] sm:$0xff]
        %v936 = vld [vmem:[#allocation7 + $0x4c8] sm:$0xff]
        %v937 = vld [vmem:[#allocation7 + $0x4d0] sm:$0xff]
        %v938 = vld [vmem:[#allocation7 + $0x4d8] sm:$0xff]
        %v939 = vld [vmem:[#allocation7 + $0x4e0] sm:$0xff]
        %v940 = vld [vmem:[#allocation7 + $0x4e8] sm:$0xff]
        %v941 = vld [vmem:[#allocation7 + $0x4f0] sm:$0xff]
        %v942 = vld [vmem:[#allocation7 + $0x4f8] sm:$0xff]
        %v943 = vld [vmem:[#allocation7 + $0x500] sm:$0xff]
        %v944 = vld [vmem:[#allocation7 + $0x508] sm:$0xff]
        %v945 = vld [vmem:[#allocation7 + $0x510] sm:$0xff]
        %v946 = vld [vmem:[#allocation7 + $0x518] sm:$0xff]
        %v947 = vld [vmem:[#allocation7 + $0x520] sm:$0xff]
        %v948 = vld [vmem:[#allocation7 + $0x528] sm:$0xff]
        %v949 = vld [vmem:[#allocation7 + $0x530] sm:$0xff]
        %v950 = vld [vmem:[#allocation7 + $0x538] sm:$0xff]
        %v951 = vld [vmem:[#allocation7 + $0x540] sm:$0xff]
        %v952 = vld [vmem:[#allocation7 + $0x548] sm:$0xff]
        %v953 = vld [vmem:[#allocation7 + $0x550] sm:$0xff]
        %v954 = vld [vmem:[#allocation7 + $0x558] sm:$0xff]
        %v955 = vld [vmem:[#allocation7 + $0x560] sm:$0xff]
        %v956 = vld [vmem:[#allocation7 + $0x568] sm:$0xff]
        %v957 = vld [vmem:[#allocation7 + $0x570] sm:$0xff]
        %v958 = vld [vmem:[#allocation7 + $0x578] sm:$0xff]
        %v959 = vld [vmem:[#allocation7 + $0x580] sm:$0xff]
        %v960 = vld [vmem:[#allocation7 + $0x588] sm:$0xff]
        %v961 = vld [vmem:[#allocation7 + $0x590] sm:$0xff]
        %v962 = vld [vmem:[#allocation7 + $0x598] sm:$0xff]
        %v963 = vld [vmem:[#allocation7 + $0x5a0] sm:$0xff]
        %v964 = vld [vmem:[#allocation7 + $0x5a8] sm:$0xff]
        %v965 = vld [vmem:[#allocation7 + $0x5b0] sm:$0xff]
        %v966 = vld [vmem:[#allocation7 + $0x5b8] sm:$0xff]
        %v967 = vld [vmem:[#allocation7 + $0x5c0] sm:$0xff]
        %v968 = vld [vmem:[#allocation7 + $0x5c8] sm:$0xff]
        %v969 = vld [vmem:[#allocation7 + $0x5d0] sm:$0xff]
        %v970 = vld [vmem:[#allocation7 + $0x5d8] sm:$0xff]
        %v971 = vld [vmem:[#allocation7 + $0x5e0] sm:$0xff]
        %v972 = vld [vmem:[#allocation7 + $0x5e8] sm:$0xff]
        %v973 = vld [vmem:[#allocation7 + $0x5f0] sm:$0xff]
        %v974 = vld [vmem:[#allocation7 + $0x5f8] sm:$0xff]
        %v975 = vld [vmem:[#allocation7 + $0x600] sm:$0xff]
        %v976 = vld [vmem:[#allocation7 + $0x608] sm:$0xff]
        %v977 = vld [vmem:[#allocation7 + $0x610] sm:$0xff]
        %v978 = vld [vmem:[#allocation7 + $0x618] sm:$0xff]
        %v979 = vld [vmem:[#allocation7 + $0x620] sm:$0xff]
        %v980 = vld [vmem:[#allocation7 + $0x628] sm:$0xff]
        %v981 = vld [vmem:[#allocation7 + $0x630] sm:$0xff]
        %v982 = vld [vmem:[#allocation7 + $0x638] sm:$0xff]
        %v983 = vld [vmem:[#allocation7 + $0x640] sm:$0xff]
        %v984 = vld [vmem:[#allocation7 + $0x648] sm:$0xff]
        %v985 = vld [vmem:[#allocation7 + $0x650] sm:$0xff]
        %v986 = vld [vmem:[#allocation7 + $0x658] sm:$0xff]
        %v987 = vld [vmem:[#allocation7 + $0x660] sm:$0xff]
        %v988 = vld [vmem:[#allocation7 + $0x668] sm:$0xff]
        %v989 = vld [vmem:[#allocation7 + $0x670] sm:$0xff]
        %v990 = vld [vmem:[#allocation7 + $0x678] sm:$0xff]
        %v991 = vld [vmem:[#allocation7 + $0x680] sm:$0xff]
        %v992 = vld [vmem:[#allocation7 + $0x688] sm:$0xff]
        %v993 = vld [vmem:[#allocation7 + $0x690] sm:$0xff]
        %v994 = vld [vmem:[#allocation7 + $0x698] sm:$0xff]
        %v995 = vld [vmem:[#allocation7 + $0x6a0] sm:$0xff]
        %v996 = vld [vmem:[#allocation7 + $0x6a8] sm:$0xff]
        %v997 = vld [vmem:[#allocation7 + $0x6b0] sm:$0xff]
        %v998 = vld [vmem:[#allocation7 + $0x6b8] sm:$0xff]
        %v999 = vld [vmem:[#allocation7 + $0x6c0] sm:$0xff]
        %v1000 = vld [vmem:[#allocation7 + $0x6c8] sm:$0xff]
        %v1001 = vld [vmem:[#allocation7 + $0x6d0] sm:$0xff]
        %v1002 = vld [vmem:[#allocation7 + $0x6d8] sm:$0xff]
        %v1003 = vld [vmem:[#allocation7 + $0x6e0] sm:$0xff]
        %v1004 = vld [vmem:[#allocation7 + $0x6e8] sm:$0xff]
        %v1005 = vld [vmem:[#allocation7 + $0x6f0] sm:$0xff]
        %v1006 = vld [vmem:[#allocation7 + $0x6f8] sm:$0xff]
        %v1007 = vld [vmem:[#allocation7 + $0x700] sm:$0xff]
        %v1008 = vld [vmem:[#allocation7 + $0x708] sm:$0xff]
        %v1009 = vld [vmem:[#allocation7 + $0x710] sm:$0xff]
        %v1010 = vld [vmem:[#allocation7 + $0x718] sm:$0xff]
        %v1011 = vld [vmem:[#allocation7 + $0x720] sm:$0xff]
        %v1012 = vld [vmem:[#allocation7 + $0x728] sm:$0xff]
        %v1013 = vld [vmem:[#allocation7 + $0x730] sm:$0xff]
        %v1014 = vld [vmem:[#allocation7 + $0x738] sm:$0xff]
        %v1015 = vld [vmem:[#allocation7 + $0x740] sm:$0xff]
        %v1016 = vld [vmem:[#allocation7 + $0x748] sm:$0xff]
        %v1017 = vld [vmem:[#allocation7 + $0x750] sm:$0xff]
        %v1018 = vld [vmem:[#allocation7 + $0x758] sm:$0xff]
        %v1019 = vld [vmem:[#allocation7 + $0x760] sm:$0xff]
        %v1020 = vld [vmem:[#allocation7 + $0x768] sm:$0xff]
        %v1021 = vld [vmem:[#allocation7 + $0x770] sm:$0xff]
        %v1022 = vld [vmem:[#allocation7 + $0x778] sm:$0xff]
        %v1023 = vld [vmem:[#allocation7 + $0x780] sm:$0xff]
        %v1024 = vld [vmem:[#allocation7 + $0x788] sm:$0xff]
        %v1025 = vld [vmem:[#allocation7 + $0x790] sm:$0xff]
        %v1026 = vld [vmem:[#allocation7 + $0x798] sm:$0xff]
        %v1027 = vld [vmem:[#allocation7 + $0x7a0] sm:$0xff]
        %v1028 = vld [vmem:[#allocation7 + $0x7a8] sm:$0xff]
        %v1029 = vld [vmem:[#allocation7 + $0x7b0] sm:$0xff]
        %v1030 = vld [vmem:[#allocation7 + $0x7b8] sm:$0xff]
        %v1031 = vld [vmem:[#allocation7 + $0x7c0] sm:$0xff]
        %v1032 = vld [vmem:[#allocation7 + $0x7c8] sm:$0xff]
        %v1033 = vld [vmem:[#allocation7 + $0x7d0] sm:$0xff]
        %v1034 = vld [vmem:[#allocation7 + $0x7d8] sm:$0xff]
        %v1035 = vld [vmem:[#allocation7 + $0x7e0] sm:$0xff]
        %v1036 = vld [vmem:[#allocation7 + $0x7e8] sm:$0xff]
        %v1037 = vld [vmem:[#allocation7 + $0x7f0] sm:$0xff]
        %v1038 = vld [vmem:[#allocation7 + $0x7f8] sm:$0xff]
        %v1039 = vld [vmem:[#allocation7 + $0x800] sm:$0xff]
        %v1040 = vld [vmem:[#allocation7 + $0x808] sm:$0xff]
        %v1041 = vld [vmem:[#allocation7 + $0x810] sm:$0xff]
        %v1042 = vld [vmem:[#allocation7 + $0x818] sm:$0xff]
        %v1043 = vld [vmem:[#allocation7 + $0x820] sm:$0xff]
        %v1044 = vld [vmem:[#allocation7 + $0x828] sm:$0xff]
        %v1045 = vld [vmem:[#allocation7 + $0x830] sm:$0xff]
        %v1046 = vld [vmem:[#allocation7 + $0x838] sm:$0xff]
        %v1047 = vld [vmem:[#allocation7 + $0x840] sm:$0xff]
        %v1048 = vld [vmem:[#allocation7 + $0x848] sm:$0xff]
        %v1049 = vld [vmem:[#allocation7 + $0x850] sm:$0xff]
        %v1050 = vld [vmem:[#allocation7 + $0x858] sm:$0xff]
        %v1051 = vld [vmem:[#allocation7 + $0x860] sm:$0xff]
        %v1052 = vld [vmem:[#allocation7 + $0x868] sm:$0xff]
        %v1053 = vld [vmem:[#allocation7 + $0x870] sm:$0xff]
        %v1054 = vld [vmem:[#allocation7 + $0x878] sm:$0xff]
        %v1055 = vld [vmem:[#allocation7 + $0x880] sm:$0xff]
        %v1056 = vld [vmem:[#allocation7 + $0x888] sm:$0xff]
        %v1057 = vld [vmem:[#allocation7 + $0x890] sm:$0xff]
        %v1058 = vld [vmem:[#allocation7 + $0x898] sm:$0xff]
        %v1059 = vld [vmem:[#allocation7 + $0x8a0] sm:$0xff]
        %v1060 = vld [vmem:[#allocation7 + $0x8a8] sm:$0xff]
        %v1061 = vld [vmem:[#allocation7 + $0x8b0] sm:$0xff]
        %v1062 = vld [vmem:[#allocation7 + $0x8b8] sm:$0xff]
        %v1063 = vld [vmem:[#allocation7 + $0x8c0] sm:$0xff]
        %v1064 = vld [vmem:[#allocation7 + $0x8c8] sm:$0xff]
        %v1065 = vld [vmem:[#allocation7 + $0x8d0] sm:$0xff]
        %v1066 = vld [vmem:[#allocation7 + $0x8d8] sm:$0xff]
        %v1067 = vld [vmem:[#allocation7 + $0x8e0] sm:$0xff]
        %v1068 = vld [vmem:[#allocation7 + $0x8e8] sm:$0xff]
        %v1069 = vld [vmem:[#allocation7 + $0x8f0] sm:$0xff]
        %v1070 = vld [vmem:[#allocation7 + $0x8f8] sm:$0xff]
        %v1071 = vld [vmem:[#allocation7 + $0x900] sm:$0xff]
        %v1072 = vld [vmem:[#allocation7 + $0x908] sm:$0xff]
        %v1073 = vld [vmem:[#allocation7 + $0x910] sm:$0xff]
        %v1074 = vld [vmem:[#allocation7 + $0x918] sm:$0xff]
        %v1075 = vld [vmem:[#allocation7 + $0x920] sm:$0xff]
        %v1076 = vld [vmem:[#allocation7 + $0x928] sm:$0xff]
        %v1077 = vld [vmem:[#allocation7 + $0x930] sm:$0xff]
        %v1078 = vld [vmem:[#allocation7 + $0x938] sm:$0xff]
        %v1079 = vld [vmem:[#allocation7 + $0x940] sm:$0xff]
        %v1080 = vld [vmem:[#allocation7 + $0x948] sm:$0xff]
        %v1081 = vld [vmem:[#allocation7 + $0x950] sm:$0xff]
        %v1082 = vld [vmem:[#allocation7 + $0x958] sm:$0xff]
        %v1083 = vld [vmem:[#allocation7 + $0x960] sm:$0xff]
        %v1084 = vld [vmem:[#allocation7 + $0x968] sm:$0xff]
        %v1085 = vld [vmem:[#allocation7 + $0x970] sm:$0xff]
        %v1086 = vld [vmem:[#allocation7 + $0x978] sm:$0xff]
        %v1087 = vld [vmem:[#allocation7 + $0x980] sm:$0xff]
        %v1088 = vld [vmem:[#allocation7 + $0x988] sm:$0xff]
        %v1089 = vld [vmem:[#allocation7 + $0x990] sm:$0xff]
        %v1090 = vld [vmem:[#allocation7 + $0x998] sm:$0xff]
        %v1091 = vld [vmem:[#allocation7 + $0x9a0] sm:$0xff]
        %v1092 = vld [vmem:[#allocation7 + $0x9a8] sm:$0xff]
        %v1093 = vld [vmem:[#allocation7 + $0x9b0] sm:$0xff]
        %v1094 = vld [vmem:[#allocation7 + $0x9b8] sm:$0xff]
        %v1095 = vld [vmem:[#allocation7 + $0x9c0] sm:$0xff]
        %v1096 = vld [vmem:[#allocation7 + $0x9c8] sm:$0xff]
        %v1097 = vld [vmem:[#allocation7 + $0x9d0] sm:$0xff]
        %v1098 = vld [vmem:[#allocation7 + $0x9d8] sm:$0xff]
        %v1099 = vld [vmem:[#allocation7 + $0x9e0] sm:$0xff]
        %v1100 = vld [vmem:[#allocation7 + $0x9e8] sm:$0xff]
        %v1101 = vld [vmem:[#allocation7 + $0x9f0] sm:$0xff]
        %v1102 = vld [vmem:[#allocation7 + $0x9f8] sm:$0xff]
        %v1103 = vld [vmem:[#allocation7 + $0xa00] sm:$0xff]
        %v1104 = vld [vmem:[#allocation7 + $0xa08] sm:$0xff]
        %v1105 = vld [vmem:[#allocation7 + $0xa10] sm:$0xff]
        %v1106 = vld [vmem:[#allocation7 + $0xa18] sm:$0xff]
        %v1107 = vld [vmem:[#allocation7 + $0xa20] sm:$0xff]
        %v1108 = vld [vmem:[#allocation7 + $0xa28] sm:$0xff]
        %v1109 = vld [vmem:[#allocation7 + $0xa30] sm:$0xff]
        %v1110 = vld [vmem:[#allocation7 + $0xa38] sm:$0xff]
        %v1111 = vld [vmem:[#allocation7 + $0xa40] sm:$0xff]
        %v1112 = vld [vmem:[#allocation7 + $0xa48] sm:$0xff]
        %v1113 = vld [vmem:[#allocation7 + $0xa50] sm:$0xff]
        %v1114 = vld [vmem:[#allocation7 + $0xa58] sm:$0xff]
        %v1115 = vld [vmem:[#allocation7 + $0xa60] sm:$0xff]
        %v1116 = vld [vmem:[#allocation7 + $0xa68] sm:$0xff]
        %v1117 = vld [vmem:[#allocation7 + $0xa70] sm:$0xff]
        %v1118 = vld [vmem:[#allocation7 + $0xa78] sm:$0xff]
        %v1119 = vld [vmem:[#allocation7 + $0xa80] sm:$0xff]
        %v1120 = vld [vmem:[#allocation7 + $0xa88] sm:$0xff]
        %v1121 = vld [vmem:[#allocation7 + $0xa90] sm:$0xff]
        %v1122 = vld [vmem:[#allocation7 + $0xa98] sm:$0xff]
        %v1123 = vld [vmem:[#allocation7 + $0xaa0] sm:$0xff]
        %v1124 = vld [vmem:[#allocation7 + $0xaa8] sm:$0xff]
        %v1125 = vld [vmem:[#allocation7 + $0xab0] sm:$0xff]
        %v1126 = vld [vmem:[#allocation7 + $0xab8] sm:$0xff]
        %v1127 = vld [vmem:[#allocation7 + $0xac0] sm:$0xff]
        %v1128 = vld [vmem:[#allocation7 + $0xac8] sm:$0xff]
        %v1129 = vld [vmem:[#allocation7 + $0xad0] sm:$0xff]
        %v1130 = vld [vmem:[#allocation7 + $0xad8] sm:$0xff]
        %v1131 = vld [vmem:[#allocation7 + $0xae0] sm:$0xff]
        %v1132 = vld [vmem:[#allocation7 + $0xae8] sm:$0xff]
        %v1133 = vld [vmem:[#allocation7 + $0xaf0] sm:$0xff]
        %v1134 = vld [vmem:[#allocation7 + $0xaf8] sm:$0xff]
        %v1135 = vld [vmem:[#allocation7 + $0xb00] sm:$0xff]
        %v1136 = vld [vmem:[#allocation7 + $0xb08] sm:$0xff]
        %v1137 = vld [vmem:[#allocation7 + $0xb10] sm:$0xff]
        %v1138 = vld [vmem:[#allocation7 + $0xb18] sm:$0xff]
        %v1139 = vld [vmem:[#allocation7 + $0xb20] sm:$0xff]
        %v1140 = vld [vmem:[#allocation7 + $0xb28] sm:$0xff]
        %v1141 = vld [vmem:[#allocation7 + $0xb30] sm:$0xff]
        %v1142 = vld [vmem:[#allocation7 + $0xb38] sm:$0xff]
        %v1143 = vld [vmem:[#allocation7 + $0xb40] sm:$0xff]
        %v1144 = vld [vmem:[#allocation7 + $0xb48] sm:$0xff]
        %v1145 = vld [vmem:[#allocation7 + $0xb50] sm:$0xff]
        %v1146 = vld [vmem:[#allocation7 + $0xb58] sm:$0xff]
        %v1147 = vld [vmem:[#allocation7 + $0xb60] sm:$0xff]
        %v1148 = vld [vmem:[#allocation7 + $0xb68] sm:$0xff]
        %v1149 = vld [vmem:[#allocation7 + $0xb70] sm:$0xff]
        %v1150 = vld [vmem:[#allocation7 + $0xb78] sm:$0xff]
        %v1151 = vld [vmem:[#allocation7 + $0xb80] sm:$0xff]
        %v1152 = vld [vmem:[#allocation7 + $0xb88] sm:$0xff]
        %v1153 = vld [vmem:[#allocation7 + $0xb90] sm:$0xff]
        %v1154 = vld [vmem:[#allocation7 + $0xb98] sm:$0xff]
        %v1155 = vld [vmem:[#allocation7 + $0xba0] sm:$0xff]
        %v1156 = vld [vmem:[#allocation7 + $0xba8] sm:$0xff]
        %v1157 = vld [vmem:[#allocation7 + $0xbb0] sm:$0xff]
        %v1158 = vld [vmem:[#allocation7 + $0xbb8] sm:$0xff]
        %v1159 = vld [vmem:[#allocation7 + $0xbc0] sm:$0xff]
        %v1160 = vld [vmem:[#allocation7 + $0xbc8] sm:$0xff]
        %v1161 = vld [vmem:[#allocation7 + $0xbd0] sm:$0xff]
        %v1162 = vld [vmem:[#allocation7 + $0xbd8] sm:$0xff]
        %v1163 = vld [vmem:[#allocation7 + $0xbe0] sm:$0xff]
        %v1164 = vld [vmem:[#allocation7 + $0xbe8] sm:$0xff]
        %v1165 = vld [vmem:[#allocation7 + $0xbf0] sm:$0xff]
        %v1166 = vld [vmem:[#allocation7 + $0xbf8] sm:$0xff]
        %v1167 = vld [vmem:[#allocation7 + $0xc00] sm:$0xff]
        %v1168 = vld [vmem:[#allocation7 + $0xc08] sm:$0xff]
        %v1169 = vld [vmem:[#allocation7 + $0xc10] sm:$0xff]
        %v1170 = vld [vmem:[#allocation7 + $0xc18] sm:$0xff]
        %v1171 = vld [vmem:[#allocation7 + $0xc20] sm:$0xff]
        %v1172 = vld [vmem:[#allocation7 + $0xc28] sm:$0xff]
        %v1173 = vld [vmem:[#allocation7 + $0xc30] sm:$0xff]
        %v1174 = vld [vmem:[#allocation7 + $0xc38] sm:$0xff]
        %v1175 = vld [vmem:[#allocation7 + $0xc40] sm:$0xff]
        %v1176 = vld [vmem:[#allocation7 + $0xc48] sm:$0xff]
        %v1177 = vld [vmem:[#allocation7 + $0xc50] sm:$0xff]
        %v1178 = vld [vmem:[#allocation7 + $0xc58] sm:$0xff]
        %v1179 = vld [vmem:[#allocation7 + $0xc60] sm:$0xff]
        %v1180 = vld [vmem:[#allocation7 + $0xc68] sm:$0xff]
        %v1181 = vld [vmem:[#allocation7 + $0xc70] sm:$0xff]
        %v1182 = vld [vmem:[#allocation7 + $0xc78] sm:$0xff]
        %v1183 = vld [vmem:[#allocation7 + $0xc80] sm:$0xff]
        %v1184 = vld [vmem:[#allocation7 + $0xc88] sm:$0xff]
        %v1185 = vld [vmem:[#allocation7 + $0xc90] sm:$0xff]
        %v1186 = vld [vmem:[#allocation7 + $0xc98] sm:$0xff]
        %v1187 = vld [vmem:[#allocation7 + $0xca0] sm:$0xff]
        %v1188 = vld [vmem:[#allocation7 + $0xca8] sm:$0xff]
        %v1189 = vld [vmem:[#allocation7 + $0xcb0] sm:$0xff]
        %v1190 = vld [vmem:[#allocation7 + $0xcb8] sm:$0xff]
        %v1191 = vld [vmem:[#allocation7 + $0xcc0] sm:$0xff]
        %v1192 = vld [vmem:[#allocation7 + $0xcc8] sm:$0xff]
        %v1193 = vld [vmem:[#allocation7 + $0xcd0] sm:$0xff]
        %v1194 = vld [vmem:[#allocation7 + $0xcd8] sm:$0xff]
        %v1195 = vld [vmem:[#allocation7 + $0xce0] sm:$0xff]
        %v1196 = vld [vmem:[#allocation7 + $0xce8] sm:$0xff]
        %v1197 = vld [vmem:[#allocation7 + $0xcf0] sm:$0xff]
        %v1198 = vld [vmem:[#allocation7 + $0xcf8] sm:$0xff]
        %v1199 = vld [vmem:[#allocation7 + $0xd00] sm:$0xff]
        %v1200 = vld [vmem:[#allocation7 + $0xd08] sm:$0xff]
        %v1201 = vld [vmem:[#allocation7 + $0xd10] sm:$0xff]
        %v1202 = vld [vmem:[#allocation7 + $0xd18] sm:$0xff]
        %v1203 = vld [vmem:[#allocation7 + $0xd20] sm:$0xff]
        %v1204 = vld [vmem:[#allocation7 + $0xd28] sm:$0xff]
        %v1205 = vld [vmem:[#allocation7 + $0xd30] sm:$0xff]
        %v1206 = vld [vmem:[#allocation7 + $0xd38] sm:$0xff]
        %v1207 = vld [vmem:[#allocation7 + $0xd40] sm:$0xff]
        %v1208 = vld [vmem:[#allocation7 + $0xd48] sm:$0xff]
        %v1209 = vld [vmem:[#allocation7 + $0xd50] sm:$0xff]
        %v1210 = vld [vmem:[#allocation7 + $0xd58] sm:$0xff]
        %v1211 = vld [vmem:[#allocation7 + $0xd60] sm:$0xff]
        %v1212 = vld [vmem:[#allocation7 + $0xd68] sm:$0xff]
        %v1213 = vld [vmem:[#allocation7 + $0xd70] sm:$0xff]
        %v1214 = vld [vmem:[#allocation7 + $0xd78] sm:$0xff]
        %v1215 = vld [vmem:[#allocation7 + $0xd80] sm:$0xff]
        %v1216 = vld [vmem:[#allocation7 + $0xd88] sm:$0xff]
        %v1217 = vld [vmem:[#allocation7 + $0xd90] sm:$0xff]
        %v1218 = vld [vmem:[#allocation7 + $0xd98] sm:$0xff]
        %v1219 = vld [vmem:[#allocation7 + $0xda0] sm:$0xff]
        %v1220 = vld [vmem:[#allocation7 + $0xda8] sm:$0xff]
        %v1221 = vld [vmem:[#allocation7 + $0xdb0] sm:$0xff]
        %v1222 = vld [vmem:[#allocation7 + $0xdb8] sm:$0xff]
        %v1223 = vld [vmem:[#allocation7 + $0xdc0] sm:$0xff]
        %v1224 = vld [vmem:[#allocation7 + $0xdc8] sm:$0xff]
        %v1225 = vld [vmem:[#allocation7 + $0xdd0] sm:$0xff]
        %v1226 = vld [vmem:[#allocation7 + $0xdd8] sm:$0xff]
        %v1227 = vld [vmem:[#allocation7 + $0xde0] sm:$0xff]
        %v1228 = vld [vmem:[#allocation7 + $0xde8] sm:$0xff]
        %v1229 = vld [vmem:[#allocation7 + $0xdf0] sm:$0xff]
        %v1230 = vld [vmem:[#allocation7 + $0xdf8] sm:$0xff]
        %v1231 = vld [vmem:[#allocation7 + $0xe00] sm:$0xff]
        %v1232 = vld [vmem:[#allocation7 + $0xe08] sm:$0xff]
        %v1233 = vld [vmem:[#allocation7 + $0xe10] sm:$0xff]
        %v1234 = vld [vmem:[#allocation7 + $0xe18] sm:$0xff]
        %v1235 = vld [vmem:[#allocation7 + $0xe20] sm:$0xff]
        %v1236 = vld [vmem:[#allocation7 + $0xe28] sm:$0xff]
        %v1237 = vld [vmem:[#allocation7 + $0xe30] sm:$0xff]
        %v1238 = vld [vmem:[#allocation7 + $0xe38] sm:$0xff]
        %v1239 = vld [vmem:[#allocation7 + $0xe40] sm:$0xff]
        %v1240 = vld [vmem:[#allocation7 + $0xe48] sm:$0xff]
        %v1241 = vld [vmem:[#allocation7 + $0xe50] sm:$0xff]
        %v1242 = vld [vmem:[#allocation7 + $0xe58] sm:$0xff]
        %v1243 = vld [vmem:[#allocation7 + $0xe60] sm:$0xff]
        %v1244 = vld [vmem:[#allocation7 + $0xe68] sm:$0xff]
        %v1245 = vld [vmem:[#allocation7 + $0xe70] sm:$0xff]
        %v1246 = vld [vmem:[#allocation7 + $0xe78] sm:$0xff]
        %v1247 = vld [vmem:[#allocation7 + $0xe80] sm:$0xff]
        %v1248 = vld [vmem:[#allocation7 + $0xe88] sm:$0xff]
        %v1249 = vld [vmem:[#allocation7 + $0xe90] sm:$0xff]
        %v1250 = vld [vmem:[#allocation7 + $0xe98] sm:$0xff]
        %v1251 = vld [vmem:[#allocation7 + $0xea0] sm:$0xff]
        %v1252 = vld [vmem:[#allocation7 + $0xea8] sm:$0xff]
        %v1253 = vld [vmem:[#allocation7 + $0xeb0] sm:$0xff]
        %v1254 = vld [vmem:[#allocation7 + $0xeb8] sm:$0xff]
        %v1255 = vld [vmem:[#allocation7 + $0xec0] sm:$0xff]
        %v1256 = vld [vmem:[#allocation7 + $0xec8] sm:$0xff]
        %v1257 = vld [vmem:[#allocation7 + $0xed0] sm:$0xff]
        %v1258 = vld [vmem:[#allocation7 + $0xed8] sm:$0xff]
        %v1259 = vld [vmem:[#allocation7 + $0xee0] sm:$0xff]
        %v1260 = vld [vmem:[#allocation7 + $0xee8] sm:$0xff]
        %v1261 = vld [vmem:[#allocation7 + $0xef0] sm:$0xff]
        %v1262 = vld [vmem:[#allocation7 + $0xef8] sm:$0xff]
        %v1263 = vld [vmem:[#allocation7 + $0xf00] sm:$0xff]
        %v1264 = vld [vmem:[#allocation7 + $0xf08] sm:$0xff]
        %v1265 = vld [vmem:[#allocation7 + $0xf10] sm:$0xff]
        %v1266 = vld [vmem:[#allocation7 + $0xf18] sm:$0xff]
        %v1267 = vld [vmem:[#allocation7 + $0xf20] sm:$0xff]
        %v1268 = vld [vmem:[#allocation7 + $0xf28] sm:$0xff]
        %v1269 = vld [vmem:[#allocation7 + $0xf30] sm:$0xff]
        %v1270 = vld [vmem:[#allocation7 + $0xf38] sm:$0xff]
        %v1271 = vld [vmem:[#allocation7 + $0xf40] sm:$0xff]
        %v1272 = vld [vmem:[#allocation7 + $0xf48] sm:$0xff]
        %v1273 = vld [vmem:[#allocation7 + $0xf50] sm:$0xff]
        %v1274 = vld [vmem:[#allocation7 + $0xf58] sm:$0xff]
        %v1275 = vld [vmem:[#allocation7 + $0xf60] sm:$0xff]
        %v1276 = vld [vmem:[#allocation7 + $0xf68] sm:$0xff]
        %v1277 = vld [vmem:[#allocation7 + $0xf70] sm:$0xff]
        %v1278 = vld [vmem:[#allocation7 + $0xf78] sm:$0xff]
        %v1279 = vld [vmem:[#allocation7 + $0xf80] sm:$0xff]
        %v1280 = vld [vmem:[#allocation7 + $0xf88] sm:$0xff]
        %v1281 = vld [vmem:[#allocation7 + $0xf90] sm:$0xff]
        %v1282 = vld [vmem:[#allocation7 + $0xf98] sm:$0xff]
        %v1283 = vld [vmem:[#allocation7 + $0xfa0] sm:$0xff]
        %v1284 = vld [vmem:[#allocation7 + $0xfa8] sm:$0xff]
        %v1285 = vld [vmem:[#allocation7 + $0xfb0] sm:$0xff]
        %v1286 = vld [vmem:[#allocation7 + $0xfb8] sm:$0xff]
        %v1287 = vld [vmem:[#allocation7 + $0xfc0] sm:$0xff]
        %v1288 = vld [vmem:[#allocation7 + $0xfc8] sm:$0xff]
        %v1289 = vld [vmem:[#allocation7 + $0xfd0] sm:$0xff]
        %v1290 = vld [vmem:[#allocation7 + $0xfd8] sm:$0xff]
        %v1291 = vld [vmem:[#allocation7 + $0xfe0] sm:$0xff]
        %v1292 = vld [vmem:[#allocation7 + $0xfe8] sm:$0xff]
        %v1293 = vld [vmem:[#allocation7 + $0xff0] sm:$0xff]
        %v1294 = vld [vmem:[#allocation7 + $0xff8] sm:$0xff]
        %v1303 = vunpack.c.l.b16 %v263
        %v1304 = vunpack.c.h.b16 %v263
        %v1305 = vunpack.c.l.b16 %v264
        %v1306 = vunpack.c.h.b16 %v264
        %v1307 = vunpack.c.l.b16 %v265
        %v1308 = vunpack.c.h.b16 %v265
        %v1309 = vunpack.c.l.b16 %v266
        %v1310 = vunpack.c.h.b16 %v266
        %v1311 = vunpack.c.l.b16 %v267
        %v1312 = vunpack.c.h.b16 %v267
        %v1313 = vunpack.c.l.b16 %v268
        %v1314 = vunpack.c.h.b16 %v268
        %v1315 = vunpack.c.l.b16 %v269
        %v1316 = vunpack.c.h.b16 %v269
        %v1317 = vunpack.c.l.b16 %v270
        %v1318 = vunpack.c.h.b16 %v270
        %v1319 = vpack.c.b16 %v1311, %v1303
        %v1320 = vpack.c.b16 %v1312, %v1304
        %v1321 = vpack.c.b16 %v1313, %v1305
        %v1322 = vpack.c.b16 %v1314, %v1306
        %v1323 = vpack.c.b16 %v1315, %v1307
        %v1324 = vpack.c.b16 %v1316, %v1308
        %v1325 = vpack.c.b16 %v1317, %v1309
        %v1326 = vpack.c.b16 %v1318, %v1310
        %v1847 = vunpack.c.l.b16 %v783
        %v1848 = vunpack.c.h.b16 %v783
        %v1849 = vunpack.c.l.b16 %v784
        %v1850 = vunpack.c.h.b16 %v784
        %v1851 = vunpack.c.l.b16 %v785
        %v1852 = vunpack.c.h.b16 %v785
        %v1853 = vunpack.c.l.b16 %v786
        %v1854 = vunpack.c.h.b16 %v786
        %v1855 = vunpack.c.l.b16 %v787
        %v1856 = vunpack.c.h.b16 %v787
        %v1857 = vunpack.c.l.b16 %v788
        %v1858 = vunpack.c.h.b16 %v788
        %v1859 = vunpack.c.l.b16 %v789
        %v1860 = vunpack.c.h.b16 %v789
        %v1861 = vunpack.c.l.b16 %v790
        %v1862 = vunpack.c.h.b16 %v790
        %v1863 = vunpack.c.l.b16 %v791
        %v1864 = vunpack.c.h.b16 %v791
        %v1865 = vunpack.c.l.b16 %v792
        %v1866 = vunpack.c.h.b16 %v792
        %v1867 = vunpack.c.l.b16 %v793
        %v1868 = vunpack.c.h.b16 %v793
        %v1869 = vunpack.c.l.b16 %v794
        %v1870 = vunpack.c.h.b16 %v794
        %v1871 = vunpack.c.l.b16 %v795
        %v1872 = vunpack.c.h.b16 %v795
        %v1873 = vunpack.c.l.b16 %v796
        %v1874 = vunpack.c.h.b16 %v796
        %v1875 = vunpack.c.l.b16 %v797
        %v1876 = vunpack.c.h.b16 %v797
        %v1877 = vunpack.c.l.b16 %v798
        %v1878 = vunpack.c.h.b16 %v798
        %v1879 = vunpack.c.l.b16 %v799
        %v1880 = vunpack.c.h.b16 %v799
        %v1881 = vunpack.c.l.b16 %v800
        %v1882 = vunpack.c.h.b16 %v800
        %v1883 = vunpack.c.l.b16 %v801
        %v1884 = vunpack.c.h.b16 %v801
        %v1885 = vunpack.c.l.b16 %v802
        %v1886 = vunpack.c.h.b16 %v802
        %v1887 = vunpack.c.l.b16 %v803
        %v1888 = vunpack.c.h.b16 %v803
        %v1889 = vunpack.c.l.b16 %v804
        %v1890 = vunpack.c.h.b16 %v804
        %v1891 = vunpack.c.l.b16 %v805
        %v1892 = vunpack.c.h.b16 %v805
        %v1893 = vunpack.c.l.b16 %v806
        %v1894 = vunpack.c.h.b16 %v806
        %v1895 = vunpack.c.l.b16 %v807
        %v1896 = vunpack.c.h.b16 %v807
        %v1897 = vunpack.c.l.b16 %v808
        %v1898 = vunpack.c.h.b16 %v808
        %v1899 = vunpack.c.l.b16 %v809
        %v1900 = vunpack.c.h.b16 %v809
        %v1901 = vunpack.c.l.b16 %v810
        %v1902 = vunpack.c.h.b16 %v810
        %v1903 = vunpack.c.l.b16 %v811
        %v1904 = vunpack.c.h.b16 %v811
        %v1905 = vunpack.c.l.b16 %v812
        %v1906 = vunpack.c.h.b16 %v812
        %v1907 = vunpack.c.l.b16 %v813
        %v1908 = vunpack.c.h.b16 %v813
        %v1909 = vunpack.c.l.b16 %v814
        %v1910 = vunpack.c.h.b16 %v814
        %v1911 = vunpack.c.l.b16 %v815
        %v1912 = vunpack.c.h.b16 %v815
        %v1913 = vunpack.c.l.b16 %v816
        %v1914 = vunpack.c.h.b16 %v816
        %v1915 = vunpack.c.l.b16 %v817
        %v1916 = vunpack.c.h.b16 %v817
        %v1917 = vunpack.c.l.b16 %v818
        %v1918 = vunpack.c.h.b16 %v818
        %v1919 = vunpack.c.l.b16 %v819
        %v1920 = vunpack.c.h.b16 %v819
        %v1921 = vunpack.c.l.b16 %v820
        %v1922 = vunpack.c.h.b16 %v820
        %v1923 = vunpack.c.l.b16 %v821
        %v1924 = vunpack.c.h.b16 %v821
        %v1925 = vunpack.c.l.b16 %v822
        %v1926 = vunpack.c.h.b16 %v822
        %v1927 = vunpack.c.l.b16 %v823
        %v1928 = vunpack.c.h.b16 %v823
        %v1929 = vunpack.c.l.b16 %v824
        %v1930 = vunpack.c.h.b16 %v824
        %v1931 = vunpack.c.l.b16 %v825
        %v1932 = vunpack.c.h.b16 %v825
        %v1933 = vunpack.c.l.b16 %v826
        %v1934 = vunpack.c.h.b16 %v826
        %v1935 = vunpack.c.l.b16 %v827
        %v1936 = vunpack.c.h.b16 %v827
        %v1937 = vunpack.c.l.b16 %v828
        %v1938 = vunpack.c.h.b16 %v828
        %v1939 = vunpack.c.l.b16 %v829
        %v1940 = vunpack.c.h.b16 %v829
        %v1941 = vunpack.c.l.b16 %v830
        %v1942 = vunpack.c.h.b16 %v830
        %v1943 = vunpack.c.l.b16 %v831
        %v1944 = vunpack.c.h.b16 %v831
        %v1945 = vunpack.c.l.b16 %v832
        %v1946 = vunpack.c.h.b16 %v832
        %v1947 = vunpack.c.l.b16 %v833
        %v1948 = vunpack.c.h.b16 %v833
        %v1949 = vunpack.c.l.b16 %v834
        %v1950 = vunpack.c.h.b16 %v834
        %v1951 = vunpack.c.l.b16 %v835
        %v1952 = vunpack.c.h.b16 %v835
        %v1953 = vunpack.c.l.b16 %v836
        %v1954 = vunpack.c.h.b16 %v836
        %v1955 = vunpack.c.l.b16 %v837
        %v1956 = vunpack.c.h.b16 %v837
        %v1957 = vunpack.c.l.b16 %v838
        %v1958 = vunpack.c.h.b16 %v838
        %v1959 = vunpack.c.l.b16 %v839
        %v1960 = vunpack.c.h.b16 %v839
        %v1961 = vunpack.c.l.b16 %v840
        %v1962 = vunpack.c.h.b16 %v840
        %v1963 = vunpack.c.l.b16 %v841
        %v1964 = vunpack.c.h.b16 %v841
        %v1965 = vunpack.c.l.b16 %v842
        %v1966 = vunpack.c.h.b16 %v842
        %v1967 = vunpack.c.l.b16 %v843
        %v1968 = vunpack.c.h.b16 %v843
        %v1969 = vunpack.c.l.b16 %v844
        %v1970 = vunpack.c.h.b16 %v844
        %v1971 = vunpack.c.l.b16 %v845
        %v1972 = vunpack.c.h.b16 %v845
        %v1973 = vunpack.c.l.b16 %v846
        %v1974 = vunpack.c.h.b16 %v846
        %v1975 = vunpack.c.l.b16 %v847
        %v1976 = vunpack.c.h.b16 %v847
        %v1977 = vunpack.c.l.b16 %v848
        %v1978 = vunpack.c.h.b16 %v848
        %v1979 = vunpack.c.l.b16 %v849
        %v1980 = vunpack.c.h.b16 %v849
        %v1981 = vunpack.c.l.b16 %v850
        %v1982 = vunpack.c.h.b16 %v850
        %v1983 = vunpack.c.l.b16 %v851
        %v1984 = vunpack.c.h.b16 %v851
        %v1985 = vunpack.c.l.b16 %v852
        %v1986 = vunpack.c.h.b16 %v852
        %v1987 = vunpack.c.l.b16 %v853
        %v1988 = vunpack.c.h.b16 %v853
        %v1989 = vunpack.c.l.b16 %v854
        %v1990 = vunpack.c.h.b16 %v854
        %v1991 = vunpack.c.l.b16 %v855
        %v1992 = vunpack.c.h.b16 %v855
        %v1993 = vunpack.c.l.b16 %v856
        %v1994 = vunpack.c.h.b16 %v856
        %v1995 = vunpack.c.l.b16 %v857
        %v1996 = vunpack.c.h.b16 %v857
        %v1997 = vunpack.c.l.b16 %v858
        %v1998 = vunpack.c.h.b16 %v858
        %v1999 = vunpack.c.l.b16 %v859
        %v2000 = vunpack.c.h.b16 %v859
        %v2001 = vunpack.c.l.b16 %v860
        %v2002 = vunpack.c.h.b16 %v860
        %v2003 = vunpack.c.l.b16 %v861
        %v2004 = vunpack.c.h.b16 %v861
        %v2005 = vunpack.c.l.b16 %v862
        %v2006 = vunpack.c.h.b16 %v862
        %v2007 = vunpack.c.l.b16 %v863
        %v2008 = vunpack.c.h.b16 %v863
        %v2009 = vunpack.c.l.b16 %v864
        %v2010 = vunpack.c.h.b16 %v864
        %v2011 = vunpack.c.l.b16 %v865
        %v2012 = vunpack.c.h.b16 %v865
        %v2013 = vunpack.c.l.b16 %v866
        %v2014 = vunpack.c.h.b16 %v866
        %v2015 = vunpack.c.l.b16 %v867
        %v2016 = vunpack.c.h.b16 %v867
        %v2017 = vunpack.c.l.b16 %v868
        %v2018 = vunpack.c.h.b16 %v868
        %v2019 = vunpack.c.l.b16 %v869
        %v2020 = vunpack.c.h.b16 %v869
        %v2021 = vunpack.c.l.b16 %v870
        %v2022 = vunpack.c.h.b16 %v870
        %v2023 = vunpack.c.l.b16 %v871
        %v2024 = vunpack.c.h.b16 %v871
        %v2025 = vunpack.c.l.b16 %v872
        %v2026 = vunpack.c.h.b16 %v872
        %v2027 = vunpack.c.l.b16 %v873
        %v2028 = vunpack.c.h.b16 %v873
        %v2029 = vunpack.c.l.b16 %v874
        %v2030 = vunpack.c.h.b16 %v874
        %v2031 = vunpack.c.l.b16 %v875
        %v2032 = vunpack.c.h.b16 %v875
        %v2033 = vunpack.c.l.b16 %v876
        %v2034 = vunpack.c.h.b16 %v876
        %v2035 = vunpack.c.l.b16 %v877
        %v2036 = vunpack.c.h.b16 %v877
        %v2037 = vunpack.c.l.b16 %v878
        %v2038 = vunpack.c.h.b16 %v878
        %v2039 = vunpack.c.l.b16 %v879
        %v2040 = vunpack.c.h.b16 %v879
        %v2041 = vunpack.c.l.b16 %v880
        %v2042 = vunpack.c.h.b16 %v880
        %v2043 = vunpack.c.l.b16 %v881
        %v2044 = vunpack.c.h.b16 %v881
        %v2045 = vunpack.c.l.b16 %v882
        %v2046 = vunpack.c.h.b16 %v882
        %v2047 = vunpack.c.l.b16 %v883
        %v2048 = vunpack.c.h.b16 %v883
        %v2049 = vunpack.c.l.b16 %v884
        %v2050 = vunpack.c.h.b16 %v884
        %v2051 = vunpack.c.l.b16 %v885
        %v2052 = vunpack.c.h.b16 %v885
        %v2053 = vunpack.c.l.b16 %v886
        %v2054 = vunpack.c.h.b16 %v886
        %v2055 = vunpack.c.l.b16 %v887
        %v2056 = vunpack.c.h.b16 %v887
        %v2057 = vunpack.c.l.b16 %v888
        %v2058 = vunpack.c.h.b16 %v888
        %v2059 = vunpack.c.l.b16 %v889
        %v2060 = vunpack.c.h.b16 %v889
        %v2061 = vunpack.c.l.b16 %v890
        %v2062 = vunpack.c.h.b16 %v890
        %v2063 = vunpack.c.l.b16 %v891
        %v2064 = vunpack.c.h.b16 %v891
        %v2065 = vunpack.c.l.b16 %v892
        %v2066 = vunpack.c.h.b16 %v892
        %v2067 = vunpack.c.l.b16 %v893
        %v2068 = vunpack.c.h.b16 %v893
        %v2069 = vunpack.c.l.b16 %v894
        %v2070 = vunpack.c.h.b16 %v894
        %v2071 = vunpack.c.l.b16 %v895
        %v2072 = vunpack.c.h.b16 %v895
        %v2073 = vunpack.c.l.b16 %v896
        %v2074 = vunpack.c.h.b16 %v896
        %v2075 = vunpack.c.l.b16 %v897
        %v2076 = vunpack.c.h.b16 %v897
        %v2077 = vunpack.c.l.b16 %v898
        %v2078 = vunpack.c.h.b16 %v898
        %v2079 = vunpack.c.l.b16 %v899
        %v2080 = vunpack.c.h.b16 %v899
        %v2081 = vunpack.c.l.b16 %v900
        %v2082 = vunpack.c.h.b16 %v900
        %v2083 = vunpack.c.l.b16 %v901
        %v2084 = vunpack.c.h.b16 %v901
        %v2085 = vunpack.c.l.b16 %v902
        %v2086 = vunpack.c.h.b16 %v902
        %v2087 = vunpack.c.l.b16 %v903
        %v2088 = vunpack.c.h.b16 %v903
        %v2089 = vunpack.c.l.b16 %v904
        %v2090 = vunpack.c.h.b16 %v904
        %v2091 = vunpack.c.l.b16 %v905
        %v2092 = vunpack.c.h.b16 %v905
        %v2093 = vunpack.c.l.b16 %v906
        %v2094 = vunpack.c.h.b16 %v906
        %v2095 = vunpack.c.l.b16 %v907
        %v2096 = vunpack.c.h.b16 %v907
        %v2097 = vunpack.c.l.b16 %v908
        %v2098 = vunpack.c.h.b16 %v908
        %v2099 = vunpack.c.l.b16 %v909
        %v2100 = vunpack.c.h.b16 %v909
        %v2101 = vunpack.c.l.b16 %v910
        %v2102 = vunpack.c.h.b16 %v910
        %v2103 = vunpack.c.l.b16 %v911
        %v2104 = vunpack.c.h.b16 %v911
        %v2105 = vunpack.c.l.b16 %v912
        %v2106 = vunpack.c.h.b16 %v912
        %v2107 = vunpack.c.l.b16 %v913
        %v2108 = vunpack.c.h.b16 %v913
        %v2109 = vunpack.c.l.b16 %v914
        %v2110 = vunpack.c.h.b16 %v914
        %v2111 = vunpack.c.l.b16 %v915
        %v2112 = vunpack.c.h.b16 %v915
        %v2113 = vunpack.c.l.b16 %v916
        %v2114 = vunpack.c.h.b16 %v916
        %v2115 = vunpack.c.l.b16 %v917
        %v2116 = vunpack.c.h.b16 %v917
        %v2117 = vunpack.c.l.b16 %v918
        %v2118 = vunpack.c.h.b16 %v918
        %v2119 = vunpack.c.l.b16 %v919
        %v2120 = vunpack.c.h.b16 %v919
        %v2121 = vunpack.c.l.b16 %v920
        %v2122 = vunpack.c.h.b16 %v920
        %v2123 = vunpack.c.l.b16 %v921
        %v2124 = vunpack.c.h.b16 %v921
        %v2125 = vunpack.c.l.b16 %v922
        %v2126 = vunpack.c.h.b16 %v922
        %v2127 = vunpack.c.l.b16 %v923
        %v2128 = vunpack.c.h.b16 %v923
        %v2129 = vunpack.c.l.b16 %v924
        %v2130 = vunpack.c.h.b16 %v924
        %v2131 = vunpack.c.l.b16 %v925
        %v2132 = vunpack.c.h.b16 %v925
        %v2133 = vunpack.c.l.b16 %v926
        %v2134 = vunpack.c.h.b16 %v926
        %v2135 = vunpack.c.l.b16 %v927
        %v2136 = vunpack.c.h.b16 %v927
        %v2137 = vunpack.c.l.b16 %v928
        %v2138 = vunpack.c.h.b16 %v928
        %v2139 = vunpack.c.l.b16 %v929
        %v2140 = vunpack.c.h.b16 %v929
        %v2141 = vunpack.c.l.b16 %v930
        %v2142 = vunpack.c.h.b16 %v930
        %v2143 = vunpack.c.l.b16 %v931
        %v2144 = vunpack.c.h.b16 %v931
        %v2145 = vunpack.c.l.b16 %v932
        %v2146 = vunpack.c.h.b16 %v932
        %v2147 = vunpack.c.l.b16 %v933
        %v2148 = vunpack.c.h.b16 %v933
        %v2149 = vunpack.c.l.b16 %v934
        %v2150 = vunpack.c.h.b16 %v934
        %v2151 = vunpack.c.l.b16 %v935
        %v2152 = vunpack.c.h.b16 %v935
        %v2153 = vunpack.c.l.b16 %v936
        %v2154 = vunpack.c.h.b16 %v936
        %v2155 = vunpack.c.l.b16 %v937
        %v2156 = vunpack.c.h.b16 %v937
        %v2157 = vunpack.c.l.b16 %v938
        %v2158 = vunpack.c.h.b16 %v938
        %v2159 = vunpack.c.l.b16 %v939
        %v2160 = vunpack.c.h.b16 %v939
        %v2161 = vunpack.c.l.b16 %v940
        %v2162 = vunpack.c.h.b16 %v940
        %v2163 = vunpack.c.l.b16 %v941
        %v2164 = vunpack.c.h.b16 %v941
        %v2165 = vunpack.c.l.b16 %v942
        %v2166 = vunpack.c.h.b16 %v942
        %v2167 = vunpack.c.l.b16 %v943
        %v2168 = vunpack.c.h.b16 %v943
        %v2169 = vunpack.c.l.b16 %v944
        %v2170 = vunpack.c.h.b16 %v944
        %v2171 = vunpack.c.l.b16 %v945
        %v2172 = vunpack.c.h.b16 %v945
        %v2173 = vunpack.c.l.b16 %v946
        %v2174 = vunpack.c.h.b16 %v946
        %v2175 = vunpack.c.l.b16 %v947
        %v2176 = vunpack.c.h.b16 %v947
        %v2177 = vunpack.c.l.b16 %v948
        %v2178 = vunpack.c.h.b16 %v948
        %v2179 = vunpack.c.l.b16 %v949
        %v2180 = vunpack.c.h.b16 %v949
        %v2181 = vunpack.c.l.b16 %v950
        %v2182 = vunpack.c.h.b16 %v950
        %v2183 = vunpack.c.l.b16 %v951
        %v2184 = vunpack.c.h.b16 %v951
        %v2185 = vunpack.c.l.b16 %v952
        %v2186 = vunpack.c.h.b16 %v952
        %v2187 = vunpack.c.l.b16 %v953
        %v2188 = vunpack.c.h.b16 %v953
        %v2189 = vunpack.c.l.b16 %v954
        %v2190 = vunpack.c.h.b16 %v954
        %v2191 = vunpack.c.l.b16 %v955
        %v2192 = vunpack.c.h.b16 %v955
        %v2193 = vunpack.c.l.b16 %v956
        %v2194 = vunpack.c.h.b16 %v956
        %v2195 = vunpack.c.l.b16 %v957
        %v2196 = vunpack.c.h.b16 %v957
        %v2197 = vunpack.c.l.b16 %v958
        %v2198 = vunpack.c.h.b16 %v958
        %v2199 = vunpack.c.l.b16 %v959
        %v2200 = vunpack.c.h.b16 %v959
        %v2201 = vunpack.c.l.b16 %v960
        %v2202 = vunpack.c.h.b16 %v960
        %v2203 = vunpack.c.l.b16 %v961
        %v2204 = vunpack.c.h.b16 %v961
        %v2205 = vunpack.c.l.b16 %v962
        %v2206 = vunpack.c.h.b16 %v962
        %v2207 = vunpack.c.l.b16 %v963
        %v2208 = vunpack.c.h.b16 %v963
        %v2209 = vunpack.c.l.b16 %v964
        %v2210 = vunpack.c.h.b16 %v964
        %v2211 = vunpack.c.l.b16 %v965
        %v2212 = vunpack.c.h.b16 %v965
        %v2213 = vunpack.c.l.b16 %v966
        %v2214 = vunpack.c.h.b16 %v966
        %v2215 = vunpack.c.l.b16 %v967
        %v2216 = vunpack.c.h.b16 %v967
        %v2217 = vunpack.c.l.b16 %v968
        %v2218 = vunpack.c.h.b16 %v968
        %v2219 = vunpack.c.l.b16 %v969
        %v2220 = vunpack.c.h.b16 %v969
        %v2221 = vunpack.c.l.b16 %v970
        %v2222 = vunpack.c.h.b16 %v970
        %v2223 = vunpack.c.l.b16 %v971
        %v2224 = vunpack.c.h.b16 %v971
        %v2225 = vunpack.c.l.b16 %v972
        %v2226 = vunpack.c.h.b16 %v972
        %v2227 = vunpack.c.l.b16 %v973
        %v2228 = vunpack.c.h.b16 %v973
        %v2229 = vunpack.c.l.b16 %v974
        %v2230 = vunpack.c.h.b16 %v974
        %v2231 = vunpack.c.l.b16 %v975
        %v2232 = vunpack.c.h.b16 %v975
        %v2233 = vunpack.c.l.b16 %v976
        %v2234 = vunpack.c.h.b16 %v976
        %v2235 = vunpack.c.l.b16 %v977
        %v2236 = vunpack.c.h.b16 %v977
        %v2237 = vunpack.c.l.b16 %v978
        %v2238 = vunpack.c.h.b16 %v978
        %v2239 = vunpack.c.l.b16 %v979
        %v2240 = vunpack.c.h.b16 %v979
        %v2241 = vunpack.c.l.b16 %v980
        %v2242 = vunpack.c.h.b16 %v980
        %v2243 = vunpack.c.l.b16 %v981
        %v2244 = vunpack.c.h.b16 %v981
        %v2245 = vunpack.c.l.b16 %v982
        %v2246 = vunpack.c.h.b16 %v982
        %v2247 = vunpack.c.l.b16 %v983
        %v2248 = vunpack.c.h.b16 %v983
        %v2249 = vunpack.c.l.b16 %v984
        %v2250 = vunpack.c.h.b16 %v984
        %v2251 = vunpack.c.l.b16 %v985
        %v2252 = vunpack.c.h.b16 %v985
        %v2253 = vunpack.c.l.b16 %v986
        %v2254 = vunpack.c.h.b16 %v986
        %v2255 = vunpack.c.l.b16 %v987
        %v2256 = vunpack.c.h.b16 %v987
        %v2257 = vunpack.c.l.b16 %v988
        %v2258 = vunpack.c.h.b16 %v988
        %v2259 = vunpack.c.l.b16 %v989
        %v2260 = vunpack.c.h.b16 %v989
        %v2261 = vunpack.c.l.b16 %v990
        %v2262 = vunpack.c.h.b16 %v990
        %v2263 = vunpack.c.l.b16 %v991
        %v2264 = vunpack.c.h.b16 %v991
        %v2265 = vunpack.c.l.b16 %v992
        %v2266 = vunpack.c.h.b16 %v992
        %v2267 = vunpack.c.l.b16 %v993
        %v2268 = vunpack.c.h.b16 %v993
        %v2269 = vunpack.c.l.b16 %v994
        %v2270 = vunpack.c.h.b16 %v994
        %v2271 = vunpack.c.l.b16 %v995
        %v2272 = vunpack.c.h.b16 %v995
        %v2273 = vunpack.c.l.b16 %v996
        %v2274 = vunpack.c.h.b16 %v996
        %v2275 = vunpack.c.l.b16 %v997
        %v2276 = vunpack.c.h.b16 %v997
        %v2277 = vunpack.c.l.b16 %v998
        %v2278 = vunpack.c.h.b16 %v998
        %v2279 = vunpack.c.l.b16 %v999
        %v2280 = vunpack.c.h.b16 %v999
        %v2281 = vunpack.c.l.b16 %v1000
        %v2282 = vunpack.c.h.b16 %v1000
        %v2283 = vunpack.c.l.b16 %v1001
        %v2284 = vunpack.c.h.b16 %v1001
        %v2285 = vunpack.c.l.b16 %v1002
        %v2286 = vunpack.c.h.b16 %v1002
        %v2287 = vunpack.c.l.b16 %v1003
        %v2288 = vunpack.c.h.b16 %v1003
        %v2289 = vunpack.c.l.b16 %v1004
        %v2290 = vunpack.c.h.b16 %v1004
        %v2291 = vunpack.c.l.b16 %v1005
        %v2292 = vunpack.c.h.b16 %v1005
        %v2293 = vunpack.c.l.b16 %v1006
        %v2294 = vunpack.c.h.b16 %v1006
        %v2295 = vunpack.c.l.b16 %v1007
        %v2296 = vunpack.c.h.b16 %v1007
        %v2297 = vunpack.c.l.b16 %v1008
        %v2298 = vunpack.c.h.b16 %v1008
        %v2299 = vunpack.c.l.b16 %v1009
        %v2300 = vunpack.c.h.b16 %v1009
        %v2301 = vunpack.c.l.b16 %v1010
        %v2302 = vunpack.c.h.b16 %v1010
        %v2303 = vunpack.c.l.b16 %v1011
        %v2304 = vunpack.c.h.b16 %v1011
        %v2305 = vunpack.c.l.b16 %v1012
        %v2306 = vunpack.c.h.b16 %v1012
        %v2307 = vunpack.c.l.b16 %v1013
        %v2308 = vunpack.c.h.b16 %v1013
        %v2309 = vunpack.c.l.b16 %v1014
        %v2310 = vunpack.c.h.b16 %v1014
        %v2311 = vunpack.c.l.b16 %v1015
        %v2312 = vunpack.c.h.b16 %v1015
        %v2313 = vunpack.c.l.b16 %v1016
        %v2314 = vunpack.c.h.b16 %v1016
        %v2315 = vunpack.c.l.b16 %v1017
        %v2316 = vunpack.c.h.b16 %v1017
        %v2317 = vunpack.c.l.b16 %v1018
        %v2318 = vunpack.c.h.b16 %v1018
        %v2319 = vunpack.c.l.b16 %v1019
        %v2320 = vunpack.c.h.b16 %v1019
        %v2321 = vunpack.c.l.b16 %v1020
        %v2322 = vunpack.c.h.b16 %v1020
        %v2323 = vunpack.c.l.b16 %v1021
        %v2324 = vunpack.c.h.b16 %v1021
        %v2325 = vunpack.c.l.b16 %v1022
        %v2326 = vunpack.c.h.b16 %v1022
        %v2327 = vunpack.c.l.b16 %v1023
        %v2328 = vunpack.c.h.b16 %v1023
        %v2329 = vunpack.c.l.b16 %v1024
        %v2330 = vunpack.c.h.b16 %v1024
        %v2331 = vunpack.c.l.b16 %v1025
        %v2332 = vunpack.c.h.b16 %v1025
        %v2333 = vunpack.c.l.b16 %v1026
        %v2334 = vunpack.c.h.b16 %v1026
        %v2335 = vunpack.c.l.b16 %v1027
        %v2336 = vunpack.c.h.b16 %v1027
        %v2337 = vunpack.c.l.b16 %v1028
        %v2338 = vunpack.c.h.b16 %v1028
        %v2339 = vunpack.c.l.b16 %v1029
        %v2340 = vunpack.c.h.b16 %v1029
        %v2341 = vunpack.c.l.b16 %v1030
        %v2342 = vunpack.c.h.b16 %v1030
        %v2343 = vunpack.c.l.b16 %v1031
        %v2344 = vunpack.c.h.b16 %v1031
        %v2345 = vunpack.c.l.b16 %v1032
        %v2346 = vunpack.c.h.b16 %v1032
        %v2347 = vunpack.c.l.b16 %v1033
        %v2348 = vunpack.c.h.b16 %v1033
        %v2349 = vunpack.c.l.b16 %v1034
        %v2350 = vunpack.c.h.b16 %v1034
        %v2351 = vunpack.c.l.b16 %v1035
        %v2352 = vunpack.c.h.b16 %v1035
        %v2353 = vunpack.c.l.b16 %v1036
        %v2354 = vunpack.c.h.b16 %v1036
        %v2355 = vunpack.c.l.b16 %v1037
        %v2356 = vunpack.c.h.b16 %v1037
        %v2357 = vunpack.c.l.b16 %v1038
        %v2358 = vunpack.c.h.b16 %v1038
        %v2359 = vunpack.c.l.b16 %v1039
        %v2360 = vunpack.c.h.b16 %v1039
        %v2361 = vunpack.c.l.b16 %v1040
        %v2362 = vunpack.c.h.b16 %v1040
        %v2363 = vunpack.c.l.b16 %v1041
        %v2364 = vunpack.c.h.b16 %v1041
        %v2365 = vunpack.c.l.b16 %v1042
        %v2366 = vunpack.c.h.b16 %v1042
        %v2367 = vunpack.c.l.b16 %v1043
        %v2368 = vunpack.c.h.b16 %v1043
        %v2369 = vunpack.c.l.b16 %v1044
        %v2370 = vunpack.c.h.b16 %v1044
        %v2371 = vunpack.c.l.b16 %v1045
        %v2372 = vunpack.c.h.b16 %v1045
        %v2373 = vunpack.c.l.b16 %v1046
        %v2374 = vunpack.c.h.b16 %v1046
        %v2375 = vunpack.c.l.b16 %v1047
        %v2376 = vunpack.c.h.b16 %v1047
        %v2377 = vunpack.c.l.b16 %v1048
        %v2378 = vunpack.c.h.b16 %v1048
        %v2379 = vunpack.c.l.b16 %v1049
        %v2380 = vunpack.c.h.b16 %v1049
        %v2381 = vunpack.c.l.b16 %v1050
        %v2382 = vunpack.c.h.b16 %v1050
        %v2383 = vunpack.c.l.b16 %v1051
        %v2384 = vunpack.c.h.b16 %v1051
        %v2385 = vunpack.c.l.b16 %v1052
        %v2386 = vunpack.c.h.b16 %v1052
        %v2387 = vunpack.c.l.b16 %v1053
        %v2388 = vunpack.c.h.b16 %v1053
        %v2389 = vunpack.c.l.b16 %v1054
        %v2390 = vunpack.c.h.b16 %v1054
        %v2391 = vunpack.c.l.b16 %v1055
        %v2392 = vunpack.c.h.b16 %v1055
        %v2393 = vunpack.c.l.b16 %v1056
        %v2394 = vunpack.c.h.b16 %v1056
        %v2395 = vunpack.c.l.b16 %v1057
        %v2396 = vunpack.c.h.b16 %v1057
        %v2397 = vunpack.c.l.b16 %v1058
        %v2398 = vunpack.c.h.b16 %v1058
        %v2399 = vunpack.c.l.b16 %v1059
        %v2400 = vunpack.c.h.b16 %v1059
        %v2401 = vunpack.c.l.b16 %v1060
        %v2402 = vunpack.c.h.b16 %v1060
        %v2403 = vunpack.c.l.b16 %v1061
        %v2404 = vunpack.c.h.b16 %v1061
        %v2405 = vunpack.c.l.b16 %v1062
        %v2406 = vunpack.c.h.b16 %v1062
        %v2407 = vunpack.c.l.b16 %v1063
        %v2408 = vunpack.c.h.b16 %v1063
        %v2409 = vunpack.c.l.b16 %v1064
        %v2410 = vunpack.c.h.b16 %v1064
        %v2411 = vunpack.c.l.b16 %v1065
        %v2412 = vunpack.c.h.b16 %v1065
        %v2413 = vunpack.c.l.b16 %v1066
        %v2414 = vunpack.c.h.b16 %v1066
        %v2415 = vunpack.c.l.b16 %v1067
        %v2416 = vunpack.c.h.b16 %v1067
        %v2417 = vunpack.c.l.b16 %v1068
        %v2418 = vunpack.c.h.b16 %v1068
        %v2419 = vunpack.c.l.b16 %v1069
        %v2420 = vunpack.c.h.b16 %v1069
        %v2421 = vunpack.c.l.b16 %v1070
        %v2422 = vunpack.c.h.b16 %v1070
        %v2423 = vunpack.c.l.b16 %v1071
        %v2424 = vunpack.c.h.b16 %v1071
        %v2425 = vunpack.c.l.b16 %v1072
        %v2426 = vunpack.c.h.b16 %v1072
        %v2427 = vunpack.c.l.b16 %v1073
        %v2428 = vunpack.c.h.b16 %v1073
        %v2429 = vunpack.c.l.b16 %v1074
        %v2430 = vunpack.c.h.b16 %v1074
        %v2431 = vunpack.c.l.b16 %v1075
        %v2432 = vunpack.c.h.b16 %v1075
        %v2433 = vunpack.c.l.b16 %v1076
        %v2434 = vunpack.c.h.b16 %v1076
        %v2435 = vunpack.c.l.b16 %v1077
        %v2436 = vunpack.c.h.b16 %v1077
        %v2437 = vunpack.c.l.b16 %v1078
        %v2438 = vunpack.c.h.b16 %v1078
        %v2439 = vunpack.c.l.b16 %v1079
        %v2440 = vunpack.c.h.b16 %v1079
        %v2441 = vunpack.c.l.b16 %v1080
        %v2442 = vunpack.c.h.b16 %v1080
        %v2443 = vunpack.c.l.b16 %v1081
        %v2444 = vunpack.c.h.b16 %v1081
        %v2445 = vunpack.c.l.b16 %v1082
        %v2446 = vunpack.c.h.b16 %v1082
        %v2447 = vunpack.c.l.b16 %v1083
        %v2448 = vunpack.c.h.b16 %v1083
        %v2449 = vunpack.c.l.b16 %v1084
        %v2450 = vunpack.c.h.b16 %v1084
        %v2451 = vunpack.c.l.b16 %v1085
        %v2452 = vunpack.c.h.b16 %v1085
        %v2453 = vunpack.c.l.b16 %v1086
        %v2454 = vunpack.c.h.b16 %v1086
        %v2455 = vunpack.c.l.b16 %v1087
        %v2456 = vunpack.c.h.b16 %v1087
        %v2457 = vunpack.c.l.b16 %v1088
        %v2458 = vunpack.c.h.b16 %v1088
        %v2459 = vunpack.c.l.b16 %v1089
        %v2460 = vunpack.c.h.b16 %v1089
        %v2461 = vunpack.c.l.b16 %v1090
        %v2462 = vunpack.c.h.b16 %v1090
        %v2463 = vunpack.c.l.b16 %v1091
        %v2464 = vunpack.c.h.b16 %v1091
        %v2465 = vunpack.c.l.b16 %v1092
        %v2466 = vunpack.c.h.b16 %v1092
        %v2467 = vunpack.c.l.b16 %v1093
        %v2468 = vunpack.c.h.b16 %v1093
        %v2469 = vunpack.c.l.b16 %v1094
        %v2470 = vunpack.c.h.b16 %v1094
        %v2471 = vunpack.c.l.b16 %v1095
        %v2472 = vunpack.c.h.b16 %v1095
        %v2473 = vunpack.c.l.b16 %v1096
        %v2474 = vunpack.c.h.b16 %v1096
        %v2475 = vunpack.c.l.b16 %v1097
        %v2476 = vunpack.c.h.b16 %v1097
        %v2477 = vunpack.c.l.b16 %v1098
        %v2478 = vunpack.c.h.b16 %v1098
        %v2479 = vunpack.c.l.b16 %v1099
        %v2480 = vunpack.c.h.b16 %v1099
        %v2481 = vunpack.c.l.b16 %v1100
        %v2482 = vunpack.c.h.b16 %v1100
        %v2483 = vunpack.c.l.b16 %v1101
        %v2484 = vunpack.c.h.b16 %v1101
        %v2485 = vunpack.c.l.b16 %v1102
        %v2486 = vunpack.c.h.b16 %v1102
        %v2487 = vunpack.c.l.b16 %v1103
        %v2488 = vunpack.c.h.b16 %v1103
        %v2489 = vunpack.c.l.b16 %v1104
        %v2490 = vunpack.c.h.b16 %v1104
        %v2491 = vunpack.c.l.b16 %v1105
        %v2492 = vunpack.c.h.b16 %v1105
        %v2493 = vunpack.c.l.b16 %v1106
        %v2494 = vunpack.c.h.b16 %v1106
        %v2495 = vunpack.c.l.b16 %v1107
        %v2496 = vunpack.c.h.b16 %v1107
        %v2497 = vunpack.c.l.b16 %v1108
        %v2498 = vunpack.c.h.b16 %v1108
        %v2499 = vunpack.c.l.b16 %v1109
        %v2500 = vunpack.c.h.b16 %v1109
        %v2501 = vunpack.c.l.b16 %v1110
        %v2502 = vunpack.c.h.b16 %v1110
        %v2503 = vunpack.c.l.b16 %v1111
        %v2504 = vunpack.c.h.b16 %v1111
        %v2505 = vunpack.c.l.b16 %v1112
        %v2506 = vunpack.c.h.b16 %v1112
        %v2507 = vunpack.c.l.b16 %v1113
        %v2508 = vunpack.c.h.b16 %v1113
        %v2509 = vunpack.c.l.b16 %v1114
        %v2510 = vunpack.c.h.b16 %v1114
        %v2511 = vunpack.c.l.b16 %v1115
        %v2512 = vunpack.c.h.b16 %v1115
        %v2513 = vunpack.c.l.b16 %v1116
        %v2514 = vunpack.c.h.b16 %v1116
        %v2515 = vunpack.c.l.b16 %v1117
        %v2516 = vunpack.c.h.b16 %v1117
        %v2517 = vunpack.c.l.b16 %v1118
        %v2518 = vunpack.c.h.b16 %v1118
        %v2519 = vunpack.c.l.b16 %v1119
        %v2520 = vunpack.c.h.b16 %v1119
        %v2521 = vunpack.c.l.b16 %v1120
        %v2522 = vunpack.c.h.b16 %v1120
        %v2523 = vunpack.c.l.b16 %v1121
        %v2524 = vunpack.c.h.b16 %v1121
        %v2525 = vunpack.c.l.b16 %v1122
        %v2526 = vunpack.c.h.b16 %v1122
        %v2527 = vunpack.c.l.b16 %v1123
        %v2528 = vunpack.c.h.b16 %v1123
        %v2529 = vunpack.c.l.b16 %v1124
        %v2530 = vunpack.c.h.b16 %v1124
        %v2531 = vunpack.c.l.b16 %v1125
        %v2532 = vunpack.c.h.b16 %v1125
        %v2533 = vunpack.c.l.b16 %v1126
        %v2534 = vunpack.c.h.b16 %v1126
        %v2535 = vunpack.c.l.b16 %v1127
        %v2536 = vunpack.c.h.b16 %v1127
        %v2537 = vunpack.c.l.b16 %v1128
        %v2538 = vunpack.c.h.b16 %v1128
        %v2539 = vunpack.c.l.b16 %v1129
        %v2540 = vunpack.c.h.b16 %v1129
        %v2541 = vunpack.c.l.b16 %v1130
        %v2542 = vunpack.c.h.b16 %v1130
        %v2543 = vunpack.c.l.b16 %v1131
        %v2544 = vunpack.c.h.b16 %v1131
        %v2545 = vunpack.c.l.b16 %v1132
        %v2546 = vunpack.c.h.b16 %v1132
        %v2547 = vunpack.c.l.b16 %v1133
        %v2548 = vunpack.c.h.b16 %v1133
        %v2549 = vunpack.c.l.b16 %v1134
        %v2550 = vunpack.c.h.b16 %v1134
        %v2551 = vunpack.c.l.b16 %v1135
        %v2552 = vunpack.c.h.b16 %v1135
        %v2553 = vunpack.c.l.b16 %v1136
        %v2554 = vunpack.c.h.b16 %v1136
        %v2555 = vunpack.c.l.b16 %v1137
        %v2556 = vunpack.c.h.b16 %v1137
        %v2557 = vunpack.c.l.b16 %v1138
        %v2558 = vunpack.c.h.b16 %v1138
        %v2559 = vunpack.c.l.b16 %v1139
        %v2560 = vunpack.c.h.b16 %v1139
        %v2561 = vunpack.c.l.b16 %v1140
        %v2562 = vunpack.c.h.b16 %v1140
        %v2563 = vunpack.c.l.b16 %v1141
        %v2564 = vunpack.c.h.b16 %v1141
        %v2565 = vunpack.c.l.b16 %v1142
        %v2566 = vunpack.c.h.b16 %v1142
        %v2567 = vunpack.c.l.b16 %v1143
        %v2568 = vunpack.c.h.b16 %v1143
        %v2569 = vunpack.c.l.b16 %v1144
        %v2570 = vunpack.c.h.b16 %v1144
        %v2571 = vunpack.c.l.b16 %v1145
        %v2572 = vunpack.c.h.b16 %v1145
        %v2573 = vunpack.c.l.b16 %v1146
        %v2574 = vunpack.c.h.b16 %v1146
        %v2575 = vunpack.c.l.b16 %v1147
        %v2576 = vunpack.c.h.b16 %v1147
        %v2577 = vunpack.c.l.b16 %v1148
        %v2578 = vunpack.c.h.b16 %v1148
        %v2579 = vunpack.c.l.b16 %v1149
        %v2580 = vunpack.c.h.b16 %v1149
        %v2581 = vunpack.c.l.b16 %v1150
        %v2582 = vunpack.c.h.b16 %v1150
        %v2583 = vunpack.c.l.b16 %v1151
        %v2584 = vunpack.c.h.b16 %v1151
        %v2585 = vunpack.c.l.b16 %v1152
        %v2586 = vunpack.c.h.b16 %v1152
        %v2587 = vunpack.c.l.b16 %v1153
        %v2588 = vunpack.c.h.b16 %v1153
        %v2589 = vunpack.c.l.b16 %v1154
        %v2590 = vunpack.c.h.b16 %v1154
        %v2591 = vunpack.c.l.b16 %v1155
        %v2592 = vunpack.c.h.b16 %v1155
        %v2593 = vunpack.c.l.b16 %v1156
        %v2594 = vunpack.c.h.b16 %v1156
        %v2595 = vunpack.c.l.b16 %v1157
        %v2596 = vunpack.c.h.b16 %v1157
        %v2597 = vunpack.c.l.b16 %v1158
        %v2598 = vunpack.c.h.b16 %v1158
        %v2599 = vunpack.c.l.b16 %v1159
        %v2600 = vunpack.c.h.b16 %v1159
        %v2601 = vunpack.c.l.b16 %v1160
        %v2602 = vunpack.c.h.b16 %v1160
        %v2603 = vunpack.c.l.b16 %v1161
        %v2604 = vunpack.c.h.b16 %v1161
        %v2605 = vunpack.c.l.b16 %v1162
        %v2606 = vunpack.c.h.b16 %v1162
        %v2607 = vunpack.c.l.b16 %v1163
        %v2608 = vunpack.c.h.b16 %v1163
        %v2609 = vunpack.c.l.b16 %v1164
        %v2610 = vunpack.c.h.b16 %v1164
        %v2611 = vunpack.c.l.b16 %v1165
        %v2612 = vunpack.c.h.b16 %v1165
        %v2613 = vunpack.c.l.b16 %v1166
        %v2614 = vunpack.c.h.b16 %v1166
        %v2615 = vunpack.c.l.b16 %v1167
        %v2616 = vunpack.c.h.b16 %v1167
        %v2617 = vunpack.c.l.b16 %v1168
        %v2618 = vunpack.c.h.b16 %v1168
        %v2619 = vunpack.c.l.b16 %v1169
        %v2620 = vunpack.c.h.b16 %v1169
        %v2621 = vunpack.c.l.b16 %v1170
        %v2622 = vunpack.c.h.b16 %v1170
        %v2623 = vunpack.c.l.b16 %v1171
        %v2624 = vunpack.c.h.b16 %v1171
        %v2625 = vunpack.c.l.b16 %v1172
        %v2626 = vunpack.c.h.b16 %v1172
        %v2627 = vunpack.c.l.b16 %v1173
        %v2628 = vunpack.c.h.b16 %v1173
        %v2629 = vunpack.c.l.b16 %v1174
        %v2630 = vunpack.c.h.b16 %v1174
        %v2631 = vunpack.c.l.b16 %v1175
        %v2632 = vunpack.c.h.b16 %v1175
        %v2633 = vunpack.c.l.b16 %v1176
        %v2634 = vunpack.c.h.b16 %v1176
        %v2635 = vunpack.c.l.b16 %v1177
        %v2636 = vunpack.c.h.b16 %v1177
        %v2637 = vunpack.c.l.b16 %v1178
        %v2638 = vunpack.c.h.b16 %v1178
        %v2639 = vunpack.c.l.b16 %v1179
        %v2640 = vunpack.c.h.b16 %v1179
        %v2641 = vunpack.c.l.b16 %v1180
        %v2642 = vunpack.c.h.b16 %v1180
        %v2643 = vunpack.c.l.b16 %v1181
        %v2644 = vunpack.c.h.b16 %v1181
        %v2645 = vunpack.c.l.b16 %v1182
        %v2646 = vunpack.c.h.b16 %v1182
        %v2647 = vunpack.c.l.b16 %v1183
        %v2648 = vunpack.c.h.b16 %v1183
        %v2649 = vunpack.c.l.b16 %v1184
        %v2650 = vunpack.c.h.b16 %v1184
        %v2651 = vunpack.c.l.b16 %v1185
        %v2652 = vunpack.c.h.b16 %v1185
        %v2653 = vunpack.c.l.b16 %v1186
        %v2654 = vunpack.c.h.b16 %v1186
        %v2655 = vunpack.c.l.b16 %v1187
        %v2656 = vunpack.c.h.b16 %v1187
        %v2657 = vunpack.c.l.b16 %v1188
        %v2658 = vunpack.c.h.b16 %v1188
        %v2659 = vunpack.c.l.b16 %v1189
        %v2660 = vunpack.c.h.b16 %v1189
        %v2661 = vunpack.c.l.b16 %v1190
        %v2662 = vunpack.c.h.b16 %v1190
        %v2663 = vunpack.c.l.b16 %v1191
        %v2664 = vunpack.c.h.b16 %v1191
        %v2665 = vunpack.c.l.b16 %v1192
        %v2666 = vunpack.c.h.b16 %v1192
        %v2667 = vunpack.c.l.b16 %v1193
        %v2668 = vunpack.c.h.b16 %v1193
        %v2669 = vunpack.c.l.b16 %v1194
        %v2670 = vunpack.c.h.b16 %v1194
        %v2671 = vunpack.c.l.b16 %v1195
        %v2672 = vunpack.c.h.b16 %v1195
        %v2673 = vunpack.c.l.b16 %v1196
        %v2674 = vunpack.c.h.b16 %v1196
        %v2675 = vunpack.c.l.b16 %v1197
        %v2676 = vunpack.c.h.b16 %v1197
        %v2677 = vunpack.c.l.b16 %v1198
        %v2678 = vunpack.c.h.b16 %v1198
        %v2679 = vunpack.c.l.b16 %v1199
        %v2680 = vunpack.c.h.b16 %v1199
        %v2681 = vunpack.c.l.b16 %v1200
        %v2682 = vunpack.c.h.b16 %v1200
        %v2683 = vunpack.c.l.b16 %v1201
        %v2684 = vunpack.c.h.b16 %v1201
        %v2685 = vunpack.c.l.b16 %v1202
        %v2686 = vunpack.c.h.b16 %v1202
        %v2687 = vunpack.c.l.b16 %v1203
        %v2688 = vunpack.c.h.b16 %v1203
        %v2689 = vunpack.c.l.b16 %v1204
        %v2690 = vunpack.c.h.b16 %v1204
        %v2691 = vunpack.c.l.b16 %v1205
        %v2692 = vunpack.c.h.b16 %v1205
        %v2693 = vunpack.c.l.b16 %v1206
        %v2694 = vunpack.c.h.b16 %v1206
        %v2695 = vunpack.c.l.b16 %v1207
        %v2696 = vunpack.c.h.b16 %v1207
        %v2697 = vunpack.c.l.b16 %v1208
        %v2698 = vunpack.c.h.b16 %v1208
        %v2699 = vunpack.c.l.b16 %v1209
        %v2700 = vunpack.c.h.b16 %v1209
        %v2701 = vunpack.c.l.b16 %v1210
        %v2702 = vunpack.c.h.b16 %v1210
        %v2703 = vunpack.c.l.b16 %v1211
        %v2704 = vunpack.c.h.b16 %v1211
        %v2705 = vunpack.c.l.b16 %v1212
        %v2706 = vunpack.c.h.b16 %v1212
        %v2707 = vunpack.c.l.b16 %v1213
        %v2708 = vunpack.c.h.b16 %v1213
        %v2709 = vunpack.c.l.b16 %v1214
        %v2710 = vunpack.c.h.b16 %v1214
        %v2711 = vunpack.c.l.b16 %v1215
        %v2712 = vunpack.c.h.b16 %v1215
        %v2713 = vunpack.c.l.b16 %v1216
        %v2714 = vunpack.c.h.b16 %v1216
        %v2715 = vunpack.c.l.b16 %v1217
        %v2716 = vunpack.c.h.b16 %v1217
        %v2717 = vunpack.c.l.b16 %v1218
        %v2718 = vunpack.c.h.b16 %v1218
        %v2719 = vunpack.c.l.b16 %v1219
        %v2720 = vunpack.c.h.b16 %v1219
        %v2721 = vunpack.c.l.b16 %v1220
        %v2722 = vunpack.c.h.b16 %v1220
        %v2723 = vunpack.c.l.b16 %v1221
        %v2724 = vunpack.c.h.b16 %v1221
        %v2725 = vunpack.c.l.b16 %v1222
        %v2726 = vunpack.c.h.b16 %v1222
        %v2727 = vunpack.c.l.b16 %v1223
        %v2728 = vunpack.c.h.b16 %v1223
        %v2729 = vunpack.c.l.b16 %v1224
        %v2730 = vunpack.c.h.b16 %v1224
        %v2731 = vunpack.c.l.b16 %v1225
        %v2732 = vunpack.c.h.b16 %v1225
        %v2733 = vunpack.c.l.b16 %v1226
        %v2734 = vunpack.c.h.b16 %v1226
        %v2735 = vunpack.c.l.b16 %v1227
        %v2736 = vunpack.c.h.b16 %v1227
        %v2737 = vunpack.c.l.b16 %v1228
        %v2738 = vunpack.c.h.b16 %v1228
        %v2739 = vunpack.c.l.b16 %v1229
        %v2740 = vunpack.c.h.b16 %v1229
        %v2741 = vunpack.c.l.b16 %v1230
        %v2742 = vunpack.c.h.b16 %v1230
        %v2743 = vunpack.c.l.b16 %v1231
        %v2744 = vunpack.c.h.b16 %v1231
        %v2745 = vunpack.c.l.b16 %v1232
        %v2746 = vunpack.c.h.b16 %v1232
        %v2747 = vunpack.c.l.b16 %v1233
        %v2748 = vunpack.c.h.b16 %v1233
        %v2749 = vunpack.c.l.b16 %v1234
        %v2750 = vunpack.c.h.b16 %v1234
        %v2751 = vunpack.c.l.b16 %v1235
        %v2752 = vunpack.c.h.b16 %v1235
        %v2753 = vunpack.c.l.b16 %v1236
        %v2754 = vunpack.c.h.b16 %v1236
        %v2755 = vunpack.c.l.b16 %v1237
        %v2756 = vunpack.c.h.b16 %v1237
        %v2757 = vunpack.c.l.b16 %v1238
        %v2758 = vunpack.c.h.b16 %v1238
        %v2759 = vunpack.c.l.b16 %v1239
        %v2760 = vunpack.c.h.b16 %v1239
        %v2761 = vunpack.c.l.b16 %v1240
        %v2762 = vunpack.c.h.b16 %v1240
        %v2763 = vunpack.c.l.b16 %v1241
        %v2764 = vunpack.c.h.b16 %v1241
        %v2765 = vunpack.c.l.b16 %v1242
        %v2766 = vunpack.c.h.b16 %v1242
        %v2767 = vunpack.c.l.b16 %v1243
        %v2768 = vunpack.c.h.b16 %v1243
        %v2769 = vunpack.c.l.b16 %v1244
        %v2770 = vunpack.c.h.b16 %v1244
        %v2771 = vunpack.c.l.b16 %v1245
        %v2772 = vunpack.c.h.b16 %v1245
        %v2773 = vunpack.c.l.b16 %v1246
        %v2774 = vunpack.c.h.b16 %v1246
        %v2775 = vunpack.c.l.b16 %v1247
        %v2776 = vunpack.c.h.b16 %v1247
        %v2777 = vunpack.c.l.b16 %v1248
        %v2778 = vunpack.c.h.b16 %v1248
        %v2779 = vunpack.c.l.b16 %v1249
        %v2780 = vunpack.c.h.b16 %v1249
        %v2781 = vunpack.c.l.b16 %v1250
        %v2782 = vunpack.c.h.b16 %v1250
        %v2783 = vunpack.c.l.b16 %v1251
        %v2784 = vunpack.c.h.b16 %v1251
        %v2785 = vunpack.c.l.b16 %v1252
        %v2786 = vunpack.c.h.b16 %v1252
        %v2787 = vunpack.c.l.b16 %v1253
        %v2788 = vunpack.c.h.b16 %v1253
        %v2789 = vunpack.c.l.b16 %v1254
        %v2790 = vunpack.c.h.b16 %v1254
        %v2791 = vunpack.c.l.b16 %v1255
        %v2792 = vunpack.c.h.b16 %v1255
        %v2793 = vunpack.c.l.b16 %v1256
        %v2794 = vunpack.c.h.b16 %v1256
        %v2795 = vunpack.c.l.b16 %v1257
        %v2796 = vunpack.c.h.b16 %v1257
        %v2797 = vunpack.c.l.b16 %v1258
        %v2798 = vunpack.c.h.b16 %v1258
        %v2799 = vunpack.c.l.b16 %v1259
        %v2800 = vunpack.c.h.b16 %v1259
        %v2801 = vunpack.c.l.b16 %v1260
        %v2802 = vunpack.c.h.b16 %v1260
        %v2803 = vunpack.c.l.b16 %v1261
        %v2804 = vunpack.c.h.b16 %v1261
        %v2805 = vunpack.c.l.b16 %v1262
        %v2806 = vunpack.c.h.b16 %v1262
        %v2807 = vunpack.c.l.b16 %v1263
        %v2808 = vunpack.c.h.b16 %v1263
        %v2809 = vunpack.c.l.b16 %v1264
        %v2810 = vunpack.c.h.b16 %v1264
        %v2811 = vunpack.c.l.b16 %v1265
        %v2812 = vunpack.c.h.b16 %v1265
        %v2813 = vunpack.c.l.b16 %v1266
        %v2814 = vunpack.c.h.b16 %v1266
        %v2815 = vunpack.c.l.b16 %v1267
        %v2816 = vunpack.c.h.b16 %v1267
        %v2817 = vunpack.c.l.b16 %v1268
        %v2818 = vunpack.c.h.b16 %v1268
        %v2819 = vunpack.c.l.b16 %v1269
        %v2820 = vunpack.c.h.b16 %v1269
        %v2821 = vunpack.c.l.b16 %v1270
        %v2822 = vunpack.c.h.b16 %v1270
        %v2823 = vunpack.c.l.b16 %v1271
        %v2824 = vunpack.c.h.b16 %v1271
        %v2825 = vunpack.c.l.b16 %v1272
        %v2826 = vunpack.c.h.b16 %v1272
        %v2827 = vunpack.c.l.b16 %v1273
        %v2828 = vunpack.c.h.b16 %v1273
        %v2829 = vunpack.c.l.b16 %v1274
        %v2830 = vunpack.c.h.b16 %v1274
        %v2831 = vunpack.c.l.b16 %v1275
        %v2832 = vunpack.c.h.b16 %v1275
        %v2833 = vunpack.c.l.b16 %v1276
        %v2834 = vunpack.c.h.b16 %v1276
        %v2835 = vunpack.c.l.b16 %v1277
        %v2836 = vunpack.c.h.b16 %v1277
        %v2837 = vunpack.c.l.b16 %v1278
        %v2838 = vunpack.c.h.b16 %v1278
        %v2839 = vunpack.c.l.b16 %v1279
        %v2840 = vunpack.c.h.b16 %v1279
        %v2841 = vunpack.c.l.b16 %v1280
        %v2842 = vunpack.c.h.b16 %v1280
        %v2843 = vunpack.c.l.b16 %v1281
        %v2844 = vunpack.c.h.b16 %v1281
        %v2845 = vunpack.c.l.b16 %v1282
        %v2846 = vunpack.c.h.b16 %v1282
        %v2847 = vunpack.c.l.b16 %v1283
        %v2848 = vunpack.c.h.b16 %v1283
        %v2849 = vunpack.c.l.b16 %v1284
        %v2850 = vunpack.c.h.b16 %v1284
        %v2851 = vunpack.c.l.b16 %v1285
        %v2852 = vunpack.c.h.b16 %v1285
        %v2853 = vunpack.c.l.b16 %v1286
        %v2854 = vunpack.c.h.b16 %v1286
        %v2855 = vunpack.c.l.b16 %v1287
        %v2856 = vunpack.c.h.b16 %v1287
        %v2857 = vunpack.c.l.b16 %v1288
        %v2858 = vunpack.c.h.b16 %v1288
        %v2859 = vunpack.c.l.b16 %v1289
        %v2860 = vunpack.c.h.b16 %v1289
        %v2861 = vunpack.c.l.b16 %v1290
        %v2862 = vunpack.c.h.b16 %v1290
        %v2863 = vunpack.c.l.b16 %v1291
        %v2864 = vunpack.c.h.b16 %v1291
        %v2865 = vunpack.c.l.b16 %v1292
        %v2866 = vunpack.c.h.b16 %v1292
        %v2867 = vunpack.c.l.b16 %v1293
        %v2868 = vunpack.c.h.b16 %v1293
        %v2869 = vunpack.c.l.b16 %v1294
        %v2870 = vunpack.c.h.b16 %v1294
        %v2871 = vpack.c.b16 %v1855, %v1847
        %v2872 = vpack.c.b16 %v1856, %v1848
        %v2873 = vpack.c.b16 %v1857, %v1849
        %v2874 = vpack.c.b16 %v1858, %v1850
        %v2875 = vpack.c.b16 %v1859, %v1851
        %v2876 = vpack.c.b16 %v1860, %v1852
        %v2877 = vpack.c.b16 %v1861, %v1853
        %v2878 = vpack.c.b16 %v1862, %v1854
        %v2879 = vpack.c.b16 %v1871, %v1863
        %v2880 = vpack.c.b16 %v1872, %v1864
        %v2881 = vpack.c.b16 %v1873, %v1865
        %v2882 = vpack.c.b16 %v1874, %v1866
        %v2883 = vpack.c.b16 %v1875, %v1867
        %v2884 = vpack.c.b16 %v1876, %v1868
        %v2885 = vpack.c.b16 %v1877, %v1869
        %v2886 = vpack.c.b16 %v1878, %v1870
        %v2887 = vpack.c.b16 %v1887, %v1879
        %v2888 = vpack.c.b16 %v1888, %v1880
        %v2889 = vpack.c.b16 %v1889, %v1881
        %v2890 = vpack.c.b16 %v1890, %v1882
        %v2891 = vpack.c.b16 %v1891, %v1883
        %v2892 = vpack.c.b16 %v1892, %v1884
        %v2893 = vpack.c.b16 %v1893, %v1885
        %v2894 = vpack.c.b16 %v1894, %v1886
        %v2895 = vpack.c.b16 %v1903, %v1895
        %v2896 = vpack.c.b16 %v1904, %v1896
        %v2897 = vpack.c.b16 %v1905, %v1897
        %v2898 = vpack.c.b16 %v1906, %v1898
        %v2899 = vpack.c.b16 %v1907, %v1899
        %v2900 = vpack.c.b16 %v1908, %v1900
        %v2901 = vpack.c.b16 %v1909, %v1901
        %v2902 = vpack.c.b16 %v1910, %v1902
        %v2903 = vpack.c.b16 %v1919, %v1911
        %v2904 = vpack.c.b16 %v1920, %v1912
        %v2905 = vpack.c.b16 %v1921, %v1913
        %v2906 = vpack.c.b16 %v1922, %v1914
        %v2907 = vpack.c.b16 %v1923, %v1915
        %v2908 = vpack.c.b16 %v1924, %v1916
        %v2909 = vpack.c.b16 %v1925, %v1917
        %v2910 = vpack.c.b16 %v1926, %v1918
        %v2911 = vpack.c.b16 %v1935, %v1927
        %v2912 = vpack.c.b16 %v1936, %v1928
        %v2913 = vpack.c.b16 %v1937, %v1929
        %v2914 = vpack.c.b16 %v1938, %v1930
        %v2915 = vpack.c.b16 %v1939, %v1931
        %v2916 = vpack.c.b16 %v1940, %v1932
        %v2917 = vpack.c.b16 %v1941, %v1933
        %v2918 = vpack.c.b16 %v1942, %v1934
        %v2919 = vpack.c.b16 %v1951, %v1943
        %v2920 = vpack.c.b16 %v1952, %v1944
        %v2921 = vpack.c.b16 %v1953, %v1945
        %v2922 = vpack.c.b16 %v1954, %v1946
        %v2923 = vpack.c.b16 %v1955, %v1947
        %v2924 = vpack.c.b16 %v1956, %v1948
        %v2925 = vpack.c.b16 %v1957, %v1949
        %v2926 = vpack.c.b16 %v1958, %v1950
        %v2927 = vpack.c.b16 %v1967, %v1959
        %v2928 = vpack.c.b16 %v1968, %v1960
        %v2929 = vpack.c.b16 %v1969, %v1961
        %v2930 = vpack.c.b16 %v1970, %v1962
        %v2931 = vpack.c.b16 %v1971, %v1963
        %v2932 = vpack.c.b16 %v1972, %v1964
        %v2933 = vpack.c.b16 %v1973, %v1965
        %v2934 = vpack.c.b16 %v1974, %v1966
        %v2935 = vpack.c.b16 %v1983, %v1975
        %v2936 = vpack.c.b16 %v1984, %v1976
        %v2937 = vpack.c.b16 %v1985, %v1977
        %v2938 = vpack.c.b16 %v1986, %v1978
        %v2939 = vpack.c.b16 %v1987, %v1979
        %v2940 = vpack.c.b16 %v1988, %v1980
        %v2941 = vpack.c.b16 %v1989, %v1981
        %v2942 = vpack.c.b16 %v1990, %v1982
        %v2943 = vpack.c.b16 %v1999, %v1991
        %v2944 = vpack.c.b16 %v2000, %v1992
        %v2945 = vpack.c.b16 %v2001, %v1993
        %v2946 = vpack.c.b16 %v2002, %v1994
        %v2947 = vpack.c.b16 %v2003, %v1995
        %v2948 = vpack.c.b16 %v2004, %v1996
        %v2949 = vpack.c.b16 %v2005, %v1997
        %v2950 = vpack.c.b16 %v2006, %v1998
        %v2951 = vpack.c.b16 %v2015, %v2007
        %v2952 = vpack.c.b16 %v2016, %v2008
        %v2953 = vpack.c.b16 %v2017, %v2009
        %v2954 = vpack.c.b16 %v2018, %v2010
        %v2955 = vpack.c.b16 %v2019, %v2011
        %v2956 = vpack.c.b16 %v2020, %v2012
        %v2957 = vpack.c.b16 %v2021, %v2013
        %v2958 = vpack.c.b16 %v2022, %v2014
        %v2959 = vpack.c.b16 %v2031, %v2023
        %v2960 = vpack.c.b16 %v2032, %v2024
        %v2961 = vpack.c.b16 %v2033, %v2025
        %v2962 = vpack.c.b16 %v2034, %v2026
        %v2963 = vpack.c.b16 %v2035, %v2027
        %v2964 = vpack.c.b16 %v2036, %v2028
        %v2965 = vpack.c.b16 %v2037, %v2029
        %v2966 = vpack.c.b16 %v2038, %v2030
        %v2967 = vpack.c.b16 %v2047, %v2039
        %v2968 = vpack.c.b16 %v2048, %v2040
        %v2969 = vpack.c.b16 %v2049, %v2041
        %v2970 = vpack.c.b16 %v2050, %v2042
        %v2971 = vpack.c.b16 %v2051, %v2043
        %v2972 = vpack.c.b16 %v2052, %v2044
        %v2973 = vpack.c.b16 %v2053, %v2045
        %v2974 = vpack.c.b16 %v2054, %v2046
        %v2975 = vpack.c.b16 %v2063, %v2055
        %v2976 = vpack.c.b16 %v2064, %v2056
        %v2977 = vpack.c.b16 %v2065, %v2057
        %v2978 = vpack.c.b16 %v2066, %v2058
        %v2979 = vpack.c.b16 %v2067, %v2059
        %v2980 = vpack.c.b16 %v2068, %v2060
        %v2981 = vpack.c.b16 %v2069, %v2061
        %v2982 = vpack.c.b16 %v2070, %v2062
        %v2983 = vpack.c.b16 %v2079, %v2071
        %v2984 = vpack.c.b16 %v2080, %v2072
        %v2985 = vpack.c.b16 %v2081, %v2073
        %v2986 = vpack.c.b16 %v2082, %v2074
        %v2987 = vpack.c.b16 %v2083, %v2075
        %v2988 = vpack.c.b16 %v2084, %v2076
        %v2989 = vpack.c.b16 %v2085, %v2077
        %v2990 = vpack.c.b16 %v2086, %v2078
        %v2991 = vpack.c.b16 %v2095, %v2087
        %v2992 = vpack.c.b16 %v2096, %v2088
        %v2993 = vpack.c.b16 %v2097, %v2089
        %v2994 = vpack.c.b16 %v2098, %v2090
        %v2995 = vpack.c.b16 %v2099, %v2091
        %v2996 = vpack.c.b16 %v2100, %v2092
        %v2997 = vpack.c.b16 %v2101, %v2093
        %v2998 = vpack.c.b16 %v2102, %v2094
        %v2999 = vpack.c.b16 %v2111, %v2103
        %v3000 = vpack.c.b16 %v2112, %v2104
        %v3001 = vpack.c.b16 %v2113, %v2105
        %v3002 = vpack.c.b16 %v2114, %v2106
        %v3003 = vpack.c.b16 %v2115, %v2107
        %v3004 = vpack.c.b16 %v2116, %v2108
        %v3005 = vpack.c.b16 %v2117, %v2109
        %v3006 = vpack.c.b16 %v2118, %v2110
        %v3007 = vpack.c.b16 %v2127, %v2119
        %v3008 = vpack.c.b16 %v2128, %v2120
        %v3009 = vpack.c.b16 %v2129, %v2121
        %v3010 = vpack.c.b16 %v2130, %v2122
        %v3011 = vpack.c.b16 %v2131, %v2123
        %v3012 = vpack.c.b16 %v2132, %v2124
        %v3013 = vpack.c.b16 %v2133, %v2125
        %v3014 = vpack.c.b16 %v2134, %v2126
        %v3015 = vpack.c.b16 %v2143, %v2135
        %v3016 = vpack.c.b16 %v2144, %v2136
        %v3017 = vpack.c.b16 %v2145, %v2137
        %v3018 = vpack.c.b16 %v2146, %v2138
        %v3019 = vpack.c.b16 %v2147, %v2139
        %v3020 = vpack.c.b16 %v2148, %v2140
        %v3021 = vpack.c.b16 %v2149, %v2141
        %v3022 = vpack.c.b16 %v2150, %v2142
        %v3023 = vpack.c.b16 %v2159, %v2151
        %v3024 = vpack.c.b16 %v2160, %v2152
        %v3025 = vpack.c.b16 %v2161, %v2153
        %v3026 = vpack.c.b16 %v2162, %v2154
        %v3027 = vpack.c.b16 %v2163, %v2155
        %v3028 = vpack.c.b16 %v2164, %v2156
        %v3029 = vpack.c.b16 %v2165, %v2157
        %v3030 = vpack.c.b16 %v2166, %v2158
        %v3031 = vpack.c.b16 %v2175, %v2167
        %v3032 = vpack.c.b16 %v2176, %v2168
        %v3033 = vpack.c.b16 %v2177, %v2169
        %v3034 = vpack.c.b16 %v2178, %v2170
        %v3035 = vpack.c.b16 %v2179, %v2171
        %v3036 = vpack.c.b16 %v2180, %v2172
        %v3037 = vpack.c.b16 %v2181, %v2173
        %v3038 = vpack.c.b16 %v2182, %v2174
        %v3039 = vpack.c.b16 %v2191, %v2183
        %v3040 = vpack.c.b16 %v2192, %v2184
        %v3041 = vpack.c.b16 %v2193, %v2185
        %v3042 = vpack.c.b16 %v2194, %v2186
        %v3043 = vpack.c.b16 %v2195, %v2187
        %v3044 = vpack.c.b16 %v2196, %v2188
        %v3045 = vpack.c.b16 %v2197, %v2189
        %v3046 = vpack.c.b16 %v2198, %v2190
        %v3047 = vpack.c.b16 %v2207, %v2199
        %v3048 = vpack.c.b16 %v2208, %v2200
        %v3049 = vpack.c.b16 %v2209, %v2201
        %v3050 = vpack.c.b16 %v2210, %v2202
        %v3051 = vpack.c.b16 %v2211, %v2203
        %v3052 = vpack.c.b16 %v2212, %v2204
        %v3053 = vpack.c.b16 %v2213, %v2205
        %v3054 = vpack.c.b16 %v2214, %v2206
        %v3055 = vpack.c.b16 %v2223, %v2215
        %v3056 = vpack.c.b16 %v2224, %v2216
        %v3057 = vpack.c.b16 %v2225, %v2217
        %v3058 = vpack.c.b16 %v2226, %v2218
        %v3059 = vpack.c.b16 %v2227, %v2219
        %v3060 = vpack.c.b16 %v2228, %v2220
        %v3061 = vpack.c.b16 %v2229, %v2221
        %v3062 = vpack.c.b16 %v2230, %v2222
        %v3063 = vpack.c.b16 %v2239, %v2231
        %v3064 = vpack.c.b16 %v2240, %v2232
        %v3065 = vpack.c.b16 %v2241, %v2233
        %v3066 = vpack.c.b16 %v2242, %v2234
        %v3067 = vpack.c.b16 %v2243, %v2235
        %v3068 = vpack.c.b16 %v2244, %v2236
        %v3069 = vpack.c.b16 %v2245, %v2237
        %v3070 = vpack.c.b16 %v2246, %v2238
        %v3071 = vpack.c.b16 %v2255, %v2247
        %v3072 = vpack.c.b16 %v2256, %v2248
        %v3073 = vpack.c.b16 %v2257, %v2249
        %v3074 = vpack.c.b16 %v2258, %v2250
        %v3075 = vpack.c.b16 %v2259, %v2251
        %v3076 = vpack.c.b16 %v2260, %v2252
        %v3077 = vpack.c.b16 %v2261, %v2253
        %v3078 = vpack.c.b16 %v2262, %v2254
        %v3079 = vpack.c.b16 %v2271, %v2263
        %v3080 = vpack.c.b16 %v2272, %v2264
        %v3081 = vpack.c.b16 %v2273, %v2265
        %v3082 = vpack.c.b16 %v2274, %v2266
        %v3083 = vpack.c.b16 %v2275, %v2267
        %v3084 = vpack.c.b16 %v2276, %v2268
        %v3085 = vpack.c.b16 %v2277, %v2269
        %v3086 = vpack.c.b16 %v2278, %v2270
        %v3087 = vpack.c.b16 %v2287, %v2279
        %v3088 = vpack.c.b16 %v2288, %v2280
        %v3089 = vpack.c.b16 %v2289, %v2281
        %v3090 = vpack.c.b16 %v2290, %v2282
        %v3091 = vpack.c.b16 %v2291, %v2283
        %v3092 = vpack.c.b16 %v2292, %v2284
        %v3093 = vpack.c.b16 %v2293, %v2285
        %v3094 = vpack.c.b16 %v2294, %v2286
        %v3095 = vpack.c.b16 %v2303, %v2295
        %v3096 = vpack.c.b16 %v2304, %v2296
        %v3097 = vpack.c.b16 %v2305, %v2297
        %v3098 = vpack.c.b16 %v2306, %v2298
        %v3099 = vpack.c.b16 %v2307, %v2299
        %v3100 = vpack.c.b16 %v2308, %v2300
        %v3101 = vpack.c.b16 %v2309, %v2301
        %v3102 = vpack.c.b16 %v2310, %v2302
        %v3103 = vpack.c.b16 %v2319, %v2311
        %v3104 = vpack.c.b16 %v2320, %v2312
        %v3105 = vpack.c.b16 %v2321, %v2313
        %v3106 = vpack.c.b16 %v2322, %v2314
        %v3107 = vpack.c.b16 %v2323, %v2315
        %v3108 = vpack.c.b16 %v2324, %v2316
        %v3109 = vpack.c.b16 %v2325, %v2317
        %v3110 = vpack.c.b16 %v2326, %v2318
        %v3111 = vpack.c.b16 %v2335, %v2327
        %v3112 = vpack.c.b16 %v2336, %v2328
        %v3113 = vpack.c.b16 %v2337, %v2329
        %v3114 = vpack.c.b16 %v2338, %v2330
        %v3115 = vpack.c.b16 %v2339, %v2331
        %v3116 = vpack.c.b16 %v2340, %v2332
        %v3117 = vpack.c.b16 %v2341, %v2333
        %v3118 = vpack.c.b16 %v2342, %v2334
        %v3119 = vpack.c.b16 %v2351, %v2343
        %v3120 = vpack.c.b16 %v2352, %v2344
        %v3121 = vpack.c.b16 %v2353, %v2345
        %v3122 = vpack.c.b16 %v2354, %v2346
        %v3123 = vpack.c.b16 %v2355, %v2347
        %v3124 = vpack.c.b16 %v2356, %v2348
        %v3125 = vpack.c.b16 %v2357, %v2349
        %v3126 = vpack.c.b16 %v2358, %v2350
        %v3127 = vpack.c.b16 %v2367, %v2359
        %v3128 = vpack.c.b16 %v2368, %v2360
        %v3129 = vpack.c.b16 %v2369, %v2361
        %v3130 = vpack.c.b16 %v2370, %v2362
        %v3131 = vpack.c.b16 %v2371, %v2363
        %v3132 = vpack.c.b16 %v2372, %v2364
        %v3133 = vpack.c.b16 %v2373, %v2365
        %v3134 = vpack.c.b16 %v2374, %v2366
        %v3135 = vpack.c.b16 %v2383, %v2375
        %v3136 = vpack.c.b16 %v2384, %v2376
        %v3137 = vpack.c.b16 %v2385, %v2377
        %v3138 = vpack.c.b16 %v2386, %v2378
        %v3139 = vpack.c.b16 %v2387, %v2379
        %v3140 = vpack.c.b16 %v2388, %v2380
        %v3141 = vpack.c.b16 %v2389, %v2381
        %v3142 = vpack.c.b16 %v2390, %v2382
        %v3143 = vpack.c.b16 %v2399, %v2391
        %v3144 = vpack.c.b16 %v2400, %v2392
        %v3145 = vpack.c.b16 %v2401, %v2393
        %v3146 = vpack.c.b16 %v2402, %v2394
        %v3147 = vpack.c.b16 %v2403, %v2395
        %v3148 = vpack.c.b16 %v2404, %v2396
        %v3149 = vpack.c.b16 %v2405, %v2397
        %v3150 = vpack.c.b16 %v2406, %v2398
        %v3151 = vpack.c.b16 %v2415, %v2407
        %v3152 = vpack.c.b16 %v2416, %v2408
        %v3153 = vpack.c.b16 %v2417, %v2409
        %v3154 = vpack.c.b16 %v2418, %v2410
        %v3155 = vpack.c.b16 %v2419, %v2411
        %v3156 = vpack.c.b16 %v2420, %v2412
        %v3157 = vpack.c.b16 %v2421, %v2413
        %v3158 = vpack.c.b16 %v2422, %v2414
        %v3159 = vpack.c.b16 %v2431, %v2423
        %v3160 = vpack.c.b16 %v2432, %v2424
        %v3161 = vpack.c.b16 %v2433, %v2425
        %v3162 = vpack.c.b16 %v2434, %v2426
        %v3163 = vpack.c.b16 %v2435, %v2427
        %v3164 = vpack.c.b16 %v2436, %v2428
        %v3165 = vpack.c.b16 %v2437, %v2429
        %v3166 = vpack.c.b16 %v2438, %v2430
        %v3167 = vpack.c.b16 %v2447, %v2439
        %v3168 = vpack.c.b16 %v2448, %v2440
        %v3169 = vpack.c.b16 %v2449, %v2441
        %v3170 = vpack.c.b16 %v2450, %v2442
        %v3171 = vpack.c.b16 %v2451, %v2443
        %v3172 = vpack.c.b16 %v2452, %v2444
        %v3173 = vpack.c.b16 %v2453, %v2445
        %v3174 = vpack.c.b16 %v2454, %v2446
        %v3175 = vpack.c.b16 %v2463, %v2455
        %v3176 = vpack.c.b16 %v2464, %v2456
        %v3177 = vpack.c.b16 %v2465, %v2457
        %v3178 = vpack.c.b16 %v2466, %v2458
        %v3179 = vpack.c.b16 %v2467, %v2459
        %v3180 = vpack.c.b16 %v2468, %v2460
        %v3181 = vpack.c.b16 %v2469, %v2461
        %v3182 = vpack.c.b16 %v2470, %v2462
        %v3183 = vpack.c.b16 %v2479, %v2471
        %v3184 = vpack.c.b16 %v2480, %v2472
        %v3185 = vpack.c.b16 %v2481, %v2473
        %v3186 = vpack.c.b16 %v2482, %v2474
        %v3187 = vpack.c.b16 %v2483, %v2475
        %v3188 = vpack.c.b16 %v2484, %v2476
        %v3189 = vpack.c.b16 %v2485, %v2477
        %v3190 = vpack.c.b16 %v2486, %v2478
        %v3191 = vpack.c.b16 %v2495, %v2487
        %v3192 = vpack.c.b16 %v2496, %v2488
        %v3193 = vpack.c.b16 %v2497, %v2489
        %v3194 = vpack.c.b16 %v2498, %v2490
        %v3195 = vpack.c.b16 %v2499, %v2491
        %v3196 = vpack.c.b16 %v2500, %v2492
        %v3197 = vpack.c.b16 %v2501, %v2493
        %v3198 = vpack.c.b16 %v2502, %v2494
        %v3199 = vpack.c.b16 %v2511, %v2503
        %v3200 = vpack.c.b16 %v2512, %v2504
        %v3201 = vpack.c.b16 %v2513, %v2505
        %v3202 = vpack.c.b16 %v2514, %v2506
        %v3203 = vpack.c.b16 %v2515, %v2507
        %v3204 = vpack.c.b16 %v2516, %v2508
        %v3205 = vpack.c.b16 %v2517, %v2509
        %v3206 = vpack.c.b16 %v2518, %v2510
        %v3207 = vpack.c.b16 %v2527, %v2519
        %v3208 = vpack.c.b16 %v2528, %v2520
        %v3209 = vpack.c.b16 %v2529, %v2521
        %v3210 = vpack.c.b16 %v2530, %v2522
        %v3211 = vpack.c.b16 %v2531, %v2523
        %v3212 = vpack.c.b16 %v2532, %v2524
        %v3213 = vpack.c.b16 %v2533, %v2525
        %v3214 = vpack.c.b16 %v2534, %v2526
        %v3215 = vpack.c.b16 %v2543, %v2535
        %v3216 = vpack.c.b16 %v2544, %v2536
        %v3217 = vpack.c.b16 %v2545, %v2537
        %v3218 = vpack.c.b16 %v2546, %v2538
        %v3219 = vpack.c.b16 %v2547, %v2539
        %v3220 = vpack.c.b16 %v2548, %v2540
        %v3221 = vpack.c.b16 %v2549, %v2541
        %v3222 = vpack.c.b16 %v2550, %v2542
        %v3223 = vpack.c.b16 %v2559, %v2551
        %v3224 = vpack.c.b16 %v2560, %v2552
        %v3225 = vpack.c.b16 %v2561, %v2553
        %v3226 = vpack.c.b16 %v2562, %v2554
        %v3227 = vpack.c.b16 %v2563, %v2555
        %v3228 = vpack.c.b16 %v2564, %v2556
        %v3229 = vpack.c.b16 %v2565, %v2557
        %v3230 = vpack.c.b16 %v2566, %v2558
        %v3231 = vpack.c.b16 %v2575, %v2567
        %v3232 = vpack.c.b16 %v2576, %v2568
        %v3233 = vpack.c.b16 %v2577, %v2569
        %v3234 = vpack.c.b16 %v2578, %v2570
        %v3235 = vpack.c.b16 %v2579, %v2571
        %v3236 = vpack.c.b16 %v2580, %v2572
        %v3237 = vpack.c.b16 %v2581, %v2573
        %v3238 = vpack.c.b16 %v2582, %v2574
        %v3239 = vpack.c.b16 %v2591, %v2583
        %v3240 = vpack.c.b16 %v2592, %v2584
        %v3241 = vpack.c.b16 %v2593, %v2585
        %v3242 = vpack.c.b16 %v2594, %v2586
        %v3243 = vpack.c.b16 %v2595, %v2587
        %v3244 = vpack.c.b16 %v2596, %v2588
        %v3245 = vpack.c.b16 %v2597, %v2589
        %v3246 = vpack.c.b16 %v2598, %v2590
        %v3247 = vpack.c.b16 %v2607, %v2599
        %v3248 = vpack.c.b16 %v2608, %v2600
        %v3249 = vpack.c.b16 %v2609, %v2601
        %v3250 = vpack.c.b16 %v2610, %v2602
        %v3251 = vpack.c.b16 %v2611, %v2603
        %v3252 = vpack.c.b16 %v2612, %v2604
        %v3253 = vpack.c.b16 %v2613, %v2605
        %v3254 = vpack.c.b16 %v2614, %v2606
        %v3255 = vpack.c.b16 %v2623, %v2615
        %v3256 = vpack.c.b16 %v2624, %v2616
        %v3257 = vpack.c.b16 %v2625, %v2617
        %v3258 = vpack.c.b16 %v2626, %v2618
        %v3259 = vpack.c.b16 %v2627, %v2619
        %v3260 = vpack.c.b16 %v2628, %v2620
        %v3261 = vpack.c.b16 %v2629, %v2621
        %v3262 = vpack.c.b16 %v2630, %v2622
        %v3263 = vpack.c.b16 %v2639, %v2631
        %v3264 = vpack.c.b16 %v2640, %v2632
        %v3265 = vpack.c.b16 %v2641, %v2633
        %v3266 = vpack.c.b16 %v2642, %v2634
        %v3267 = vpack.c.b16 %v2643, %v2635
        %v3268 = vpack.c.b16 %v2644, %v2636
        %v3269 = vpack.c.b16 %v2645, %v2637
        %v3270 = vpack.c.b16 %v2646, %v2638
        %v3271 = vpack.c.b16 %v2655, %v2647
        %v3272 = vpack.c.b16 %v2656, %v2648
        %v3273 = vpack.c.b16 %v2657, %v2649
        %v3274 = vpack.c.b16 %v2658, %v2650
        %v3275 = vpack.c.b16 %v2659, %v2651
        %v3276 = vpack.c.b16 %v2660, %v2652
        %v3277 = vpack.c.b16 %v2661, %v2653
        %v3278 = vpack.c.b16 %v2662, %v2654
        %v3279 = vpack.c.b16 %v2671, %v2663
        %v3280 = vpack.c.b16 %v2672, %v2664
        %v3281 = vpack.c.b16 %v2673, %v2665
        %v3282 = vpack.c.b16 %v2674, %v2666
        %v3283 = vpack.c.b16 %v2675, %v2667
        %v3284 = vpack.c.b16 %v2676, %v2668
        %v3285 = vpack.c.b16 %v2677, %v2669
        %v3286 = vpack.c.b16 %v2678, %v2670
        %v3287 = vpack.c.b16 %v2687, %v2679
        %v3288 = vpack.c.b16 %v2688, %v2680
        %v3289 = vpack.c.b16 %v2689, %v2681
        %v3290 = vpack.c.b16 %v2690, %v2682
        %v3291 = vpack.c.b16 %v2691, %v2683
        %v3292 = vpack.c.b16 %v2692, %v2684
        %v3293 = vpack.c.b16 %v2693, %v2685
        %v3294 = vpack.c.b16 %v2694, %v2686
        %v3295 = vpack.c.b16 %v2703, %v2695
        %v3296 = vpack.c.b16 %v2704, %v2696
        %v3297 = vpack.c.b16 %v2705, %v2697
        %v3298 = vpack.c.b16 %v2706, %v2698
        %v3299 = vpack.c.b16 %v2707, %v2699
        %v3300 = vpack.c.b16 %v2708, %v2700
        %v3301 = vpack.c.b16 %v2709, %v2701
        %v3302 = vpack.c.b16 %v2710, %v2702
        %v3303 = vpack.c.b16 %v2719, %v2711
        %v3304 = vpack.c.b16 %v2720, %v2712
        %v3305 = vpack.c.b16 %v2721, %v2713
        %v3306 = vpack.c.b16 %v2722, %v2714
        %v3307 = vpack.c.b16 %v2723, %v2715
        %v3308 = vpack.c.b16 %v2724, %v2716
        %v3309 = vpack.c.b16 %v2725, %v2717
        %v3310 = vpack.c.b16 %v2726, %v2718
        %v3311 = vpack.c.b16 %v2735, %v2727
        %v3312 = vpack.c.b16 %v2736, %v2728
        %v3313 = vpack.c.b16 %v2737, %v2729
        %v3314 = vpack.c.b16 %v2738, %v2730
        %v3315 = vpack.c.b16 %v2739, %v2731
        %v3316 = vpack.c.b16 %v2740, %v2732
        %v3317 = vpack.c.b16 %v2741, %v2733
        %v3318 = vpack.c.b16 %v2742, %v2734
        %v3319 = vpack.c.b16 %v2751, %v2743
        %v3320 = vpack.c.b16 %v2752, %v2744
        %v3321 = vpack.c.b16 %v2753, %v2745
        %v3322 = vpack.c.b16 %v2754, %v2746
        %v3323 = vpack.c.b16 %v2755, %v2747
        %v3324 = vpack.c.b16 %v2756, %v2748
        %v3325 = vpack.c.b16 %v2757, %v2749
        %v3326 = vpack.c.b16 %v2758, %v2750
        %v3327 = vpack.c.b16 %v2767, %v2759
        %v3328 = vpack.c.b16 %v2768, %v2760
        %v3329 = vpack.c.b16 %v2769, %v2761
        %v3330 = vpack.c.b16 %v2770, %v2762
        %v3331 = vpack.c.b16 %v2771, %v2763
        %v3332 = vpack.c.b16 %v2772, %v2764
        %v3333 = vpack.c.b16 %v2773, %v2765
        %v3334 = vpack.c.b16 %v2774, %v2766
        %v3335 = vpack.c.b16 %v2783, %v2775
        %v3336 = vpack.c.b16 %v2784, %v2776
        %v3337 = vpack.c.b16 %v2785, %v2777
        %v3338 = vpack.c.b16 %v2786, %v2778
        %v3339 = vpack.c.b16 %v2787, %v2779
        %v3340 = vpack.c.b16 %v2788, %v2780
        %v3341 = vpack.c.b16 %v2789, %v2781
        %v3342 = vpack.c.b16 %v2790, %v2782
        %v3343 = vpack.c.b16 %v2799, %v2791
        %v3344 = vpack.c.b16 %v2800, %v2792
        %v3345 = vpack.c.b16 %v2801, %v2793
        %v3346 = vpack.c.b16 %v2802, %v2794
        %v3347 = vpack.c.b16 %v2803, %v2795
        %v3348 = vpack.c.b16 %v2804, %v2796
        %v3349 = vpack.c.b16 %v2805, %v2797
        %v3350 = vpack.c.b16 %v2806, %v2798
        %v3351 = vpack.c.b16 %v2815, %v2807
        %v3352 = vpack.c.b16 %v2816, %v2808
        %v3353 = vpack.c.b16 %v2817, %v2809
        %v3354 = vpack.c.b16 %v2818, %v2810
        %v3355 = vpack.c.b16 %v2819, %v2811
        %v3356 = vpack.c.b16 %v2820, %v2812
        %v3357 = vpack.c.b16 %v2821, %v2813
        %v3358 = vpack.c.b16 %v2822, %v2814
        %v3359 = vpack.c.b16 %v2831, %v2823
        %v3360 = vpack.c.b16 %v2832, %v2824
        %v3361 = vpack.c.b16 %v2833, %v2825
        %v3362 = vpack.c.b16 %v2834, %v2826
        %v3363 = vpack.c.b16 %v2835, %v2827
        %v3364 = vpack.c.b16 %v2836, %v2828
        %v3365 = vpack.c.b16 %v2837, %v2829
        %v3366 = vpack.c.b16 %v2838, %v2830
        %v3367 = vpack.c.b16 %v2847, %v2839
        %v3368 = vpack.c.b16 %v2848, %v2840
        %v3369 = vpack.c.b16 %v2849, %v2841
        %v3370 = vpack.c.b16 %v2850, %v2842
        %v3371 = vpack.c.b16 %v2851, %v2843
        %v3372 = vpack.c.b16 %v2852, %v2844
        %v3373 = vpack.c.b16 %v2853, %v2845
        %v3374 = vpack.c.b16 %v2854, %v2846
        %v3375 = vpack.c.b16 %v2863, %v2855
        %v3376 = vpack.c.b16 %v2864, %v2856
        %v3377 = vpack.c.b16 %v2865, %v2857
        %v3378 = vpack.c.b16 %v2866, %v2858
        %v3379 = vpack.c.b16 %v2867, %v2859
        %v3380 = vpack.c.b16 %v2868, %v2860
        %v3381 = vpack.c.b16 %v2869, %v2861
        %v3382 = vpack.c.b16 %v2870, %v2862
        %3895 = vmatprep.subr.bf16.mxu0 %v2872
        %3896 = vmatpush1.bf16.msra.mxu0 %v2871
        %3897 = vmatprep.subr.bf16.mxu0 %v2880
        %3898 = vmatpush1.bf16.msra.mxu0 %v2879
        %3899 = vmatprep.subr.bf16.mxu0 %v2888
        %3900 = vmatpush1.bf16.msra.mxu0 %v2887
        %3901 = vmatprep.subr.bf16.mxu0 %v2896
        %3902 = vmatpush1.bf16.msra.mxu0 %v2895
        %3903 = vmatprep.subr.bf16.mxu0 %v2904
        %3904 = vmatpush1.bf16.msra.mxu0 %v2903
        %3905 = vmatprep.subr.bf16.mxu0 %v2912
        %3906 = vmatpush1.bf16.msra.mxu0 %v2911
        %3907 = vmatprep.subr.bf16.mxu0 %v2920
        %3908 = vmatpush1.bf16.msra.mxu0 %v2919
        %3909 = vmatprep.subr.bf16.mxu0 %v2928
        %3910 = vmatpush1.bf16.msra.mxu0 %v2927
        %3911 = vmatprep.subr.bf16.mxu0 %v2936
        %3912 = vmatpush1.bf16.msra.mxu0 %v2935
        %3913 = vmatprep.subr.bf16.mxu0 %v2944
        %3914 = vmatpush1.bf16.msra.mxu0 %v2943
        %3915 = vmatprep.subr.bf16.mxu0 %v2952
        %3916 = vmatpush1.bf16.msra.mxu0 %v2951
        %3917 = vmatprep.subr.bf16.mxu0 %v2960
        %3918 = vmatpush1.bf16.msra.mxu0 %v2959
        %3919 = vmatprep.subr.bf16.mxu0 %v2968
        %3920 = vmatpush1.bf16.msra.mxu0 %v2967
        %3921 = vmatprep.subr.bf16.mxu0 %v2976
        %3922 = vmatpush1.bf16.msra.mxu0 %v2975
        %3923 = vmatprep.subr.bf16.mxu0 %v2984
        %3924 = vmatpush1.bf16.msra.mxu0 %v2983
        %3925 = vmatprep.subr.bf16.mxu0 %v2992
        %3926 = vmatpush1.bf16.msra.mxu0 %v2991
        %3927 = vmatprep.mubr.bf16.mxu0 %v1320
        %3928 = vmatmul.mubr.bf16.gmra.mrb[0].mxu0 %v1319
        %v3929 = vpop.f32.mrb[0].mxu0
        %v3930 = vadd.f32 0.0, %v3929
        %v3931 = vpop.f32.mrb[0].mxu0
        %v3932 = vadd.f32 0.0, %v3931
        %v3933 = vpop.f32.mrb[0].mxu0
        %v3934 = vadd.f32 0.0, %v3933
        %v3935 = vpop.f32.mrb[0].mxu0
        %v3936 = vadd.f32 0.0, %v3935
        %3937 = vdwg.mxu0
        %3938 = vmatprep.subr.bf16.mxu0 %v3000
        %3939 = vmatpush1.bf16.msra.mxu0 %v2999
        %3940 = vmatprep.subr.bf16.mxu0 %v3008
        %3941 = vmatpush1.bf16.msra.mxu0 %v3007
        %3942 = vmatprep.subr.bf16.mxu0 %v3016
        %3943 = vmatpush1.bf16.msra.mxu0 %v3015
        %3944 = vmatprep.subr.bf16.mxu0 %v3024
        %3945 = vmatpush1.bf16.msra.mxu0 %v3023
        %3946 = vmatprep.subr.bf16.mxu0 %v3032
        %3947 = vmatpush1.bf16.msra.mxu0 %v3031
        %3948 = vmatprep.subr.bf16.mxu0 %v3040
        %3949 = vmatpush1.bf16.msra.mxu0 %v3039
        %3950 = vmatprep.subr.bf16.mxu0 %v3048
        %3951 = vmatpush1.bf16.msra.mxu0 %v3047
        %3952 = vmatprep.subr.bf16.mxu0 %v3056
        %3953 = vmatpush1.bf16.msra.mxu0 %v3055
        %3954 = vmatprep.subr.bf16.mxu0 %v3064
        %3955 = vmatpush1.bf16.msra.mxu0 %v3063
        %3956 = vmatprep.subr.bf16.mxu0 %v3072
        %3957 = vmatpush1.bf16.msra.mxu0 %v3071
        %3958 = vmatprep.subr.bf16.mxu0 %v3080
        %3959 = vmatpush1.bf16.msra.mxu0 %v3079
        %3960 = vmatprep.subr.bf16.mxu0 %v3088
        %3961 = vmatpush1.bf16.msra.mxu0 %v3087
        %3962 = vmatprep.subr.bf16.mxu0 %v3096
        %3963 = vmatpush1.bf16.msra.mxu0 %v3095
        %3964 = vmatprep.subr.bf16.mxu0 %v3104
        %3965 = vmatpush1.bf16.msra.mxu0 %v3103
        %3966 = vmatprep.subr.bf16.mxu0 %v3112
        %3967 = vmatpush1.bf16.msra.mxu0 %v3111
        %3968 = vmatprep.subr.bf16.mxu0 %v3120
        %3969 = vmatpush1.bf16.msra.mxu0 %v3119
        %3970 = vmatprep.mubr.bf16.mxu0 %v1322
        %3971 = vmatmul.mubr.bf16.gmra.mrb[0].mxu0 %v1321
        %v3972 = vpop.f32.mrb[0].mxu0
        %v3973 = vadd.f32 %v3930, %v3972
        %v3974 = vpop.f32.mrb[0].mxu0
        %v3975 = vadd.f32 %v3932, %v3974
        %v3976 = vpop.f32.mrb[0].mxu0
        %v3977 = vadd.f32 %v3934, %v3976
        %v3978 = vpop.f32.mrb[0].mxu0
        %v3979 = vadd.f32 %v3936, %v3978
        %3980 = vdwg.mxu0
        %3981 = vmatprep.subr.bf16.mxu0 %v3128
        %3982 = vmatpush1.bf16.msra.mxu0 %v3127
        %3983 = vmatprep.subr.bf16.mxu0 %v3136
        %3984 = vmatpush1.bf16.msra.mxu0 %v3135
        %3985 = vmatprep.subr.bf16.mxu0 %v3144
        %3986 = vmatpush1.bf16.msra.mxu0 %v3143
        %3987 = vmatprep.subr.bf16.mxu0 %v3152
        %3988 = vmatpush1.bf16.msra.mxu0 %v3151
        %3989 = vmatprep.subr.bf16.mxu0 %v3160
        %3990 = vmatpush1.bf16.msra.mxu0 %v3159
        %3991 = vmatprep.subr.bf16.mxu0 %v3168
        %3992 = vmatpush1.bf16.msra.mxu0 %v3167
        %3993 = vmatprep.subr.bf16.mxu0 %v3176
        %3994 = vmatpush1.bf16.msra.mxu0 %v3175
        %3995 = vmatprep.subr.bf16.mxu0 %v3184
        %3996 = vmatpush1.bf16.msra.mxu0 %v3183
        %3997 = vmatprep.subr.bf16.mxu0 %v3192
        %3998 = vmatpush1.bf16.msra.mxu0 %v3191
        %3999 = vmatprep.subr.bf16.mxu0 %v3200
        %4000 = vmatpush1.bf16.msra.mxu0 %v3199
        %4001 = vmatprep.subr.bf16.mxu0 %v3208
        %4002 = vmatpush1.bf16.msra.mxu0 %v3207
        %4003 = vmatprep.subr.bf16.mxu0 %v3216
        %4004 = vmatpush1.bf16.msra.mxu0 %v3215
        %4005 = vmatprep.subr.bf16.mxu0 %v3224
        %4006 = vmatpush1.bf16.msra.mxu0 %v3223
        %4007 = vmatprep.subr.bf16.mxu0 %v3232
        %4008 = vmatpush1.bf16.msra.mxu0 %v3231
        %4009 = vmatprep.subr.bf16.mxu0 %v3240
        %4010 = vmatpush1.bf16.msra.mxu0 %v3239
        %4011 = vmatprep.subr.bf16.mxu0 %v3248
        %4012 = vmatpush1.bf16.msra.mxu0 %v3247
        %4013 = vmatprep.mubr.bf16.mxu0 %v1324
        %4014 = vmatmul.mubr.bf16.gmra.mrb[0].mxu0 %v1323
        %v4015 = vpop.f32.mrb[0].mxu0
        %v4016 = vadd.f32 %v3973, %v4015
        %v4017 = vpop.f32.mrb[0].mxu0
        %v4018 = vadd.f32 %v3975, %v4017
        %v4019 = vpop.f32.mrb[0].mxu0
        %v4020 = vadd.f32 %v3977, %v4019
        %v4021 = vpop.f32.mrb[0].mxu0
        %v4022 = vadd.f32 %v3979, %v4021
        %4023 = vdwg.mxu0
        %4024 = vmatprep.subr.bf16.mxu0 %v3256
        %4025 = vmatpush1.bf16.msra.mxu0 %v3255
        %4026 = vmatprep.subr.bf16.mxu0 %v3264
        %4027 = vmatpush1.bf16.msra.mxu0 %v3263
        %4028 = vmatprep.subr.bf16.mxu0 %v3272
        %4029 = vmatpush1.bf16.msra.mxu0 %v3271
        %4030 = vmatprep.subr.bf16.mxu0 %v3280
        %4031 = vmatpush1.bf16.msra.mxu0 %v3279
        %4032 = vmatprep.subr.bf16.mxu0 %v3288
        %4033 = vmatpush1.bf16.msra.mxu0 %v3287
        %4034 = vmatprep.subr.bf16.mxu0 %v3296
        %4035 = vmatpush1.bf16.msra.mxu0 %v3295
        %4036 = vmatprep.subr.bf16.mxu0 %v3304
        %4037 = vmatpush1.bf16.msra.mxu0 %v3303
        %4038 = vmatprep.subr.bf16.mxu0 %v3312
        %4039 = vmatpush1.bf16.msra.mxu0 %v3311
        %4040 = vmatprep.subr.bf16.mxu0 %v3320
        %4041 = vmatpush1.bf16.msra.mxu0 %v3319
        %4042 = vmatprep.subr.bf16.mxu0 %v3328
        %4043 = vmatpush1.bf16.msra.mxu0 %v3327
        %4044 = vmatprep.subr.bf16.mxu0 %v3336
        %4045 = vmatpush1.bf16.msra.mxu0 %v3335
        %4046 = vmatprep.subr.bf16.mxu0 %v3344
        %4047 = vmatpush1.bf16.msra.mxu0 %v3343
        %4048 = vmatprep.subr.bf16.mxu0 %v3352
        %4049 = vmatpush1.bf16.msra.mxu0 %v3351
        %4050 = vmatprep.subr.bf16.mxu0 %v3360
        %4051 = vmatpush1.bf16.msra.mxu0 %v3359
        %4052 = vmatprep.subr.bf16.mxu0 %v3368
        %4053 = vmatpush1.bf16.msra.mxu0 %v3367
        %4054 = vmatprep.subr.bf16.mxu0 %v3376
        %4055 = vmatpush1.bf16.msra.mxu0 %v3375
        %4056 = vmatprep.mubr.bf16.mxu0 %v1326
        %4057 = vmatmul.mubr.bf16.gmra.mrb[0].mxu0 %v1325
        %v4058 = vpop.f32.mrb[0].mxu0
        %v4059 = vadd.f32 %v4016, %v4058
        %v4060 = vpop.f32.mrb[0].mxu0
        %v4061 = vadd.f32 %v4018, %v4060
        %v4062 = vpop.f32.mrb[0].mxu0
        %v4063 = vadd.f32 %v4020, %v4062
        %v4064 = vpop.f32.mrb[0].mxu0
        %v4065 = vadd.f32 %v4022, %v4064
        %4066 = vdwg.mxu0
        %4067 = vmatprep.subr.bf16.mxu0 %v2874
        %4068 = vmatpush1.bf16.msra.mxu0 %v2873
        %4069 = vmatprep.subr.bf16.mxu0 %v2882
        %4070 = vmatpush1.bf16.msra.mxu0 %v2881
        %4071 = vmatprep.subr.bf16.mxu0 %v2890
        %4072 = vmatpush1.bf16.msra.mxu0 %v2889
        %4073 = vmatprep.subr.bf16.mxu0 %v2898
        %4074 = vmatpush1.bf16.msra.mxu0 %v2897
        %4075 = vmatprep.subr.bf16.mxu0 %v2906
        %4076 = vmatpush1.bf16.msra.mxu0 %v2905
        %4077 = vmatprep.subr.bf16.mxu0 %v2914
        %4078 = vmatpush1.bf16.msra.mxu0 %v2913
        %4079 = vmatprep.subr.bf16.mxu0 %v2922
        %4080 = vmatpush1.bf16.msra.mxu0 %v2921
        %4081 = vmatprep.subr.bf16.mxu0 %v2930
        %4082 = vmatpush1.bf16.msra.mxu0 %v2929
        %4083 = vmatprep.subr.bf16.mxu0 %v2938
        %4084 = vmatpush1.bf16.msra.mxu0 %v2937
        %4085 = vmatprep.subr.bf16.mxu0 %v2946
        %4086 = vmatpush1.bf16.msra.mxu0 %v2945
        %4087 = vmatprep.subr.bf16.mxu0 %v2954
        %4088 = vmatpush1.bf16.msra.mxu0 %v2953
        %4089 = vmatprep.subr.bf16.mxu0 %v2962
        %4090 = vmatpush1.bf16.msra.mxu0 %v2961
        %4091 = vmatprep.subr.bf16.mxu0 %v2970
        %4092 = vmatpush1.bf16.msra.mxu0 %v2969
        %4093 = vmatprep.subr.bf16.mxu0 %v2978
        %4094 = vmatpush1.bf16.msra.mxu0 %v2977
        %4095 = vmatprep.subr.bf16.mxu0 %v2986
        %4096 = vmatpush1.bf16.msra.mxu0 %v2985
        %4097 = vmatprep.subr.bf16.mxu0 %v2994
        %4098 = vmatpush1.bf16.msra.mxu0 %v2993
        %4099 = vmatprep.mubr.bf16.mxu0 %v1320
        %4100 = vmatmul.mubr.bf16.gmra.mrb[0].mxu0 %v1319
        %v4101 = vpop.f32.mrb[0].mxu0
        %v4102 = vadd.f32 0.0, %v4101
        %v4103 = vpop.f32.mrb[0].mxu0
        %v4104 = vadd.f32 0.0, %v4103
        %v4105 = vpop.f32.mrb[0].mxu0
        %v4106 = vadd.f32 0.0, %v4105
        %v4107 = vpop.f32.mrb[0].mxu0
        %v4108 = vadd.f32 0.0, %v4107
        %4109 = vdwg.mxu0
        %4110 = vmatprep.subr.bf16.mxu0 %v3002
        %4111 = vmatpush1.bf16.msra.mxu0 %v3001
        %4112 = vmatprep.subr.bf16.mxu0 %v3010
        %4113 = vmatpush1.bf16.msra.mxu0 %v3009
        %4114 = vmatprep.subr.bf16.mxu0 %v3018
        %4115 = vmatpush1.bf16.msra.mxu0 %v3017
        %4116 = vmatprep.subr.bf16.mxu0 %v3026
        %4117 = vmatpush1.bf16.msra.mxu0 %v3025
        %4118 = vmatprep.subr.bf16.mxu0 %v3034
        %4119 = vmatpush1.bf16.msra.mxu0 %v3033
        %4120 = vmatprep.subr.bf16.mxu0 %v3042
        %4121 = vmatpush1.bf16.msra.mxu0 %v3041
        %4122 = vmatprep.subr.bf16.mxu0 %v3050
        %4123 = vmatpush1.bf16.msra.mxu0 %v3049
        %4124 = vmatprep.subr.bf16.mxu0 %v3058
        %4125 = vmatpush1.bf16.msra.mxu0 %v3057
        %4126 = vmatprep.subr.bf16.mxu0 %v3066
        %4127 = vmatpush1.bf16.msra.mxu0 %v3065
        %4128 = vmatprep.subr.bf16.mxu0 %v3074
        %4129 = vmatpush1.bf16.msra.mxu0 %v3073
        %4130 = vmatprep.subr.bf16.mxu0 %v3082
        %4131 = vmatpush1.bf16.msra.mxu0 %v3081
        %4132 = vmatprep.subr.bf16.mxu0 %v3090
        %4133 = vmatpush1.bf16.msra.mxu0 %v3089
        %4134 = vmatprep.subr.bf16.mxu0 %v3098
        %4135 = vmatpush1.bf16.msra.mxu0 %v3097
        %4136 = vmatprep.subr.bf16.mxu0 %v3106
        %4137 = vmatpush1.bf16.msra.mxu0 %v3105
        %4138 = vmatprep.subr.bf16.mxu0 %v3114
        %4139 = vmatpush1.bf16.msra.mxu0 %v3113
        %4140 = vmatprep.subr.bf16.mxu0 %v3122
        %4141 = vmatpush1.bf16.msra.mxu0 %v3121
        %4142 = vmatprep.mubr.bf16.mxu0 %v1322
        %4143 = vmatmul.mubr.bf16.gmra.mrb[0].mxu0 %v1321
        %v4144 = vpop.f32.mrb[0].mxu0
        %v4145 = vadd.f32 %v4102, %v4144
        %v4146 = vpop.f32.mrb[0].mxu0
        %v4147 = vadd.f32 %v4104, %v4146
        %v4148 = vpop.f32.mrb[0].mxu0
        %v4149 = vadd.f32 %v4106, %v4148
        %v4150 = vpop.f32.mrb[0].mxu0
        %v4151 = vadd.f32 %v4108, %v4150
        %4152 = vdwg.mxu0
        %4153 = vmatprep.subr.bf16.mxu0 %v3130
        %4154 = vmatpush1.bf16.msra.mxu0 %v3129
        %4155 = vmatprep.subr.bf16.mxu0 %v3138
        %4156 = vmatpush1.bf16.msra.mxu0 %v3137
        %4157 = vmatprep.subr.bf16.mxu0 %v3146
        %4158 = vmatpush1.bf16.msra.mxu0 %v3145
        %4159 = vmatprep.subr.bf16.mxu0 %v3154
        %4160 = vmatpush1.bf16.msra.mxu0 %v3153
        %4161 = vmatprep.subr.bf16.mxu0 %v3162
        %4162 = vmatpush1.bf16.msra.mxu0 %v3161
        %4163 = vmatprep.subr.bf16.mxu0 %v3170
        %4164 = vmatpush1.bf16.msra.mxu0 %v3169
        %4165 = vmatprep.subr.bf16.mxu0 %v3178
        %4166 = vmatpush1.bf16.msra.mxu0 %v3177
        %4167 = vmatprep.subr.bf16.mxu0 %v3186
        %4168 = vmatpush1.bf16.msra.mxu0 %v3185
        %4169 = vmatprep.subr.bf16.mxu0 %v3194
        %4170 = vmatpush1.bf16.msra.mxu0 %v3193
        %4171 = vmatprep.subr.bf16.mxu0 %v3202
        %4172 = vmatpush1.bf16.msra.mxu0 %v3201
        %4173 = vmatprep.subr.bf16.mxu0 %v3210
        %4174 = vmatpush1.bf16.msra.mxu0 %v3209
        %4175 = vmatprep.subr.bf16.mxu0 %v3218
        %4176 = vmatpush1.bf16.msra.mxu0 %v3217
        %4177 = vmatprep.subr.bf16.mxu0 %v3226
        %4178 = vmatpush1.bf16.msra.mxu0 %v3225
        %4179 = vmatprep.subr.bf16.mxu0 %v3234
        %4180 = vmatpush1.bf16.msra.mxu0 %v3233
        %4181 = vmatprep.subr.bf16.mxu0 %v3242
        %4182 = vmatpush1.bf16.msra.mxu0 %v3241
        %4183 = vmatprep.subr.bf16.mxu0 %v3250
        %4184 = vmatpush1.bf16.msra.mxu0 %v3249
        %4185 = vmatprep.mubr.bf16.mxu0 %v1324
        %4186 = vmatmul.mubr.bf16.gmra.mrb[0].mxu0 %v1323
        %v4187 = vpop.f32.mrb[0].mxu0
        %v4188 = vadd.f32 %v4145, %v4187
        %v4189 = vpop.f32.mrb[0].mxu0
        %v4190 = vadd.f32 %v4147, %v4189
        %v4191 = vpop.f32.mrb[0].mxu0
        %v4192 = vadd.f32 %v4149, %v4191
        %v4193 = vpop.f32.mrb[0].mxu0
        %v4194 = vadd.f32 %v4151, %v4193
        %4195 = vdwg.mxu0
        %4196 = vmatprep.subr.bf16.mxu0 %v3258
        %4197 = vmatpush1.bf16.msra.mxu0 %v3257
        %4198 = vmatprep.subr.bf16.mxu0 %v3266
        %4199 = vmatpush1.bf16.msra.mxu0 %v3265
        %4200 = vmatprep.subr.bf16.mxu0 %v3274
        %4201 = vmatpush1.bf16.msra.mxu0 %v3273
        %4202 = vmatprep.subr.bf16.mxu0 %v3282
        %4203 = vmatpush1.bf16.msra.mxu0 %v3281
        %4204 = vmatprep.subr.bf16.mxu0 %v3290
        %4205 = vmatpush1.bf16.msra.mxu0 %v3289
        %4206 = vmatprep.subr.bf16.mxu0 %v3298
        %4207 = vmatpush1.bf16.msra.mxu0 %v3297
        %4208 = vmatprep.subr.bf16.mxu0 %v3306
        %4209 = vmatpush1.bf16.msra.mxu0 %v3305
        %4210 = vmatprep.subr.bf16.mxu0 %v3314
        %4211 = vmatpush1.bf16.msra.mxu0 %v3313
        %4212 = vmatprep.subr.bf16.mxu0 %v3322
        %4213 = vmatpush1.bf16.msra.mxu0 %v3321
        %4214 = vmatprep.subr.bf16.mxu0 %v3330
        %4215 = vmatpush1.bf16.msra.mxu0 %v3329
        %4216 = vmatprep.subr.bf16.mxu0 %v3338
        %4217 = vmatpush1.bf16.msra.mxu0 %v3337
        %4218 = vmatprep.subr.bf16.mxu0 %v3346
        %4219 = vmatpush1.bf16.msra.mxu0 %v3345
        %4220 = vmatprep.subr.bf16.mxu0 %v3354
        %4221 = vmatpush1.bf16.msra.mxu0 %v3353
        %4222 = vmatprep.subr.bf16.mxu0 %v3362
        %4223 = vmatpush1.bf16.msra.mxu0 %v3361
        %4224 = vmatprep.subr.bf16.mxu0 %v3370
        %4225 = vmatpush1.bf16.msra.mxu0 %v3369
        %4226 = vmatprep.subr.bf16.mxu0 %v3378
        %4227 = vmatpush1.bf16.msra.mxu0 %v3377
        %4228 = vmatprep.mubr.bf16.mxu0 %v1326
        %4229 = vmatmul.mubr.bf16.gmra.mrb[0].mxu0 %v1325
        %v4230 = vpop.f32.mrb[0].mxu0
        %v4231 = vadd.f32 %v4188, %v4230
        %v4232 = vpop.f32.mrb[0].mxu0
        %v4233 = vadd.f32 %v4190, %v4232
        %v4234 = vpop.f32.mrb[0].mxu0
        %v4235 = vadd.f32 %v4192, %v4234
        %v4236 = vpop.f32.mrb[0].mxu0
        %v4237 = vadd.f32 %v4194, %v4236
        %4238 = vdwg.mxu0
        %4239 = vmatprep.subr.bf16.mxu0 %v2876
        %4240 = vmatpush1.bf16.msra.mxu0 %v2875
        %4241 = vmatprep.subr.bf16.mxu0 %v2884
        %4242 = vmatpush1.bf16.msra.mxu0 %v2883
        %4243 = vmatprep.subr.bf16.mxu0 %v2892
        %4244 = vmatpush1.bf16.msra.mxu0 %v2891
        %4245 = vmatprep.subr.bf16.mxu0 %v2900
        %4246 = vmatpush1.bf16.msra.mxu0 %v2899
        %4247 = vmatprep.subr.bf16.mxu0 %v2908
        %4248 = vmatpush1.bf16.msra.mxu0 %v2907
        %4249 = vmatprep.subr.bf16.mxu0 %v2916
        %4250 = vmatpush1.bf16.msra.mxu0 %v2915
        %4251 = vmatprep.subr.bf16.mxu0 %v2924
        %4252 = vmatpush1.bf16.msra.mxu0 %v2923
        %4253 = vmatprep.subr.bf16.mxu0 %v2932
        %4254 = vmatpush1.bf16.msra.mxu0 %v2931
        %4255 = vmatprep.subr.bf16.mxu0 %v2940
        %4256 = vmatpush1.bf16.msra.mxu0 %v2939
        %4257 = vmatprep.subr.bf16.mxu0 %v2948
        %4258 = vmatpush1.bf16.msra.mxu0 %v2947
        %4259 = vmatprep.subr.bf16.mxu0 %v2956
        %4260 = vmatpush1.bf16.msra.mxu0 %v2955
        %4261 = vmatprep.subr.bf16.mxu0 %v2964
        %4262 = vmatpush1.bf16.msra.mxu0 %v2963
        %4263 = vmatprep.subr.bf16.mxu0 %v2972
        %4264 = vmatpush1.bf16.msra.mxu0 %v2971
        %4265 = vmatprep.subr.bf16.mxu0 %v2980
        %4266 = vmatpush1.bf16.msra.mxu0 %v2979
        %4267 = vmatprep.subr.bf16.mxu0 %v2988
        %4268 = vmatpush1.bf16.msra.mxu0 %v2987
        %4269 = vmatprep.subr.bf16.mxu0 %v2996
        %4270 = vmatpush1.bf16.msra.mxu0 %v2995
        %4271 = vmatprep.mubr.bf16.mxu0 %v1320
        %4272 = vmatmul.mubr.bf16.gmra.mrb[0].mxu0 %v1319
        %v4273 = vpop.f32.mrb[0].mxu0
        %v4274 = vadd.f32 0.0, %v4273
        %v4275 = vpop.f32.mrb[0].mxu0
        %v4276 = vadd.f32 0.0, %v4275
        %v4277 = vpop.f32.mrb[0].mxu0
        %v4278 = vadd.f32 0.0, %v4277
        %v4279 = vpop.f32.mrb[0].mxu0
        %v4280 = vadd.f32 0.0, %v4279
        %4281 = vdwg.mxu0
        %4282 = vmatprep.subr.bf16.mxu0 %v3004
        %4283 = vmatpush1.bf16.msra.mxu0 %v3003
        %4284 = vmatprep.subr.bf16.mxu0 %v3012
        %4285 = vmatpush1.bf16.msra.mxu0 %v3011
        %4286 = vmatprep.subr.bf16.mxu0 %v3020
        %4287 = vmatpush1.bf16.msra.mxu0 %v3019
        %4288 = vmatprep.subr.bf16.mxu0 %v3028
        %4289 = vmatpush1.bf16.msra.mxu0 %v3027
        %4290 = vmatprep.subr.bf16.mxu0 %v3036
        %4291 = vmatpush1.bf16.msra.mxu0 %v3035
        %4292 = vmatprep.subr.bf16.mxu0 %v3044
        %4293 = vmatpush1.bf16.msra.mxu0 %v3043
        %4294 = vmatprep.subr.bf16.mxu0 %v3052
        %4295 = vmatpush1.bf16.msra.mxu0 %v3051
        %4296 = vmatprep.subr.bf16.mxu0 %v3060
        %4297 = vmatpush1.bf16.msra.mxu0 %v3059
        %4298 = vmatprep.subr.bf16.mxu0 %v3068
        %4299 = vmatpush1.bf16.msra.mxu0 %v3067
        %4300 = vmatprep.subr.bf16.mxu0 %v3076
        %4301 = vmatpush1.bf16.msra.mxu0 %v3075
        %4302 = vmatprep.subr.bf16.mxu0 %v3084
        %4303 = vmatpush1.bf16.msra.mxu0 %v3083
        %4304 = vmatprep.subr.bf16.mxu0 %v3092
        %4305 = vmatpush1.bf16.msra.mxu0 %v3091
        %4306 = vmatprep.subr.bf16.mxu0 %v3100
        %4307 = vmatpush1.bf16.msra.mxu0 %v3099
        %4308 = vmatprep.subr.bf16.mxu0 %v3108
        %4309 = vmatpush1.bf16.msra.mxu0 %v3107
        %4310 = vmatprep.subr.bf16.mxu0 %v3116
        %4311 = vmatpush1.bf16.msra.mxu0 %v3115
        %4312 = vmatprep.subr.bf16.mxu0 %v3124
        %4313 = vmatpush1.bf16.msra.mxu0 %v3123
        %4314 = vmatprep.mubr.bf16.mxu0 %v1322
        %4315 = vmatmul.mubr.bf16.gmra.mrb[0].mxu0 %v1321
        %v4316 = vpop.f32.mrb[0].mxu0
        %v4317 = vadd.f32 %v4274, %v4316
        %v4318 = vpop.f32.mrb[0].mxu0
        %v4319 = vadd.f32 %v4276, %v4318
        %v4320 = vpop.f32.mrb[0].mxu0
        %v4321 = vadd.f32 %v4278, %v4320
        %v4322 = vpop.f32.mrb[0].mxu0
        %v4323 = vadd.f32 %v4280, %v4322
        %4324 = vdwg.mxu0
        %4325 = vmatprep.subr.bf16.mxu0 %v3132
        %4326 = vmatpush1.bf16.msra.mxu0 %v3131
        %4327 = vmatprep.subr.bf16.mxu0 %v3140
        %4328 = vmatpush1.bf16.msra.mxu0 %v3139
        %4329 = vmatprep.subr.bf16.mxu0 %v3148
        %4330 = vmatpush1.bf16.msra.mxu0 %v3147
        %4331 = vmatprep.subr.bf16.mxu0 %v3156
        %4332 = vmatpush1.bf16.msra.mxu0 %v3155
        %4333 = vmatprep.subr.bf16.mxu0 %v3164
        %4334 = vmatpush1.bf16.msra.mxu0 %v3163
        %4335 = vmatprep.subr.bf16.mxu0 %v3172
        %4336 = vmatpush1.bf16.msra.mxu0 %v3171
        %4337 = vmatprep.subr.bf16.mxu0 %v3180
        %4338 = vmatpush1.bf16.msra.mxu0 %v3179
        %4339 = vmatprep.subr.bf16.mxu0 %v3188
        %4340 = vmatpush1.bf16.msra.mxu0 %v3187
        %4341 = vmatprep.subr.bf16.mxu0 %v3196
        %4342 = vmatpush1.bf16.msra.mxu0 %v3195
        %4343 = vmatprep.subr.bf16.mxu0 %v3204
        %4344 = vmatpush1.bf16.msra.mxu0 %v3203
        %4345 = vmatprep.subr.bf16.mxu0 %v3212
        %4346 = vmatpush1.bf16.msra.mxu0 %v3211
        %4347 = vmatprep.subr.bf16.mxu0 %v3220
        %4348 = vmatpush1.bf16.msra.mxu0 %v3219
        %4349 = vmatprep.subr.bf16.mxu0 %v3228
        %4350 = vmatpush1.bf16.msra.mxu0 %v3227
        %4351 = vmatprep.subr.bf16.mxu0 %v3236
        %4352 = vmatpush1.bf16.msra.mxu0 %v3235
        %4353 = vmatprep.subr.bf16.mxu0 %v3244
        %4354 = vmatpush1.bf16.msra.mxu0 %v3243
        %4355 = vmatprep.subr.bf16.mxu0 %v3252
        %4356 = vmatpush1.bf16.msra.mxu0 %v3251
        %4357 = vmatprep.mubr.bf16.mxu0 %v1324
        %4358 = vmatmul.mubr.bf16.gmra.mrb[0].mxu0 %v1323
        %v4359 = vpop.f32.mrb[0].mxu0
        %v4360 = vadd.f32 %v4317, %v4359
        %v4361 = vpop.f32.mrb[0].mxu0
        %v4362 = vadd.f32 %v4319, %v4361
        %v4363 = vpop.f32.mrb[0].mxu0
        %v4364 = vadd.f32 %v4321, %v4363
        %v4365 = vpop.f32.mrb[0].mxu0
        %v4366 = vadd.f32 %v4323, %v4365
        %4367 = vdwg.mxu0
        %4368 = vmatprep.subr.bf16.mxu0 %v3260
        %4369 = vmatpush1.bf16.msra.mxu0 %v3259
        %4370 = vmatprep.subr.bf16.mxu0 %v3268
        %4371 = vmatpush1.bf16.msra.mxu0 %v3267
        %4372 = vmatprep.subr.bf16.mxu0 %v3276
        %4373 = vmatpush1.bf16.msra.mxu0 %v3275
        %4374 = vmatprep.subr.bf16.mxu0 %v3284
        %4375 = vmatpush1.bf16.msra.mxu0 %v3283
        %4376 = vmatprep.subr.bf16.mxu0 %v3292
        %4377 = vmatpush1.bf16.msra.mxu0 %v3291
        %4378 = vmatprep.subr.bf16.mxu0 %v3300
        %4379 = vmatpush1.bf16.msra.mxu0 %v3299
        %4380 = vmatprep.subr.bf16.mxu0 %v3308
        %4381 = vmatpush1.bf16.msra.mxu0 %v3307
        %4382 = vmatprep.subr.bf16.mxu0 %v3316
        %4383 = vmatpush1.bf16.msra.mxu0 %v3315
        %4384 = vmatprep.subr.bf16.mxu0 %v3324
        %4385 = vmatpush1.bf16.msra.mxu0 %v3323
        %4386 = vmatprep.subr.bf16.mxu0 %v3332
        %4387 = vmatpush1.bf16.msra.mxu0 %v3331
        %4388 = vmatprep.subr.bf16.mxu0 %v3340
        %4389 = vmatpush1.bf16.msra.mxu0 %v3339
        %4390 = vmatprep.subr.bf16.mxu0 %v3348
        %4391 = vmatpush1.bf16.msra.mxu0 %v3347
        %4392 = vmatprep.subr.bf16.mxu0 %v3356
        %4393 = vmatpush1.bf16.msra.mxu0 %v3355
        %4394 = vmatprep.subr.bf16.mxu0 %v3364
        %4395 = vmatpush1.bf16.msra.mxu0 %v3363
        %4396 = vmatprep.subr.bf16.mxu0 %v3372
        %4397 = vmatpush1.bf16.msra.mxu0 %v3371
        %4398 = vmatprep.subr.bf16.mxu0 %v3380
        %4399 = vmatpush1.bf16.msra.mxu0 %v3379
        %4400 = vmatprep.mubr.bf16.mxu0 %v1326
        %4401 = vmatmul.mubr.bf16.gmra.mrb[0].mxu0 %v1325
        %v4402 = vpop.f32.mrb[0].mxu0
        %v4403 = vadd.f32 %v4360, %v4402
        %v4404 = vpop.f32.mrb[0].mxu0
        %v4405 = vadd.f32 %v4362, %v4404
        %v4406 = vpop.f32.mrb[0].mxu0
        %v4407 = vadd.f32 %v4364, %v4406
        %v4408 = vpop.f32.mrb[0].mxu0
        %v4409 = vadd.f32 %v4366, %v4408
        %4410 = vdwg.mxu0
        %4411 = vmatprep.subr.bf16.mxu0 %v2878
        %4412 = vmatpush1.bf16.msra.mxu0 %v2877
        %4413 = vmatprep.subr.bf16.mxu0 %v2886
        %4414 = vmatpush1.bf16.msra.mxu0 %v2885
        %4415 = vmatprep.subr.bf16.mxu0 %v2894
        %4416 = vmatpush1.bf16.msra.mxu0 %v2893
        %4417 = vmatprep.subr.bf16.mxu0 %v2902
        %4418 = vmatpush1.bf16.msra.mxu0 %v2901
        %4419 = vmatprep.subr.bf16.mxu0 %v2910
        %4420 = vmatpush1.bf16.msra.mxu0 %v2909
        %4421 = vmatprep.subr.bf16.mxu0 %v2918
        %4422 = vmatpush1.bf16.msra.mxu0 %v2917
        %4423 = vmatprep.subr.bf16.mxu0 %v2926
        %4424 = vmatpush1.bf16.msra.mxu0 %v2925
        %4425 = vmatprep.subr.bf16.mxu0 %v2934
        %4426 = vmatpush1.bf16.msra.mxu0 %v2933
        %4427 = vmatprep.subr.bf16.mxu0 %v2942
        %4428 = vmatpush1.bf16.msra.mxu0 %v2941
        %4429 = vmatprep.subr.bf16.mxu0 %v2950
        %4430 = vmatpush1.bf16.msra.mxu0 %v2949
        %4431 = vmatprep.subr.bf16.mxu0 %v2958
        %4432 = vmatpush1.bf16.msra.mxu0 %v2957
        %4433 = vmatprep.subr.bf16.mxu0 %v2966
        %4434 = vmatpush1.bf16.msra.mxu0 %v2965
        %4435 = vmatprep.subr.bf16.mxu0 %v2974
        %4436 = vmatpush1.bf16.msra.mxu0 %v2973
        %4437 = vmatprep.subr.bf16.mxu0 %v2982
        %4438 = vmatpush1.bf16.msra.mxu0 %v2981
        %4439 = vmatprep.subr.bf16.mxu0 %v2990
        %4440 = vmatpush1.bf16.msra.mxu0 %v2989
        %4441 = vmatprep.subr.bf16.mxu0 %v2998
        %4442 = vmatpush1.bf16.msra.mxu0 %v2997
        %4443 = vmatprep.mubr.bf16.mxu0 %v1320
        %4444 = vmatmul.mubr.bf16.gmra.mrb[0].mxu0 %v1319
        %v4445 = vpop.f32.mrb[0].mxu0
        %v4446 = vadd.f32 0.0, %v4445
        %v4447 = vpop.f32.mrb[0].mxu0
        %v4448 = vadd.f32 0.0, %v4447
        %v4449 = vpop.f32.mrb[0].mxu0
        %v4450 = vadd.f32 0.0, %v4449
        %v4451 = vpop.f32.mrb[0].mxu0
        %v4452 = vadd.f32 0.0, %v4451
        %4453 = vdwg.mxu0
        %4454 = vmatprep.subr.bf16.mxu0 %v3006
        %4455 = vmatpush1.bf16.msra.mxu0 %v3005
        %4456 = vmatprep.subr.bf16.mxu0 %v3014
        %4457 = vmatpush1.bf16.msra.mxu0 %v3013
        %4458 = vmatprep.subr.bf16.mxu0 %v3022
        %4459 = vmatpush1.bf16.msra.mxu0 %v3021
        %4460 = vmatprep.subr.bf16.mxu0 %v3030
        %4461 = vmatpush1.bf16.msra.mxu0 %v3029
        %4462 = vmatprep.subr.bf16.mxu0 %v3038
        %4463 = vmatpush1.bf16.msra.mxu0 %v3037
        %4464 = vmatprep.subr.bf16.mxu0 %v3046
        %4465 = vmatpush1.bf16.msra.mxu0 %v3045
        %4466 = vmatprep.subr.bf16.mxu0 %v3054
        %4467 = vmatpush1.bf16.msra.mxu0 %v3053
        %4468 = vmatprep.subr.bf16.mxu0 %v3062
        %4469 = vmatpush1.bf16.msra.mxu0 %v3061
        %4470 = vmatprep.subr.bf16.mxu0 %v3070
        %4471 = vmatpush1.bf16.msra.mxu0 %v3069
        %4472 = vmatprep.subr.bf16.mxu0 %v3078
        %4473 = vmatpush1.bf16.msra.mxu0 %v3077
        %4474 = vmatprep.subr.bf16.mxu0 %v3086
        %4475 = vmatpush1.bf16.msra.mxu0 %v3085
        %4476 = vmatprep.subr.bf16.mxu0 %v3094
        %4477 = vmatpush1.bf16.msra.mxu0 %v3093
        %4478 = vmatprep.subr.bf16.mxu0 %v3102
        %4479 = vmatpush1.bf16.msra.mxu0 %v3101
        %4480 = vmatprep.subr.bf16.mxu0 %v3110
        %4481 = vmatpush1.bf16.msra.mxu0 %v3109
        %4482 = vmatprep.subr.bf16.mxu0 %v3118
        %4483 = vmatpush1.bf16.msra.mxu0 %v3117
        %4484 = vmatprep.subr.bf16.mxu0 %v3126
        %4485 = vmatpush1.bf16.msra.mxu0 %v3125
        %4486 = vmatprep.mubr.bf16.mxu0 %v1322
        %4487 = vmatmul.mubr.bf16.gmra.mrb[0].mxu0 %v1321
        %v4488 = vpop.f32.mrb[0].mxu0
        %v4489 = vadd.f32 %v4446, %v4488
        %v4490 = vpop.f32.mrb[0].mxu0
        %v4491 = vadd.f32 %v4448, %v4490
        %v4492 = vpop.f32.mrb[0].mxu0
        %v4493 = vadd.f32 %v4450, %v4492
        %v4494 = vpop.f32.mrb[0].mxu0
        %v4495 = vadd.f32 %v4452, %v4494
        %4496 = vdwg.mxu0
        %4497 = vmatprep.subr.bf16.mxu0 %v3134
        %4498 = vmatpush1.bf16.msra.mxu0 %v3133
        %4499 = vmatprep.subr.bf16.mxu0 %v3142
        %4500 = vmatpush1.bf16.msra.mxu0 %v3141
        %4501 = vmatprep.subr.bf16.mxu0 %v3150
        %4502 = vmatpush1.bf16.msra.mxu0 %v3149
        %4503 = vmatprep.subr.bf16.mxu0 %v3158
        %4504 = vmatpush1.bf16.msra.mxu0 %v3157
        %4505 = vmatprep.subr.bf16.mxu0 %v3166
        %4506 = vmatpush1.bf16.msra.mxu0 %v3165
        %4507 = vmatprep.subr.bf16.mxu0 %v3174
        %4508 = vmatpush1.bf16.msra.mxu0 %v3173
        %4509 = vmatprep.subr.bf16.mxu0 %v3182
        %4510 = vmatpush1.bf16.msra.mxu0 %v3181
        %4511 = vmatprep.subr.bf16.mxu0 %v3190
        %4512 = vmatpush1.bf16.msra.mxu0 %v3189
        %4513 = vmatprep.subr.bf16.mxu0 %v3198
        %4514 = vmatpush1.bf16.msra.mxu0 %v3197
        %4515 = vmatprep.subr.bf16.mxu0 %v3206
        %4516 = vmatpush1.bf16.msra.mxu0 %v3205
        %4517 = vmatprep.subr.bf16.mxu0 %v3214
        %4518 = vmatpush1.bf16.msra.mxu0 %v3213
        %4519 = vmatprep.subr.bf16.mxu0 %v3222
        %4520 = vmatpush1.bf16.msra.mxu0 %v3221
        %4521 = vmatprep.subr.bf16.mxu0 %v3230
        %4522 = vmatpush1.bf16.msra.mxu0 %v3229
        %4523 = vmatprep.subr.bf16.mxu0 %v3238
        %4524 = vmatpush1.bf16.msra.mxu0 %v3237
        %4525 = vmatprep.subr.bf16.mxu0 %v3246
        %4526 = vmatpush1.bf16.msra.mxu0 %v3245
        %4527 = vmatprep.subr.bf16.mxu0 %v3254
        %4528 = vmatpush1.bf16.msra.mxu0 %v3253
        %4529 = vmatprep.mubr.bf16.mxu0 %v1324
        %4530 = vmatmul.mubr.bf16.gmra.mrb[0].mxu0 %v1323
        %v4531 = vpop.f32.mrb[0].mxu0
        %v4532 = vadd.f32 %v4489, %v4531
        %v4533 = vpop.f32.mrb[0].mxu0
        %v4534 = vadd.f32 %v4491, %v4533
        %v4535 = vpop.f32.mrb[0].mxu0
        %v4536 = vadd.f32 %v4493, %v4535
        %v4537 = vpop.f32.mrb[0].mxu0
        %v4538 = vadd.f32 %v4495, %v4537
        %4539 = vdwg.mxu0
        %4540 = vmatprep.subr.bf16.mxu0 %v3262
        %4541 = vmatpush1.bf16.msra.mxu0 %v3261
        %4542 = vmatprep.subr.bf16.mxu0 %v3270
        %4543 = vmatpush1.bf16.msra.mxu0 %v3269
        %4544 = vmatprep.subr.bf16.mxu0 %v3278
        %4545 = vmatpush1.bf16.msra.mxu0 %v3277
        %4546 = vmatprep.subr.bf16.mxu0 %v3286
        %4547 = vmatpush1.bf16.msra.mxu0 %v3285
        %4548 = vmatprep.subr.bf16.mxu0 %v3294
        %4549 = vmatpush1.bf16.msra.mxu0 %v3293
        %4550 = vmatprep.subr.bf16.mxu0 %v3302
        %4551 = vmatpush1.bf16.msra.mxu0 %v3301
        %4552 = vmatprep.subr.bf16.mxu0 %v3310
        %4553 = vmatpush1.bf16.msra.mxu0 %v3309
        %4554 = vmatprep.subr.bf16.mxu0 %v3318
        %4555 = vmatpush1.bf16.msra.mxu0 %v3317
        %4556 = vmatprep.subr.bf16.mxu0 %v3326
        %4557 = vmatpush1.bf16.msra.mxu0 %v3325
        %4558 = vmatprep.subr.bf16.mxu0 %v3334
        %4559 = vmatpush1.bf16.msra.mxu0 %v3333
        %4560 = vmatprep.subr.bf16.mxu0 %v3342
        %4561 = vmatpush1.bf16.msra.mxu0 %v3341
        %4562 = vmatprep.subr.bf16.mxu0 %v3350
        %4563 = vmatpush1.bf16.msra.mxu0 %v3349
        %4564 = vmatprep.subr.bf16.mxu0 %v3358
        %4565 = vmatpush1.bf16.msra.mxu0 %v3357
        %4566 = vmatprep.subr.bf16.mxu0 %v3366
        %4567 = vmatpush1.bf16.msra.mxu0 %v3365
        %4568 = vmatprep.subr.bf16.mxu0 %v3374
        %4569 = vmatpush1.bf16.msra.mxu0 %v3373
        %4570 = vmatprep.subr.bf16.mxu0 %v3382
        %4571 = vmatpush1.bf16.msra.mxu0 %v3381
        %4572 = vmatprep.mubr.bf16.mxu0 %v1326
        %4573 = vmatmul.mubr.bf16.gmra.mrb[0].mxu0 %v1325
        %v4574 = vpop.f32.mrb[0].mxu0
        %v4575 = vadd.f32 %v4532, %v4574
        %v4576 = vpop.f32.mrb[0].mxu0
        %v4577 = vadd.f32 %v4534, %v4576
        %v4578 = vpop.f32.mrb[0].mxu0
        %v4579 = vadd.f32 %v4536, %v4578
        %v4580 = vpop.f32.mrb[0].mxu0
        %v4581 = vadd.f32 %v4538, %v4580
        %4582 = vdwg.mxu0
        %v5095 = vunpack.c.l.b16 %v271
        %v5096 = vunpack.c.h.b16 %v271
        %v5097 = vunpack.c.l.b16 %v272
        %v5098 = vunpack.c.h.b16 %v272
        %v5099 = vunpack.c.l.b16 %v273
        %v5100 = vunpack.c.h.b16 %v273
        %v5101 = vunpack.c.l.b16 %v274
        %v5102 = vunpack.c.h.b16 %v274
        %v5103 = vunpack.c.l.b16 %v275
        %v5104 = vunpack.c.h.b16 %v275
        %v5105 = vunpack.c.l.b16 %v276
        %v5106 = vunpack.c.h.b16 %v276
        %v5107 = vunpack.c.l.b16 %v277
        %v5108 = vunpack.c.h.b16 %v277
        %v5109 = vunpack.c.l.b16 %v278
        %v5110 = vunpack.c.h.b16 %v278
        %v5111 = vunpack.c.l.b16 %v279
        %v5112 = vunpack.c.h.b16 %v279
        %v5113 = vunpack.c.l.b16 %v280
        %v5114 = vunpack.c.h.b16 %v280
        %v5115 = vunpack.c.l.b16 %v281
        %v5116 = vunpack.c.h.b16 %v281
        %v5117 = vunpack.c.l.b16 %v282
        %v5118 = vunpack.c.h.b16 %v282
        %v5119 = vunpack.c.l.b16 %v283
        %v5120 = vunpack.c.h.b16 %v283
        %v5121 = vunpack.c.l.b16 %v284
        %v5122 = vunpack.c.h.b16 %v284
        %v5123 = vunpack.c.l.b16 %v285
        %v5124 = vunpack.c.h.b16 %v285
        %v5125 = vunpack.c.l.b16 %v286
        %v5126 = vunpack.c.h.b16 %v286
        %v5127 = vunpack.c.l.b16 %v287
        %v5128 = vunpack.c.h.b16 %v287
        %v5129 = vunpack.c.l.b16 %v288
        %v5130 = vunpack.c.h.b16 %v288
        %v5131 = vunpack.c.l.b16 %v289
        %v5132 = vunpack.c.h.b16 %v289
        %v5133 = vunpack.c.l.b16 %v290
        %v5134 = vunpack.c.h.b16 %v290
        %v5135 = vunpack.c.l.b16 %v291
        %v5136 = vunpack.c.h.b16 %v291
        %v5137 = vunpack.c.l.b16 %v292
        %v5138 = vunpack.c.h.b16 %v292
        %v5139 = vunpack.c.l.b16 %v293
        %v5140 = vunpack.c.h.b16 %v293
        %v5141 = vunpack.c.l.b16 %v294
        %v5142 = vunpack.c.h.b16 %v294
        %v5143 = vunpack.c.l.b16 %v295
        %v5144 = vunpack.c.h.b16 %v295
        %v5145 = vunpack.c.l.b16 %v296
        %v5146 = vunpack.c.h.b16 %v296
        %v5147 = vunpack.c.l.b16 %v297
        %v5148 = vunpack.c.h.b16 %v297
        %v5149 = vunpack.c.l.b16 %v298
        %v5150 = vunpack.c.h.b16 %v298
        %v5151 = vunpack.c.l.b16 %v299
        %v5152 = vunpack.c.h.b16 %v299
        %v5153 = vunpack.c.l.b16 %v300
        %v5154 = vunpack.c.h.b16 %v300
        %v5155 = vunpack.c.l.b16 %v301
        %v5156 = vunpack.c.h.b16 %v301
        %v5157 = vunpack.c.l.b16 %v302
        %v5158 = vunpack.c.h.b16 %v302
        %v5159 = vunpack.c.l.b16 %v303
        %v5160 = vunpack.c.h.b16 %v303
        %v5161 = vunpack.c.l.b16 %v304
        %v5162 = vunpack.c.h.b16 %v304
        %v5163 = vunpack.c.l.b16 %v305
        %v5164 = vunpack.c.h.b16 %v305
        %v5165 = vunpack.c.l.b16 %v306
        %v5166 = vunpack.c.h.b16 %v306
        %v5167 = vunpack.c.l.b16 %v307
        %v5168 = vunpack.c.h.b16 %v307
        %v5169 = vunpack.c.l.b16 %v308
        %v5170 = vunpack.c.h.b16 %v308
        %v5171 = vunpack.c.l.b16 %v309
        %v5172 = vunpack.c.h.b16 %v309
        %v5173 = vunpack.c.l.b16 %v310
        %v5174 = vunpack.c.h.b16 %v310
        %v5175 = vunpack.c.l.b16 %v311
        %v5176 = vunpack.c.h.b16 %v311
        %v5177 = vunpack.c.l.b16 %v312
        %v5178 = vunpack.c.h.b16 %v312
        %v5179 = vunpack.c.l.b16 %v313
        %v5180 = vunpack.c.h.b16 %v313
        %v5181 = vunpack.c.l.b16 %v314
        %v5182 = vunpack.c.h.b16 %v314
        %v5183 = vunpack.c.l.b16 %v315
        %v5184 = vunpack.c.h.b16 %v315
        %v5185 = vunpack.c.l.b16 %v316
        %v5186 = vunpack.c.h.b16 %v316
        %v5187 = vunpack.c.l.b16 %v317
        %v5188 = vunpack.c.h.b16 %v317
        %v5189 = vunpack.c.l.b16 %v318
        %v5190 = vunpack.c.h.b16 %v318
        %v5191 = vunpack.c.l.b16 %v319
        %v5192 = vunpack.c.h.b16 %v319
        %v5193 = vunpack.c.l.b16 %v320
        %v5194 = vunpack.c.h.b16 %v320
        %v5195 = vunpack.c.l.b16 %v321
        %v5196 = vunpack.c.h.b16 %v321
        %v5197 = vunpack.c.l.b16 %v322
        %v5198 = vunpack.c.h.b16 %v322
        %v5199 = vunpack.c.l.b16 %v323
        %v5200 = vunpack.c.h.b16 %v323
        %v5201 = vunpack.c.l.b16 %v324
        %v5202 = vunpack.c.h.b16 %v324
        %v5203 = vunpack.c.l.b16 %v325
        %v5204 = vunpack.c.h.b16 %v325
        %v5205 = vunpack.c.l.b16 %v326
        %v5206 = vunpack.c.h.b16 %v326
        %v5207 = vunpack.c.l.b16 %v327
        %v5208 = vunpack.c.h.b16 %v327
        %v5209 = vunpack.c.l.b16 %v328
        %v5210 = vunpack.c.h.b16 %v328
        %v5211 = vunpack.c.l.b16 %v329
        %v5212 = vunpack.c.h.b16 %v329
        %v5213 = vunpack.c.l.b16 %v330
        %v5214 = vunpack.c.h.b16 %v330
        %v5215 = vunpack.c.l.b16 %v331
        %v5216 = vunpack.c.h.b16 %v331
        %v5217 = vunpack.c.l.b16 %v332
        %v5218 = vunpack.c.h.b16 %v332
        %v5219 = vunpack.c.l.b16 %v333
        %v5220 = vunpack.c.h.b16 %v333
        %v5221 = vunpack.c.l.b16 %v334
        %v5222 = vunpack.c.h.b16 %v334
        %v5223 = vunpack.c.l.b16 %v335
        %v5224 = vunpack.c.h.b16 %v335
        %v5225 = vunpack.c.l.b16 %v336
        %v5226 = vunpack.c.h.b16 %v336
        %v5227 = vunpack.c.l.b16 %v337
        %v5228 = vunpack.c.h.b16 %v337
        %v5229 = vunpack.c.l.b16 %v338
        %v5230 = vunpack.c.h.b16 %v338
        %v5231 = vunpack.c.l.b16 %v339
        %v5232 = vunpack.c.h.b16 %v339
        %v5233 = vunpack.c.l.b16 %v340
        %v5234 = vunpack.c.h.b16 %v340
        %v5235 = vunpack.c.l.b16 %v341
        %v5236 = vunpack.c.h.b16 %v341
        %v5237 = vunpack.c.l.b16 %v342
        %v5238 = vunpack.c.h.b16 %v342
        %v5239 = vunpack.c.l.b16 %v343
        %v5240 = vunpack.c.h.b16 %v343
        %v5241 = vunpack.c.l.b16 %v344
        %v5242 = vunpack.c.h.b16 %v344
        %v5243 = vunpack.c.l.b16 %v345
        %v5244 = vunpack.c.h.b16 %v345
        %v5245 = vunpack.c.l.b16 %v346
        %v5246 = vunpack.c.h.b16 %v346
        %v5247 = vunpack.c.l.b16 %v347
        %v5248 = vunpack.c.h.b16 %v347
        %v5249 = vunpack.c.l.b16 %v348
        %v5250 = vunpack.c.h.b16 %v348
        %v5251 = vunpack.c.l.b16 %v349
        %v5252 = vunpack.c.h.b16 %v349
        %v5253 = vunpack.c.l.b16 %v350
        %v5254 = vunpack.c.h.b16 %v350
        %v5255 = vunpack.c.l.b16 %v351
        %v5256 = vunpack.c.h.b16 %v351
        %v5257 = vunpack.c.l.b16 %v352
        %v5258 = vunpack.c.h.b16 %v352
        %v5259 = vunpack.c.l.b16 %v353
        %v5260 = vunpack.c.h.b16 %v353
        %v5261 = vunpack.c.l.b16 %v354
        %v5262 = vunpack.c.h.b16 %v354
        %v5263 = vunpack.c.l.b16 %v355
        %v5264 = vunpack.c.h.b16 %v355
        %v5265 = vunpack.c.l.b16 %v356
        %v5266 = vunpack.c.h.b16 %v356
        %v5267 = vunpack.c.l.b16 %v357
        %v5268 = vunpack.c.h.b16 %v357
        %v5269 = vunpack.c.l.b16 %v358
        %v5270 = vunpack.c.h.b16 %v358
        %v5271 = vunpack.c.l.b16 %v359
        %v5272 = vunpack.c.h.b16 %v359
        %v5273 = vunpack.c.l.b16 %v360
        %v5274 = vunpack.c.h.b16 %v360
        %v5275 = vunpack.c.l.b16 %v361
        %v5276 = vunpack.c.h.b16 %v361
        %v5277 = vunpack.c.l.b16 %v362
        %v5278 = vunpack.c.h.b16 %v362
        %v5279 = vunpack.c.l.b16 %v363
        %v5280 = vunpack.c.h.b16 %v363
        %v5281 = vunpack.c.l.b16 %v364
        %v5282 = vunpack.c.h.b16 %v364
        %v5283 = vunpack.c.l.b16 %v365
        %v5284 = vunpack.c.h.b16 %v365
        %v5285 = vunpack.c.l.b16 %v366
        %v5286 = vunpack.c.h.b16 %v366
        %v5287 = vunpack.c.l.b16 %v367
        %v5288 = vunpack.c.h.b16 %v367
        %v5289 = vunpack.c.l.b16 %v368
        %v5290 = vunpack.c.h.b16 %v368
        %v5291 = vunpack.c.l.b16 %v369
        %v5292 = vunpack.c.h.b16 %v369
        %v5293 = vunpack.c.l.b16 %v370
        %v5294 = vunpack.c.h.b16 %v370
        %v5295 = vunpack.c.l.b16 %v371
        %v5296 = vunpack.c.h.b16 %v371
        %v5297 = vunpack.c.l.b16 %v372
        %v5298 = vunpack.c.h.b16 %v372
        %v5299 = vunpack.c.l.b16 %v373
        %v5300 = vunpack.c.h.b16 %v373
        %v5301 = vunpack.c.l.b16 %v374
        %v5302 = vunpack.c.h.b16 %v374
        %v5303 = vunpack.c.l.b16 %v375
        %v5304 = vunpack.c.h.b16 %v375
        %v5305 = vunpack.c.l.b16 %v376
        %v5306 = vunpack.c.h.b16 %v376
        %v5307 = vunpack.c.l.b16 %v377
        %v5308 = vunpack.c.h.b16 %v377
        %v5309 = vunpack.c.l.b16 %v378
        %v5310 = vunpack.c.h.b16 %v378
        %v5311 = vunpack.c.l.b16 %v379
        %v5312 = vunpack.c.h.b16 %v379
        %v5313 = vunpack.c.l.b16 %v380
        %v5314 = vunpack.c.h.b16 %v380
        %v5315 = vunpack.c.l.b16 %v381
        %v5316 = vunpack.c.h.b16 %v381
        %v5317 = vunpack.c.l.b16 %v382
        %v5318 = vunpack.c.h.b16 %v382
        %v5319 = vunpack.c.l.b16 %v383
        %v5320 = vunpack.c.h.b16 %v383
        %v5321 = vunpack.c.l.b16 %v384
        %v5322 = vunpack.c.h.b16 %v384
        %v5323 = vunpack.c.l.b16 %v385
        %v5324 = vunpack.c.h.b16 %v385
        %v5325 = vunpack.c.l.b16 %v386
        %v5326 = vunpack.c.h.b16 %v386
        %v5327 = vunpack.c.l.b16 %v387
        %v5328 = vunpack.c.h.b16 %v387
        %v5329 = vunpack.c.l.b16 %v388
        %v5330 = vunpack.c.h.b16 %v388
        %v5331 = vunpack.c.l.b16 %v389
        %v5332 = vunpack.c.h.b16 %v389
        %v5333 = vunpack.c.l.b16 %v390
        %v5334 = vunpack.c.h.b16 %v390
        %v5335 = vunpack.c.l.b16 %v391
        %v5336 = vunpack.c.h.b16 %v391
        %v5337 = vunpack.c.l.b16 %v392
        %v5338 = vunpack.c.h.b16 %v392
        %v5339 = vunpack.c.l.b16 %v393
        %v5340 = vunpack.c.h.b16 %v393
        %v5341 = vunpack.c.l.b16 %v394
        %v5342 = vunpack.c.h.b16 %v394
        %v5343 = vunpack.c.l.b16 %v395
        %v5344 = vunpack.c.h.b16 %v395
        %v5345 = vunpack.c.l.b16 %v396
        %v5346 = vunpack.c.h.b16 %v396
        %v5347 = vunpack.c.l.b16 %v397
        %v5348 = vunpack.c.h.b16 %v397
        %v5349 = vunpack.c.l.b16 %v398
        %v5350 = vunpack.c.h.b16 %v398
        %v5351 = vunpack.c.l.b16 %v399
        %v5352 = vunpack.c.h.b16 %v399
        %v5353 = vunpack.c.l.b16 %v400
        %v5354 = vunpack.c.h.b16 %v400
        %v5355 = vunpack.c.l.b16 %v401
        %v5356 = vunpack.c.h.b16 %v401
        %v5357 = vunpack.c.l.b16 %v402
        %v5358 = vunpack.c.h.b16 %v402
        %v5359 = vunpack.c.l.b16 %v403
        %v5360 = vunpack.c.h.b16 %v403
        %v5361 = vunpack.c.l.b16 %v404
        %v5362 = vunpack.c.h.b16 %v404
        %v5363 = vunpack.c.l.b16 %v405
        %v5364 = vunpack.c.h.b16 %v405
        %v5365 = vunpack.c.l.b16 %v406
        %v5366 = vunpack.c.h.b16 %v406
        %v5367 = vunpack.c.l.b16 %v407
        %v5368 = vunpack.c.h.b16 %v407
        %v5369 = vunpack.c.l.b16 %v408
        %v5370 = vunpack.c.h.b16 %v408
        %v5371 = vunpack.c.l.b16 %v409
        %v5372 = vunpack.c.h.b16 %v409
        %v5373 = vunpack.c.l.b16 %v410
        %v5374 = vunpack.c.h.b16 %v410
        %v5375 = vunpack.c.l.b16 %v411
        %v5376 = vunpack.c.h.b16 %v411
        %v5377 = vunpack.c.l.b16 %v412
        %v5378 = vunpack.c.h.b16 %v412
        %v5379 = vunpack.c.l.b16 %v413
        %v5380 = vunpack.c.h.b16 %v413
        %v5381 = vunpack.c.l.b16 %v414
        %v5382 = vunpack.c.h.b16 %v414
        %v5383 = vunpack.c.l.b16 %v415
        %v5384 = vunpack.c.h.b16 %v415
        %v5385 = vunpack.c.l.b16 %v416
        %v5386 = vunpack.c.h.b16 %v416
        %v5387 = vunpack.c.l.b16 %v417
        %v5388 = vunpack.c.h.b16 %v417
        %v5389 = vunpack.c.l.b16 %v418
        %v5390 = vunpack.c.h.b16 %v418
        %v5391 = vunpack.c.l.b16 %v419
        %v5392 = vunpack.c.h.b16 %v419
        %v5393 = vunpack.c.l.b16 %v420
        %v5394 = vunpack.c.h.b16 %v420
        %v5395 = vunpack.c.l.b16 %v421
        %v5396 = vunpack.c.h.b16 %v421
        %v5397 = vunpack.c.l.b16 %v422
        %v5398 = vunpack.c.h.b16 %v422
        %v5399 = vunpack.c.l.b16 %v423
        %v5400 = vunpack.c.h.b16 %v423
        %v5401 = vunpack.c.l.b16 %v424
        %v5402 = vunpack.c.h.b16 %v424
        %v5403 = vunpack.c.l.b16 %v425
        %v5404 = vunpack.c.h.b16 %v425
        %v5405 = vunpack.c.l.b16 %v426
        %v5406 = vunpack.c.h.b16 %v426
        %v5407 = vunpack.c.l.b16 %v427
        %v5408 = vunpack.c.h.b16 %v427
        %v5409 = vunpack.c.l.b16 %v428
        %v5410 = vunpack.c.h.b16 %v428
        %v5411 = vunpack.c.l.b16 %v429
        %v5412 = vunpack.c.h.b16 %v429
        %v5413 = vunpack.c.l.b16 %v430
        %v5414 = vunpack.c.h.b16 %v430
        %v5415 = vunpack.c.l.b16 %v431
        %v5416 = vunpack.c.h.b16 %v431
        %v5417 = vunpack.c.l.b16 %v432
        %v5418 = vunpack.c.h.b16 %v432
        %v5419 = vunpack.c.l.b16 %v433
        %v5420 = vunpack.c.h.b16 %v433
        %v5421 = vunpack.c.l.b16 %v434
        %v5422 = vunpack.c.h.b16 %v434
        %v5423 = vunpack.c.l.b16 %v435
        %v5424 = vunpack.c.h.b16 %v435
        %v5425 = vunpack.c.l.b16 %v436
        %v5426 = vunpack.c.h.b16 %v436
        %v5427 = vunpack.c.l.b16 %v437
        %v5428 = vunpack.c.h.b16 %v437
        %v5429 = vunpack.c.l.b16 %v438
        %v5430 = vunpack.c.h.b16 %v438
        %v5431 = vunpack.c.l.b16 %v439
        %v5432 = vunpack.c.h.b16 %v439
        %v5433 = vunpack.c.l.b16 %v440
        %v5434 = vunpack.c.h.b16 %v440
        %v5435 = vunpack.c.l.b16 %v441
        %v5436 = vunpack.c.h.b16 %v441
        %v5437 = vunpack.c.l.b16 %v442
        %v5438 = vunpack.c.h.b16 %v442
        %v5439 = vunpack.c.l.b16 %v443
        %v5440 = vunpack.c.h.b16 %v443
        %v5441 = vunpack.c.l.b16 %v444
        %v5442 = vunpack.c.h.b16 %v444
        %v5443 = vunpack.c.l.b16 %v445
        %v5444 = vunpack.c.h.b16 %v445
        %v5445 = vunpack.c.l.b16 %v446
        %v5446 = vunpack.c.h.b16 %v446
        %v5447 = vunpack.c.l.b16 %v447
        %v5448 = vunpack.c.h.b16 %v447
        %v5449 = vunpack.c.l.b16 %v448
        %v5450 = vunpack.c.h.b16 %v448
        %v5451 = vunpack.c.l.b16 %v449
        %v5452 = vunpack.c.h.b16 %v449
        %v5453 = vunpack.c.l.b16 %v450
        %v5454 = vunpack.c.h.b16 %v450
        %v5455 = vunpack.c.l.b16 %v451
        %v5456 = vunpack.c.h.b16 %v451
        %v5457 = vunpack.c.l.b16 %v452
        %v5458 = vunpack.c.h.b16 %v452
        %v5459 = vunpack.c.l.b16 %v453
        %v5460 = vunpack.c.h.b16 %v453
        %v5461 = vunpack.c.l.b16 %v454
        %v5462 = vunpack.c.h.b16 %v454
        %v5463 = vunpack.c.l.b16 %v455
        %v5464 = vunpack.c.h.b16 %v455
        %v5465 = vunpack.c.l.b16 %v456
        %v5466 = vunpack.c.h.b16 %v456
        %v5467 = vunpack.c.l.b16 %v457
        %v5468 = vunpack.c.h.b16 %v457
        %v5469 = vunpack.c.l.b16 %v458
        %v5470 = vunpack.c.h.b16 %v458
        %v5471 = vunpack.c.l.b16 %v459
        %v5472 = vunpack.c.h.b16 %v459
        %v5473 = vunpack.c.l.b16 %v460
        %v5474 = vunpack.c.h.b16 %v460
        %v5475 = vunpack.c.l.b16 %v461
        %v5476 = vunpack.c.h.b16 %v461
        %v5477 = vunpack.c.l.b16 %v462
        %v5478 = vunpack.c.h.b16 %v462
        %v5479 = vunpack.c.l.b16 %v463
        %v5480 = vunpack.c.h.b16 %v463
        %v5481 = vunpack.c.l.b16 %v464
        %v5482 = vunpack.c.h.b16 %v464
        %v5483 = vunpack.c.l.b16 %v465
        %v5484 = vunpack.c.h.b16 %v465
        %v5485 = vunpack.c.l.b16 %v466
        %v5486 = vunpack.c.h.b16 %v466
        %v5487 = vunpack.c.l.b16 %v467
        %v5488 = vunpack.c.h.b16 %v467
        %v5489 = vunpack.c.l.b16 %v468
        %v5490 = vunpack.c.h.b16 %v468
        %v5491 = vunpack.c.l.b16 %v469
        %v5492 = vunpack.c.h.b16 %v469
        %v5493 = vunpack.c.l.b16 %v470
        %v5494 = vunpack.c.h.b16 %v470
        %v5495 = vunpack.c.l.b16 %v471
        %v5496 = vunpack.c.h.b16 %v471
        %v5497 = vunpack.c.l.b16 %v472
        %v5498 = vunpack.c.h.b16 %v472
        %v5499 = vunpack.c.l.b16 %v473
        %v5500 = vunpack.c.h.b16 %v473
        %v5501 = vunpack.c.l.b16 %v474
        %v5502 = vunpack.c.h.b16 %v474
        %v5503 = vunpack.c.l.b16 %v475
        %v5504 = vunpack.c.h.b16 %v475
        %v5505 = vunpack.c.l.b16 %v476
        %v5506 = vunpack.c.h.b16 %v476
        %v5507 = vunpack.c.l.b16 %v477
        %v5508 = vunpack.c.h.b16 %v477
        %v5509 = vunpack.c.l.b16 %v478
        %v5510 = vunpack.c.h.b16 %v478
        %v5511 = vunpack.c.l.b16 %v479
        %v5512 = vunpack.c.h.b16 %v479
        %v5513 = vunpack.c.l.b16 %v480
        %v5514 = vunpack.c.h.b16 %v480
        %v5515 = vunpack.c.l.b16 %v481
        %v5516 = vunpack.c.h.b16 %v481
        %v5517 = vunpack.c.l.b16 %v482
        %v5518 = vunpack.c.h.b16 %v482
        %v5519 = vunpack.c.l.b16 %v483
        %v5520 = vunpack.c.h.b16 %v483
        %v5521 = vunpack.c.l.b16 %v484
        %v5522 = vunpack.c.h.b16 %v484
        %v5523 = vunpack.c.l.b16 %v485
        %v5524 = vunpack.c.h.b16 %v485
        %v5525 = vunpack.c.l.b16 %v486
        %v5526 = vunpack.c.h.b16 %v486
        %v5527 = vunpack.c.l.b16 %v487
        %v5528 = vunpack.c.h.b16 %v487
        %v5529 = vunpack.c.l.b16 %v488
        %v5530 = vunpack.c.h.b16 %v488
        %v5531 = vunpack.c.l.b16 %v489
        %v5532 = vunpack.c.h.b16 %v489
        %v5533 = vunpack.c.l.b16 %v490
        %v5534 = vunpack.c.h.b16 %v490
        %v5535 = vunpack.c.l.b16 %v491
        %v5536 = vunpack.c.h.b16 %v491
        %v5537 = vunpack.c.l.b16 %v492
        %v5538 = vunpack.c.h.b16 %v492
        %v5539 = vunpack.c.l.b16 %v493
        %v5540 = vunpack.c.h.b16 %v493
        %v5541 = vunpack.c.l.b16 %v494
        %v5542 = vunpack.c.h.b16 %v494
        %v5543 = vunpack.c.l.b16 %v495
        %v5544 = vunpack.c.h.b16 %v495
        %v5545 = vunpack.c.l.b16 %v496
        %v5546 = vunpack.c.h.b16 %v496
        %v5547 = vunpack.c.l.b16 %v497
        %v5548 = vunpack.c.h.b16 %v497
        %v5549 = vunpack.c.l.b16 %v498
        %v5550 = vunpack.c.h.b16 %v498
        %v5551 = vunpack.c.l.b16 %v499
        %v5552 = vunpack.c.h.b16 %v499
        %v5553 = vunpack.c.l.b16 %v500
        %v5554 = vunpack.c.h.b16 %v500
        %v5555 = vunpack.c.l.b16 %v501
        %v5556 = vunpack.c.h.b16 %v501
        %v5557 = vunpack.c.l.b16 %v502
        %v5558 = vunpack.c.h.b16 %v502
        %v5559 = vunpack.c.l.b16 %v503
        %v5560 = vunpack.c.h.b16 %v503
        %v5561 = vunpack.c.l.b16 %v504
        %v5562 = vunpack.c.h.b16 %v504
        %v5563 = vunpack.c.l.b16 %v505
        %v5564 = vunpack.c.h.b16 %v505
        %v5565 = vunpack.c.l.b16 %v506
        %v5566 = vunpack.c.h.b16 %v506
        %v5567 = vunpack.c.l.b16 %v507
        %v5568 = vunpack.c.h.b16 %v507
        %v5569 = vunpack.c.l.b16 %v508
        %v5570 = vunpack.c.h.b16 %v508
        %v5571 = vunpack.c.l.b16 %v509
        %v5572 = vunpack.c.h.b16 %v509
        %v5573 = vunpack.c.l.b16 %v510
        %v5574 = vunpack.c.h.b16 %v510
        %v5575 = vunpack.c.l.b16 %v511
        %v5576 = vunpack.c.h.b16 %v511
        %v5577 = vunpack.c.l.b16 %v512
        %v5578 = vunpack.c.h.b16 %v512
        %v5579 = vunpack.c.l.b16 %v513
        %v5580 = vunpack.c.h.b16 %v513
        %v5581 = vunpack.c.l.b16 %v514
        %v5582 = vunpack.c.h.b16 %v514
        %v5583 = vunpack.c.l.b16 %v515
        %v5584 = vunpack.c.h.b16 %v515
        %v5585 = vunpack.c.l.b16 %v516
        %v5586 = vunpack.c.h.b16 %v516
        %v5587 = vunpack.c.l.b16 %v517
        %v5588 = vunpack.c.h.b16 %v517
        %v5589 = vunpack.c.l.b16 %v518
        %v5590 = vunpack.c.h.b16 %v518
        %v5591 = vunpack.c.l.b16 %v519
        %v5592 = vunpack.c.h.b16 %v519
        %v5593 = vunpack.c.l.b16 %v520
        %v5594 = vunpack.c.h.b16 %v520
        %v5595 = vunpack.c.l.b16 %v521
        %v5596 = vunpack.c.h.b16 %v521
        %v5597 = vunpack.c.l.b16 %v522
        %v5598 = vunpack.c.h.b16 %v522
        %v5599 = vunpack.c.l.b16 %v523
        %v5600 = vunpack.c.h.b16 %v523
        %v5601 = vunpack.c.l.b16 %v524
        %v5602 = vunpack.c.h.b16 %v524
        %v5603 = vunpack.c.l.b16 %v525
        %v5604 = vunpack.c.h.b16 %v525
        %v5605 = vunpack.c.l.b16 %v526
        %v5606 = vunpack.c.h.b16 %v526
        %v5607 = vunpack.c.l.b16 %v527
        %v5608 = vunpack.c.h.b16 %v527
        %v5609 = vunpack.c.l.b16 %v528
        %v5610 = vunpack.c.h.b16 %v528
        %v5611 = vunpack.c.l.b16 %v529
        %v5612 = vunpack.c.h.b16 %v529
        %v5613 = vunpack.c.l.b16 %v530
        %v5614 = vunpack.c.h.b16 %v530
        %v5615 = vunpack.c.l.b16 %v531
        %v5616 = vunpack.c.h.b16 %v531
        %v5617 = vunpack.c.l.b16 %v532
        %v5618 = vunpack.c.h.b16 %v532
        %v5619 = vunpack.c.l.b16 %v533
        %v5620 = vunpack.c.h.b16 %v533
        %v5621 = vunpack.c.l.b16 %v534
        %v5622 = vunpack.c.h.b16 %v534
        %v5623 = vunpack.c.l.b16 %v535
        %v5624 = vunpack.c.h.b16 %v535
        %v5625 = vunpack.c.l.b16 %v536
        %v5626 = vunpack.c.h.b16 %v536
        %v5627 = vunpack.c.l.b16 %v537
        %v5628 = vunpack.c.h.b16 %v537
        %v5629 = vunpack.c.l.b16 %v538
        %v5630 = vunpack.c.h.b16 %v538
        %v5631 = vunpack.c.l.b16 %v539
        %v5632 = vunpack.c.h.b16 %v539
        %v5633 = vunpack.c.l.b16 %v540
        %v5634 = vunpack.c.h.b16 %v540
        %v5635 = vunpack.c.l.b16 %v541
        %v5636 = vunpack.c.h.b16 %v541
        %v5637 = vunpack.c.l.b16 %v542
        %v5638 = vunpack.c.h.b16 %v542
        %v5639 = vunpack.c.l.b16 %v543
        %v5640 = vunpack.c.h.b16 %v543
        %v5641 = vunpack.c.l.b16 %v544
        %v5642 = vunpack.c.h.b16 %v544
        %v5643 = vunpack.c.l.b16 %v545
        %v5644 = vunpack.c.h.b16 %v545
        %v5645 = vunpack.c.l.b16 %v546
        %v5646 = vunpack.c.h.b16 %v546
        %v5647 = vunpack.c.l.b16 %v547
        %v5648 = vunpack.c.h.b16 %v547
        %v5649 = vunpack.c.l.b16 %v548
        %v5650 = vunpack.c.h.b16 %v548
        %v5651 = vunpack.c.l.b16 %v549
        %v5652 = vunpack.c.h.b16 %v549
        %v5653 = vunpack.c.l.b16 %v550
        %v5654 = vunpack.c.h.b16 %v550
        %v5655 = vunpack.c.l.b16 %v551
        %v5656 = vunpack.c.h.b16 %v551
        %v5657 = vunpack.c.l.b16 %v552
        %v5658 = vunpack.c.h.b16 %v552
        %v5659 = vunpack.c.l.b16 %v553
        %v5660 = vunpack.c.h.b16 %v553
        %v5661 = vunpack.c.l.b16 %v554
        %v5662 = vunpack.c.h.b16 %v554
        %v5663 = vunpack.c.l.b16 %v555
        %v5664 = vunpack.c.h.b16 %v555
        %v5665 = vunpack.c.l.b16 %v556
        %v5666 = vunpack.c.h.b16 %v556
        %v5667 = vunpack.c.l.b16 %v557
        %v5668 = vunpack.c.h.b16 %v557
        %v5669 = vunpack.c.l.b16 %v558
        %v5670 = vunpack.c.h.b16 %v558
        %v5671 = vunpack.c.l.b16 %v559
        %v5672 = vunpack.c.h.b16 %v559
        %v5673 = vunpack.c.l.b16 %v560
        %v5674 = vunpack.c.h.b16 %v560
        %v5675 = vunpack.c.l.b16 %v561
        %v5676 = vunpack.c.h.b16 %v561
        %v5677 = vunpack.c.l.b16 %v562
        %v5678 = vunpack.c.h.b16 %v562
        %v5679 = vunpack.c.l.b16 %v563
        %v5680 = vunpack.c.h.b16 %v563
        %v5681 = vunpack.c.l.b16 %v564
        %v5682 = vunpack.c.h.b16 %v564
        %v5683 = vunpack.c.l.b16 %v565
        %v5684 = vunpack.c.h.b16 %v565
        %v5685 = vunpack.c.l.b16 %v566
        %v5686 = vunpack.c.h.b16 %v566
        %v5687 = vunpack.c.l.b16 %v567
        %v5688 = vunpack.c.h.b16 %v567
        %v5689 = vunpack.c.l.b16 %v568
        %v5690 = vunpack.c.h.b16 %v568
        %v5691 = vunpack.c.l.b16 %v569
        %v5692 = vunpack.c.h.b16 %v569
        %v5693 = vunpack.c.l.b16 %v570
        %v5694 = vunpack.c.h.b16 %v570
        %v5695 = vunpack.c.l.b16 %v571
        %v5696 = vunpack.c.h.b16 %v571
        %v5697 = vunpack.c.l.b16 %v572
        %v5698 = vunpack.c.h.b16 %v572
        %v5699 = vunpack.c.l.b16 %v573
        %v5700 = vunpack.c.h.b16 %v573
        %v5701 = vunpack.c.l.b16 %v574
        %v5702 = vunpack.c.h.b16 %v574
        %v5703 = vunpack.c.l.b16 %v575
        %v5704 = vunpack.c.h.b16 %v575
        %v5705 = vunpack.c.l.b16 %v576
        %v5706 = vunpack.c.h.b16 %v576
        %v5707 = vunpack.c.l.b16 %v577
        %v5708 = vunpack.c.h.b16 %v577
        %v5709 = vunpack.c.l.b16 %v578
        %v5710 = vunpack.c.h.b16 %v578
        %v5711 = vunpack.c.l.b16 %v579
        %v5712 = vunpack.c.h.b16 %v579
        %v5713 = vunpack.c.l.b16 %v580
        %v5714 = vunpack.c.h.b16 %v580
        %v5715 = vunpack.c.l.b16 %v581
        %v5716 = vunpack.c.h.b16 %v581
        %v5717 = vunpack.c.l.b16 %v582
        %v5718 = vunpack.c.h.b16 %v582
        %v5719 = vunpack.c.l.b16 %v583
        %v5720 = vunpack.c.h.b16 %v583
        %v5721 = vunpack.c.l.b16 %v584
        %v5722 = vunpack.c.h.b16 %v584
        %v5723 = vunpack.c.l.b16 %v585
        %v5724 = vunpack.c.h.b16 %v585
        %v5725 = vunpack.c.l.b16 %v586
        %v5726 = vunpack.c.h.b16 %v586
        %v5727 = vunpack.c.l.b16 %v587
        %v5728 = vunpack.c.h.b16 %v587
        %v5729 = vunpack.c.l.b16 %v588
        %v5730 = vunpack.c.h.b16 %v588
        %v5731 = vunpack.c.l.b16 %v589
        %v5732 = vunpack.c.h.b16 %v589
        %v5733 = vunpack.c.l.b16 %v590
        %v5734 = vunpack.c.h.b16 %v590
        %v5735 = vunpack.c.l.b16 %v591
        %v5736 = vunpack.c.h.b16 %v591
        %v5737 = vunpack.c.l.b16 %v592
        %v5738 = vunpack.c.h.b16 %v592
        %v5739 = vunpack.c.l.b16 %v593
        %v5740 = vunpack.c.h.b16 %v593
        %v5741 = vunpack.c.l.b16 %v594
        %v5742 = vunpack.c.h.b16 %v594
        %v5743 = vunpack.c.l.b16 %v595
        %v5744 = vunpack.c.h.b16 %v595
        %v5745 = vunpack.c.l.b16 %v596
        %v5746 = vunpack.c.h.b16 %v596
        %v5747 = vunpack.c.l.b16 %v597
        %v5748 = vunpack.c.h.b16 %v597
        %v5749 = vunpack.c.l.b16 %v598
        %v5750 = vunpack.c.h.b16 %v598
        %v5751 = vunpack.c.l.b16 %v599
        %v5752 = vunpack.c.h.b16 %v599
        %v5753 = vunpack.c.l.b16 %v600
        %v5754 = vunpack.c.h.b16 %v600
        %v5755 = vunpack.c.l.b16 %v601
        %v5756 = vunpack.c.h.b16 %v601
        %v5757 = vunpack.c.l.b16 %v602
        %v5758 = vunpack.c.h.b16 %v602
        %v5759 = vunpack.c.l.b16 %v603
        %v5760 = vunpack.c.h.b16 %v603
        %v5761 = vunpack.c.l.b16 %v604
        %v5762 = vunpack.c.h.b16 %v604
        %v5763 = vunpack.c.l.b16 %v605
        %v5764 = vunpack.c.h.b16 %v605
        %v5765 = vunpack.c.l.b16 %v606
        %v5766 = vunpack.c.h.b16 %v606
        %v5767 = vunpack.c.l.b16 %v607
        %v5768 = vunpack.c.h.b16 %v607
        %v5769 = vunpack.c.l.b16 %v608
        %v5770 = vunpack.c.h.b16 %v608
        %v5771 = vunpack.c.l.b16 %v609
        %v5772 = vunpack.c.h.b16 %v609
        %v5773 = vunpack.c.l.b16 %v610
        %v5774 = vunpack.c.h.b16 %v610
        %v5775 = vunpack.c.l.b16 %v611
        %v5776 = vunpack.c.h.b16 %v611
        %v5777 = vunpack.c.l.b16 %v612
        %v5778 = vunpack.c.h.b16 %v612
        %v5779 = vunpack.c.l.b16 %v613
        %v5780 = vunpack.c.h.b16 %v613
        %v5781 = vunpack.c.l.b16 %v614
        %v5782 = vunpack.c.h.b16 %v614
        %v5783 = vunpack.c.l.b16 %v615
        %v5784 = vunpack.c.h.b16 %v615
        %v5785 = vunpack.c.l.b16 %v616
        %v5786 = vunpack.c.h.b16 %v616
        %v5787 = vunpack.c.l.b16 %v617
        %v5788 = vunpack.c.h.b16 %v617
        %v5789 = vunpack.c.l.b16 %v618
        %v5790 = vunpack.c.h.b16 %v618
        %v5791 = vunpack.c.l.b16 %v619
        %v5792 = vunpack.c.h.b16 %v619
        %v5793 = vunpack.c.l.b16 %v620
        %v5794 = vunpack.c.h.b16 %v620
        %v5795 = vunpack.c.l.b16 %v621
        %v5796 = vunpack.c.h.b16 %v621
        %v5797 = vunpack.c.l.b16 %v622
        %v5798 = vunpack.c.h.b16 %v622
        %v5799 = vunpack.c.l.b16 %v623
        %v5800 = vunpack.c.h.b16 %v623
        %v5801 = vunpack.c.l.b16 %v624
        %v5802 = vunpack.c.h.b16 %v624
        %v5803 = vunpack.c.l.b16 %v625
        %v5804 = vunpack.c.h.b16 %v625
        %v5805 = vunpack.c.l.b16 %v626
        %v5806 = vunpack.c.h.b16 %v626
        %v5807 = vunpack.c.l.b16 %v627
        %v5808 = vunpack.c.h.b16 %v627
        %v5809 = vunpack.c.l.b16 %v628
        %v5810 = vunpack.c.h.b16 %v628
        %v5811 = vunpack.c.l.b16 %v629
        %v5812 = vunpack.c.h.b16 %v629
        %v5813 = vunpack.c.l.b16 %v630
        %v5814 = vunpack.c.h.b16 %v630
        %v5815 = vunpack.c.l.b16 %v631
        %v5816 = vunpack.c.h.b16 %v631
        %v5817 = vunpack.c.l.b16 %v632
        %v5818 = vunpack.c.h.b16 %v632
        %v5819 = vunpack.c.l.b16 %v633
        %v5820 = vunpack.c.h.b16 %v633
        %v5821 = vunpack.c.l.b16 %v634
        %v5822 = vunpack.c.h.b16 %v634
        %v5823 = vunpack.c.l.b16 %v635
        %v5824 = vunpack.c.h.b16 %v635
        %v5825 = vunpack.c.l.b16 %v636
        %v5826 = vunpack.c.h.b16 %v636
        %v5827 = vunpack.c.l.b16 %v637
        %v5828 = vunpack.c.h.b16 %v637
        %v5829 = vunpack.c.l.b16 %v638
        %v5830 = vunpack.c.h.b16 %v638
        %v5831 = vunpack.c.l.b16 %v639
        %v5832 = vunpack.c.h.b16 %v639
        %v5833 = vunpack.c.l.b16 %v640
        %v5834 = vunpack.c.h.b16 %v640
        %v5835 = vunpack.c.l.b16 %v641
        %v5836 = vunpack.c.h.b16 %v641
        %v5837 = vunpack.c.l.b16 %v642
        %v5838 = vunpack.c.h.b16 %v642
        %v5839 = vunpack.c.l.b16 %v643
        %v5840 = vunpack.c.h.b16 %v643
        %v5841 = vunpack.c.l.b16 %v644
        %v5842 = vunpack.c.h.b16 %v644
        %v5843 = vunpack.c.l.b16 %v645
        %v5844 = vunpack.c.h.b16 %v645
        %v5845 = vunpack.c.l.b16 %v646
        %v5846 = vunpack.c.h.b16 %v646
        %v5847 = vunpack.c.l.b16 %v647
        %v5848 = vunpack.c.h.b16 %v647
        %v5849 = vunpack.c.l.b16 %v648
        %v5850 = vunpack.c.h.b16 %v648
        %v5851 = vunpack.c.l.b16 %v649
        %v5852 = vunpack.c.h.b16 %v649
        %v5853 = vunpack.c.l.b16 %v650
        %v5854 = vunpack.c.h.b16 %v650
        %v5855 = vunpack.c.l.b16 %v651
        %v5856 = vunpack.c.h.b16 %v651
        %v5857 = vunpack.c.l.b16 %v652
        %v5858 = vunpack.c.h.b16 %v652
        %v5859 = vunpack.c.l.b16 %v653
        %v5860 = vunpack.c.h.b16 %v653
        %v5861 = vunpack.c.l.b16 %v654
        %v5862 = vunpack.c.h.b16 %v654
        %v5863 = vunpack.c.l.b16 %v655
        %v5864 = vunpack.c.h.b16 %v655
        %v5865 = vunpack.c.l.b16 %v656
        %v5866 = vunpack.c.h.b16 %v656
        %v5867 = vunpack.c.l.b16 %v657
        %v5868 = vunpack.c.h.b16 %v657
        %v5869 = vunpack.c.l.b16 %v658
        %v5870 = vunpack.c.h.b16 %v658
        %v5871 = vunpack.c.l.b16 %v659
        %v5872 = vunpack.c.h.b16 %v659
        %v5873 = vunpack.c.l.b16 %v660
        %v5874 = vunpack.c.h.b16 %v660
        %v5875 = vunpack.c.l.b16 %v661
        %v5876 = vunpack.c.h.b16 %v661
        %v5877 = vunpack.c.l.b16 %v662
        %v5878 = vunpack.c.h.b16 %v662
        %v5879 = vunpack.c.l.b16 %v663
        %v5880 = vunpack.c.h.b16 %v663
        %v5881 = vunpack.c.l.b16 %v664
        %v5882 = vunpack.c.h.b16 %v664
        %v5883 = vunpack.c.l.b16 %v665
        %v5884 = vunpack.c.h.b16 %v665
        %v5885 = vunpack.c.l.b16 %v666
        %v5886 = vunpack.c.h.b16 %v666
        %v5887 = vunpack.c.l.b16 %v667
        %v5888 = vunpack.c.h.b16 %v667
        %v5889 = vunpack.c.l.b16 %v668
        %v5890 = vunpack.c.h.b16 %v668
        %v5891 = vunpack.c.l.b16 %v669
        %v5892 = vunpack.c.h.b16 %v669
        %v5893 = vunpack.c.l.b16 %v670
        %v5894 = vunpack.c.h.b16 %v670
        %v5895 = vunpack.c.l.b16 %v671
        %v5896 = vunpack.c.h.b16 %v671
        %v5897 = vunpack.c.l.b16 %v672
        %v5898 = vunpack.c.h.b16 %v672
        %v5899 = vunpack.c.l.b16 %v673
        %v5900 = vunpack.c.h.b16 %v673
        %v5901 = vunpack.c.l.b16 %v674
        %v5902 = vunpack.c.h.b16 %v674
        %v5903 = vunpack.c.l.b16 %v675
        %v5904 = vunpack.c.h.b16 %v675
        %v5905 = vunpack.c.l.b16 %v676
        %v5906 = vunpack.c.h.b16 %v676
        %v5907 = vunpack.c.l.b16 %v677
        %v5908 = vunpack.c.h.b16 %v677
        %v5909 = vunpack.c.l.b16 %v678
        %v5910 = vunpack.c.h.b16 %v678
        %v5911 = vunpack.c.l.b16 %v679
        %v5912 = vunpack.c.h.b16 %v679
        %v5913 = vunpack.c.l.b16 %v680
        %v5914 = vunpack.c.h.b16 %v680
        %v5915 = vunpack.c.l.b16 %v681
        %v5916 = vunpack.c.h.b16 %v681
        %v5917 = vunpack.c.l.b16 %v682
        %v5918 = vunpack.c.h.b16 %v682
        %v5919 = vunpack.c.l.b16 %v683
        %v5920 = vunpack.c.h.b16 %v683
        %v5921 = vunpack.c.l.b16 %v684
        %v5922 = vunpack.c.h.b16 %v684
        %v5923 = vunpack.c.l.b16 %v685
        %v5924 = vunpack.c.h.b16 %v685
        %v5925 = vunpack.c.l.b16 %v686
        %v5926 = vunpack.c.h.b16 %v686
        %v5927 = vunpack.c.l.b16 %v687
        %v5928 = vunpack.c.h.b16 %v687
        %v5929 = vunpack.c.l.b16 %v688
        %v5930 = vunpack.c.h.b16 %v688
        %v5931 = vunpack.c.l.b16 %v689
        %v5932 = vunpack.c.h.b16 %v689
        %v5933 = vunpack.c.l.b16 %v690
        %v5934 = vunpack.c.h.b16 %v690
        %v5935 = vunpack.c.l.b16 %v691
        %v5936 = vunpack.c.h.b16 %v691
        %v5937 = vunpack.c.l.b16 %v692
        %v5938 = vunpack.c.h.b16 %v692
        %v5939 = vunpack.c.l.b16 %v693
        %v5940 = vunpack.c.h.b16 %v693
        %v5941 = vunpack.c.l.b16 %v694
        %v5942 = vunpack.c.h.b16 %v694
        %v5943 = vunpack.c.l.b16 %v695
        %v5944 = vunpack.c.h.b16 %v695
        %v5945 = vunpack.c.l.b16 %v696
        %v5946 = vunpack.c.h.b16 %v696
        %v5947 = vunpack.c.l.b16 %v697
        %v5948 = vunpack.c.h.b16 %v697
        %v5949 = vunpack.c.l.b16 %v698
        %v5950 = vunpack.c.h.b16 %v698
        %v5951 = vunpack.c.l.b16 %v699
        %v5952 = vunpack.c.h.b16 %v699
        %v5953 = vunpack.c.l.b16 %v700
        %v5954 = vunpack.c.h.b16 %v700
        %v5955 = vunpack.c.l.b16 %v701
        %v5956 = vunpack.c.h.b16 %v701
        %v5957 = vunpack.c.l.b16 %v702
        %v5958 = vunpack.c.h.b16 %v702
        %v5959 = vunpack.c.l.b16 %v703
        %v5960 = vunpack.c.h.b16 %v703
        %v5961 = vunpack.c.l.b16 %v704
        %v5962 = vunpack.c.h.b16 %v704
        %v5963 = vunpack.c.l.b16 %v705
        %v5964 = vunpack.c.h.b16 %v705
        %v5965 = vunpack.c.l.b16 %v706
        %v5966 = vunpack.c.h.b16 %v706
        %v5967 = vunpack.c.l.b16 %v707
        %v5968 = vunpack.c.h.b16 %v707
        %v5969 = vunpack.c.l.b16 %v708
        %v5970 = vunpack.c.h.b16 %v708
        %v5971 = vunpack.c.l.b16 %v709
        %v5972 = vunpack.c.h.b16 %v709
        %v5973 = vunpack.c.l.b16 %v710
        %v5974 = vunpack.c.h.b16 %v710
        %v5975 = vunpack.c.l.b16 %v711
        %v5976 = vunpack.c.h.b16 %v711
        %v5977 = vunpack.c.l.b16 %v712
        %v5978 = vunpack.c.h.b16 %v712
        %v5979 = vunpack.c.l.b16 %v713
        %v5980 = vunpack.c.h.b16 %v713
        %v5981 = vunpack.c.l.b16 %v714
        %v5982 = vunpack.c.h.b16 %v714
        %v5983 = vunpack.c.l.b16 %v715
        %v5984 = vunpack.c.h.b16 %v715
        %v5985 = vunpack.c.l.b16 %v716
        %v5986 = vunpack.c.h.b16 %v716
        %v5987 = vunpack.c.l.b16 %v717
        %v5988 = vunpack.c.h.b16 %v717
        %v5989 = vunpack.c.l.b16 %v718
        %v5990 = vunpack.c.h.b16 %v718
        %v5991 = vunpack.c.l.b16 %v719
        %v5992 = vunpack.c.h.b16 %v719
        %v5993 = vunpack.c.l.b16 %v720
        %v5994 = vunpack.c.h.b16 %v720
        %v5995 = vunpack.c.l.b16 %v721
        %v5996 = vunpack.c.h.b16 %v721
        %v5997 = vunpack.c.l.b16 %v722
        %v5998 = vunpack.c.h.b16 %v722
        %v5999 = vunpack.c.l.b16 %v723
        %v6000 = vunpack.c.h.b16 %v723
        %v6001 = vunpack.c.l.b16 %v724
        %v6002 = vunpack.c.h.b16 %v724
        %v6003 = vunpack.c.l.b16 %v725
        %v6004 = vunpack.c.h.b16 %v725
        %v6005 = vunpack.c.l.b16 %v726
        %v6006 = vunpack.c.h.b16 %v726
        %v6007 = vunpack.c.l.b16 %v727
        %v6008 = vunpack.c.h.b16 %v727
        %v6009 = vunpack.c.l.b16 %v728
        %v6010 = vunpack.c.h.b16 %v728
        %v6011 = vunpack.c.l.b16 %v729
        %v6012 = vunpack.c.h.b16 %v729
        %v6013 = vunpack.c.l.b16 %v730
        %v6014 = vunpack.c.h.b16 %v730
        %v6015 = vunpack.c.l.b16 %v731
        %v6016 = vunpack.c.h.b16 %v731
        %v6017 = vunpack.c.l.b16 %v732
        %v6018 = vunpack.c.h.b16 %v732
        %v6019 = vunpack.c.l.b16 %v733
        %v6020 = vunpack.c.h.b16 %v733
        %v6021 = vunpack.c.l.b16 %v734
        %v6022 = vunpack.c.h.b16 %v734
        %v6023 = vunpack.c.l.b16 %v735
        %v6024 = vunpack.c.h.b16 %v735
        %v6025 = vunpack.c.l.b16 %v736
        %v6026 = vunpack.c.h.b16 %v736
        %v6027 = vunpack.c.l.b16 %v737
        %v6028 = vunpack.c.h.b16 %v737
        %v6029 = vunpack.c.l.b16 %v738
        %v6030 = vunpack.c.h.b16 %v738
        %v6031 = vunpack.c.l.b16 %v739
        %v6032 = vunpack.c.h.b16 %v739
        %v6033 = vunpack.c.l.b16 %v740
        %v6034 = vunpack.c.h.b16 %v740
        %v6035 = vunpack.c.l.b16 %v741
        %v6036 = vunpack.c.h.b16 %v741
        %v6037 = vunpack.c.l.b16 %v742
        %v6038 = vunpack.c.h.b16 %v742
        %v6039 = vunpack.c.l.b16 %v743
        %v6040 = vunpack.c.h.b16 %v743
        %v6041 = vunpack.c.l.b16 %v744
        %v6042 = vunpack.c.h.b16 %v744
        %v6043 = vunpack.c.l.b16 %v745
        %v6044 = vunpack.c.h.b16 %v745
        %v6045 = vunpack.c.l.b16 %v746
        %v6046 = vunpack.c.h.b16 %v746
        %v6047 = vunpack.c.l.b16 %v747
        %v6048 = vunpack.c.h.b16 %v747
        %v6049 = vunpack.c.l.b16 %v748
        %v6050 = vunpack.c.h.b16 %v748
        %v6051 = vunpack.c.l.b16 %v749
        %v6052 = vunpack.c.h.b16 %v749
        %v6053 = vunpack.c.l.b16 %v750
        %v6054 = vunpack.c.h.b16 %v750
        %v6055 = vunpack.c.l.b16 %v751
        %v6056 = vunpack.c.h.b16 %v751
        %v6057 = vunpack.c.l.b16 %v752
        %v6058 = vunpack.c.h.b16 %v752
        %v6059 = vunpack.c.l.b16 %v753
        %v6060 = vunpack.c.h.b16 %v753
        %v6061 = vunpack.c.l.b16 %v754
        %v6062 = vunpack.c.h.b16 %v754
        %v6063 = vunpack.c.l.b16 %v755
        %v6064 = vunpack.c.h.b16 %v755
        %v6065 = vunpack.c.l.b16 %v756
        %v6066 = vunpack.c.h.b16 %v756
        %v6067 = vunpack.c.l.b16 %v757
        %v6068 = vunpack.c.h.b16 %v757
        %v6069 = vunpack.c.l.b16 %v758
        %v6070 = vunpack.c.h.b16 %v758
        %v6071 = vunpack.c.l.b16 %v759
        %v6072 = vunpack.c.h.b16 %v759
        %v6073 = vunpack.c.l.b16 %v760
        %v6074 = vunpack.c.h.b16 %v760
        %v6075 = vunpack.c.l.b16 %v761
        %v6076 = vunpack.c.h.b16 %v761
        %v6077 = vunpack.c.l.b16 %v762
        %v6078 = vunpack.c.h.b16 %v762
        %v6079 = vunpack.c.l.b16 %v763
        %v6080 = vunpack.c.h.b16 %v763
        %v6081 = vunpack.c.l.b16 %v764
        %v6082 = vunpack.c.h.b16 %v764
        %v6083 = vunpack.c.l.b16 %v765
        %v6084 = vunpack.c.h.b16 %v765
        %v6085 = vunpack.c.l.b16 %v766
        %v6086 = vunpack.c.h.b16 %v766
        %v6087 = vunpack.c.l.b16 %v767
        %v6088 = vunpack.c.h.b16 %v767
        %v6089 = vunpack.c.l.b16 %v768
        %v6090 = vunpack.c.h.b16 %v768
        %v6091 = vunpack.c.l.b16 %v769
        %v6092 = vunpack.c.h.b16 %v769
        %v6093 = vunpack.c.l.b16 %v770
        %v6094 = vunpack.c.h.b16 %v770
        %v6095 = vunpack.c.l.b16 %v771
        %v6096 = vunpack.c.h.b16 %v771
        %v6097 = vunpack.c.l.b16 %v772
        %v6098 = vunpack.c.h.b16 %v772
        %v6099 = vunpack.c.l.b16 %v773
        %v6100 = vunpack.c.h.b16 %v773
        %v6101 = vunpack.c.l.b16 %v774
        %v6102 = vunpack.c.h.b16 %v774
        %v6103 = vunpack.c.l.b16 %v775
        %v6104 = vunpack.c.h.b16 %v775
        %v6105 = vunpack.c.l.b16 %v776
        %v6106 = vunpack.c.h.b16 %v776
        %v6107 = vunpack.c.l.b16 %v777
        %v6108 = vunpack.c.h.b16 %v777
        %v6109 = vunpack.c.l.b16 %v778
        %v6110 = vunpack.c.h.b16 %v778
        %v6111 = vunpack.c.l.b16 %v779
        %v6112 = vunpack.c.h.b16 %v779
        %v6113 = vunpack.c.l.b16 %v780
        %v6114 = vunpack.c.h.b16 %v780
        %v6115 = vunpack.c.l.b16 %v781
        %v6116 = vunpack.c.h.b16 %v781
        %v6117 = vunpack.c.l.b16 %v782
        %v6118 = vunpack.c.h.b16 %v782
        %v6119 = vpack.c.b16 %v5103, %v5095
        %v6120 = vpack.c.b16 %v5104, %v5096
        %v6121 = vpack.c.b16 %v5105, %v5097
        %v6122 = vpack.c.b16 %v5106, %v5098
        %v6123 = vpack.c.b16 %v5107, %v5099
        %v6124 = vpack.c.b16 %v5108, %v5100
        %v6125 = vpack.c.b16 %v5109, %v5101
        %v6126 = vpack.c.b16 %v5110, %v5102
        %v6127 = vpack.c.b16 %v5119, %v5111
        %v6128 = vpack.c.b16 %v5120, %v5112
        %v6129 = vpack.c.b16 %v5121, %v5113
        %v6130 = vpack.c.b16 %v5122, %v5114
        %v6131 = vpack.c.b16 %v5123, %v5115
        %v6132 = vpack.c.b16 %v5124, %v5116
        %v6133 = vpack.c.b16 %v5125, %v5117
        %v6134 = vpack.c.b16 %v5126, %v5118
        %v6135 = vpack.c.b16 %v5135, %v5127
        %v6136 = vpack.c.b16 %v5136, %v5128
        %v6137 = vpack.c.b16 %v5137, %v5129
        %v6138 = vpack.c.b16 %v5138, %v5130
        %v6139 = vpack.c.b16 %v5139, %v5131
        %v6140 = vpack.c.b16 %v5140, %v5132
        %v6141 = vpack.c.b16 %v5141, %v5133
        %v6142 = vpack.c.b16 %v5142, %v5134
        %v6143 = vpack.c.b16 %v5151, %v5143
        %v6144 = vpack.c.b16 %v5152, %v5144
        %v6145 = vpack.c.b16 %v5153, %v5145
        %v6146 = vpack.c.b16 %v5154, %v5146
        %v6147 = vpack.c.b16 %v5155, %v5147
        %v6148 = vpack.c.b16 %v5156, %v5148
        %v6149 = vpack.c.b16 %v5157, %v5149
        %v6150 = vpack.c.b16 %v5158, %v5150
        %v6151 = vpack.c.b16 %v5167, %v5159
        %v6152 = vpack.c.b16 %v5168, %v5160
        %v6153 = vpack.c.b16 %v5169, %v5161
        %v6154 = vpack.c.b16 %v5170, %v5162
        %v6155 = vpack.c.b16 %v5171, %v5163
        %v6156 = vpack.c.b16 %v5172, %v5164
        %v6157 = vpack.c.b16 %v5173, %v5165
        %v6158 = vpack.c.b16 %v5174, %v5166
        %v6159 = vpack.c.b16 %v5183, %v5175
        %v6160 = vpack.c.b16 %v5184, %v5176
        %v6161 = vpack.c.b16 %v5185, %v5177
        %v6162 = vpack.c.b16 %v5186, %v5178
        %v6163 = vpack.c.b16 %v5187, %v5179
        %v6164 = vpack.c.b16 %v5188, %v5180
        %v6165 = vpack.c.b16 %v5189, %v5181
        %v6166 = vpack.c.b16 %v5190, %v5182
        %v6167 = vpack.c.b16 %v5199, %v5191
        %v6168 = vpack.c.b16 %v5200, %v5192
        %v6169 = vpack.c.b16 %v5201, %v5193
        %v6170 = vpack.c.b16 %v5202, %v5194
        %v6171 = vpack.c.b16 %v5203, %v5195
        %v6172 = vpack.c.b16 %v5204, %v5196
        %v6173 = vpack.c.b16 %v5205, %v5197
        %v6174 = vpack.c.b16 %v5206, %v5198
        %v6175 = vpack.c.b16 %v5215, %v5207
        %v6176 = vpack.c.b16 %v5216, %v5208
        %v6177 = vpack.c.b16 %v5217, %v5209
        %v6178 = vpack.c.b16 %v5218, %v5210
        %v6179 = vpack.c.b16 %v5219, %v5211
        %v6180 = vpack.c.b16 %v5220, %v5212
        %v6181 = vpack.c.b16 %v5221, %v5213
        %v6182 = vpack.c.b16 %v5222, %v5214
        %v6183 = vpack.c.b16 %v5231, %v5223
        %v6184 = vpack.c.b16 %v5232, %v5224
        %v6185 = vpack.c.b16 %v5233, %v5225
        %v6186 = vpack.c.b16 %v5234, %v5226
        %v6187 = vpack.c.b16 %v5235, %v5227
        %v6188 = vpack.c.b16 %v5236, %v5228
        %v6189 = vpack.c.b16 %v5237, %v5229
        %v6190 = vpack.c.b16 %v5238, %v5230
        %v6191 = vpack.c.b16 %v5247, %v5239
        %v6192 = vpack.c.b16 %v5248, %v5240
        %v6193 = vpack.c.b16 %v5249, %v5241
        %v6194 = vpack.c.b16 %v5250, %v5242
        %v6195 = vpack.c.b16 %v5251, %v5243
        %v6196 = vpack.c.b16 %v5252, %v5244
        %v6197 = vpack.c.b16 %v5253, %v5245
        %v6198 = vpack.c.b16 %v5254, %v5246
        %v6199 = vpack.c.b16 %v5263, %v5255
        %v6200 = vpack.c.b16 %v5264, %v5256
        %v6201 = vpack.c.b16 %v5265, %v5257
        %v6202 = vpack.c.b16 %v5266, %v5258
        %v6203 = vpack.c.b16 %v5267, %v5259
        %v6204 = vpack.c.b16 %v5268, %v5260
        %v6205 = vpack.c.b16 %v5269, %v5261
        %v6206 = vpack.c.b16 %v5270, %v5262
        %v6207 = vpack.c.b16 %v5279, %v5271
        %v6208 = vpack.c.b16 %v5280, %v5272
        %v6209 = vpack.c.b16 %v5281, %v5273
        %v6210 = vpack.c.b16 %v5282, %v5274
        %v6211 = vpack.c.b16 %v5283, %v5275
        %v6212 = vpack.c.b16 %v5284, %v5276
        %v6213 = vpack.c.b16 %v5285, %v5277
        %v6214 = vpack.c.b16 %v5286, %v5278
        %v6215 = vpack.c.b16 %v5295, %v5287
        %v6216 = vpack.c.b16 %v5296, %v5288
        %v6217 = vpack.c.b16 %v5297, %v5289
        %v6218 = vpack.c.b16 %v5298, %v5290
        %v6219 = vpack.c.b16 %v5299, %v5291
        %v6220 = vpack.c.b16 %v5300, %v5292
        %v6221 = vpack.c.b16 %v5301, %v5293
        %v6222 = vpack.c.b16 %v5302, %v5294
        %v6223 = vpack.c.b16 %v5311, %v5303
        %v6224 = vpack.c.b16 %v5312, %v5304
        %v6225 = vpack.c.b16 %v5313, %v5305
        %v6226 = vpack.c.b16 %v5314, %v5306
        %v6227 = vpack.c.b16 %v5315, %v5307
        %v6228 = vpack.c.b16 %v5316, %v5308
        %v6229 = vpack.c.b16 %v5317, %v5309
        %v6230 = vpack.c.b16 %v5318, %v5310
        %v6231 = vpack.c.b16 %v5327, %v5319
        %v6232 = vpack.c.b16 %v5328, %v5320
        %v6233 = vpack.c.b16 %v5329, %v5321
        %v6234 = vpack.c.b16 %v5330, %v5322
        %v6235 = vpack.c.b16 %v5331, %v5323
        %v6236 = vpack.c.b16 %v5332, %v5324
        %v6237 = vpack.c.b16 %v5333, %v5325
        %v6238 = vpack.c.b16 %v5334, %v5326
        %v6239 = vpack.c.b16 %v5343, %v5335
        %v6240 = vpack.c.b16 %v5344, %v5336
        %v6241 = vpack.c.b16 %v5345, %v5337
        %v6242 = vpack.c.b16 %v5346, %v5338
        %v6243 = vpack.c.b16 %v5347, %v5339
        %v6244 = vpack.c.b16 %v5348, %v5340
        %v6245 = vpack.c.b16 %v5349, %v5341
        %v6246 = vpack.c.b16 %v5350, %v5342
        %v6247 = vpack.c.b16 %v5359, %v5351
        %v6248 = vpack.c.b16 %v5360, %v5352
        %v6249 = vpack.c.b16 %v5361, %v5353
        %v6250 = vpack.c.b16 %v5362, %v5354
        %v6251 = vpack.c.b16 %v5363, %v5355
        %v6252 = vpack.c.b16 %v5364, %v5356
        %v6253 = vpack.c.b16 %v5365, %v5357
        %v6254 = vpack.c.b16 %v5366, %v5358
        %v6255 = vpack.c.b16 %v5375, %v5367
        %v6256 = vpack.c.b16 %v5376, %v5368
        %v6257 = vpack.c.b16 %v5377, %v5369
        %v6258 = vpack.c.b16 %v5378, %v5370
        %v6259 = vpack.c.b16 %v5379, %v5371
        %v6260 = vpack.c.b16 %v5380, %v5372
        %v6261 = vpack.c.b16 %v5381, %v5373
        %v6262 = vpack.c.b16 %v5382, %v5374
        %v6263 = vpack.c.b16 %v5391, %v5383
        %v6264 = vpack.c.b16 %v5392, %v5384
        %v6265 = vpack.c.b16 %v5393, %v5385
        %v6266 = vpack.c.b16 %v5394, %v5386
        %v6267 = vpack.c.b16 %v5395, %v5387
        %v6268 = vpack.c.b16 %v5396, %v5388
        %v6269 = vpack.c.b16 %v5397, %v5389
        %v6270 = vpack.c.b16 %v5398, %v5390
        %v6271 = vpack.c.b16 %v5407, %v5399
        %v6272 = vpack.c.b16 %v5408, %v5400
        %v6273 = vpack.c.b16 %v5409, %v5401
        %v6274 = vpack.c.b16 %v5410, %v5402
        %v6275 = vpack.c.b16 %v5411, %v5403
        %v6276 = vpack.c.b16 %v5412, %v5404
        %v6277 = vpack.c.b16 %v5413, %v5405
        %v6278 = vpack.c.b16 %v5414, %v5406
        %v6279 = vpack.c.b16 %v5423, %v5415
        %v6280 = vpack.c.b16 %v5424, %v5416
        %v6281 = vpack.c.b16 %v5425, %v5417
        %v6282 = vpack.c.b16 %v5426, %v5418
        %v6283 = vpack.c.b16 %v5427, %v5419
        %v6284 = vpack.c.b16 %v5428, %v5420
        %v6285 = vpack.c.b16 %v5429, %v5421
        %v6286 = vpack.c.b16 %v5430, %v5422
        %v6287 = vpack.c.b16 %v5439, %v5431
        %v6288 = vpack.c.b16 %v5440, %v5432
        %v6289 = vpack.c.b16 %v5441, %v5433
        %v6290 = vpack.c.b16 %v5442, %v5434
        %v6291 = vpack.c.b16 %v5443, %v5435
        %v6292 = vpack.c.b16 %v5444, %v5436
        %v6293 = vpack.c.b16 %v5445, %v5437
        %v6294 = vpack.c.b16 %v5446, %v5438
        %v6295 = vpack.c.b16 %v5455, %v5447
        %v6296 = vpack.c.b16 %v5456, %v5448
        %v6297 = vpack.c.b16 %v5457, %v5449
        %v6298 = vpack.c.b16 %v5458, %v5450
        %v6299 = vpack.c.b16 %v5459, %v5451
        %v6300 = vpack.c.b16 %v5460, %v5452
        %v6301 = vpack.c.b16 %v5461, %v5453
        %v6302 = vpack.c.b16 %v5462, %v5454
        %v6303 = vpack.c.b16 %v5471, %v5463
        %v6304 = vpack.c.b16 %v5472, %v5464
        %v6305 = vpack.c.b16 %v5473, %v5465
        %v6306 = vpack.c.b16 %v5474, %v5466
        %v6307 = vpack.c.b16 %v5475, %v5467
        %v6308 = vpack.c.b16 %v5476, %v5468
        %v6309 = vpack.c.b16 %v5477, %v5469
        %v6310 = vpack.c.b16 %v5478, %v5470
        %v6311 = vpack.c.b16 %v5487, %v5479
        %v6312 = vpack.c.b16 %v5488, %v5480
        %v6313 = vpack.c.b16 %v5489, %v5481
        %v6314 = vpack.c.b16 %v5490, %v5482
        %v6315 = vpack.c.b16 %v5491, %v5483
        %v6316 = vpack.c.b16 %v5492, %v5484
        %v6317 = vpack.c.b16 %v5493, %v5485
        %v6318 = vpack.c.b16 %v5494, %v5486
        %v6319 = vpack.c.b16 %v5503, %v5495
        %v6320 = vpack.c.b16 %v5504, %v5496
        %v6321 = vpack.c.b16 %v5505, %v5497
        %v6322 = vpack.c.b16 %v5506, %v5498
        %v6323 = vpack.c.b16 %v5507, %v5499
        %v6324 = vpack.c.b16 %v5508, %v5500
        %v6325 = vpack.c.b16 %v5509, %v5501
        %v6326 = vpack.c.b16 %v5510, %v5502
        %v6327 = vpack.c.b16 %v5519, %v5511
        %v6328 = vpack.c.b16 %v5520, %v5512
        %v6329 = vpack.c.b16 %v5521, %v5513
        %v6330 = vpack.c.b16 %v5522, %v5514
        %v6331 = vpack.c.b16 %v5523, %v5515
        %v6332 = vpack.c.b16 %v5524, %v5516
        %v6333 = vpack.c.b16 %v5525, %v5517
        %v6334 = vpack.c.b16 %v5526, %v5518
        %v6335 = vpack.c.b16 %v5535, %v5527
        %v6336 = vpack.c.b16 %v5536, %v5528
        %v6337 = vpack.c.b16 %v5537, %v5529
        %v6338 = vpack.c.b16 %v5538, %v5530
        %v6339 = vpack.c.b16 %v5539, %v5531
        %v6340 = vpack.c.b16 %v5540, %v5532
        %v6341 = vpack.c.b16 %v5541, %v5533
        %v6342 = vpack.c.b16 %v5542, %v5534
        %v6343 = vpack.c.b16 %v5551, %v5543
        %v6344 = vpack.c.b16 %v5552, %v5544
        %v6345 = vpack.c.b16 %v5553, %v5545
        %v6346 = vpack.c.b16 %v5554, %v5546
        %v6347 = vpack.c.b16 %v5555, %v5547
        %v6348 = vpack.c.b16 %v5556, %v5548
        %v6349 = vpack.c.b16 %v5557, %v5549
        %v6350 = vpack.c.b16 %v5558, %v5550
        %v6351 = vpack.c.b16 %v5567, %v5559
        %v6352 = vpack.c.b16 %v5568, %v5560
        %v6353 = vpack.c.b16 %v5569, %v5561
        %v6354 = vpack.c.b16 %v5570, %v5562
        %v6355 = vpack.c.b16 %v5571, %v5563
        %v6356 = vpack.c.b16 %v5572, %v5564
        %v6357 = vpack.c.b16 %v5573, %v5565
        %v6358 = vpack.c.b16 %v5574, %v5566
        %v6359 = vpack.c.b16 %v5583, %v5575
        %v6360 = vpack.c.b16 %v5584, %v5576
        %v6361 = vpack.c.b16 %v5585, %v5577
        %v6362 = vpack.c.b16 %v5586, %v5578
        %v6363 = vpack.c.b16 %v5587, %v5579
        %v6364 = vpack.c.b16 %v5588, %v5580
        %v6365 = vpack.c.b16 %v5589, %v5581
        %v6366 = vpack.c.b16 %v5590, %v5582
        %v6367 = vpack.c.b16 %v5599, %v5591
        %v6368 = vpack.c.b16 %v5600, %v5592
        %v6369 = vpack.c.b16 %v5601, %v5593
        %v6370 = vpack.c.b16 %v5602, %v5594
        %v6371 = vpack.c.b16 %v5603, %v5595
        %v6372 = vpack.c.b16 %v5604, %v5596
        %v6373 = vpack.c.b16 %v5605, %v5597
        %v6374 = vpack.c.b16 %v5606, %v5598
        %v6375 = vpack.c.b16 %v5615, %v5607
        %v6376 = vpack.c.b16 %v5616, %v5608
        %v6377 = vpack.c.b16 %v5617, %v5609
        %v6378 = vpack.c.b16 %v5618, %v5610
        %v6379 = vpack.c.b16 %v5619, %v5611
        %v6380 = vpack.c.b16 %v5620, %v5612
        %v6381 = vpack.c.b16 %v5621, %v5613
        %v6382 = vpack.c.b16 %v5622, %v5614
        %v6383 = vpack.c.b16 %v5631, %v5623
        %v6384 = vpack.c.b16 %v5632, %v5624
        %v6385 = vpack.c.b16 %v5633, %v5625
        %v6386 = vpack.c.b16 %v5634, %v5626
        %v6387 = vpack.c.b16 %v5635, %v5627
        %v6388 = vpack.c.b16 %v5636, %v5628
        %v6389 = vpack.c.b16 %v5637, %v5629
        %v6390 = vpack.c.b16 %v5638, %v5630
        %v6391 = vpack.c.b16 %v5647, %v5639
        %v6392 = vpack.c.b16 %v5648, %v5640
        %v6393 = vpack.c.b16 %v5649, %v5641
        %v6394 = vpack.c.b16 %v5650, %v5642
        %v6395 = vpack.c.b16 %v5651, %v5643
        %v6396 = vpack.c.b16 %v5652, %v5644
        %v6397 = vpack.c.b16 %v5653, %v5645
        %v6398 = vpack.c.b16 %v5654, %v5646
        %v6399 = vpack.c.b16 %v5663, %v5655
        %v6400 = vpack.c.b16 %v5664, %v5656
        %v6401 = vpack.c.b16 %v5665, %v5657
        %v6402 = vpack.c.b16 %v5666, %v5658
        %v6403 = vpack.c.b16 %v5667, %v5659
        %v6404 = vpack.c.b16 %v5668, %v5660
        %v6405 = vpack.c.b16 %v5669, %v5661
        %v6406 = vpack.c.b16 %v5670, %v5662
        %v6407 = vpack.c.b16 %v5679, %v5671
        %v6408 = vpack.c.b16 %v5680, %v5672
        %v6409 = vpack.c.b16 %v5681, %v5673
        %v6410 = vpack.c.b16 %v5682, %v5674
        %v6411 = vpack.c.b16 %v5683, %v5675
        %v6412 = vpack.c.b16 %v5684, %v5676
        %v6413 = vpack.c.b16 %v5685, %v5677
        %v6414 = vpack.c.b16 %v5686, %v5678
        %v6415 = vpack.c.b16 %v5695, %v5687
        %v6416 = vpack.c.b16 %v5696, %v5688
        %v6417 = vpack.c.b16 %v5697, %v5689
        %v6418 = vpack.c.b16 %v5698, %v5690
        %v6419 = vpack.c.b16 %v5699, %v5691
        %v6420 = vpack.c.b16 %v5700, %v5692
        %v6421 = vpack.c.b16 %v5701, %v5693
        %v6422 = vpack.c.b16 %v5702, %v5694
        %v6423 = vpack.c.b16 %v5711, %v5703
        %v6424 = vpack.c.b16 %v5712, %v5704
        %v6425 = vpack.c.b16 %v5713, %v5705
        %v6426 = vpack.c.b16 %v5714, %v5706
        %v6427 = vpack.c.b16 %v5715, %v5707
        %v6428 = vpack.c.b16 %v5716, %v5708
        %v6429 = vpack.c.b16 %v5717, %v5709
        %v6430 = vpack.c.b16 %v5718, %v5710
        %v6431 = vpack.c.b16 %v5727, %v5719
        %v6432 = vpack.c.b16 %v5728, %v5720
        %v6433 = vpack.c.b16 %v5729, %v5721
        %v6434 = vpack.c.b16 %v5730, %v5722
        %v6435 = vpack.c.b16 %v5731, %v5723
        %v6436 = vpack.c.b16 %v5732, %v5724
        %v6437 = vpack.c.b16 %v5733, %v5725
        %v6438 = vpack.c.b16 %v5734, %v5726
        %v6439 = vpack.c.b16 %v5743, %v5735
        %v6440 = vpack.c.b16 %v5744, %v5736
        %v6441 = vpack.c.b16 %v5745, %v5737
        %v6442 = vpack.c.b16 %v5746, %v5738
        %v6443 = vpack.c.b16 %v5747, %v5739
        %v6444 = vpack.c.b16 %v5748, %v5740
        %v6445 = vpack.c.b16 %v5749, %v5741
        %v6446 = vpack.c.b16 %v5750, %v5742
        %v6447 = vpack.c.b16 %v5759, %v5751
        %v6448 = vpack.c.b16 %v5760, %v5752
        %v6449 = vpack.c.b16 %v5761, %v5753
        %v6450 = vpack.c.b16 %v5762, %v5754
        %v6451 = vpack.c.b16 %v5763, %v5755
        %v6452 = vpack.c.b16 %v5764, %v5756
        %v6453 = vpack.c.b16 %v5765, %v5757
        %v6454 = vpack.c.b16 %v5766, %v5758
        %v6455 = vpack.c.b16 %v5775, %v5767
        %v6456 = vpack.c.b16 %v5776, %v5768
        %v6457 = vpack.c.b16 %v5777, %v5769
        %v6458 = vpack.c.b16 %v5778, %v5770
        %v6459 = vpack.c.b16 %v5779, %v5771
        %v6460 = vpack.c.b16 %v5780, %v5772
        %v6461 = vpack.c.b16 %v5781, %v5773
        %v6462 = vpack.c.b16 %v5782, %v5774
        %v6463 = vpack.c.b16 %v5791, %v5783
        %v6464 = vpack.c.b16 %v5792, %v5784
        %v6465 = vpack.c.b16 %v5793, %v5785
        %v6466 = vpack.c.b16 %v5794, %v5786
        %v6467 = vpack.c.b16 %v5795, %v5787
        %v6468 = vpack.c.b16 %v5796, %v5788
        %v6469 = vpack.c.b16 %v5797, %v5789
        %v6470 = vpack.c.b16 %v5798, %v5790
        %v6471 = vpack.c.b16 %v5807, %v5799
        %v6472 = vpack.c.b16 %v5808, %v5800
        %v6473 = vpack.c.b16 %v5809, %v5801
        %v6474 = vpack.c.b16 %v5810, %v5802
        %v6475 = vpack.c.b16 %v5811, %v5803
        %v6476 = vpack.c.b16 %v5812, %v5804
        %v6477 = vpack.c.b16 %v5813, %v5805
        %v6478 = vpack.c.b16 %v5814, %v5806
        %v6479 = vpack.c.b16 %v5823, %v5815
        %v6480 = vpack.c.b16 %v5824, %v5816
        %v6481 = vpack.c.b16 %v5825, %v5817
        %v6482 = vpack.c.b16 %v5826, %v5818
        %v6483 = vpack.c.b16 %v5827, %v5819
        %v6484 = vpack.c.b16 %v5828, %v5820
        %v6485 = vpack.c.b16 %v5829, %v5821
        %v6486 = vpack.c.b16 %v5830, %v5822
        %v6487 = vpack.c.b16 %v5839, %v5831
        %v6488 = vpack.c.b16 %v5840, %v5832
        %v6489 = vpack.c.b16 %v5841, %v5833
        %v6490 = vpack.c.b16 %v5842, %v5834
        %v6491 = vpack.c.b16 %v5843, %v5835
        %v6492 = vpack.c.b16 %v5844, %v5836
        %v6493 = vpack.c.b16 %v5845, %v5837
        %v6494 = vpack.c.b16 %v5846, %v5838
        %v6495 = vpack.c.b16 %v5855, %v5847
        %v6496 = vpack.c.b16 %v5856, %v5848
        %v6497 = vpack.c.b16 %v5857, %v5849
        %v6498 = vpack.c.b16 %v5858, %v5850
        %v6499 = vpack.c.b16 %v5859, %v5851
        %v6500 = vpack.c.b16 %v5860, %v5852
        %v6501 = vpack.c.b16 %v5861, %v5853
        %v6502 = vpack.c.b16 %v5862, %v5854
        %v6503 = vpack.c.b16 %v5871, %v5863
        %v6504 = vpack.c.b16 %v5872, %v5864
        %v6505 = vpack.c.b16 %v5873, %v5865
        %v6506 = vpack.c.b16 %v5874, %v5866
        %v6507 = vpack.c.b16 %v5875, %v5867
        %v6508 = vpack.c.b16 %v5876, %v5868
        %v6509 = vpack.c.b16 %v5877, %v5869
        %v6510 = vpack.c.b16 %v5878, %v5870
        %v6511 = vpack.c.b16 %v5887, %v5879
        %v6512 = vpack.c.b16 %v5888, %v5880
        %v6513 = vpack.c.b16 %v5889, %v5881
        %v6514 = vpack.c.b16 %v5890, %v5882
        %v6515 = vpack.c.b16 %v5891, %v5883
        %v6516 = vpack.c.b16 %v5892, %v5884
        %v6517 = vpack.c.b16 %v5893, %v5885
        %v6518 = vpack.c.b16 %v5894, %v5886
        %v6519 = vpack.c.b16 %v5903, %v5895
        %v6520 = vpack.c.b16 %v5904, %v5896
        %v6521 = vpack.c.b16 %v5905, %v5897
        %v6522 = vpack.c.b16 %v5906, %v5898
        %v6523 = vpack.c.b16 %v5907, %v5899
        %v6524 = vpack.c.b16 %v5908, %v5900
        %v6525 = vpack.c.b16 %v5909, %v5901
        %v6526 = vpack.c.b16 %v5910, %v5902
        %v6527 = vpack.c.b16 %v5919, %v5911
        %v6528 = vpack.c.b16 %v5920, %v5912
        %v6529 = vpack.c.b16 %v5921, %v5913
        %v6530 = vpack.c.b16 %v5922, %v5914
        %v6531 = vpack.c.b16 %v5923, %v5915
        %v6532 = vpack.c.b16 %v5924, %v5916
        %v6533 = vpack.c.b16 %v5925, %v5917
        %v6534 = vpack.c.b16 %v5926, %v5918
        %v6535 = vpack.c.b16 %v5935, %v5927
        %v6536 = vpack.c.b16 %v5936, %v5928
        %v6537 = vpack.c.b16 %v5937, %v5929
        %v6538 = vpack.c.b16 %v5938, %v5930
        %v6539 = vpack.c.b16 %v5939, %v5931
        %v6540 = vpack.c.b16 %v5940, %v5932
        %v6541 = vpack.c.b16 %v5941, %v5933
        %v6542 = vpack.c.b16 %v5942, %v5934
        %v6543 = vpack.c.b16 %v5951, %v5943
        %v6544 = vpack.c.b16 %v5952, %v5944
        %v6545 = vpack.c.b16 %v5953, %v5945
        %v6546 = vpack.c.b16 %v5954, %v5946
        %v6547 = vpack.c.b16 %v5955, %v5947
        %v6548 = vpack.c.b16 %v5956, %v5948
        %v6549 = vpack.c.b16 %v5957, %v5949
        %v6550 = vpack.c.b16 %v5958, %v5950
        %v6551 = vpack.c.b16 %v5967, %v5959
        %v6552 = vpack.c.b16 %v5968, %v5960
        %v6553 = vpack.c.b16 %v5969, %v5961
        %v6554 = vpack.c.b16 %v5970, %v5962
        %v6555 = vpack.c.b16 %v5971, %v5963
        %v6556 = vpack.c.b16 %v5972, %v5964
        %v6557 = vpack.c.b16 %v5973, %v5965
        %v6558 = vpack.c.b16 %v5974, %v5966
        %v6559 = vpack.c.b16 %v5983, %v5975
        %v6560 = vpack.c.b16 %v5984, %v5976
        %v6561 = vpack.c.b16 %v5985, %v5977
        %v6562 = vpack.c.b16 %v5986, %v5978
        %v6563 = vpack.c.b16 %v5987, %v5979
        %v6564 = vpack.c.b16 %v5988, %v5980
        %v6565 = vpack.c.b16 %v5989, %v5981
        %v6566 = vpack.c.b16 %v5990, %v5982
        %v6567 = vpack.c.b16 %v5999, %v5991
        %v6568 = vpack.c.b16 %v6000, %v5992
        %v6569 = vpack.c.b16 %v6001, %v5993
        %v6570 = vpack.c.b16 %v6002, %v5994
        %v6571 = vpack.c.b16 %v6003, %v5995
        %v6572 = vpack.c.b16 %v6004, %v5996
        %v6573 = vpack.c.b16 %v6005, %v5997
        %v6574 = vpack.c.b16 %v6006, %v5998
        %v6575 = vpack.c.b16 %v6015, %v6007
        %v6576 = vpack.c.b16 %v6016, %v6008
        %v6577 = vpack.c.b16 %v6017, %v6009
        %v6578 = vpack.c.b16 %v6018, %v6010
        %v6579 = vpack.c.b16 %v6019, %v6011
        %v6580 = vpack.c.b16 %v6020, %v6012
        %v6581 = vpack.c.b16 %v6021, %v6013
        %v6582 = vpack.c.b16 %v6022, %v6014
        %v6583 = vpack.c.b16 %v6031, %v6023
        %v6584 = vpack.c.b16 %v6032, %v6024
        %v6585 = vpack.c.b16 %v6033, %v6025
        %v6586 = vpack.c.b16 %v6034, %v6026
        %v6587 = vpack.c.b16 %v6035, %v6027
        %v6588 = vpack.c.b16 %v6036, %v6028
        %v6589 = vpack.c.b16 %v6037, %v6029
        %v6590 = vpack.c.b16 %v6038, %v6030
        %v6591 = vpack.c.b16 %v6047, %v6039
        %v6592 = vpack.c.b16 %v6048, %v6040
        %v6593 = vpack.c.b16 %v6049, %v6041
        %v6594 = vpack.c.b16 %v6050, %v6042
        %v6595 = vpack.c.b16 %v6051, %v6043
        %v6596 = vpack.c.b16 %v6052, %v6044
        %v6597 = vpack.c.b16 %v6053, %v6045
        %v6598 = vpack.c.b16 %v6054, %v6046
        %v6599 = vpack.c.b16 %v6063, %v6055
        %v6600 = vpack.c.b16 %v6064, %v6056
        %v6601 = vpack.c.b16 %v6065, %v6057
        %v6602 = vpack.c.b16 %v6066, %v6058
        %v6603 = vpack.c.b16 %v6067, %v6059
        %v6604 = vpack.c.b16 %v6068, %v6060
        %v6605 = vpack.c.b16 %v6069, %v6061
        %v6606 = vpack.c.b16 %v6070, %v6062
        %v6607 = vpack.c.b16 %v6079, %v6071
        %v6608 = vpack.c.b16 %v6080, %v6072
        %v6609 = vpack.c.b16 %v6081, %v6073
        %v6610 = vpack.c.b16 %v6082, %v6074
        %v6611 = vpack.c.b16 %v6083, %v6075
        %v6612 = vpack.c.b16 %v6084, %v6076
        %v6613 = vpack.c.b16 %v6085, %v6077
        %v6614 = vpack.c.b16 %v6086, %v6078
        %v6615 = vpack.c.b16 %v6095, %v6087
        %v6616 = vpack.c.b16 %v6096, %v6088
        %v6617 = vpack.c.b16 %v6097, %v6089
        %v6618 = vpack.c.b16 %v6098, %v6090
        %v6619 = vpack.c.b16 %v6099, %v6091
        %v6620 = vpack.c.b16 %v6100, %v6092
        %v6621 = vpack.c.b16 %v6101, %v6093
        %v6622 = vpack.c.b16 %v6102, %v6094
        %v6623 = vpack.c.b16 %v6111, %v6103
        %v6624 = vpack.c.b16 %v6112, %v6104
        %v6625 = vpack.c.b16 %v6113, %v6105
        %v6626 = vpack.c.b16 %v6114, %v6106
        %v6627 = vpack.c.b16 %v6115, %v6107
        %v6628 = vpack.c.b16 %v6116, %v6108
        %v6629 = vpack.c.b16 %v6117, %v6109
        %v6630 = vpack.c.b16 %v6118, %v6110
        %7143 = vmatprep.subr.bf16.mxu0 %v6120
        %7144 = vmatpush1.bf16.msra.mxu0 %v6119
        %7145 = vmatprep.subr.bf16.mxu0 %v6128
        %7146 = vmatpush1.bf16.msra.mxu0 %v6127
        %7147 = vmatprep.subr.bf16.mxu0 %v6136
        %7148 = vmatpush1.bf16.msra.mxu0 %v6135
        %7149 = vmatprep.subr.bf16.mxu0 %v6144
        %7150 = vmatpush1.bf16.msra.mxu0 %v6143
        %7151 = vmatprep.subr.bf16.mxu0 %v6152
        %7152 = vmatpush1.bf16.msra.mxu0 %v6151
        %7153 = vmatprep.subr.bf16.mxu0 %v6160
        %7154 = vmatpush1.bf16.msra.mxu0 %v6159
        %7155 = vmatprep.subr.bf16.mxu0 %v6168
        %7156 = vmatpush1.bf16.msra.mxu0 %v6167
        %7157 = vmatprep.subr.bf16.mxu0 %v6176
        %7158 = vmatpush1.bf16.msra.mxu0 %v6175
        %7159 = vmatprep.subr.bf16.mxu0 %v6184
        %7160 = vmatpush1.bf16.msra.mxu0 %v6183
        %7161 = vmatprep.subr.bf16.mxu0 %v6192
        %7162 = vmatpush1.bf16.msra.mxu0 %v6191
        %7163 = vmatprep.subr.bf16.mxu0 %v6200
        %7164 = vmatpush1.bf16.msra.mxu0 %v6199
        %7165 = vmatprep.subr.bf16.mxu0 %v6208
        %7166 = vmatpush1.bf16.msra.mxu0 %v6207
        %7167 = vmatprep.subr.bf16.mxu0 %v6216
        %7168 = vmatpush1.bf16.msra.mxu0 %v6215
        %7169 = vmatprep.subr.bf16.mxu0 %v6224
        %7170 = vmatpush1.bf16.msra.mxu0 %v6223
        %7171 = vmatprep.subr.bf16.mxu0 %v6232
        %7172 = vmatpush1.bf16.msra.mxu0 %v6231
        %7173 = vmatprep.subr.bf16.mxu0 %v6240
        %7174 = vmatpush1.bf16.msra.mxu0 %v6239
        %7175 = vmatprep.mubr.bf16.mxu0 %v1320
        %7176 = vmatmul.mubr.bf16.gmra.mrb[0].mxu0 %v1319
        %v7177 = vpop.f32.mrb[0].mxu0
        %v7178 = vadd.f32 %v4059, %v7177
        %v7179 = vpop.f32.mrb[0].mxu0
        %v7180 = vadd.f32 %v4061, %v7179
        %v7181 = vpop.f32.mrb[0].mxu0
        %v7182 = vadd.f32 %v4063, %v7181
        %v7183 = vpop.f32.mrb[0].mxu0
        %v7184 = vadd.f32 %v4065, %v7183
        %7185 = vdwg.mxu0
        %7186 = vmatprep.subr.bf16.mxu0 %v6248
        %7187 = vmatpush1.bf16.msra.mxu0 %v6247
        %7188 = vmatprep.subr.bf16.mxu0 %v6256
        %7189 = vmatpush1.bf16.msra.mxu0 %v6255
        %7190 = vmatprep.subr.bf16.mxu0 %v6264
        %7191 = vmatpush1.bf16.msra.mxu0 %v6263
        %7192 = vmatprep.subr.bf16.mxu0 %v6272
        %7193 = vmatpush1.bf16.msra.mxu0 %v6271
        %7194 = vmatprep.subr.bf16.mxu0 %v6280
        %7195 = vmatpush1.bf16.msra.mxu0 %v6279
        %7196 = vmatprep.subr.bf16.mxu0 %v6288
        %7197 = vmatpush1.bf16.msra.mxu0 %v6287
        %7198 = vmatprep.subr.bf16.mxu0 %v6296
        %7199 = vmatpush1.bf16.msra.mxu0 %v6295
        %7200 = vmatprep.subr.bf16.mxu0 %v6304
        %7201 = vmatpush1.bf16.msra.mxu0 %v6303
        %7202 = vmatprep.subr.bf16.mxu0 %v6312
        %7203 = vmatpush1.bf16.msra.mxu0 %v6311
        %7204 = vmatprep.subr.bf16.mxu0 %v6320
        %7205 = vmatpush1.bf16.msra.mxu0 %v6319
        %7206 = vmatprep.subr.bf16.mxu0 %v6328
        %7207 = vmatpush1.bf16.msra.mxu0 %v6327
        %7208 = vmatprep.subr.bf16.mxu0 %v6336
        %7209 = vmatpush1.bf16.msra.mxu0 %v6335
        %7210 = vmatprep.subr.bf16.mxu0 %v6344
        %7211 = vmatpush1.bf16.msra.mxu0 %v6343
        %7212 = vmatprep.subr.bf16.mxu0 %v6352
        %7213 = vmatpush1.bf16.msra.mxu0 %v6351
        %7214 = vmatprep.subr.bf16.mxu0 %v6360
        %7215 = vmatpush1.bf16.msra.mxu0 %v6359
        %7216 = vmatprep.subr.bf16.mxu0 %v6368
        %7217 = vmatpush1.bf16.msra.mxu0 %v6367
        %7218 = vmatprep.mubr.bf16.mxu0 %v1322
        %7219 = vmatmul.mubr.bf16.gmra.mrb[0].mxu0 %v1321
        %v7220 = vpop.f32.mrb[0].mxu0
        %v7221 = vadd.f32 %v7178, %v7220
        %v7222 = vpop.f32.mrb[0].mxu0
        %v7223 = vadd.f32 %v7180, %v7222
        %v7224 = vpop.f32.mrb[0].mxu0
        %v7225 = vadd.f32 %v7182, %v7224
        %v7226 = vpop.f32.mrb[0].mxu0
        %v7227 = vadd.f32 %v7184, %v7226
        %7228 = vdwg.mxu0
        %7229 = vmatprep.subr.bf16.mxu0 %v6376
        %7230 = vmatpush1.bf16.msra.mxu0 %v6375
        %7231 = vmatprep.subr.bf16.mxu0 %v6384
        %7232 = vmatpush1.bf16.msra.mxu0 %v6383
        %7233 = vmatprep.subr.bf16.mxu0 %v6392
        %7234 = vmatpush1.bf16.msra.mxu0 %v6391
        %7235 = vmatprep.subr.bf16.mxu0 %v6400
        %7236 = vmatpush1.bf16.msra.mxu0 %v6399
        %7237 = vmatprep.subr.bf16.mxu0 %v6408
        %7238 = vmatpush1.bf16.msra.mxu0 %v6407
        %7239 = vmatprep.subr.bf16.mxu0 %v6416
        %7240 = vmatpush1.bf16.msra.mxu0 %v6415
        %7241 = vmatprep.subr.bf16.mxu0 %v6424
        %7242 = vmatpush1.bf16.msra.mxu0 %v6423
        %7243 = vmatprep.subr.bf16.mxu0 %v6432
        %7244 = vmatpush1.bf16.msra.mxu0 %v6431
        %7245 = vmatprep.subr.bf16.mxu0 %v6440
        %7246 = vmatpush1.bf16.msra.mxu0 %v6439
        %7247 = vmatprep.subr.bf16.mxu0 %v6448
        %7248 = vmatpush1.bf16.msra.mxu0 %v6447
        %7249 = vmatprep.subr.bf16.mxu0 %v6456
        %7250 = vmatpush1.bf16.msra.mxu0 %v6455
        %7251 = vmatprep.subr.bf16.mxu0 %v6464
        %7252 = vmatpush1.bf16.msra.mxu0 %v6463
        %7253 = vmatprep.subr.bf16.mxu0 %v6472
        %7254 = vmatpush1.bf16.msra.mxu0 %v6471
        %7255 = vmatprep.subr.bf16.mxu0 %v6480
        %7256 = vmatpush1.bf16.msra.mxu0 %v6479
        %7257 = vmatprep.subr.bf16.mxu0 %v6488
        %7258 = vmatpush1.bf16.msra.mxu0 %v6487
        %7259 = vmatprep.subr.bf16.mxu0 %v6496
        %7260 = vmatpush1.bf16.msra.mxu0 %v6495
        %7261 = vmatprep.mubr.bf16.mxu0 %v1324
        %7262 = vmatmul.mubr.bf16.gmra.mrb[0].mxu0 %v1323
        %v7263 = vpop.f32.mrb[0].mxu0
        %v7264 = vadd.f32 %v7221, %v7263
        %v7265 = vpop.f32.mrb[0].mxu0
        %v7266 = vadd.f32 %v7223, %v7265
        %v7267 = vpop.f32.mrb[0].mxu0
        %v7268 = vadd.f32 %v7225, %v7267
        %v7269 = vpop.f32.mrb[0].mxu0
        %v7270 = vadd.f32 %v7227, %v7269
        %7271 = vdwg.mxu0
        %7272 = vmatprep.subr.bf16.mxu0 %v6504
        %7273 = vmatpush1.bf16.msra.mxu0 %v6503
        %7274 = vmatprep.subr.bf16.mxu0 %v6512
        %7275 = vmatpush1.bf16.msra.mxu0 %v6511
        %7276 = vmatprep.subr.bf16.mxu0 %v6520
        %7277 = vmatpush1.bf16.msra.mxu0 %v6519
        %7278 = vmatprep.subr.bf16.mxu0 %v6528
        %7279 = vmatpush1.bf16.msra.mxu0 %v6527
        %7280 = vmatprep.subr.bf16.mxu0 %v6536
        %7281 = vmatpush1.bf16.msra.mxu0 %v6535
        %7282 = vmatprep.subr.bf16.mxu0 %v6544
        %7283 = vmatpush1.bf16.msra.mxu0 %v6543
        %7284 = vmatprep.subr.bf16.mxu0 %v6552
        %7285 = vmatpush1.bf16.msra.mxu0 %v6551
        %7286 = vmatprep.subr.bf16.mxu0 %v6560
        %7287 = vmatpush1.bf16.msra.mxu0 %v6559
        %7288 = vmatprep.subr.bf16.mxu0 %v6568
        %7289 = vmatpush1.bf16.msra.mxu0 %v6567
        %7290 = vmatprep.subr.bf16.mxu0 %v6576
        %7291 = vmatpush1.bf16.msra.mxu0 %v6575
        %7292 = vmatprep.subr.bf16.mxu0 %v6584
        %7293 = vmatpush1.bf16.msra.mxu0 %v6583
        %7294 = vmatprep.subr.bf16.mxu0 %v6592
        %7295 = vmatpush1.bf16.msra.mxu0 %v6591
        %7296 = vmatprep.subr.bf16.mxu0 %v6600
        %7297 = vmatpush1.bf16.msra.mxu0 %v6599
        %7298 = vmatprep.subr.bf16.mxu0 %v6608
        %7299 = vmatpush1.bf16.msra.mxu0 %v6607
        %7300 = vmatprep.subr.bf16.mxu0 %v6616
        %7301 = vmatpush1.bf16.msra.mxu0 %v6615
        %7302 = vmatprep.subr.bf16.mxu0 %v6624
        %7303 = vmatpush1.bf16.msra.mxu0 %v6623
        %7304 = vmatprep.mubr.bf16.mxu0 %v1326
        %7305 = vmatmul.mubr.bf16.gmra.mrb[0].mxu0 %v1325
        %v7306 = vpop.f32.mrb[0].mxu0
        %v7307 = vadd.f32 %v7264, %v7306
        %v7308 = vpop.f32.mrb[0].mxu0
        %v7309 = vadd.f32 %v7266, %v7308
        %v7310 = vpop.f32.mrb[0].mxu0
        %v7311 = vadd.f32 %v7268, %v7310
        %v7312 = vpop.f32.mrb[0].mxu0
        %v7313 = vadd.f32 %v7270, %v7312
        %7314 = vdwg.mxu0
        %7315 = vmatprep.subr.bf16.mxu0 %v6122
        %7316 = vmatpush1.bf16.msra.mxu0 %v6121
        %7317 = vmatprep.subr.bf16.mxu0 %v6130
        %7318 = vmatpush1.bf16.msra.mxu0 %v6129
        %7319 = vmatprep.subr.bf16.mxu0 %v6138
        %7320 = vmatpush1.bf16.msra.mxu0 %v6137
        %7321 = vmatprep.subr.bf16.mxu0 %v6146
        %7322 = vmatpush1.bf16.msra.mxu0 %v6145
        %7323 = vmatprep.subr.bf16.mxu0 %v6154
        %7324 = vmatpush1.bf16.msra.mxu0 %v6153
        %7325 = vmatprep.subr.bf16.mxu0 %v6162
        %7326 = vmatpush1.bf16.msra.mxu0 %v6161
        %7327 = vmatprep.subr.bf16.mxu0 %v6170
        %7328 = vmatpush1.bf16.msra.mxu0 %v6169
        %7329 = vmatprep.subr.bf16.mxu0 %v6178
        %7330 = vmatpush1.bf16.msra.mxu0 %v6177
        %7331 = vmatprep.subr.bf16.mxu0 %v6186
        %7332 = vmatpush1.bf16.msra.mxu0 %v6185
        %7333 = vmatprep.subr.bf16.mxu0 %v6194
        %7334 = vmatpush1.bf16.msra.mxu0 %v6193
        %7335 = vmatprep.subr.bf16.mxu0 %v6202
        %7336 = vmatpush1.bf16.msra.mxu0 %v6201
        %7337 = vmatprep.subr.bf16.mxu0 %v6210
        %7338 = vmatpush1.bf16.msra.mxu0 %v6209
        %7339 = vmatprep.subr.bf16.mxu0 %v6218
        %7340 = vmatpush1.bf16.msra.mxu0 %v6217
        %7341 = vmatprep.subr.bf16.mxu0 %v6226
        %7342 = vmatpush1.bf16.msra.mxu0 %v6225
        %7343 = vmatprep.subr.bf16.mxu0 %v6234
        %7344 = vmatpush1.bf16.msra.mxu0 %v6233
        %7345 = vmatprep.subr.bf16.mxu0 %v6242
        %7346 = vmatpush1.bf16.msra.mxu0 %v6241
        %7347 = vmatprep.mubr.bf16.mxu0 %v1320
        %7348 = vmatmul.mubr.bf16.gmra.mrb[0].mxu0 %v1319
        %v7349 = vpop.f32.mrb[0].mxu0
        %v7350 = vadd.f32 %v4231, %v7349
        %v7351 = vpop.f32.mrb[0].mxu0
        %v7352 = vadd.f32 %v4233, %v7351
        %v7353 = vpop.f32.mrb[0].mxu0
        %v7354 = vadd.f32 %v4235, %v7353
        %v7355 = vpop.f32.mrb[0].mxu0
        %v7356 = vadd.f32 %v4237, %v7355
        %7357 = vdwg.mxu0
        %7358 = vmatprep.subr.bf16.mxu0 %v6250
        %7359 = vmatpush1.bf16.msra.mxu0 %v6249
        %7360 = vmatprep.subr.bf16.mxu0 %v6258
        %7361 = vmatpush1.bf16.msra.mxu0 %v6257
        %7362 = vmatprep.subr.bf16.mxu0 %v6266
        %7363 = vmatpush1.bf16.msra.mxu0 %v6265
        %7364 = vmatprep.subr.bf16.mxu0 %v6274
        %7365 = vmatpush1.bf16.msra.mxu0 %v6273
        %7366 = vmatprep.subr.bf16.mxu0 %v6282
        %7367 = vmatpush1.bf16.msra.mxu0 %v6281
        %7368 = vmatprep.subr.bf16.mxu0 %v6290
        %7369 = vmatpush1.bf16.msra.mxu0 %v6289
        %7370 = vmatprep.subr.bf16.mxu0 %v6298
        %7371 = vmatpush1.bf16.msra.mxu0 %v6297
        %7372 = vmatprep.subr.bf16.mxu0 %v6306
        %7373 = vmatpush1.bf16.msra.mxu0 %v6305
        %7374 = vmatprep.subr.bf16.mxu0 %v6314
        %7375 = vmatpush1.bf16.msra.mxu0 %v6313
        %7376 = vmatprep.subr.bf16.mxu0 %v6322
        %7377 = vmatpush1.bf16.msra.mxu0 %v6321
        %7378 = vmatprep.subr.bf16.mxu0 %v6330
        %7379 = vmatpush1.bf16.msra.mxu0 %v6329
        %7380 = vmatprep.subr.bf16.mxu0 %v6338
        %7381 = vmatpush1.bf16.msra.mxu0 %v6337
        %7382 = vmatprep.subr.bf16.mxu0 %v6346
        %7383 = vmatpush1.bf16.msra.mxu0 %v6345
        %7384 = vmatprep.subr.bf16.mxu0 %v6354
        %7385 = vmatpush1.bf16.msra.mxu0 %v6353
        %7386 = vmatprep.subr.bf16.mxu0 %v6362
        %7387 = vmatpush1.bf16.msra.mxu0 %v6361
        %7388 = vmatprep.subr.bf16.mxu0 %v6370
        %7389 = vmatpush1.bf16.msra.mxu0 %v6369
        %7390 = vmatprep.mubr.bf16.mxu0 %v1322
        %7391 = vmatmul.mubr.bf16.gmra.mrb[0].mxu0 %v1321
        %v7392 = vpop.f32.mrb[0].mxu0
        %v7393 = vadd.f32 %v7350, %v7392
        %v7394 = vpop.f32.mrb[0].mxu0
        %v7395 = vadd.f32 %v7352, %v7394
        %v7396 = vpop.f32.mrb[0].mxu0
        %v7397 = vadd.f32 %v7354, %v7396
        %v7398 = vpop.f32.mrb[0].mxu0
        %v7399 = vadd.f32 %v7356, %v7398
        %7400 = vdwg.mxu0
        %7401 = vmatprep.subr.bf16.mxu0 %v6378
        %7402 = vmatpush1.bf16.msra.mxu0 %v6377
        %7403 = vmatprep.subr.bf16.mxu0 %v6386
        %7404 = vmatpush1.bf16.msra.mxu0 %v6385
        %7405 = vmatprep.subr.bf16.mxu0 %v6394
        %7406 = vmatpush1.bf16.msra.mxu0 %v6393
        %7407 = vmatprep.subr.bf16.mxu0 %v6402
        %7408 = vmatpush1.bf16.msra.mxu0 %v6401
        %7409 = vmatprep.subr.bf16.mxu0 %v6410
        %7410 = vmatpush1.bf16.msra.mxu0 %v6409
        %7411 = vmatprep.subr.bf16.mxu0 %v6418
        %7412 = vmatpush1.bf16.msra.mxu0 %v6417
        %7413 = vmatprep.subr.bf16.mxu0 %v6426
        %7414 = vmatpush1.bf16.msra.mxu0 %v6425
        %7415 = vmatprep.subr.bf16.mxu0 %v6434
        %7416 = vmatpush1.bf16.msra.mxu0 %v6433
        %7417 = vmatprep.subr.bf16.mxu0 %v6442
        %7418 = vmatpush1.bf16.msra.mxu0 %v6441
        %7419 = vmatprep.subr.bf16.mxu0 %v6450
        %7420 = vmatpush1.bf16.msra.mxu0 %v6449
        %7421 = vmatprep.subr.bf16.mxu0 %v6458
        %7422 = vmatpush1.bf16.msra.mxu0 %v6457
        %7423 = vmatprep.subr.bf16.mxu0 %v6466
        %7424 = vmatpush1.bf16.msra.mxu0 %v6465
        %7425 = vmatprep.subr.bf16.mxu0 %v6474
        %7426 = vmatpush1.bf16.msra.mxu0 %v6473
        %7427 = vmatprep.subr.bf16.mxu0 %v6482
        %7428 = vmatpush1.bf16.msra.mxu0 %v6481
        %7429 = vmatprep.subr.bf16.mxu0 %v6490
        %7430 = vmatpush1.bf16.msra.mxu0 %v6489
        %7431 = vmatprep.subr.bf16.mxu0 %v6498
        %7432 = vmatpush1.bf16.msra.mxu0 %v6497
        %7433 = vmatprep.mubr.bf16.mxu0 %v1324
        %7434 = vmatmul.mubr.bf16.gmra.mrb[0].mxu0 %v1323
        %v7435 = vpop.f32.mrb[0].mxu0
        %v7436 = vadd.f32 %v7393, %v7435
        %v7437 = vpop.f32.mrb[0].mxu0
        %v7438 = vadd.f32 %v7395, %v7437
        %v7439 = vpop.f32.mrb[0].mxu0
        %v7440 = vadd.f32 %v7397, %v7439
        %v7441 = vpop.f32.mrb[0].mxu0
        %v7442 = vadd.f32 %v7399, %v7441
        %7443 = vdwg.mxu0
        %7444 = vmatprep.subr.bf16.mxu0 %v6506
        %7445 = vmatpush1.bf16.msra.mxu0 %v6505
        %7446 = vmatprep.subr.bf16.mxu0 %v6514
        %7447 = vmatpush1.bf16.msra.mxu0 %v6513
        %7448 = vmatprep.subr.bf16.mxu0 %v6522
        %7449 = vmatpush1.bf16.msra.mxu0 %v6521
        %7450 = vmatprep.subr.bf16.mxu0 %v6530
        %7451 = vmatpush1.bf16.msra.mxu0 %v6529
        %7452 = vmatprep.subr.bf16.mxu0 %v6538
        %7453 = vmatpush1.bf16.msra.mxu0 %v6537
        %7454 = vmatprep.subr.bf16.mxu0 %v6546
        %7455 = vmatpush1.bf16.msra.mxu0 %v6545
        %7456 = vmatprep.subr.bf16.mxu0 %v6554
        %7457 = vmatpush1.bf16.msra.mxu0 %v6553
        %7458 = vmatprep.subr.bf16.mxu0 %v6562
        %7459 = vmatpush1.bf16.msra.mxu0 %v6561
        %7460 = vmatprep.subr.bf16.mxu0 %v6570
        %7461 = vmatpush1.bf16.msra.mxu0 %v6569
        %7462 = vmatprep.subr.bf16.mxu0 %v6578
        %7463 = vmatpush1.bf16.msra.mxu0 %v6577
        %7464 = vmatprep.subr.bf16.mxu0 %v6586
        %7465 = vmatpush1.bf16.msra.mxu0 %v6585
        %7466 = vmatprep.subr.bf16.mxu0 %v6594
        %7467 = vmatpush1.bf16.msra.mxu0 %v6593
        %7468 = vmatprep.subr.bf16.mxu0 %v6602
        %7469 = vmatpush1.bf16.msra.mxu0 %v6601
        %7470 = vmatprep.subr.bf16.mxu0 %v6610
        %7471 = vmatpush1.bf16.msra.mxu0 %v6609
        %7472 = vmatprep.subr.bf16.mxu0 %v6618
        %7473 = vmatpush1.bf16.msra.mxu0 %v6617
        %7474 = vmatprep.subr.bf16.mxu0 %v6626
        %7475 = vmatpush1.bf16.msra.mxu0 %v6625
        %7476 = vmatprep.mubr.bf16.mxu0 %v1326
        %7477 = vmatmul.mubr.bf16.gmra.mrb[0].mxu0 %v1325
        %v7478 = vpop.f32.mrb[0].mxu0
        %v7479 = vadd.f32 %v7436, %v7478
        %v7480 = vpop.f32.mrb[0].mxu0
        %v7481 = vadd.f32 %v7438, %v7480
        %v7482 = vpop.f32.mrb[0].mxu0
        %v7483 = vadd.f32 %v7440, %v7482
        %v7484 = vpop.f32.mrb[0].mxu0
        %v7485 = vadd.f32 %v7442, %v7484
        %7486 = vdwg.mxu0
        %7487 = vmatprep.subr.bf16.mxu0 %v6124
        %7488 = vmatpush1.bf16.msra.mxu0 %v6123
        %7489 = vmatprep.subr.bf16.mxu0 %v6132
        %7490 = vmatpush1.bf16.msra.mxu0 %v6131
        %7491 = vmatprep.subr.bf16.mxu0 %v6140
        %7492 = vmatpush1.bf16.msra.mxu0 %v6139
        %7493 = vmatprep.subr.bf16.mxu0 %v6148
        %7494 = vmatpush1.bf16.msra.mxu0 %v6147
        %7495 = vmatprep.subr.bf16.mxu0 %v6156
        %7496 = vmatpush1.bf16.msra.mxu0 %v6155
        %7497 = vmatprep.subr.bf16.mxu0 %v6164
        %7498 = vmatpush1.bf16.msra.mxu0 %v6163
        %7499 = vmatprep.subr.bf16.mxu0 %v6172
        %7500 = vmatpush1.bf16.msra.mxu0 %v6171
        %7501 = vmatprep.subr.bf16.mxu0 %v6180
        %7502 = vmatpush1.bf16.msra.mxu0 %v6179
        %7503 = vmatprep.subr.bf16.mxu0 %v6188
        %7504 = vmatpush1.bf16.msra.mxu0 %v6187
        %7505 = vmatprep.subr.bf16.mxu0 %v6196
        %7506 = vmatpush1.bf16.msra.mxu0 %v6195
        %7507 = vmatprep.subr.bf16.mxu0 %v6204
        %7508 = vmatpush1.bf16.msra.mxu0 %v6203
        %7509 = vmatprep.subr.bf16.mxu0 %v6212
        %7510 = vmatpush1.bf16.msra.mxu0 %v6211
        %7511 = vmatprep.subr.bf16.mxu0 %v6220
        %7512 = vmatpush1.bf16.msra.mxu0 %v6219
        %7513 = vmatprep.subr.bf16.mxu0 %v6228
        %7514 = vmatpush1.bf16.msra.mxu0 %v6227
        %7515 = vmatprep.subr.bf16.mxu0 %v6236
        %7516 = vmatpush1.bf16.msra.mxu0 %v6235
        %7517 = vmatprep.subr.bf16.mxu0 %v6244
        %7518 = vmatpush1.bf16.msra.mxu0 %v6243
        %7519 = vmatprep.mubr.bf16.mxu0 %v1320
        %7520 = vmatmul.mubr.bf16.gmra.mrb[0].mxu0 %v1319
        %v7521 = vpop.f32.mrb[0].mxu0
        %v7522 = vadd.f32 %v4403, %v7521
        %v7523 = vpop.f32.mrb[0].mxu0
        %v7524 = vadd.f32 %v4405, %v7523
        %v7525 = vpop.f32.mrb[0].mxu0
        %v7526 = vadd.f32 %v4407, %v7525
        %v7527 = vpop.f32.mrb[0].mxu0
        %v7528 = vadd.f32 %v4409, %v7527
        %7529 = vdwg.mxu0
        %7530 = vmatprep.subr.bf16.mxu0 %v6252
        %7531 = vmatpush1.bf16.msra.mxu0 %v6251
        %7532 = vmatprep.subr.bf16.mxu0 %v6260
        %7533 = vmatpush1.bf16.msra.mxu0 %v6259
        %7534 = vmatprep.subr.bf16.mxu0 %v6268
        %7535 = vmatpush1.bf16.msra.mxu0 %v6267
        %7536 = vmatprep.subr.bf16.mxu0 %v6276
        %7537 = vmatpush1.bf16.msra.mxu0 %v6275
        %7538 = vmatprep.subr.bf16.mxu0 %v6284
        %7539 = vmatpush1.bf16.msra.mxu0 %v6283
        %7540 = vmatprep.subr.bf16.mxu0 %v6292
        %7541 = vmatpush1.bf16.msra.mxu0 %v6291
        %7542 = vmatprep.subr.bf16.mxu0 %v6300
        %7543 = vmatpush1.bf16.msra.mxu0 %v6299
        %7544 = vmatprep.subr.bf16.mxu0 %v6308
        %7545 = vmatpush1.bf16.msra.mxu0 %v6307
        %7546 = vmatprep.subr.bf16.mxu0 %v6316
        %7547 = vmatpush1.bf16.msra.mxu0 %v6315
        %7548 = vmatprep.subr.bf16.mxu0 %v6324
        %7549 = vmatpush1.bf16.msra.mxu0 %v6323
        %7550 = vmatprep.subr.bf16.mxu0 %v6332
        %7551 = vmatpush1.bf16.msra.mxu0 %v6331
        %7552 = vmatprep.subr.bf16.mxu0 %v6340
        %7553 = vmatpush1.bf16.msra.mxu0 %v6339
        %7554 = vmatprep.subr.bf16.mxu0 %v6348
        %7555 = vmatpush1.bf16.msra.mxu0 %v6347
        %7556 = vmatprep.subr.bf16.mxu0 %v6356
        %7557 = vmatpush1.bf16.msra.mxu0 %v6355
        %7558 = vmatprep.subr.bf16.mxu0 %v6364
        %7559 = vmatpush1.bf16.msra.mxu0 %v6363
        %7560 = vmatprep.subr.bf16.mxu0 %v6372
        %7561 = vmatpush1.bf16.msra.mxu0 %v6371
        %7562 = vmatprep.mubr.bf16.mxu0 %v1322
        %7563 = vmatmul.mubr.bf16.gmra.mrb[0].mxu0 %v1321
        %v7564 = vpop.f32.mrb[0].mxu0
        %v7565 = vadd.f32 %v7522, %v7564
        %v7566 = vpop.f32.mrb[0].mxu0
        %v7567 = vadd.f32 %v7524, %v7566
        %v7568 = vpop.f32.mrb[0].mxu0
        %v7569 = vadd.f32 %v7526, %v7568
        %v7570 = vpop.f32.mrb[0].mxu0
        %v7571 = vadd.f32 %v7528, %v7570
        %7572 = vdwg.mxu0
        %7573 = vmatprep.subr.bf16.mxu0 %v6380
        %7574 = vmatpush1.bf16.msra.mxu0 %v6379
        %7575 = vmatprep.subr.bf16.mxu0 %v6388
        %7576 = vmatpush1.bf16.msra.mxu0 %v6387
        %7577 = vmatprep.subr.bf16.mxu0 %v6396
        %7578 = vmatpush1.bf16.msra.mxu0 %v6395
        %7579 = vmatprep.subr.bf16.mxu0 %v6404
        %7580 = vmatpush1.bf16.msra.mxu0 %v6403
        %7581 = vmatprep.subr.bf16.mxu0 %v6412
        %7582 = vmatpush1.bf16.msra.mxu0 %v6411
        %7583 = vmatprep.subr.bf16.mxu0 %v6420
        %7584 = vmatpush1.bf16.msra.mxu0 %v6419
        %7585 = vmatprep.subr.bf16.mxu0 %v6428
        %7586 = vmatpush1.bf16.msra.mxu0 %v6427
        %7587 = vmatprep.subr.bf16.mxu0 %v6436
        %7588 = vmatpush1.bf16.msra.mxu0 %v6435
        %7589 = vmatprep.subr.bf16.mxu0 %v6444
        %7590 = vmatpush1.bf16.msra.mxu0 %v6443
        %7591 = vmatprep.subr.bf16.mxu0 %v6452
        %7592 = vmatpush1.bf16.msra.mxu0 %v6451
        %7593 = vmatprep.subr.bf16.mxu0 %v6460
        %7594 = vmatpush1.bf16.msra.mxu0 %v6459
        %7595 = vmatprep.subr.bf16.mxu0 %v6468
        %7596 = vmatpush1.bf16.msra.mxu0 %v6467
        %7597 = vmatprep.subr.bf16.mxu0 %v6476
        %7598 = vmatpush1.bf16.msra.mxu0 %v6475
        %7599 = vmatprep.subr.bf16.mxu0 %v6484
        %7600 = vmatpush1.bf16.msra.mxu0 %v6483
        %7601 = vmatprep.subr.bf16.mxu0 %v6492
        %7602 = vmatpush1.bf16.msra.mxu0 %v6491
        %7603 = vmatprep.subr.bf16.mxu0 %v6500
        %7604 = vmatpush1.bf16.msra.mxu0 %v6499
        %7605 = vmatprep.mubr.bf16.mxu0 %v1324
        %7606 = vmatmul.mubr.bf16.gmra.mrb[0].mxu0 %v1323
        %v7607 = vpop.f32.mrb[0].mxu0
        %v7608 = vadd.f32 %v7565, %v7607
        %v7609 = vpop.f32.mrb[0].mxu0
        %v7610 = vadd.f32 %v7567, %v7609
        %v7611 = vpop.f32.mrb[0].mxu0
        %v7612 = vadd.f32 %v7569, %v7611
        %v7613 = vpop.f32.mrb[0].mxu0
        %v7614 = vadd.f32 %v7571, %v7613
        %7615 = vdwg.mxu0
        %7616 = vmatprep.subr.bf16.mxu0 %v6508
        %7617 = vmatpush1.bf16.msra.mxu0 %v6507
        %7618 = vmatprep.subr.bf16.mxu0 %v6516
        %7619 = vmatpush1.bf16.msra.mxu0 %v6515
        %7620 = vmatprep.subr.bf16.mxu0 %v6524
        %7621 = vmatpush1.bf16.msra.mxu0 %v6523
        %7622 = vmatprep.subr.bf16.mxu0 %v6532
        %7623 = vmatpush1.bf16.msra.mxu0 %v6531
        %7624 = vmatprep.subr.bf16.mxu0 %v6540
        %7625 = vmatpush1.bf16.msra.mxu0 %v6539
        %7626 = vmatprep.subr.bf16.mxu0 %v6548
        %7627 = vmatpush1.bf16.msra.mxu0 %v6547
        %7628 = vmatprep.subr.bf16.mxu0 %v6556
        %7629 = vmatpush1.bf16.msra.mxu0 %v6555
        %7630 = vmatprep.subr.bf16.mxu0 %v6564
        %7631 = vmatpush1.bf16.msra.mxu0 %v6563
        %7632 = vmatprep.subr.bf16.mxu0 %v6572
        %7633 = vmatpush1.bf16.msra.mxu0 %v6571
        %7634 = vmatprep.subr.bf16.mxu0 %v6580
        %7635 = vmatpush1.bf16.msra.mxu0 %v6579
        %7636 = vmatprep.subr.bf16.mxu0 %v6588
        %7637 = vmatpush1.bf16.msra.mxu0 %v6587
        %7638 = vmatprep.subr.bf16.mxu0 %v6596
        %7639 = vmatpush1.bf16.msra.mxu0 %v6595
        %7640 = vmatprep.subr.bf16.mxu0 %v6604
        %7641 = vmatpush1.bf16.msra.mxu0 %v6603
        %7642 = vmatprep.subr.bf16.mxu0 %v6612
        %7643 = vmatpush1.bf16.msra.mxu0 %v6611
        %7644 = vmatprep.subr.bf16.mxu0 %v6620
        %7645 = vmatpush1.bf16.msra.mxu0 %v6619
        %7646 = vmatprep.subr.bf16.mxu0 %v6628
        %7647 = vmatpush1.bf16.msra.mxu0 %v6627
        %7648 = vmatprep.mubr.bf16.mxu0 %v1326
        %7649 = vmatmul.mubr.bf16.gmra.mrb[0].mxu0 %v1325
        %v7650 = vpop.f32.mrb[0].mxu0
        %v7651 = vadd.f32 %v7608, %v7650
        %v7652 = vpop.f32.mrb[0].mxu0
        %v7653 = vadd.f32 %v7610, %v7652
        %v7654 = vpop.f32.mrb[0].mxu0
        %v7655 = vadd.f32 %v7612, %v7654
        %v7656 = vpop.f32.mrb[0].mxu0
        %v7657 = vadd.f32 %v7614, %v7656
        %7658 = vdwg.mxu0
        %7659 = vmatprep.subr.bf16.mxu0 %v6126
        %7660 = vmatpush1.bf16.msra.mxu0 %v6125
        %7661 = vmatprep.subr.bf16.mxu0 %v6134
        %7662 = vmatpush1.bf16.msra.mxu0 %v6133
        %7663 = vmatprep.subr.bf16.mxu0 %v6142
        %7664 = vmatpush1.bf16.msra.mxu0 %v6141
        %7665 = vmatprep.subr.bf16.mxu0 %v6150
        %7666 = vmatpush1.bf16.msra.mxu0 %v6149
        %7667 = vmatprep.subr.bf16.mxu0 %v6158
        %7668 = vmatpush1.bf16.msra.mxu0 %v6157
        %7669 = vmatprep.subr.bf16.mxu0 %v6166
        %7670 = vmatpush1.bf16.msra.mxu0 %v6165
        %7671 = vmatprep.subr.bf16.mxu0 %v6174
        %7672 = vmatpush1.bf16.msra.mxu0 %v6173
        %7673 = vmatprep.subr.bf16.mxu0 %v6182
        %7674 = vmatpush1.bf16.msra.mxu0 %v6181
        %7675 = vmatprep.subr.bf16.mxu0 %v6190
        %7676 = vmatpush1.bf16.msra.mxu0 %v6189
        %7677 = vmatprep.subr.bf16.mxu0 %v6198
        %7678 = vmatpush1.bf16.msra.mxu0 %v6197
        %7679 = vmatprep.subr.bf16.mxu0 %v6206
        %7680 = vmatpush1.bf16.msra.mxu0 %v6205
        %7681 = vmatprep.subr.bf16.mxu0 %v6214
        %7682 = vmatpush1.bf16.msra.mxu0 %v6213
        %7683 = vmatprep.subr.bf16.mxu0 %v6222
        %7684 = vmatpush1.bf16.msra.mxu0 %v6221
        %7685 = vmatprep.subr.bf16.mxu0 %v6230
        %7686 = vmatpush1.bf16.msra.mxu0 %v6229
        %7687 = vmatprep.subr.bf16.mxu0 %v6238
        %7688 = vmatpush1.bf16.msra.mxu0 %v6237
        %7689 = vmatprep.subr.bf16.mxu0 %v6246
        %7690 = vmatpush1.bf16.msra.mxu0 %v6245
        %7691 = vmatprep.mubr.bf16.mxu0 %v1320
        %7692 = vmatmul.mubr.bf16.gmra.mrb[0].mxu0 %v1319
        %v7693 = vpop.f32.mrb[0].mxu0
        %v7694 = vadd.f32 %v4575, %v7693
        %v7695 = vpop.f32.mrb[0].mxu0
        %v7696 = vadd.f32 %v4577, %v7695
        %v7697 = vpop.f32.mrb[0].mxu0
        %v7698 = vadd.f32 %v4579, %v7697
        %v7699 = vpop.f32.mrb[0].mxu0
        %v7700 = vadd.f32 %v4581, %v7699
        %7701 = vdwg.mxu0
        %7702 = vmatprep.subr.bf16.mxu0 %v6254
        %7703 = vmatpush1.bf16.msra.mxu0 %v6253
        %7704 = vmatprep.subr.bf16.mxu0 %v6262
        %7705 = vmatpush1.bf16.msra.mxu0 %v6261
        %7706 = vmatprep.subr.bf16.mxu0 %v6270
        %7707 = vmatpush1.bf16.msra.mxu0 %v6269
        %7708 = vmatprep.subr.bf16.mxu0 %v6278
        %7709 = vmatpush1.bf16.msra.mxu0 %v6277
        %7710 = vmatprep.subr.bf16.mxu0 %v6286
        %7711 = vmatpush1.bf16.msra.mxu0 %v6285
        %7712 = vmatprep.subr.bf16.mxu0 %v6294
        %7713 = vmatpush1.bf16.msra.mxu0 %v6293
        %7714 = vmatprep.subr.bf16.mxu0 %v6302
        %7715 = vmatpush1.bf16.msra.mxu0 %v6301
        %7716 = vmatprep.subr.bf16.mxu0 %v6310
        %7717 = vmatpush1.bf16.msra.mxu0 %v6309
        %7718 = vmatprep.subr.bf16.mxu0 %v6318
        %7719 = vmatpush1.bf16.msra.mxu0 %v6317
        %7720 = vmatprep.subr.bf16.mxu0 %v6326
        %7721 = vmatpush1.bf16.msra.mxu0 %v6325
        %7722 = vmatprep.subr.bf16.mxu0 %v6334
        %7723 = vmatpush1.bf16.msra.mxu0 %v6333
        %7724 = vmatprep.subr.bf16.mxu0 %v6342
        %7725 = vmatpush1.bf16.msra.mxu0 %v6341
        %7726 = vmatprep.subr.bf16.mxu0 %v6350
        %7727 = vmatpush1.bf16.msra.mxu0 %v6349
        %7728 = vmatprep.subr.bf16.mxu0 %v6358
        %7729 = vmatpush1.bf16.msra.mxu0 %v6357
        %7730 = vmatprep.subr.bf16.mxu0 %v6366
        %7731 = vmatpush1.bf16.msra.mxu0 %v6365
        %7732 = vmatprep.subr.bf16.mxu0 %v6374
        %7733 = vmatpush1.bf16.msra.mxu0 %v6373
        %7734 = vmatprep.mubr.bf16.mxu0 %v1322
        %7735 = vmatmul.mubr.bf16.gmra.mrb[0].mxu0 %v1321
        %v7736 = vpop.f32.mrb[0].mxu0
        %v7737 = vadd.f32 %v7694, %v7736
        %v7738 = vpop.f32.mrb[0].mxu0
        %v7739 = vadd.f32 %v7696, %v7738
        %v7740 = vpop.f32.mrb[0].mxu0
        %v7741 = vadd.f32 %v7698, %v7740
        %v7742 = vpop.f32.mrb[0].mxu0
        %v7743 = vadd.f32 %v7700, %v7742
        %7744 = vdwg.mxu0
        %7745 = vmatprep.subr.bf16.mxu0 %v6382
        %7746 = vmatpush1.bf16.msra.mxu0 %v6381
        %7747 = vmatprep.subr.bf16.mxu0 %v6390
        %7748 = vmatpush1.bf16.msra.mxu0 %v6389
        %7749 = vmatprep.subr.bf16.mxu0 %v6398
        %7750 = vmatpush1.bf16.msra.mxu0 %v6397
        %7751 = vmatprep.subr.bf16.mxu0 %v6406
        %7752 = vmatpush1.bf16.msra.mxu0 %v6405
        %7753 = vmatprep.subr.bf16.mxu0 %v6414
        %7754 = vmatpush1.bf16.msra.mxu0 %v6413
        %7755 = vmatprep.subr.bf16.mxu0 %v6422
        %7756 = vmatpush1.bf16.msra.mxu0 %v6421
        %7757 = vmatprep.subr.bf16.mxu0 %v6430
        %7758 = vmatpush1.bf16.msra.mxu0 %v6429
        %7759 = vmatprep.subr.bf16.mxu0 %v6438
        %7760 = vmatpush1.bf16.msra.mxu0 %v6437
        %7761 = vmatprep.subr.bf16.mxu0 %v6446
        %7762 = vmatpush1.bf16.msra.mxu0 %v6445
        %7763 = vmatprep.subr.bf16.mxu0 %v6454
        %7764 = vmatpush1.bf16.msra.mxu0 %v6453
        %7765 = vmatprep.subr.bf16.mxu0 %v6462
        %7766 = vmatpush1.bf16.msra.mxu0 %v6461
        %7767 = vmatprep.subr.bf16.mxu0 %v6470
        %7768 = vmatpush1.bf16.msra.mxu0 %v6469
        %7769 = vmatprep.subr.bf16.mxu0 %v6478
        %7770 = vmatpush1.bf16.msra.mxu0 %v6477
        %7771 = vmatprep.subr.bf16.mxu0 %v6486
        %7772 = vmatpush1.bf16.msra.mxu0 %v6485
        %7773 = vmatprep.subr.bf16.mxu0 %v6494
        %7774 = vmatpush1.bf16.msra.mxu0 %v6493
        %7775 = vmatprep.subr.bf16.mxu0 %v6502
        %7776 = vmatpush1.bf16.msra.mxu0 %v6501
        %7777 = vmatprep.mubr.bf16.mxu0 %v1324
        %7778 = vmatmul.mubr.bf16.gmra.mrb[0].mxu0 %v1323
        %v7779 = vpop.f32.mrb[0].mxu0
        %v7780 = vadd.f32 %v7737, %v7779
        %v7781 = vpop.f32.mrb[0].mxu0
        %v7782 = vadd.f32 %v7739, %v7781
        %v7783 = vpop.f32.mrb[0].mxu0
        %v7784 = vadd.f32 %v7741, %v7783
        %v7785 = vpop.f32.mrb[0].mxu0
        %v7786 = vadd.f32 %v7743, %v7785
        %7787 = vdwg.mxu0
        %7788 = vmatprep.subr.bf16.mxu0 %v6510
        %7789 = vmatpush1.bf16.msra.mxu0 %v6509
        %7790 = vmatprep.subr.bf16.mxu0 %v6518
        %7791 = vmatpush1.bf16.msra.mxu0 %v6517
        %7792 = vmatprep.subr.bf16.mxu0 %v6526
        %7793 = vmatpush1.bf16.msra.mxu0 %v6525
        %7794 = vmatprep.subr.bf16.mxu0 %v6534
        %7795 = vmatpush1.bf16.msra.mxu0 %v6533
        %7796 = vmatprep.subr.bf16.mxu0 %v6542
        %7797 = vmatpush1.bf16.msra.mxu0 %v6541
        %7798 = vmatprep.subr.bf16.mxu0 %v6550
        %7799 = vmatpush1.bf16.msra.mxu0 %v6549
        %7800 = vmatprep.subr.bf16.mxu0 %v6558
        %7801 = vmatpush1.bf16.msra.mxu0 %v6557
        %7802 = vmatprep.subr.bf16.mxu0 %v6566
        %7803 = vmatpush1.bf16.msra.mxu0 %v6565
        %7804 = vmatprep.subr.bf16.mxu0 %v6574
        %7805 = vmatpush1.bf16.msra.mxu0 %v6573
        %7806 = vmatprep.subr.bf16.mxu0 %v6582
        %7807 = vmatpush1.bf16.msra.mxu0 %v6581
        %7808 = vmatprep.subr.bf16.mxu0 %v6590
        %7809 = vmatpush1.bf16.msra.mxu0 %v6589
        %7810 = vmatprep.subr.bf16.mxu0 %v6598
        %7811 = vmatpush1.bf16.msra.mxu0 %v6597
        %7812 = vmatprep.subr.bf16.mxu0 %v6606
        %7813 = vmatpush1.bf16.msra.mxu0 %v6605
        %7814 = vmatprep.subr.bf16.mxu0 %v6614
        %7815 = vmatpush1.bf16.msra.mxu0 %v6613
        %7816 = vmatprep.subr.bf16.mxu0 %v6622
        %7817 = vmatpush1.bf16.msra.mxu0 %v6621
        %7818 = vmatprep.subr.bf16.mxu0 %v6630
        %7819 = vmatpush1.bf16.msra.mxu0 %v6629
        %7820 = vmatprep.mubr.bf16.mxu0 %v1326
        %7821 = vmatmul.mubr.bf16.gmra.mrb[0].mxu0 %v1325
        %v7822 = vpop.f32.mrb[0].mxu0
        %v7823 = vadd.f32 %v7780, %v7822
        %v7824 = vpop.f32.mrb[0].mxu0
        %v7825 = vadd.f32 %v7782, %v7824
        %v7826 = vpop.f32.mrb[0].mxu0
        %v7827 = vadd.f32 %v7784, %v7826
        %v7828 = vpop.f32.mrb[0].mxu0
        %v7829 = vadd.f32 %v7786, %v7828
        %7830 = vdwg.mxu0
        %v7831 = vmul.f32 %v7307, %v7307
        %v7832 = vmul.f32 %v7309, %v7309
        %v7833 = vmul.f32 %v7479, %v7479
        %v7834 = vmul.f32 %v7481, %v7481
        %v7835 = vmul.f32 %v7311, %v7311
        %v7836 = vmul.f32 %v7313, %v7313
        %v7837 = vmul.f32 %v7483, %v7483
        %v7838 = vmul.f32 %v7485, %v7485
        %v7839 = vmul.f32 %v7651, %v7651
        %v7840 = vmul.f32 %v7653, %v7653
        %v7841 = vmul.f32 %v7823, %v7823
        %v7842 = vmul.f32 %v7825, %v7825
        %v7843 = vmul.f32 %v7655, %v7655
        %v7844 = vmul.f32 %v7657, %v7657
        %v7845 = vmul.f32 %v7827, %v7827
        %v7846 = vmul.f32 %v7829, %v7829
        %v7847 = vadd.f32 %v7831, %v7839
        %v7848 = vadd.f32 %v7832, %v7840
        %v7849 = vadd.f32 %v7833, %v7841
        %v7850 = vadd.f32 %v7834, %v7842
        %v7851 = vadd.f32 %v7835, %v7843
        %v7852 = vadd.f32 %v7836, %v7844
        %v7853 = vadd.f32 %v7837, %v7845
        %v7854 = vadd.f32 %v7838, %v7846
        %v7855 = vld [vmem:[#allocation8] sm:$0xff]
        %v7856 = vld [vmem:[#allocation8 + $0x8] sm:$0xff]
        %v7857 = vld [vmem:[#allocation8 + $0x10] sm:$0xff]
        %v7858 = vld [vmem:[#allocation8 + $0x18] sm:$0xff]
        %v7859 = vld [vmem:[#allocation8 + $0x20] sm:$0xff]
        %v7860 = vld [vmem:[#allocation8 + $0x28] sm:$0xff]
        %v7861 = vld [vmem:[#allocation8 + $0x30] sm:$0xff]
        %v7862 = vld [vmem:[#allocation8 + $0x38] sm:$0xff]
        %v7863 = vld [vmem:[#allocation8 + $0x40] sm:$0xff]
        %v7864 = vld [vmem:[#allocation8 + $0x48] sm:$0xff]
        %v7865 = vld [vmem:[#allocation8 + $0x50] sm:$0xff]
        %v7866 = vld [vmem:[#allocation8 + $0x58] sm:$0xff]
        %v7867 = vld [vmem:[#allocation8 + $0x60] sm:$0xff]
        %v7868 = vld [vmem:[#allocation8 + $0x68] sm:$0xff]
        %v7869 = vld [vmem:[#allocation8 + $0x70] sm:$0xff]
        %v7870 = vld [vmem:[#allocation8 + $0x78] sm:$0xff]
        %v7871 = vld [vmem:[#allocation8 + $0x80] sm:$0xff]
        %v7872 = vld [vmem:[#allocation8 + $0x88] sm:$0xff]
        %v7873 = vld [vmem:[#allocation8 + $0x90] sm:$0xff]
        %v7874 = vld [vmem:[#allocation8 + $0x98] sm:$0xff]
        %v7875 = vld [vmem:[#allocation8 + $0xa0] sm:$0xff]
        %v7876 = vld [vmem:[#allocation8 + $0xa8] sm:$0xff]
        %v7877 = vld [vmem:[#allocation8 + $0xb0] sm:$0xff]
        %v7878 = vld [vmem:[#allocation8 + $0xb8] sm:$0xff]
        %v7879 = vld [vmem:[#allocation8 + $0xc0] sm:$0xff]
        %v7880 = vld [vmem:[#allocation8 + $0xc8] sm:$0xff]
        %v7881 = vld [vmem:[#allocation8 + $0xd0] sm:$0xff]
        %v7882 = vld [vmem:[#allocation8 + $0xd8] sm:$0xff]
        %v7883 = vld [vmem:[#allocation8 + $0xe0] sm:$0xff]
        %v7884 = vld [vmem:[#allocation8 + $0xe8] sm:$0xff]
        %v7885 = vld [vmem:[#allocation8 + $0xf0] sm:$0xff]
        %v7886 = vld [vmem:[#allocation8 + $0xf8] sm:$0xff]
        %v7887 = vld [vmem:[#allocation8 + $0x100] sm:$0xff]
        %v7888 = vld [vmem:[#allocation8 + $0x108] sm:$0xff]
        %v7889 = vld [vmem:[#allocation8 + $0x110] sm:$0xff]
        %v7890 = vld [vmem:[#allocation8 + $0x118] sm:$0xff]
        %v7891 = vld [vmem:[#allocation8 + $0x120] sm:$0xff]
        %v7892 = vld [vmem:[#allocation8 + $0x128] sm:$0xff]
        %v7893 = vld [vmem:[#allocation8 + $0x130] sm:$0xff]
        %v7894 = vld [vmem:[#allocation8 + $0x138] sm:$0xff]
        %v7895 = vld [vmem:[#allocation8 + $0x140] sm:$0xff]
        %v7896 = vld [vmem:[#allocation8 + $0x148] sm:$0xff]
        %v7897 = vld [vmem:[#allocation8 + $0x150] sm:$0xff]
        %v7898 = vld [vmem:[#allocation8 + $0x158] sm:$0xff]
        %v7899 = vld [vmem:[#allocation8 + $0x160] sm:$0xff]
        %v7900 = vld [vmem:[#allocation8 + $0x168] sm:$0xff]
        %v7901 = vld [vmem:[#allocation8 + $0x170] sm:$0xff]
        %v7902 = vld [vmem:[#allocation8 + $0x178] sm:$0xff]
        %v7903 = vld [vmem:[#allocation8 + $0x180] sm:$0xff]
        %v7904 = vld [vmem:[#allocation8 + $0x188] sm:$0xff]
        %v7905 = vld [vmem:[#allocation8 + $0x190] sm:$0xff]
        %v7906 = vld [vmem:[#allocation8 + $0x198] sm:$0xff]
        %v7907 = vld [vmem:[#allocation8 + $0x1a0] sm:$0xff]
        %v7908 = vld [vmem:[#allocation8 + $0x1a8] sm:$0xff]
        %v7909 = vld [vmem:[#allocation8 + $0x1b0] sm:$0xff]
        %v7910 = vld [vmem:[#allocation8 + $0x1b8] sm:$0xff]
        %v7911 = vld [vmem:[#allocation8 + $0x1c0] sm:$0xff]
        %v7912 = vld [vmem:[#allocation8 + $0x1c8] sm:$0xff]
        %v7913 = vld [vmem:[#allocation8 + $0x1d0] sm:$0xff]
        %v7914 = vld [vmem:[#allocation8 + $0x1d8] sm:$0xff]
        %v7915 = vld [vmem:[#allocation8 + $0x1e0] sm:$0xff]
        %v7916 = vld [vmem:[#allocation8 + $0x1e8] sm:$0xff]
        %v7917 = vld [vmem:[#allocation8 + $0x1f0] sm:$0xff]
        %v7918 = vld [vmem:[#allocation8 + $0x1f8] sm:$0xff]
        %7919 = vmatprep.subr.mxu0 0.0
        %7920 = vmatpush1.msra.mxu0 %v7855
        %7921 = vmatprep.subr.mxu0 0.0
        %7922 = vmatpush1.msra.mxu0 %v7856
        %7923 = vmatprep.subr.mxu0 0.0
        %7924 = vmatpush1.msra.mxu0 %v7857
        %7925 = vmatprep.subr.mxu0 0.0
        %7926 = vmatpush1.msra.mxu0 %v7858
        %7927 = vmatprep.subr.mxu0 0.0
        %7928 = vmatpush1.msra.mxu0 %v7859
        %7929 = vmatprep.subr.mxu0 0.0
        %7930 = vmatpush1.msra.mxu0 %v7860
        %7931 = vmatprep.subr.mxu0 0.0
        %7932 = vmatpush1.msra.mxu0 %v7861
        %7933 = vmatprep.subr.mxu0 0.0
        %7934 = vmatpush1.msra.mxu0 %v7862
        %7935 = vmatprep.subr.mxu0 0.0
        %7936 = vmatpush1.msra.mxu0 %v7863
        %7937 = vmatprep.subr.mxu0 0.0
        %7938 = vmatpush1.msra.mxu0 %v7864
        %7939 = vmatprep.subr.mxu0 0.0
        %7940 = vmatpush1.msra.mxu0 %v7865
        %7941 = vmatprep.subr.mxu0 0.0
        %7942 = vmatpush1.msra.mxu0 %v7866
        %7943 = vmatprep.subr.mxu0 0.0
        %7944 = vmatpush1.msra.mxu0 %v7867
        %7945 = vmatprep.subr.mxu0 0.0
        %7946 = vmatpush1.msra.mxu0 %v7868
        %7947 = vmatprep.subr.mxu0 0.0
        %7948 = vmatpush1.msra.mxu0 %v7869
        %7949 = vmatprep.subr.mxu0 0.0
        %7950 = vmatpush1.msra.mxu0 %v7870
        %7951 = vmatprep.subr.mxu0 0.0
        %7952 = vmatpush1.msra.mxu0 %v7871
        %7953 = vmatprep.subr.mxu0 0.0
        %7954 = vmatpush1.msra.mxu0 %v7872
        %7955 = vmatprep.subr.mxu0 0.0
        %7956 = vmatpush1.msra.mxu0 %v7873
        %7957 = vmatprep.subr.mxu0 0.0
        %7958 = vmatpush1.msra.mxu0 %v7874
        %7959 = vmatprep.subr.mxu0 0.0
        %7960 = vmatpush1.msra.mxu0 %v7875
        %7961 = vmatprep.subr.mxu0 0.0
        %7962 = vmatpush1.msra.mxu0 %v7876
        %7963 = vmatprep.subr.mxu0 0.0
        %7964 = vmatpush1.msra.mxu0 %v7877
        %7965 = vmatprep.subr.mxu0 0.0
        %7966 = vmatpush1.msra.mxu0 %v7878
        %7967 = vmatprep.subr.mxu0 0.0
        %7968 = vmatpush1.msra.mxu0 %v7879
        %7969 = vmatprep.subr.mxu0 0.0
        %7970 = vmatpush1.msra.mxu0 %v7880
        %7971 = vmatprep.subr.mxu0 0.0
        %7972 = vmatpush1.msra.mxu0 %v7881
        %7973 = vmatprep.subr.mxu0 0.0
        %7974 = vmatpush1.msra.mxu0 %v7882
        %7975 = vmatprep.subr.mxu0 0.0
        %7976 = vmatpush1.msra.mxu0 %v7883
        %7977 = vmatprep.subr.mxu0 0.0
        %7978 = vmatpush1.msra.mxu0 %v7884
        %7979 = vmatprep.subr.mxu0 0.0
        %7980 = vmatpush1.msra.mxu0 %v7885
        %7981 = vmatprep.subr.mxu0 0.0
        %7982 = vmatpush1.msra.mxu0 %v7886
        %7983 = vmatprep.mubr.f32.mxu0 %v7848
        %7984 = vmatmul.mubr.f32.gmra.mrb[0].mxu0 %v7847
        %v7985 = vpop.f32.mrb[0].mxu0
        %v7986 = vadd.f32 0.0, %v7985
        %v7987 = vpop.f32.mrb[0].mxu0
        %7988 = vmatprep.mubr.f32.mxu0 %v7852
        %7989 = vmatmul.mubr.f32.gmra.mrb[0].mxu0 %v7851
        %v7990 = vpop.f32.mrb[0].mxu0
        %v7991 = vadd.f32 0.0, %v7990
        %v7992 = vpop.f32.mrb[0].mxu0
        %7993 = vdwg.mxu0
        %7994 = vmatprep.subr.mxu0 0.0
        %7995 = vmatpush1.msra.mxu0 %v7887
        %7996 = vmatprep.subr.mxu0 0.0
        %7997 = vmatpush1.msra.mxu0 %v7888
        %7998 = vmatprep.subr.mxu0 0.0
        %7999 = vmatpush1.msra.mxu0 %v7889
        %8000 = vmatprep.subr.mxu0 0.0
        %8001 = vmatpush1.msra.mxu0 %v7890
        %8002 = vmatprep.subr.mxu0 0.0
        %8003 = vmatpush1.msra.mxu0 %v7891
        %8004 = vmatprep.subr.mxu0 0.0
        %8005 = vmatpush1.msra.mxu0 %v7892
        %8006 = vmatprep.subr.mxu0 0.0
        %8007 = vmatpush1.msra.mxu0 %v7893
        %8008 = vmatprep.subr.mxu0 0.0
        %8009 = vmatpush1.msra.mxu0 %v7894
        %8010 = vmatprep.subr.mxu0 0.0
        %8011 = vmatpush1.msra.mxu0 %v7895
        %8012 = vmatprep.subr.mxu0 0.0
        %8013 = vmatpush1.msra.mxu0 %v7896
        %8014 = vmatprep.subr.mxu0 0.0
        %8015 = vmatpush1.msra.mxu0 %v7897
        %8016 = vmatprep.subr.mxu0 0.0
        %8017 = vmatpush1.msra.mxu0 %v7898
        %8018 = vmatprep.subr.mxu0 0.0
        %8019 = vmatpush1.msra.mxu0 %v7899
        %8020 = vmatprep.subr.mxu0 0.0
        %8021 = vmatpush1.msra.mxu0 %v7900
        %8022 = vmatprep.subr.mxu0 0.0
        %8023 = vmatpush1.msra.mxu0 %v7901
        %8024 = vmatprep.subr.mxu0 0.0
        %8025 = vmatpush1.msra.mxu0 %v7902
        %8026 = vmatprep.subr.mxu0 0.0
        %8027 = vmatpush1.msra.mxu0 %v7903
        %8028 = vmatprep.subr.mxu0 0.0
        %8029 = vmatpush1.msra.mxu0 %v7904
        %8030 = vmatprep.subr.mxu0 0.0
        %8031 = vmatpush1.msra.mxu0 %v7905
        %8032 = vmatprep.subr.mxu0 0.0
        %8033 = vmatpush1.msra.mxu0 %v7906
        %8034 = vmatprep.subr.mxu0 0.0
        %8035 = vmatpush1.msra.mxu0 %v7907
        %8036 = vmatprep.subr.mxu0 0.0
        %8037 = vmatpush1.msra.mxu0 %v7908
        %8038 = vmatprep.subr.mxu0 0.0
        %8039 = vmatpush1.msra.mxu0 %v7909
        %8040 = vmatprep.subr.mxu0 0.0
        %8041 = vmatpush1.msra.mxu0 %v7910
        %8042 = vmatprep.subr.mxu0 0.0
        %8043 = vmatpush1.msra.mxu0 %v7911
        %8044 = vmatprep.subr.mxu0 0.0
        %8045 = vmatpush1.msra.mxu0 %v7912
        %8046 = vmatprep.subr.mxu0 0.0
        %8047 = vmatpush1.msra.mxu0 %v7913
        %8048 = vmatprep.subr.mxu0 0.0
        %8049 = vmatpush1.msra.mxu0 %v7914
        %8050 = vmatprep.subr.mxu0 0.0
        %8051 = vmatpush1.msra.mxu0 %v7915
        %8052 = vmatprep.subr.mxu0 0.0
        %8053 = vmatpush1.msra.mxu0 %v7916
        %8054 = vmatprep.subr.mxu0 0.0
        %8055 = vmatpush1.msra.mxu0 %v7917
        %8056 = vmatprep.subr.mxu0 0.0
        %8057 = vmatpush1.msra.mxu0 %v7918
        %8058 = vmatprep.mubr.f32.mxu0 %v7850
        %8059 = vmatmul.mubr.f32.gmra.mrb[0].mxu0 %v7849
        %v8060 = vpop.f32.mrb[0].mxu0
        %v8061 = vadd.f32 %v7986, %v8060
        %v8062 = vpop.f32.mrb[0].mxu0
        %8063 = vmatprep.mubr.f32.mxu0 %v7854
        %8064 = vmatmul.mubr.f32.gmra.mrb[0].mxu0 %v7853
        %v8065 = vpop.f32.mrb[0].mxu0
        %v8066 = vadd.f32 %v7991, %v8065
        %v8067 = vpop.f32.mrb[0].mxu0
        %8068 = vdwg.mxu0
        %8069 = vst [vmem:[%s260] sm:$0xff] %v8061
        %8070 = vst [vmem:[%s260 + $0x8] sm:$0xff] %v8066
        %s8071 = sand.u32 %s120, 1
        %s8072 = scalar_lea.sflag [#allocation4], %s8071
        %s8073 = sand.u32 %s120, 1
        %s8074 = smul.addr %s8073, 16
        %s8075 = scalar_lea.vmem [#allocation10], %s8074
        // Predicated region
        $region53: #{tpu_custom_call.1} parent=35 // pred_check
          %p8076 = pneg %p130
        $region54: #{tpu_custom_call.1} parent=35 // pred_check_branch
          %8078 = sbr.rel (%p8076) target = $region56
        $region55: #{tpu_custom_call.1} parent=35 // pred_region
          %s8079 = smul.u32 2, %s23
          %s8081 = ssub.s32 256, 256
          %8082 = vsyncadd %s8072, %s8081
          %s8083 = smul.addr %s8079, 128
          %s8084 = scalar_lea.hbm %s4, %s8083
          %s8085 = sshll.u32 %s8075, 4
          %s8086 = int_to_ptr.vmem [resolvable:$true] %s8085
          %8091 = dma.vmem_to_hbm [thread:$0]  %s8086, 256, %s8084, %s8072, 128, 128, 8
        $region56: #{tpu_custom_call.1} parent=35 // pred_fallthru
          _
      $region36: #{tpu_custom_call.1} parent=5 // pred_fallthru
        _
      %p8092 = scmp.le.s32.totalorder 2, %s18
      // Predicated region
      $region57: #{tpu_custom_call.1} parent=5 // pred_check
        %p8093 = pneg %p8092
      $region58: #{tpu_custom_call.1} parent=5 // pred_check_branch
        %8095 = sbr.rel (%p8093) target = $region60
      $region59: #{tpu_custom_call.1} parent=5 // pred_region
        %s8096 = ssub.s32 %s18, 2
        // Predicated region
        $region61: #{tpu_custom_call.1} parent=59 // pred_check
          %p8097 = pneg %p136
        $region62: #{tpu_custom_call.1} parent=59 // pred_check_branch
          %8099 = sbr.rel (%p8097) target = $region64
        $region63: #{tpu_custom_call.1} parent=59 // pred_region
          %s8100 = sand.u32 %s121, 1
          %s8101 = scalar_lea.sflag [#allocation4], %s8100
          %s8102 = sand.u32 %s121, 1
          %s8103 = smul.addr %s8102, 16
          %s8104 = scalar_lea.vmem [#allocation10], %s8103
          %8105 = dma.done %s8101, 256
        $region64: #{tpu_custom_call.1} parent=59 // pred_fallthru
          _
      $region60: #{tpu_custom_call.1} parent=5 // pred_fallthru
        _
    $region6: #{tpu_custom_call.1} parent=1 // loop_footer
      %s22 = sadd.s32 1, %s18
    $region7: #{tpu_custom_call.1} parent=1 // loop_footer_branch
      %17 = sbr.rel target = $region3
    $region8: #{tpu_custom_call.1} parent=1 // loop_exit
      _
    %8106 = vsyncpa [#allocation3], 1
    %s8107 = scalar_lea.sflag [#allocation3], 1
    %8108 = vsyncpa %s8107, 1
    %8109 = vsyncpa [#allocation6], 1
    %8110 = vsyncpa [#allocation9], 1
    %8111 = vsyncpa [#allocation4], 1
    %s8112 = scalar_lea.sflag [#allocation4], 1
    %8113 = vsyncpa %s8112, 1

</llo_original>
